<compile_context>
chip_gen: v5e
topology: v5e:2x2
jax: 0.10.0
libtpu: 0.0.40
codegen_flags: <defaults>
</compile_context>

<pallas_src>
import jax
import jax.numpy as jnp
from jax.experimental import pallas as pl
from jax.experimental.pallas import tpu as pltpu

GROUPS = 16
EPS = 1e-5


def _nobottleneck_kernel(x_ref, g1_ref, b1_ref, g2_ref, b2_ref,
                         s_ref, w1_ref, w2_ref, m2_ref, m2t_ref, o_ref):
    # x_ref: (1, H, W*C) f32   s_ref: (3, H, H) bf16 row-shift/halo matrices
    # w*_ref: (3, W*C, W*C) bf16 banded block-Toeplitz conv weights
    # m2_ref: (W*C, G) f32 group membership,  m2t_ref: (G, W*C) f32
    _, H, WC = x_ref.shape
    inv_n = float(GROUPS) / float(H * WC)          # 1 / (H * W * C/G)

    x = x_ref[0]                                   # (H, W*C), lane-dense f32
    m2 = m2_ref[...]
    m2t = m2t_ref[...]

    def groupnorm_relu(y, gamma, beta):
        s = jnp.sum(y, axis=0, keepdims=True)                       # (1, WC)
        ss = jnp.sum(y * y, axis=0, keepdims=True)                  # (1, WC)
        sg = jnp.dot(s, m2, preferred_element_type=jnp.float32)     # (1, G)
        ssg = jnp.dot(ss, m2, preferred_element_type=jnp.float32)   # (1, G)
        mean_g = sg * inv_n
        var_g = ssg * inv_n - mean_g * mean_g                       # biased var (torch)
        inv_g = jax.lax.rsqrt(var_g + EPS)
        mean_l = jnp.dot(mean_g, m2t, preferred_element_type=jnp.float32)  # (1, WC)
        inv_l = jnp.dot(inv_g, m2t, preferred_element_type=jnp.float32)    # (1, WC)
        out = (y - mean_l) * (inv_l * gamma) + beta
        return jnp.maximum(out, 0.0)                                # ReLU

    def conv3x3(y, w_ref):
        # SAME-padded 3x3 cross-correlation:
        #   row shift + top/bottom halo zeros : S[kh] @ y        (exact 0/1 selection)
        #   col shift + left/right halo zeros
        #   + channel contraction             : (.) @ B[kh]      (banded, K=N=W*C)
        y16 = y.astype(jnp.bfloat16)
        acc = jnp.zeros(y.shape, jnp.float32)
        for kh in range(3):
            shifted = jnp.dot(s_ref[kh], y16,
                              preferred_element_type=jnp.float32).astype(jnp.bfloat16)
            acc = acc + jnp.dot(shifted, w_ref[kh],
                                preferred_element_type=jnp.float32)
        return acc

    out = groupnorm_relu(x, g1_ref[...], b1_ref[...])
    out = conv3x3(out, w1_ref)
    out = groupnorm_relu(out, g2_ref[...], b2_ref[...])
    out = conv3x3(out, w2_ref)
    o_ref[0] = out + x                              # residual add (downsample is None)


def nobottleneck(x, params):
    """x: (N, H, W, C) float32 NHWC; params: (g1, b1, w1_hwio, g2, b2, w2_hwio)."""
    N, H, W, C = x.shape
    g1, b1, w1, g2, b2, w2 = params
    G = GROUPS
    WC = W * C

    # ---------------- host-side prep (free; nothing layout-related in-kernel) -------
    x2 = x.reshape(N, H, WC)                         # contiguous -> free reshape

    # group membership of lane l = w*C + c  ->  group c // (C/G)
    lane_c = jnp.arange(WC) % C
    m2 = (lane_c[:, None] // (C // G) == jnp.arange(G)[None, :]).astype(jnp.float32)
    m2t = m2.T

    # per-lane affine params (tile gamma/beta across the W copies packed into lanes)
    gamma1 = jnp.tile(g1, W).reshape(1, WC)
    beta1 = jnp.tile(b1, W).reshape(1, WC)
    gamma2 = jnp.tile(g2, W).reshape(1, WC)
    beta2 = jnp.tile(b2, W).reshape(1, WC)

    # row-shift / halo matrices: S[kh][h, h'] = 1 iff h' == h + (kh-1), 0 <= h' < H
    hh = jnp.arange(H)
    smats = jnp.stack([(hh[None, :] == hh[:, None] + (kh - 1)) for kh in range(3)]
                      ).astype(jnp.bfloat16)                          # (3, H, H)

    # banded block-Toeplitz weights:
    #   B[kh][w'*C + c, w*C + o] = w_hwio[kh, (w'-w)+1, c, o] if |w'-w| <= 1 else 0
    ww = jnp.arange(W)
    def banded(w_hwio):
        mats = []
        for kh in range(3):
            bk = jnp.zeros((WC, WC), jnp.float32)
            for kw in range(3):
                dxm = (ww[:, None] == ww[None, :] + (kw - 1)).astype(jnp.float32)
                bk = bk + jnp.kron(dxm, w_hwio[kh, kw])
            mats.append(bk)
        return jnp.stack(mats).astype(jnp.bfloat16)                   # (3, WC, WC)

    bw1 = banded(w1)
    bw2 = banded(w2)

    grid_spec = pltpu.PrefetchScalarGridSpec(
        num_scalar_prefetch=0,
        grid=(N,),
        in_specs=[
            pl.BlockSpec((1, H, WC), lambda n: (n, 0, 0)),    # x (lane-dense)
            pl.BlockSpec((1, WC), lambda n: (0, 0)),          # gamma1
            pl.BlockSpec((1, WC), lambda n: (0, 0)),          # beta1
            pl.BlockSpec((1, WC), lambda n: (0, 0)),          # gamma2
            pl.BlockSpec((1, WC), lambda n: (0, 0)),          # beta2
            pl.BlockSpec((3, H, H), lambda n: (0, 0, 0)),     # row-shift mats
            pl.BlockSpec((3, WC, WC), lambda n: (0, 0, 0)),   # banded conv1 weights
            pl.BlockSpec((3, WC, WC), lambda n: (0, 0, 0)),   # banded conv2 weights
            pl.BlockSpec((WC, G), lambda n: (0, 0)),          # group map
            pl.BlockSpec((G, WC), lambda n: (0, 0)),          # group map^T
        ],
        out_specs=pl.BlockSpec((1, H, WC), lambda n: (n, 0, 0)),
    )

    out2 = pl.pallas_call(
        _nobottleneck_kernel,
        out_shape=jax.ShapeDtypeStruct((N, H, WC), jnp.float32),
        grid_spec=grid_spec,
        compiler_params=pltpu.CompilerParams(
            dimension_semantics=("parallel",),   # one image per TC on v7x megacore
        ),
    )(x2, gamma1, beta1, gamma2, beta2, smats, bw1, bw2, m2, m2t)

    return out2.reshape(N, H, W, C)


def reference(x, g1, b1, w1, g2, b2, w2):
    """Pure-JAX reference (NHWC) matching PyTorch NoBottleneck semantics."""
    def gn(y, gamma, beta):
        N, H, W, C = y.shape
        yg = y.reshape(N, H, W, GROUPS, C // GROUPS)
        mean = yg.mean(axis=(1, 2, 4), keepdims=True)
        var = yg.var(axis=(1, 2, 4), keepdims=True)   # biased var, like torch GroupNorm
        yn = ((yg - mean) / jnp.sqrt(var + EPS)).reshape(N, H, W, C)
        return yn * gamma.reshape(1, 1, 1, C) + beta.reshape(1, 1, 1, C)

    def conv(y, w):
        return jax.lax.conv_general_dilated(
            y, w, window_strides=(1, 1), padding="SAME",
            dimension_numbers=("NHWC", "HWIO", "NHWC"))

    out = jax.nn.relu(gn(x, g1, b1))
    out = conv(out, w1)
    out = jax.nn.relu(gn(out, g2, b2))
    out = conv(out, w2)
    return out + x


if __name__ == "__main__":
    N, C, H, W = 2, 32, 16, 16   # inplanes == planes == 32, stride == 1, downsample None
    key = jax.random.PRNGKey(0)
    k = jax.random.split(key, 7)
    x = jax.random.normal(k[0], (N, H, W, C), jnp.float32)
    g1 = 1.0 + 0.1 * jax.random.normal(k[1], (C,), jnp.float32)
    b1 = 0.1 * jax.random.normal(k[2], (C,), jnp.float32)
    w1 = 0.1 * jax.random.normal(k[3], (3, 3, C, C), jnp.float32)   # HWIO
    g2 = 1.0 + 0.1 * jax.random.normal(k[4], (C,), jnp.float32)
    b2 = 0.1 * jax.random.normal(k[5], (C,), jnp.float32)
    w2 = 0.1 * jax.random.normal(k[6], (3, 3, C, C), jnp.float32)   # HWIO

    out = nobottleneck(x, (g1, b1, w1, g2, b2, w2))
    out = jax.block_until_ready(out)

    ref = reference(x, g1, b1, w1, g2, b2, w2)
    err = float(jnp.max(jnp.abs(out - ref)))
    # bf16 conv operands (f32 accumulation) -> tolerance relaxed vs. pure-f32 path.
    assert err < 5e-2, f"max abs error too large: {err}"
    print("KERNEL_OK")
</pallas_src>

<mosaic_0001>
module attributes {stable_mosaic.version = 11 : i64} {
  func.func @_nobottleneck_kernel(%arg0: i32, %arg1: memref<1x16x512xf32, #tpu.memory_space<vmem>>, %arg2: memref<1x512xf32, #tpu.memory_space<vmem>>, %arg3: memref<1x512xf32, #tpu.memory_space<vmem>>, %arg4: memref<1x512xf32, #tpu.memory_space<vmem>>, %arg5: memref<1x512xf32, #tpu.memory_space<vmem>>, %arg6: memref<3x16x16xbf16, #tpu.memory_space<vmem>>, %arg7: memref<3x512x512xbf16, #tpu.memory_space<vmem>>, %arg8: memref<3x512x512xbf16, #tpu.memory_space<vmem>>, %arg9: memref<512x16xf32, #tpu.memory_space<vmem>>, %arg10: memref<16x512xf32, #tpu.memory_space<vmem>>, %arg11: memref<1x16x512xf32, #tpu.memory_space<vmem>>) attributes {dimension_semantics = [#tpu.dimension_semantics<parallel>], iteration_bounds = array<i64: 2>, scalar_prefetch = 0 : i64, scratch_operands = 0 : i64, tpu.core_type = #tpu.core_type<tc>, window_params = [{transform_indices = @transform_0, window_bounds = array<i64: 1, 16, 512>}, {pipeline_mode = #tpu.pipeline_mode<synchronous>, transform_indices = @transform_1, window_bounds = array<i64: 1, 512>}, {pipeline_mode = #tpu.pipeline_mode<synchronous>, transform_indices = @transform_2, window_bounds = array<i64: 1, 512>}, {pipeline_mode = #tpu.pipeline_mode<synchronous>, transform_indices = @transform_3, window_bounds = array<i64: 1, 512>}, {pipeline_mode = #tpu.pipeline_mode<synchronous>, transform_indices = @transform_4, window_bounds = array<i64: 1, 512>}, {pipeline_mode = #tpu.pipeline_mode<synchronous>, transform_indices = @transform_5, window_bounds = array<i64: 3, 16, 16>}, {pipeline_mode = #tpu.pipeline_mode<synchronous>, transform_indices = @transform_6, window_bounds = array<i64: 3, 512, 512>}, {pipeline_mode = #tpu.pipeline_mode<synchronous>, transform_indices = @transform_7, window_bounds = array<i64: 3, 512, 512>}, {pipeline_mode = #tpu.pipeline_mode<synchronous>, transform_indices = @transform_8, window_bounds = array<i64: 512, 16>}, {pipeline_mode = #tpu.pipeline_mode<synchronous>, transform_indices = @transform_9, window_bounds = array<i64: 16, 512>}, {transform_indices = @transform_10, window_bounds = array<i64: 1, 16, 512>}]} {
    %c0 = arith.constant 0 : index
    %c0_0 = arith.constant 0 : index
    %c0_1 = arith.constant 0 : index
    %0 = vector.load %arg1[%c0, %c0_0, %c0_1] : memref<1x16x512xf32, #tpu.memory_space<vmem>>, vector<1x16x512xf32>
    %1 = vector.shape_cast %0 : vector<1x16x512xf32> to vector<16x512xf32>
    %c0_2 = arith.constant 0 : index
    %c0_3 = arith.constant 0 : index
    %2 = vector.load %arg9[%c0_2, %c0_3] : memref<512x16xf32, #tpu.memory_space<vmem>>, vector<512x16xf32>
    %c0_4 = arith.constant 0 : index
    %c0_5 = arith.constant 0 : index
    %3 = vector.load %arg10[%c0_4, %c0_5] : memref<16x512xf32, #tpu.memory_space<vmem>>, vector<16x512xf32>
    %c0_6 = arith.constant 0 : index
    %c0_7 = arith.constant 0 : index
    %4 = vector.load %arg2[%c0_6, %c0_7] : memref<1x512xf32, #tpu.memory_space<vmem>>, vector<1x512xf32>
    %c0_8 = arith.constant 0 : index
    %c0_9 = arith.constant 0 : index
    %5 = vector.load %arg3[%c0_8, %c0_9] : memref<1x512xf32, #tpu.memory_space<vmem>>, vector<1x512xf32>
    %cst = arith.constant dense<0.000000e+00> : vector<512xf32>
    %6 = vector.multi_reduction <add>, %1, %cst [0] : vector<16x512xf32> to vector<512xf32>
    %7 = vector.shape_cast %6 : vector<512xf32> to vector<1x512xf32>
    %8 = arith.mulf %1, %1 : vector<16x512xf32>
    %cst_10 = arith.constant dense<0.000000e+00> : vector<512xf32>
    %9 = vector.multi_reduction <add>, %8, %cst_10 [0] : vector<16x512xf32> to vector<512xf32>
    %10 = vector.shape_cast %9 : vector<512xf32> to vector<1x512xf32>
    %cst_11 = arith.constant dense<0.000000e+00> : vector<1x16xf32>
    %11 = tpu.matmul %7, %2, %cst_11 {dimension_numbers = #tpu.dot_dimension_numbers<[1], [0], [0], [1], [0, 0, 1, 1], [], []>} : vector<1x512xf32>, vector<512x16xf32>, vector<1x16xf32> -> vector<1x16xf32>
    %cst_12 = arith.constant dense<0.000000e+00> : vector<1x16xf32>
    %12 = tpu.matmul %10, %2, %cst_12 {dimension_numbers = #tpu.dot_dimension_numbers<[1], [0], [0], [1], [0, 0, 1, 1], [], []>} : vector<1x512xf32>, vector<512x16xf32>, vector<1x16xf32> -> vector<1x16xf32>
    %cst_13 = arith.constant 0.001953125 : f32
    %13 = vector.broadcast %cst_13 : f32 to vector<1x16xf32>
    %14 = arith.mulf %11, %13 : vector<1x16xf32>
    %cst_14 = arith.constant 0.001953125 : f32
    %15 = vector.broadcast %cst_14 : f32 to vector<1x16xf32>
    %16 = arith.mulf %12, %15 : vector<1x16xf32>
    %17 = arith.mulf %14, %14 : vector<1x16xf32>
    %18 = arith.subf %16, %17 : vector<1x16xf32>
    %cst_15 = arith.constant 9.99999974E-6 : f32
    %19 = vector.broadcast %cst_15 : f32 to vector<1x16xf32>
    %20 = arith.addf %18, %19 : vector<1x16xf32>
    %21 = math.rsqrt %20 : vector<1x16xf32>
    %cst_16 = arith.constant dense<0.000000e+00> : vector<1x512xf32>
    %22 = tpu.matmul %14, %3, %cst_16 {dimension_numbers = #tpu.dot_dimension_numbers<[1], [0], [0], [1], [0, 0, 1, 1], [], []>} : vector<1x16xf32>, vector<16x512xf32>, vector<1x512xf32> -> vector<1x512xf32>
    %cst_17 = arith.constant dense<0.000000e+00> : vector<1x512xf32>
    %23 = tpu.matmul %21, %3, %cst_17 {dimension_numbers = #tpu.dot_dimension_numbers<[1], [0], [0], [1], [0, 0, 1, 1], [], []>} : vector<1x16xf32>, vector<16x512xf32>, vector<1x512xf32> -> vector<1x512xf32>
    %24 = vector.broadcast %22 : vector<1x512xf32> to vector<16x512xf32>
    %25 = arith.subf %1, %24 : vector<16x512xf32>
    %26 = arith.mulf %23, %4 : vector<1x512xf32>
    %27 = vector.broadcast %26 : vector<1x512xf32> to vector<16x512xf32>
    %28 = arith.mulf %25, %27 : vector<16x512xf32>
    %29 = vector.broadcast %5 : vector<1x512xf32> to vector<16x512xf32>
    %30 = arith.addf %28, %29 : vector<16x512xf32>
    %cst_18 = arith.constant 0.000000e+00 : f32
    %31 = vector.broadcast %cst_18 : f32 to vector<16x512xf32>
    %32 = arith.maximumf %30, %31 : vector<16x512xf32>
    %33 = arith.truncf %32 : vector<16x512xf32> to vector<16x512xbf16>
    %cst_19 = arith.constant 0.000000e+00 : f32
    %34 = vector.broadcast %cst_19 : f32 to vector<16x512xf32>
    %c0_20 = arith.constant 0 : index
    %c0_21 = arith.constant 0 : index
    %c0_22 = arith.constant 0 : index
    %35 = vector.load %arg6[%c0_20, %c0_21, %c0_22] : memref<3x16x16xbf16, #tpu.memory_space<vmem>>, vector<1x16x16xbf16>
    %36 = vector.shape_cast %35 : vector<1x16x16xbf16> to vector<16x16xbf16>
    %cst_23 = arith.constant dense<0.000000e+00> : vector<16x512xf32>
    %37 = tpu.matmul %36, %33, %cst_23 {dimension_numbers = #tpu.dot_dimension_numbers<[1], [0], [0], [1], [0, 0, 1, 1], [], []>} : vector<16x16xbf16>, vector<16x512xbf16>, vector<16x512xf32> -> vector<16x512xf32>
    %38 = arith.truncf %37 : vector<16x512xf32> to vector<16x512xbf16>
    %c0_24 = arith.constant 0 : index
    %c0_25 = arith.constant 0 : index
    %c0_26 = arith.constant 0 : index
    %39 = vector.load %arg7[%c0_24, %c0_25, %c0_26] : memref<3x512x512xbf16, #tpu.memory_space<vmem>>, vector<1x512x512xbf16>
    %40 = vector.shape_cast %39 : vector<1x512x512xbf16> to vector<512x512xbf16>
    %cst_27 = arith.constant dense<0.000000e+00> : vector<16x512xf32>
    %41 = tpu.matmul %38, %40, %cst_27 {dimension_numbers = #tpu.dot_dimension_numbers<[1], [0], [0], [1], [0, 0, 1, 1], [], []>} : vector<16x512xbf16>, vector<512x512xbf16>, vector<16x512xf32> -> vector<16x512xf32>
    %42 = arith.addf %34, %41 : vector<16x512xf32>
    %c1 = arith.constant 1 : index
    %c0_28 = arith.constant 0 : index
    %c0_29 = arith.constant 0 : index
    %43 = vector.load %arg6[%c1, %c0_28, %c0_29] : memref<3x16x16xbf16, #tpu.memory_space<vmem>>, vector<1x16x16xbf16>
    %44 = vector.shape_cast %43 : vector<1x16x16xbf16> to vector<16x16xbf16>
    %cst_30 = arith.constant dense<0.000000e+00> : vector<16x512xf32>
    %45 = tpu.matmul %44, %33, %cst_30 {dimension_numbers = #tpu.dot_dimension_numbers<[1], [0], [0], [1], [0, 0, 1, 1], [], []>} : vector<16x16xbf16>, vector<16x512xbf16>, vector<16x512xf32> -> vector<16x512xf32>
    %46 = arith.truncf %45 : vector<16x512xf32> to vector<16x512xbf16>
    %c1_31 = arith.constant 1 : index
    %c0_32 = arith.constant 0 : index
    %c0_33 = arith.constant 0 : index
    %47 = vector.load %arg7[%c1_31, %c0_32, %c0_33] : memref<3x512x512xbf16, #tpu.memory_space<vmem>>, vector<1x512x512xbf16>
    %48 = vector.shape_cast %47 : vector<1x512x512xbf16> to vector<512x512xbf16>
    %cst_34 = arith.constant dense<0.000000e+00> : vector<16x512xf32>
    %49 = tpu.matmul %46, %48, %cst_34 {dimension_numbers = #tpu.dot_dimension_numbers<[1], [0], [0], [1], [0, 0, 1, 1], [], []>} : vector<16x512xbf16>, vector<512x512xbf16>, vector<16x512xf32> -> vector<16x512xf32>
    %50 = arith.addf %42, %49 : vector<16x512xf32>
    %c2 = arith.constant 2 : index
    %c0_35 = arith.constant 0 : index
    %c0_36 = arith.constant 0 : index
    %51 = vector.load %arg6[%c2, %c0_35, %c0_36] : memref<3x16x16xbf16, #tpu.memory_space<vmem>>, vector<1x16x16xbf16>
    %52 = vector.shape_cast %51 : vector<1x16x16xbf16> to vector<16x16xbf16>
    %cst_37 = arith.constant dense<0.000000e+00> : vector<16x512xf32>
    %53 = tpu.matmul %52, %33, %cst_37 {dimension_numbers = #tpu.dot_dimension_numbers<[1], [0], [0], [1], [0, 0, 1, 1], [], []>} : vector<16x16xbf16>, vector<16x512xbf16>, vector<16x512xf32> -> vector<16x512xf32>
    %54 = arith.truncf %53 : vector<16x512xf32> to vector<16x512xbf16>
    %c2_38 = arith.constant 2 : index
    %c0_39 = arith.constant 0 : index
    %c0_40 = arith.constant 0 : index
    %55 = vector.load %arg7[%c2_38, %c0_39, %c0_40] : memref<3x512x512xbf16, #tpu.memory_space<vmem>>, vector<1x512x512xbf16>
    %56 = vector.shape_cast %55 : vector<1x512x512xbf16> to vector<512x512xbf16>
    %cst_41 = arith.constant dense<0.000000e+00> : vector<16x512xf32>
    %57 = tpu.matmul %54, %56, %cst_41 {dimension_numbers = #tpu.dot_dimension_numbers<[1], [0], [0], [1], [0, 0, 1, 1], [], []>} : vector<16x512xbf16>, vector<512x512xbf16>, vector<16x512xf32> -> vector<16x512xf32>
    %58 = arith.addf %50, %57 : vector<16x512xf32>
    %c0_42 = arith.constant 0 : index
    %c0_43 = arith.constant 0 : index
    %59 = vector.load %arg4[%c0_42, %c0_43] : memref<1x512xf32, #tpu.memory_space<vmem>>, vector<1x512xf32>
    %c0_44 = arith.constant 0 : index
    %c0_45 = arith.constant 0 : index
    %60 = vector.load %arg5[%c0_44, %c0_45] : memref<1x512xf32, #tpu.memory_space<vmem>>, vector<1x512xf32>
    %cst_46 = arith.constant dense<0.000000e+00> : vector<512xf32>
    %61 = vector.multi_reduction <add>, %58, %cst_46 [0] : vector<16x512xf32> to vector<512xf32>
    %62 = vector.shape_cast %61 : vector<512xf32> to vector<1x512xf32>
    %63 = arith.mulf %58, %58 : vector<16x512xf32>
    %cst_47 = arith.constant dense<0.000000e+00> : vector<512xf32>
    %64 = vector.multi_reduction <add>, %63, %cst_47 [0] : vector<16x512xf32> to vector<512xf32>
    %65 = vector.shape_cast %64 : vector<512xf32> to vector<1x512xf32>
    %cst_48 = arith.constant dense<0.000000e+00> : vector<1x16xf32>
    %66 = tpu.matmul %62, %2, %cst_48 {dimension_numbers = #tpu.dot_dimension_numbers<[1], [0], [0], [1], [0, 0, 1, 1], [], []>} : vector<1x512xf32>, vector<512x16xf32>, vector<1x16xf32> -> vector<1x16xf32>
    %cst_49 = arith.constant dense<0.000000e+00> : vector<1x16xf32>
    %67 = tpu.matmul %65, %2, %cst_49 {dimension_numbers = #tpu.dot_dimension_numbers<[1], [0], [0], [1], [0, 0, 1, 1], [], []>} : vector<1x512xf32>, vector<512x16xf32>, vector<1x16xf32> -> vector<1x16xf32>
    %cst_50 = arith.constant 0.001953125 : f32
    %68 = vector.broadcast %cst_50 : f32 to vector<1x16xf32>
    %69 = arith.mulf %66, %68 : vector<1x16xf32>
    %cst_51 = arith.constant 0.001953125 : f32
    %70 = vector.broadcast %cst_51 : f32 to vector<1x16xf32>
    %71 = arith.mulf %67, %70 : vector<1x16xf32>
    %72 = arith.mulf %69, %69 : vector<1x16xf32>
    %73 = arith.subf %71, %72 : vector<1x16xf32>
    %cst_52 = arith.constant 9.99999974E-6 : f32
    %74 = vector.broadcast %cst_52 : f32 to vector<1x16xf32>
    %75 = arith.addf %73, %74 : vector<1x16xf32>
    %76 = math.rsqrt %75 : vector<1x16xf32>
    %cst_53 = arith.constant dense<0.000000e+00> : vector<1x512xf32>
    %77 = tpu.matmul %69, %3, %cst_53 {dimension_numbers = #tpu.dot_dimension_numbers<[1], [0], [0], [1], [0, 0, 1, 1], [], []>} : vector<1x16xf32>, vector<16x512xf32>, vector<1x512xf32> -> vector<1x512xf32>
    %cst_54 = arith.constant dense<0.000000e+00> : vector<1x512xf32>
    %78 = tpu.matmul %76, %3, %cst_54 {dimension_numbers = #tpu.dot_dimension_numbers<[1], [0], [0], [1], [0, 0, 1, 1], [], []>} : vector<1x16xf32>, vector<16x512xf32>, vector<1x512xf32> -> vector<1x512xf32>
    %79 = vector.broadcast %77 : vector<1x512xf32> to vector<16x512xf32>
    %80 = arith.subf %58, %79 : vector<16x512xf32>
    %81 = arith.mulf %78, %59 : vector<1x512xf32>
    %82 = vector.broadcast %81 : vector<1x512xf32> to vector<16x512xf32>
    %83 = arith.mulf %80, %82 : vector<16x512xf32>
    %84 = vector.broadcast %60 : vector<1x512xf32> to vector<16x512xf32>
    %85 = arith.addf %83, %84 : vector<16x512xf32>
    %cst_55 = arith.constant 0.000000e+00 : f32
    %86 = vector.broadcast %cst_55 : f32 to vector<16x512xf32>
    %87 = arith.maximumf %85, %86 : vector<16x512xf32>
    %88 = arith.truncf %87 : vector<16x512xf32> to vector<16x512xbf16>
    %cst_56 = arith.constant 0.000000e+00 : f32
    %89 = vector.broadcast %cst_56 : f32 to vector<16x512xf32>
    %c0_57 = arith.constant 0 : index
    %c0_58 = arith.constant 0 : index
    %c0_59 = arith.constant 0 : index
    %90 = vector.load %arg6[%c0_57, %c0_58, %c0_59] : memref<3x16x16xbf16, #tpu.memory_space<vmem>>, vector<1x16x16xbf16>
    %91 = vector.shape_cast %90 : vector<1x16x16xbf16> to vector<16x16xbf16>
    %cst_60 = arith.constant dense<0.000000e+00> : vector<16x512xf32>
    %92 = tpu.matmul %91, %88, %cst_60 {dimension_numbers = #tpu.dot_dimension_numbers<[1], [0], [0], [1], [0, 0, 1, 1], [], []>} : vector<16x16xbf16>, vector<16x512xbf16>, vector<16x512xf32> -> vector<16x512xf32>
    %93 = arith.truncf %92 : vector<16x512xf32> to vector<16x512xbf16>
    %c0_61 = arith.constant 0 : index
    %c0_62 = arith.constant 0 : index
    %c0_63 = arith.constant 0 : index
    %94 = vector.load %arg8[%c0_61, %c0_62, %c0_63] : memref<3x512x512xbf16, #tpu.memory_space<vmem>>, vector<1x512x512xbf16>
    %95 = vector.shape_cast %94 : vector<1x512x512xbf16> to vector<512x512xbf16>
    %cst_64 = arith.constant dense<0.000000e+00> : vector<16x512xf32>
    %96 = tpu.matmul %93, %95, %cst_64 {dimension_numbers = #tpu.dot_dimension_numbers<[1], [0], [0], [1], [0, 0, 1, 1], [], []>} : vector<16x512xbf16>, vector<512x512xbf16>, vector<16x512xf32> -> vector<16x512xf32>
    %97 = arith.addf %89, %96 : vector<16x512xf32>
    %c1_65 = arith.constant 1 : index
    %c0_66 = arith.constant 0 : index
    %c0_67 = arith.constant 0 : index
    %98 = vector.load %arg6[%c1_65, %c0_66, %c0_67] : memref<3x16x16xbf16, #tpu.memory_space<vmem>>, vector<1x16x16xbf16>
    %99 = vector.shape_cast %98 : vector<1x16x16xbf16> to vector<16x16xbf16>
    %cst_68 = arith.constant dense<0.000000e+00> : vector<16x512xf32>
    %100 = tpu.matmul %99, %88, %cst_68 {dimension_numbers = #tpu.dot_dimension_numbers<[1], [0], [0], [1], [0, 0, 1, 1], [], []>} : vector<16x16xbf16>, vector<16x512xbf16>, vector<16x512xf32> -> vector<16x512xf32>
    %101 = arith.truncf %100 : vector<16x512xf32> to vector<16x512xbf16>
    %c1_69 = arith.constant 1 : index
    %c0_70 = arith.constant 0 : index
    %c0_71 = arith.constant 0 : index
    %102 = vector.load %arg8[%c1_69, %c0_70, %c0_71] : memref<3x512x512xbf16, #tpu.memory_space<vmem>>, vector<1x512x512xbf16>
    %103 = vector.shape_cast %102 : vector<1x512x512xbf16> to vector<512x512xbf16>
    %cst_72 = arith.constant dense<0.000000e+00> : vector<16x512xf32>
    %104 = tpu.matmul %101, %103, %cst_72 {dimension_numbers = #tpu.dot_dimension_numbers<[1], [0], [0], [1], [0, 0, 1, 1], [], []>} : vector<16x512xbf16>, vector<512x512xbf16>, vector<16x512xf32> -> vector<16x512xf32>
    %105 = arith.addf %97, %104 : vector<16x512xf32>
    %c2_73 = arith.constant 2 : index
    %c0_74 = arith.constant 0 : index
    %c0_75 = arith.constant 0 : index
    %106 = vector.load %arg6[%c2_73, %c0_74, %c0_75] : memref<3x16x16xbf16, #tpu.memory_space<vmem>>, vector<1x16x16xbf16>
    %107 = vector.shape_cast %106 : vector<1x16x16xbf16> to vector<16x16xbf16>
    %cst_76 = arith.constant dense<0.000000e+00> : vector<16x512xf32>
    %108 = tpu.matmul %107, %88, %cst_76 {dimension_numbers = #tpu.dot_dimension_numbers<[1], [0], [0], [1], [0, 0, 1, 1], [], []>} : vector<16x16xbf16>, vector<16x512xbf16>, vector<16x512xf32> -> vector<16x512xf32>
    %109 = arith.truncf %108 : vector<16x512xf32> to vector<16x512xbf16>
    %c2_77 = arith.constant 2 : index
    %c0_78 = arith.constant 0 : index
    %c0_79 = arith.constant 0 : index
    %110 = vector.load %arg8[%c2_77, %c0_78, %c0_79] : memref<3x512x512xbf16, #tpu.memory_space<vmem>>, vector<1x512x512xbf16>
    %111 = vector.shape_cast %110 : vector<1x512x512xbf16> to vector<512x512xbf16>
    %cst_80 = arith.constant dense<0.000000e+00> : vector<16x512xf32>
    %112 = tpu.matmul %109, %111, %cst_80 {dimension_numbers = #tpu.dot_dimension_numbers<[1], [0], [0], [1], [0, 0, 1, 1], [], []>} : vector<16x512xbf16>, vector<512x512xbf16>, vector<16x512xf32> -> vector<16x512xf32>
    %113 = arith.addf %105, %112 : vector<16x512xf32>
    %114 = arith.addf %113, %1 : vector<16x512xf32>
    %c0_81 = arith.constant 0 : index
    %c0_82 = arith.constant 0 : index
    %c0_83 = arith.constant 0 : index
    %115 = vector.load %arg11[%c0_81, %c0_82, %c0_83] : memref<1x16x512xf32, #tpu.memory_space<vmem>>, vector<1x16x512xf32>
    %116 = vector.shape_cast %115 : vector<1x16x512xf32> to vector<16x512xf32>
    %117 = vector.shape_cast %114 : vector<16x512xf32> to vector<1x16x512xf32>
    tpu.vector_store %arg11[%c0_81, %c0_82, %c0_83], %117 {strides = array<i32>} : memref<1x16x512xf32, #tpu.memory_space<vmem>>, vector<1x16x512xf32>,
    return
  }
  func.func @transform_0(%arg0: i32) -> (i32, i32, i32) {
    %c0_i32 = arith.constant 0 : i32
    %c0_i32_0 = arith.constant 0 : i32
    %c0_i32_1 = arith.constant 0 : i32
    return %arg0, %c0_i32, %c0_i32_0 : i32, i32, i32
  }
  func.func @transform_1(%arg0: i32) -> (i32, i32) {
    %c0_i32 = arith.constant 0 : i32
    %c0_i32_0 = arith.constant 0 : i32
    %c0_i32_1 = arith.constant 0 : i32
    return %c0_i32, %c0_i32_0 : i32, i32
  }
  func.func @transform_2(%arg0: i32) -> (i32, i32) {
    %c0_i32 = arith.constant 0 : i32
    %c0_i32_0 = arith.constant 0 : i32
    %c0_i32_1 = arith.constant 0 : i32
    return %c0_i32, %c0_i32_0 : i32, i32
  }
  func.func @transform_3(%arg0: i32) -> (i32, i32) {
    %c0_i32 = arith.constant 0 : i32
    %c0_i32_0 = arith.constant 0 : i32
    %c0_i32_1 = arith.constant 0 : i32
    return %c0_i32, %c0_i32_0 : i32, i32
  }
  func.func @transform_4(%arg0: i32) -> (i32, i32) {
    %c0_i32 = arith.constant 0 : i32
    %c0_i32_0 = arith.constant 0 : i32
    %c0_i32_1 = arith.constant 0 : i32
    return %c0_i32, %c0_i32_0 : i32, i32
  }
  func.func @transform_5(%arg0: i32) -> (i32, i32, i32) {
    %c0_i32 = arith.constant 0 : i32
    %c0_i32_0 = arith.constant 0 : i32
    %c0_i32_1 = arith.constant 0 : i32
    %c0_i32_2 = arith.constant 0 : i32
    return %c0_i32, %c0_i32_0, %c0_i32_1 : i32, i32, i32
  }
  func.func @transform_6(%arg0: i32) -> (i32, i32, i32) {
    %c0_i32 = arith.constant 0 : i32
    %c0_i32_0 = arith.constant 0 : i32
    %c0_i32_1 = arith.constant 0 : i32
    %c0_i32_2 = arith.constant 0 : i32
    return %c0_i32, %c0_i32_0, %c0_i32_1 : i32, i32, i32
  }
  func.func @transform_7(%arg0: i32) -> (i32, i32, i32) {
    %c0_i32 = arith.constant 0 : i32
    %c0_i32_0 = arith.constant 0 : i32
    %c0_i32_1 = arith.constant 0 : i32
    %c0_i32_2 = arith.constant 0 : i32
    return %c0_i32, %c0_i32_0, %c0_i32_1 : i32, i32, i32
  }
  func.func @transform_8(%arg0: i32) -> (i32, i32) {
    %c0_i32 = arith.constant 0 : i32
    %c0_i32_0 = arith.constant 0 : i32
    %c0_i32_1 = arith.constant 0 : i32
    return %c0_i32, %c0_i32_0 : i32, i32
  }
  func.func @transform_9(%arg0: i32) -> (i32, i32) {
    %c0_i32 = arith.constant 0 : i32
    %c0_i32_0 = arith.constant 0 : i32
    %c0_i32_1 = arith.constant 0 : i32
    return %c0_i32, %c0_i32_0 : i32, i32
  }
  func.func @transform_10(%arg0: i32) -> (i32, i32, i32) {
    %c0_i32 = arith.constant 0 : i32
    %c0_i32_0 = arith.constant 0 : i32
    %c0_i32_1 = arith.constant 0 : i32
    return %arg0, %c0_i32, %c0_i32_0 : i32, i32, i32
  }
}

</mosaic_0001>

<llo_original>
// kernel: tpu_custom_call.1
$region0: #{tpu_custom_call.1}
  #allocation0 [shape = 'u32[]', space=smem, size = 0x4, offset = 0x4, fixed_abs, tag = 'smem constant byte address 0x4 - core index']
  #allocation1 [shape = 'u32[72,128]{1,0:T(1,128)}', space=vmem, size = 0x9000, scoped, tag = 'internal scratch']
  %s0 = inlined_call_operand.hbm [shape: f32[2,16,512], index: 0, kind: input, shape index: {}]
  %s1 = inlined_call_operand.hbm [shape: f32[1,512], index: 1, kind: input, shape index: {}]
  %s2 = inlined_call_operand.hbm [shape: f32[1,512], index: 2, kind: input, shape index: {}]
  %s3 = inlined_call_operand.hbm [shape: f32[1,512], index: 3, kind: input, shape index: {}]
  %s4 = inlined_call_operand.hbm [shape: f32[1,512], index: 4, kind: input, shape index: {}]
  %s5 = inlined_call_operand.hbm [shape: bf16[3,16,16], index: 5, kind: input, shape index: {}]
  %s6 = inlined_call_operand.hbm [shape: bf16[3,512,512], index: 6, kind: input, shape index: {}]
  %s7 = inlined_call_operand.hbm [shape: bf16[3,512,512], index: 7, kind: input, shape index: {}]
  %s8 = inlined_call_operand.vmem [shape: f32[512,16], index: 8, kind: input, shape index: {}]
  %s9 = inlined_call_operand.hbm [shape: f32[16,512], index: 9, kind: input, shape index: {}]
  %s10 = inlined_call_operand.hbm [shape: f32[2,16,512], index: 10, kind: output, shape index: {}]
  %s11 = sld [smem:[#allocation0]]
  $region109: #{tpu_custom_call.1} parent=0
    _
  %s13 = ssub.s32 1, %s11
  %s14 = scalar_select 0, %s13, %s11
  $region1: #{tpu_custom_call.1} parent=0
    #allocation2 [shape = 'u8[65536]{0}', space=vmem, size = 0x10000, scoped, tag = 'input window, operand 0']
    #allocation3 [shape = 's32[2]{0}', space=sflag, size = 0x8, scoped, tag = 'scoped memory for tpu_custom_call.1']
    #allocation4 [shape = 's32[2]{0}', space=sflag, size = 0x8, scoped, tag = 'scoped memory for tpu_custom_call.1']
    #allocation5 [shape = 'u8[2048]{0}', space=vmem, size = 0x800, scoped, tag = 'input window, operand 1, single buffered']
    #allocation6 [shape = 's32[1]{0}', space=sflag, size = 0x4, scoped, tag = 'scoped memory for tpu_custom_call.1']
    #allocation7 [shape = 'u8[2048]{0}', space=vmem, size = 0x800, scoped, tag = 'input window, operand 2, single buffered']
    #allocation8 [shape = 'u8[2048]{0}', space=vmem, size = 0x800, scoped, tag = 'input window, operand 3, single buffered']
    #allocation9 [shape = 's32[1]{0}', space=sflag, size = 0x4, scoped, tag = 'scoped memory for tpu_custom_call.1']
    #allocation10 [shape = 'u8[2048]{0}', space=vmem, size = 0x800, scoped, tag = 'input window, operand 4, single buffered']
    #allocation11 [shape = 'u8[12288]{0}', space=vmem, size = 0x3000, scoped, tag = 'input window, operand 5, single buffered']
    #allocation12 [shape = 's32[1]{0}', space=sflag, size = 0x4, scoped, tag = 'scoped memory for tpu_custom_call.1']
    #allocation13 [shape = 'u8[1572864]{0}', space=vmem, size = 0x180000, scoped, tag = 'input window, operand 6, single buffered']
    #allocation14 [shape = 'u8[1572864]{0}', space=vmem, size = 0x180000, scoped, tag = 'input window, operand 7, single buffered']
    #allocation15 [shape = 's32[1]{0}', space=sflag, size = 0x4, scoped, tag = 'scoped memory for tpu_custom_call.1']
    #allocation16 [shape = 'u8[32768]{0}', space=vmem, size = 0x8000, scoped, tag = 'input window, operand 9, single buffered']
    #allocation17 [shape = 'u8[65536]{0}', space=vmem, size = 0x10000, scoped, tag = 'output window, operand 0']
    %15 = vsyncpa [#allocation3], 0
    %s16 = scalar_lea.sflag [#allocation3], 1
    %17 = vsyncpa %s16, 0
    %18 = vsyncpa [#allocation6], 0
    %19 = vsyncpa [#allocation9], 0
    %20 = vsyncpa [#allocation12], 0
    %21 = vsyncpa [#allocation15], 0
    %22 = vsyncpa [#allocation4], 0
    %s23 = scalar_lea.sflag [#allocation4], 1
    %24 = vsyncpa %s23, 0
    loop: start=0, step=1, limit=4
    $region2: #{tpu_custom_call.1} parent=1 // loop_pre_header
      _
    $region3: #{tpu_custom_call.1} parent=1 // loop_header
      %s26 = sphi 0, %s30
      %p27 = scmp.ge.s32.totalorder %s26, 4
      %s36 = sphi 0, %s38
      %s39 = sphi 0, %s36
      %s40 = sphi 0, %s39
      %s56 = sphi 0, %s40
      %s60 = sphi 0, %s60
      %s62 = sphi 0, %s60
      %s63 = sphi 0, %s62
      %s77 = sphi 0, %s63
      %s81 = sphi 0, %s81
      %s83 = sphi 0, %s81
      %s84 = sphi 0, %s83
      %s98 = sphi 0, %s84
      %s102 = sphi 0, %s102
      %s104 = sphi 0, %s102
      %s105 = sphi 0, %s104
      %s119 = sphi 0, %s105
      %s123 = sphi 0, %s123
      %s125 = sphi 0, %s123
      %s126 = sphi 0, %s125
      %s140 = sphi 0, %s126
      %s144 = sphi 0, %s144
      %s146 = sphi 0, %s144
      %s147 = sphi 0, %s146
      %s161 = sphi 0, %s147
      %s165 = sphi 0, %s165
      %s167 = sphi 0, %s165
      %s168 = sphi 0, %s167
      %s182 = sphi 0, %s168
      %s186 = sphi 0, %s186
      %s188 = sphi 0, %s186
      %s189 = sphi 0, %s188
      %s203 = sphi 0, %s189
      %s207 = sphi 0, %s207
      %s209 = sphi 0, %s207
      %s210 = sphi 0, %s209
      %s224 = sphi 0, %s210
      %s228 = sphi 0, %s228
      %s230 = sphi 0, %s228
      %s231 = sphi 0, %s230
      %s245 = sphi 0, %s231
      %s251 = sphi 0, %s253
      %s254 = sphi 0, %s251
      %s255 = sphi 0, %s254
      %s271 = sphi 0, %s255
    $region4: #{tpu_custom_call.1} parent=1 // loop_header_branch
      %29 = sbr.rel (%p27) target = $region8
    $region5: #{tpu_custom_call.1} parent=1 // loop_body
      %s31 = ssub.s32 %s26, 1
      %s32 = ssub.s32 %s26, 2
      %s33 = sadd.s32 %s26, 1
      %s34 = ssub.s32 %s26, %s33
      %p35 = scmp.eq.s32.totalorder %s34, 0
      %s37 = sadd.s32 %s36, 1
      %s38 = scalar_select %p35, %s36, %s37
      %p41 = pneg %p35
      %p42 = scmp.eq.s32.totalorder %s26, 1
      %p43 = por %p41, %p42
      %p44 = scmp.ne.s32.totalorder %s36, %s39
      %p45 = scmp.eq.s32.totalorder %s26, 0
      %p46 = por %p44, %p45
      %p47 = scmp.ne.s32.totalorder %s36, %s39
      %p48 = scmp.eq.s32.totalorder %s31, 1
      %p49 = por %p47, %p48
      %p50 = scmp.ne.s32.totalorder %s39, %s40
      %p51 = scmp.eq.s32.totalorder %s31, 0
      %p52 = por %p50, %p51
      %p53 = scmp.ne.s32.totalorder %s39, %s40
      %p54 = scmp.eq.s32.totalorder %s32, 1
      %p55 = por %p53, %p54
      %p57 = scmp.ne.s32.totalorder %s40, %s56
      %p58 = scmp.eq.s32.totalorder %s32, 0
      %p59 = por %p57, %p58
      %s61 = sadd.s32 %s60, 1
      %p64 = scmp.eq.s32.totalorder %s26, 1
      %p65 = scmp.ne.s32.totalorder %s60, %s62
      %p66 = scmp.eq.s32.totalorder %s26, 0
      %p67 = por %p65, %p66
      %p68 = scmp.ne.s32.totalorder %s60, %s62
      %p69 = scmp.eq.s32.totalorder %s31, 1
      %p70 = por %p68, %p69
      %p71 = scmp.ne.s32.totalorder %s62, %s63
      %p72 = scmp.eq.s32.totalorder %s31, 0
      %p73 = por %p71, %p72
      %p74 = scmp.ne.s32.totalorder %s62, %s63
      %p75 = scmp.eq.s32.totalorder %s32, 1
      %p76 = por %p74, %p75
      %p78 = scmp.ne.s32.totalorder %s63, %s77
      %p79 = scmp.eq.s32.totalorder %s32, 0
      %p80 = por %p78, %p79
      %s82 = sadd.s32 %s81, 1
      %p85 = scmp.eq.s32.totalorder %s26, 1
      %p86 = scmp.ne.s32.totalorder %s81, %s83
      %p87 = scmp.eq.s32.totalorder %s26, 0
      %p88 = por %p86, %p87
      %p89 = scmp.ne.s32.totalorder %s81, %s83
      %p90 = scmp.eq.s32.totalorder %s31, 1
      %p91 = por %p89, %p90
      %p92 = scmp.ne.s32.totalorder %s83, %s84
      %p93 = scmp.eq.s32.totalorder %s31, 0
      %p94 = por %p92, %p93
      %p95 = scmp.ne.s32.totalorder %s83, %s84
      %p96 = scmp.eq.s32.totalorder %s32, 1
      %p97 = por %p95, %p96
      %p99 = scmp.ne.s32.totalorder %s84, %s98
      %p100 = scmp.eq.s32.totalorder %s32, 0
      %p101 = por %p99, %p100
      %s103 = sadd.s32 %s102, 1
      %p106 = scmp.eq.s32.totalorder %s26, 1
      %p107 = scmp.ne.s32.totalorder %s102, %s104
      %p108 = scmp.eq.s32.totalorder %s26, 0
      %p109 = por %p107, %p108
      %p110 = scmp.ne.s32.totalorder %s102, %s104
      %p111 = scmp.eq.s32.totalorder %s31, 1
      %p112 = por %p110, %p111
      %p113 = scmp.ne.s32.totalorder %s104, %s105
      %p114 = scmp.eq.s32.totalorder %s31, 0
      %p115 = por %p113, %p114
      %p116 = scmp.ne.s32.totalorder %s104, %s105
      %p117 = scmp.eq.s32.totalorder %s32, 1
      %p118 = por %p116, %p117
      %p120 = scmp.ne.s32.totalorder %s105, %s119
      %p121 = scmp.eq.s32.totalorder %s32, 0
      %p122 = por %p120, %p121
      %s124 = sadd.s32 %s123, 1
      %p127 = scmp.eq.s32.totalorder %s26, 1
      %p128 = scmp.ne.s32.totalorder %s123, %s125
      %p129 = scmp.eq.s32.totalorder %s26, 0
      %p130 = por %p128, %p129
      %p131 = scmp.ne.s32.totalorder %s123, %s125
      %p132 = scmp.eq.s32.totalorder %s31, 1
      %p133 = por %p131, %p132
      %p134 = scmp.ne.s32.totalorder %s125, %s126
      %p135 = scmp.eq.s32.totalorder %s31, 0
      %p136 = por %p134, %p135
      %p137 = scmp.ne.s32.totalorder %s125, %s126
      %p138 = scmp.eq.s32.totalorder %s32, 1
      %p139 = por %p137, %p138
      %p141 = scmp.ne.s32.totalorder %s126, %s140
      %p142 = scmp.eq.s32.totalorder %s32, 0
      %p143 = por %p141, %p142
      %s145 = sadd.s32 %s144, 1
      %p148 = scmp.eq.s32.totalorder %s26, 1
      %p149 = scmp.ne.s32.totalorder %s144, %s146
      %p150 = scmp.eq.s32.totalorder %s26, 0
      %p151 = por %p149, %p150
      %p152 = scmp.ne.s32.totalorder %s144, %s146
      %p153 = scmp.eq.s32.totalorder %s31, 1
      %p154 = por %p152, %p153
      %p155 = scmp.ne.s32.totalorder %s146, %s147
      %p156 = scmp.eq.s32.totalorder %s31, 0
      %p157 = por %p155, %p156
      %p158 = scmp.ne.s32.totalorder %s146, %s147
      %p159 = scmp.eq.s32.totalorder %s32, 1
      %p160 = por %p158, %p159
      %p162 = scmp.ne.s32.totalorder %s147, %s161
      %p163 = scmp.eq.s32.totalorder %s32, 0
      %p164 = por %p162, %p163
      %s166 = sadd.s32 %s165, 1
      %p169 = scmp.eq.s32.totalorder %s26, 1
      %p170 = scmp.ne.s32.totalorder %s165, %s167
      %p171 = scmp.eq.s32.totalorder %s26, 0
      %p172 = por %p170, %p171
      %p173 = scmp.ne.s32.totalorder %s165, %s167
      %p174 = scmp.eq.s32.totalorder %s31, 1
      %p175 = por %p173, %p174
      %p176 = scmp.ne.s32.totalorder %s167, %s168
      %p177 = scmp.eq.s32.totalorder %s31, 0
      %p178 = por %p176, %p177
      %p179 = scmp.ne.s32.totalorder %s167, %s168
      %p180 = scmp.eq.s32.totalorder %s32, 1
      %p181 = por %p179, %p180
      %p183 = scmp.ne.s32.totalorder %s168, %s182
      %p184 = scmp.eq.s32.totalorder %s32, 0
      %p185 = por %p183, %p184
      %s187 = sadd.s32 %s186, 1
      %p190 = scmp.eq.s32.totalorder %s26, 1
      %p191 = scmp.ne.s32.totalorder %s186, %s188
      %p192 = scmp.eq.s32.totalorder %s26, 0
      %p193 = por %p191, %p192
      %p194 = scmp.ne.s32.totalorder %s186, %s188
      %p195 = scmp.eq.s32.totalorder %s31, 1
      %p196 = por %p194, %p195
      %p197 = scmp.ne.s32.totalorder %s188, %s189
      %p198 = scmp.eq.s32.totalorder %s31, 0
      %p199 = por %p197, %p198
      %p200 = scmp.ne.s32.totalorder %s188, %s189
      %p201 = scmp.eq.s32.totalorder %s32, 1
      %p202 = por %p200, %p201
      %p204 = scmp.ne.s32.totalorder %s189, %s203
      %p205 = scmp.eq.s32.totalorder %s32, 0
      %p206 = por %p204, %p205
      %s208 = sadd.s32 %s207, 1
      %p211 = scmp.eq.s32.totalorder %s26, 1
      %p212 = scmp.ne.s32.totalorder %s207, %s209
      %p213 = scmp.eq.s32.totalorder %s26, 0
      %p214 = por %p212, %p213
      %p215 = scmp.ne.s32.totalorder %s207, %s209
      %p216 = scmp.eq.s32.totalorder %s31, 1
      %p217 = por %p215, %p216
      %p218 = scmp.ne.s32.totalorder %s209, %s210
      %p219 = scmp.eq.s32.totalorder %s31, 0
      %p220 = por %p218, %p219
      %p221 = scmp.ne.s32.totalorder %s209, %s210
      %p222 = scmp.eq.s32.totalorder %s32, 1
      %p223 = por %p221, %p222
      %p225 = scmp.ne.s32.totalorder %s210, %s224
      %p226 = scmp.eq.s32.totalorder %s32, 0
      %p227 = por %p225, %p226
      %s229 = sadd.s32 %s228, 1
      %p232 = scmp.eq.s32.totalorder %s26, 1
      %p233 = scmp.ne.s32.totalorder %s228, %s230
      %p234 = scmp.eq.s32.totalorder %s26, 0
      %p235 = por %p233, %p234
      %p236 = scmp.ne.s32.totalorder %s228, %s230
      %p237 = scmp.eq.s32.totalorder %s31, 1
      %p238 = por %p236, %p237
      %p239 = scmp.ne.s32.totalorder %s230, %s231
      %p240 = scmp.eq.s32.totalorder %s31, 0
      %p241 = por %p239, %p240
      %p242 = scmp.ne.s32.totalorder %s230, %s231
      %p243 = scmp.eq.s32.totalorder %s32, 1
      %p244 = por %p242, %p243
      %p246 = scmp.ne.s32.totalorder %s231, %s245
      %p247 = scmp.eq.s32.totalorder %s32, 0
      %p248 = por %p246, %p247
      %s249 = ssub.s32 %s26, %s33
      %p250 = scmp.eq.s32.totalorder %s249, 0
      %s252 = sadd.s32 %s251, 1
      %s253 = scalar_select %p250, %s251, %s252
      %p256 = pneg %p250
      %p257 = scmp.eq.s32.totalorder %s26, 1
      %p258 = por %p256, %p257
      %p259 = scmp.ne.s32.totalorder %s251, %s254
      %p260 = scmp.eq.s32.totalorder %s26, 0
      %p261 = por %p259, %p260
      %p262 = scmp.ne.s32.totalorder %s251, %s254
      %p263 = scmp.eq.s32.totalorder %s31, 1
      %p264 = por %p262, %p263
      %p265 = scmp.ne.s32.totalorder %s254, %s255
      %p266 = scmp.eq.s32.totalorder %s31, 0
      %p267 = por %p265, %p266
      %p268 = scmp.ne.s32.totalorder %s254, %s255
      %p269 = scmp.eq.s32.totalorder %s32, 1
      %p270 = por %p268, %p269
      %p272 = scmp.ne.s32.totalorder %s255, %s271
      %p273 = scmp.eq.s32.totalorder %s32, 0
      %p274 = por %p272, %p273
      %p275 = scmp.le.s32.totalorder 1, %s26
      %p276 = scmp.lt.s32.totalorder %s26, 3
      %p277 = pnand %p275, %p276
      %p278 = pneg %p277
      // Predicated region
      $region9: #{tpu_custom_call.1} parent=5 // pred_check
        _
      $region10: #{tpu_custom_call.1} parent=5 // pred_check_branch
        %280 = sbr.rel (%p277) target = $region12
      $region11: #{tpu_custom_call.1} parent=5 // pred_region
        %s281 = ssub.s32 %s26, 1
        // Predicated region
        $region13: #{tpu_custom_call.1} parent=11 // pred_check
          %p282 = pneg %p73
        $region14: #{tpu_custom_call.1} parent=11 // pred_check_branch
          %284 = sbr.rel (%p282) target = $region16
        $region15: #{tpu_custom_call.1} parent=11 // pred_region
          %286 = vsyncadd [#allocation6], 0
          %s288 = sshll.u32 %s1, 4
          %s289 = int_to_ptr.hbm [resolvable:$true] %s288
          %s290 = sshll.u32 [#allocation5], 4
          %s291 = int_to_ptr.vmem [resolvable:$true] %s290
          %293 = dma.hbm_to_vmem [thread:$0]  %s289, 64, %s291, [#allocation6]
        $region16: #{tpu_custom_call.1} parent=11 // pred_fallthru
          _
        // Predicated region
        $region17: #{tpu_custom_call.1} parent=11 // pred_check
          %p294 = pneg %p94
        $region18: #{tpu_custom_call.1} parent=11 // pred_check_branch
          %296 = sbr.rel (%p294) target = $region20
        $region19: #{tpu_custom_call.1} parent=11 // pred_region
          %298 = vsyncadd [#allocation6], 0
          %s300 = sshll.u32 %s2, 4
          %s301 = int_to_ptr.hbm [resolvable:$true] %s300
          %s302 = sshll.u32 [#allocation7], 4
          %s303 = int_to_ptr.vmem [resolvable:$true] %s302
          %305 = dma.hbm_to_vmem [thread:$0]  %s301, 64, %s303, [#allocation6]
        $region20: #{tpu_custom_call.1} parent=11 // pred_fallthru
          _
        // Predicated region
        $region21: #{tpu_custom_call.1} parent=11 // pred_check
          %p306 = pneg %p115
        $region22: #{tpu_custom_call.1} parent=11 // pred_check_branch
          %308 = sbr.rel (%p306) target = $region24
        $region23: #{tpu_custom_call.1} parent=11 // pred_region
          %310 = vsyncadd [#allocation9], 0
          %s312 = sshll.u32 %s3, 4
          %s313 = int_to_ptr.hbm [resolvable:$true] %s312
          %s314 = sshll.u32 [#allocation8], 4
          %s315 = int_to_ptr.vmem [resolvable:$true] %s314
          %317 = dma.hbm_to_vmem [thread:$0]  %s313, 64, %s315, [#allocation9]
        $region24: #{tpu_custom_call.1} parent=11 // pred_fallthru
          _
        // Predicated region
        $region25: #{tpu_custom_call.1} parent=11 // pred_check
          %p318 = pneg %p136
        $region26: #{tpu_custom_call.1} parent=11 // pred_check_branch
          %320 = sbr.rel (%p318) target = $region28
        $region27: #{tpu_custom_call.1} parent=11 // pred_region
          %322 = vsyncadd [#allocation9], 0
          %s324 = sshll.u32 %s4, 4
          %s325 = int_to_ptr.hbm [resolvable:$true] %s324
          %s326 = sshll.u32 [#allocation10], 4
          %s327 = int_to_ptr.vmem [resolvable:$true] %s326
          %329 = dma.hbm_to_vmem [thread:$0]  %s325, 64, %s327, [#allocation9]
        $region28: #{tpu_custom_call.1} parent=11 // pred_fallthru
          _
        // Predicated region
        $region29: #{tpu_custom_call.1} parent=11 // pred_check
          %p330 = pneg %p157
        $region30: #{tpu_custom_call.1} parent=11 // pred_check_branch
          %332 = sbr.rel (%p330) target = $region32
        $region31: #{tpu_custom_call.1} parent=11 // pred_region
          %334 = vsyncadd [#allocation12], 0
          %s335 = sshll.u32 %s5, 4
          %s336 = int_to_ptr.hbm [resolvable:$true] %s335
          %s337 = sshll.u32 [#allocation11], 4
          %s338 = int_to_ptr.vmem [resolvable:$true] %s337
          %343 = dma.hbm_to_vmem [thread:$0]  %s336, 384, %s338, [#allocation12], 64, 64, 4
        $region32: #{tpu_custom_call.1} parent=11 // pred_fallthru
          _
        // Predicated region
        $region33: #{tpu_custom_call.1} parent=11 // pred_check
          %p344 = pneg %p178
        $region34: #{tpu_custom_call.1} parent=11 // pred_check_branch
          %346 = sbr.rel (%p344) target = $region36
        $region35: #{tpu_custom_call.1} parent=11 // pred_region
          %348 = vsyncadd [#allocation12], 0
          %s349 = sshll.u32 %s6, 4
          %s350 = int_to_ptr.hbm [resolvable:$true] %s349
          %s351 = sshll.u32 [#allocation13], 4
          %s352 = int_to_ptr.vmem [resolvable:$true] %s351
          %357 = dma.hbm_to_vmem [thread:$0]  %s350, 49152, %s352, [#allocation12], 256, 256, 16
        $region36: #{tpu_custom_call.1} parent=11 // pred_fallthru
          _
        // Predicated region
        $region37: #{tpu_custom_call.1} parent=11 // pred_check
          %p358 = pneg %p199
        $region38: #{tpu_custom_call.1} parent=11 // pred_check_branch
          %360 = sbr.rel (%p358) target = $region40
        $region39: #{tpu_custom_call.1} parent=11 // pred_region
          %362 = vsyncadd [#allocation15], 0
          %s363 = sshll.u32 %s7, 4
          %s364 = int_to_ptr.hbm [resolvable:$true] %s363
          %s365 = sshll.u32 [#allocation14], 4
          %s366 = int_to_ptr.vmem [resolvable:$true] %s365
          %371 = dma.hbm_to_vmem [thread:$0]  %s364, 49152, %s366, [#allocation15], 256, 256, 16
        $region40: #{tpu_custom_call.1} parent=11 // pred_fallthru
          _
        // Predicated region
        $region41: #{tpu_custom_call.1} parent=11 // pred_check
          %p372 = pneg %p220
        $region42: #{tpu_custom_call.1} parent=11 // pred_check_branch
          %374 = sbr.rel (%p372) target = $region44
        $region43: #{tpu_custom_call.1} parent=11 // pred_region
          _
        $region44: #{tpu_custom_call.1} parent=11 // pred_fallthru
          _
        // Predicated region
        $region45: #{tpu_custom_call.1} parent=11 // pred_check
          %p375 = pneg %p241
        $region46: #{tpu_custom_call.1} parent=11 // pred_check_branch
          %377 = sbr.rel (%p375) target = $region48
        $region47: #{tpu_custom_call.1} parent=11 // pred_region
          %379 = vsyncadd [#allocation15], 0
          %s380 = sshll.u32 %s9, 4
          %s381 = int_to_ptr.hbm [resolvable:$true] %s380
          %s382 = sshll.u32 [#allocation16], 4
          %s383 = int_to_ptr.vmem [resolvable:$true] %s382
          %388 = dma.hbm_to_vmem [thread:$0]  %s381, 1024, %s383, [#allocation15], 512, 512, 32
        $region48: #{tpu_custom_call.1} parent=11 // pred_fallthru
          _
      $region12: #{tpu_custom_call.1} parent=5 // pred_fallthru
        _
      %p389 = scmp.lt.s32.totalorder %s26, 2
      // Predicated region
      $region49: #{tpu_custom_call.1} parent=5 // pred_check
        %p390 = pneg %p389
      $region50: #{tpu_custom_call.1} parent=5 // pred_check_branch
        %392 = sbr.rel (%p390) target = $region52
      $region51: #{tpu_custom_call.1} parent=5 // pred_region
        // Predicated region
        $region53: #{tpu_custom_call.1} parent=51 // pred_check
          %p393 = pneg %p46
        $region54: #{tpu_custom_call.1} parent=51 // pred_check_branch
          %395 = sbr.rel (%p393) target = $region56
        $region55: #{tpu_custom_call.1} parent=51 // pred_region
          %s396 = sand.u32 %s36, 1
          %s397 = scalar_lea.sflag [#allocation3], %s396
          %s398 = sand.u32 %s36, 1
          %s399 = smul.addr %s398, 64
          %s400 = scalar_lea.vmem [#allocation2], %s399
          %402 = vsyncadd %s397, 0
          %s403 = smul.addr %s26, 8
          %s404 = smul.addr %s403, 8
          %s405 = scalar_lea.hbm %s0, %s404
          %s406 = sshll.u32 %s405, 4
          %s407 = int_to_ptr.hbm [resolvable:$true] %s406
          %s408 = sshll.u32 %s400, 4
          %s409 = int_to_ptr.vmem [resolvable:$true] %s408
          %414 = dma.hbm_to_vmem [thread:$0]  %s407, 1024, %s409, %s397, 512, 512, 32
        $region56: #{tpu_custom_call.1} parent=51 // pred_fallthru
          _
      $region52: #{tpu_custom_call.1} parent=5 // pred_fallthru
        _
      %p415 = scmp.le.s32.totalorder 1, %s26
      %p416 = scmp.lt.s32.totalorder %s26, 3
      %p417 = pnand %p415, %p416
      %p418 = pneg %p417
      // Predicated region
      $region57: #{tpu_custom_call.1} parent=5 // pred_check
        _
      $region58: #{tpu_custom_call.1} parent=5 // pred_check_branch
        %420 = sbr.rel (%p417) target = $region60
      $region59: #{tpu_custom_call.1} parent=5 // pred_region
        %s421 = ssub.s32 %s26, 1
        %s422 = sand.u32 %s39, 1
        %s423 = scalar_lea.sflag [#allocation3], %s422
        %s424 = sand.u32 %s39, 1
        %s425 = smul.addr %s424, 64
        %s426 = scalar_lea.vmem [#allocation2], %s425
        // Predicated region
        $region61: #{tpu_custom_call.1} parent=59 // pred_check
          %p427 = pneg %p52
        $region62: #{tpu_custom_call.1} parent=59 // pred_check_branch
          %429 = sbr.rel (%p427) target = $region64
        $region63: #{tpu_custom_call.1} parent=59 // pred_region
          %431 = dma.done %s423, 1024
        $region64: #{tpu_custom_call.1} parent=59 // pred_fallthru
          _
        // Predicated region
        $region65: #{tpu_custom_call.1} parent=59 // pred_check
          %p432 = pneg %p73
        $region66: #{tpu_custom_call.1} parent=59 // pred_check_branch
          %434 = sbr.rel (%p432) target = $region68
        $region67: #{tpu_custom_call.1} parent=59 // pred_region
          %436 = dma.done [#allocation6], 64
        $region68: #{tpu_custom_call.1} parent=59 // pred_fallthru
          _
        // Predicated region
        $region69: #{tpu_custom_call.1} parent=59 // pred_check
          %p437 = pneg %p94
        $region70: #{tpu_custom_call.1} parent=59 // pred_check_branch
          %439 = sbr.rel (%p437) target = $region72
        $region71: #{tpu_custom_call.1} parent=59 // pred_region
          %441 = dma.done [#allocation6], 64
        $region72: #{tpu_custom_call.1} parent=59 // pred_fallthru
          _
        // Predicated region
        $region73: #{tpu_custom_call.1} parent=59 // pred_check
          %p442 = pneg %p115
        $region74: #{tpu_custom_call.1} parent=59 // pred_check_branch
          %444 = sbr.rel (%p442) target = $region76
        $region75: #{tpu_custom_call.1} parent=59 // pred_region
          %446 = dma.done [#allocation9], 64
        $region76: #{tpu_custom_call.1} parent=59 // pred_fallthru
          _
        // Predicated region
        $region77: #{tpu_custom_call.1} parent=59 // pred_check
          %p447 = pneg %p136
        $region78: #{tpu_custom_call.1} parent=59 // pred_check_branch
          %449 = sbr.rel (%p447) target = $region80
        $region79: #{tpu_custom_call.1} parent=59 // pred_region
          %451 = dma.done [#allocation9], 64
        $region80: #{tpu_custom_call.1} parent=59 // pred_fallthru
          _
        // Predicated region
        $region81: #{tpu_custom_call.1} parent=59 // pred_check
          %p452 = pneg %p157
        $region82: #{tpu_custom_call.1} parent=59 // pred_check_branch
          %454 = sbr.rel (%p452) target = $region84
        $region83: #{tpu_custom_call.1} parent=59 // pred_region
          %456 = dma.done [#allocation12], 384
        $region84: #{tpu_custom_call.1} parent=59 // pred_fallthru
          _
        // Predicated region
        $region85: #{tpu_custom_call.1} parent=59 // pred_check
          %p457 = pneg %p178
        $region86: #{tpu_custom_call.1} parent=59 // pred_check_branch
          %459 = sbr.rel (%p457) target = $region88
        $region87: #{tpu_custom_call.1} parent=59 // pred_region
          %461 = dma.done [#allocation12], 49152
        $region88: #{tpu_custom_call.1} parent=59 // pred_fallthru
          _
        // Predicated region
        $region89: #{tpu_custom_call.1} parent=59 // pred_check
          %p462 = pneg %p199
        $region90: #{tpu_custom_call.1} parent=59 // pred_check_branch
          %464 = sbr.rel (%p462) target = $region92
        $region91: #{tpu_custom_call.1} parent=59 // pred_region
          %466 = dma.done [#allocation15], 49152
        $region92: #{tpu_custom_call.1} parent=59 // pred_fallthru
          _
        // Predicated region
        $region93: #{tpu_custom_call.1} parent=59 // pred_check
          %p467 = pneg %p241
        $region94: #{tpu_custom_call.1} parent=59 // pred_check_branch
          %469 = sbr.rel (%p467) target = $region96
        $region95: #{tpu_custom_call.1} parent=59 // pred_region
          %471 = dma.done [#allocation15], 1024
        $region96: #{tpu_custom_call.1} parent=59 // pred_fallthru
          _
        %s472 = sand.u32 %s39, 1
        %s473 = scalar_lea.sflag [#allocation3], %s472
        %s474 = sand.u32 %s39, 1
        %s475 = smul.addr %s474, 64
        %s476 = scalar_lea.vmem [#allocation2], %s475
        %p477 = pneg %p52
        %p478 = pneg %p49
        %p479 = pneg %p73
        %p480 = pneg %p70
        %p481 = pneg %p94
        %p482 = pneg %p91
        %p483 = pneg %p115
        %p484 = pneg %p112
        %p485 = pneg %p136
        %p486 = pneg %p133
        %p487 = pneg %p157
        %p488 = pneg %p154
        %p489 = pneg %p178
        %p490 = pneg %p175
        %p491 = pneg %p199
        %p492 = pneg %p196
        %p493 = pneg %p220
        %p494 = pneg %p217
        %p495 = pneg %p241
        %p496 = pneg %p238
        %p497 = pneg %p267
        %p498 = pneg %p264
        %s499 = sand.u32 %s254, 1
        %s500 = scalar_lea.sflag [#allocation4], %s499
        %s501 = sand.u32 %s254, 1
        %s502 = smul.addr %s501, 64
        %s503 = scalar_lea.vmem [#allocation17], %s502
        %v505 = vld [vmem:[%s426] sm:$0xff]
        %v506 = vld [vmem:[%s426 + $0x8] sm:$0xff]
        %v507 = vld [vmem:[%s426 + $0x10] sm:$0xff]
        %v508 = vld [vmem:[%s426 + $0x18] sm:$0xff]
        %v509 = vld [vmem:[%s426 + $0x20] sm:$0xff]
        %v510 = vld [vmem:[%s426 + $0x28] sm:$0xff]
        %v511 = vld [vmem:[%s426 + $0x30] sm:$0xff]
        %v512 = vld [vmem:[%s426 + $0x38] sm:$0xff]
        %v513 = vld [vmem:[%s8] sm:$0xff]
        %v514 = vld [vmem:[%s8 + $0x8] sm:$0xff]
        %v515 = vld [vmem:[%s8 + $0x10] sm:$0xff]
        %v516 = vld [vmem:[%s8 + $0x18] sm:$0xff]
        %v517 = vld [vmem:[%s8 + $0x20] sm:$0xff]
        %v518 = vld [vmem:[%s8 + $0x28] sm:$0xff]
        %v519 = vld [vmem:[%s8 + $0x30] sm:$0xff]
        %v520 = vld [vmem:[%s8 + $0x38] sm:$0xff]
        %v521 = vld [vmem:[%s8 + $0x40] sm:$0xff]
        %v522 = vld [vmem:[%s8 + $0x48] sm:$0xff]
        %v523 = vld [vmem:[%s8 + $0x50] sm:$0xff]
        %v524 = vld [vmem:[%s8 + $0x58] sm:$0xff]
        %v525 = vld [vmem:[%s8 + $0x60] sm:$0xff]
        %v526 = vld [vmem:[%s8 + $0x68] sm:$0xff]
        %v527 = vld [vmem:[%s8 + $0x70] sm:$0xff]
        %v528 = vld [vmem:[%s8 + $0x78] sm:$0xff]
        %v529 = vld [vmem:[%s8 + $0x80] sm:$0xff]
        %v530 = vld [vmem:[%s8 + $0x88] sm:$0xff]
        %v531 = vld [vmem:[%s8 + $0x90] sm:$0xff]
        %v532 = vld [vmem:[%s8 + $0x98] sm:$0xff]
        %v533 = vld [vmem:[%s8 + $0xa0] sm:$0xff]
        %v534 = vld [vmem:[%s8 + $0xa8] sm:$0xff]
        %v535 = vld [vmem:[%s8 + $0xb0] sm:$0xff]
        %v536 = vld [vmem:[%s8 + $0xb8] sm:$0xff]
        %v537 = vld [vmem:[%s8 + $0xc0] sm:$0xff]
        %v538 = vld [vmem:[%s8 + $0xc8] sm:$0xff]
        %v539 = vld [vmem:[%s8 + $0xd0] sm:$0xff]
        %v540 = vld [vmem:[%s8 + $0xd8] sm:$0xff]
        %v541 = vld [vmem:[%s8 + $0xe0] sm:$0xff]
        %v542 = vld [vmem:[%s8 + $0xe8] sm:$0xff]
        %v543 = vld [vmem:[%s8 + $0xf0] sm:$0xff]
        %v544 = vld [vmem:[%s8 + $0xf8] sm:$0xff]
        %v545 = vld [vmem:[%s8 + $0x100] sm:$0xff]
        %v546 = vld [vmem:[%s8 + $0x108] sm:$0xff]
        %v547 = vld [vmem:[%s8 + $0x110] sm:$0xff]
        %v548 = vld [vmem:[%s8 + $0x118] sm:$0xff]
        %v549 = vld [vmem:[%s8 + $0x120] sm:$0xff]
        %v550 = vld [vmem:[%s8 + $0x128] sm:$0xff]
        %v551 = vld [vmem:[%s8 + $0x130] sm:$0xff]
        %v552 = vld [vmem:[%s8 + $0x138] sm:$0xff]
        %v553 = vld [vmem:[%s8 + $0x140] sm:$0xff]
        %v554 = vld [vmem:[%s8 + $0x148] sm:$0xff]
        %v555 = vld [vmem:[%s8 + $0x150] sm:$0xff]
        %v556 = vld [vmem:[%s8 + $0x158] sm:$0xff]
        %v557 = vld [vmem:[%s8 + $0x160] sm:$0xff]
        %v558 = vld [vmem:[%s8 + $0x168] sm:$0xff]
        %v559 = vld [vmem:[%s8 + $0x170] sm:$0xff]
        %v560 = vld [vmem:[%s8 + $0x178] sm:$0xff]
        %v561 = vld [vmem:[%s8 + $0x180] sm:$0xff]
        %v562 = vld [vmem:[%s8 + $0x188] sm:$0xff]
        %v563 = vld [vmem:[%s8 + $0x190] sm:$0xff]
        %v564 = vld [vmem:[%s8 + $0x198] sm:$0xff]
        %v565 = vld [vmem:[%s8 + $0x1a0] sm:$0xff]
        %v566 = vld [vmem:[%s8 + $0x1a8] sm:$0xff]
        %v567 = vld [vmem:[%s8 + $0x1b0] sm:$0xff]
        %v568 = vld [vmem:[%s8 + $0x1b8] sm:$0xff]
        %v569 = vld [vmem:[%s8 + $0x1c0] sm:$0xff]
        %v570 = vld [vmem:[%s8 + $0x1c8] sm:$0xff]
        %v571 = vld [vmem:[%s8 + $0x1d0] sm:$0xff]
        %v572 = vld [vmem:[%s8 + $0x1d8] sm:$0xff]
        %v573 = vld [vmem:[%s8 + $0x1e0] sm:$0xff]
        %v574 = vld [vmem:[%s8 + $0x1e8] sm:$0xff]
        %v575 = vld [vmem:[%s8 + $0x1f0] sm:$0xff]
        %v576 = vld [vmem:[%s8 + $0x1f8] sm:$0xff]
        %v577 = vld [vmem:[#allocation16] sm:$0xff]
        %v578 = vld [vmem:[#allocation16 + $0x8] sm:$0xff]
        %v579 = vld [vmem:[#allocation16 + $0x10] sm:$0xff]
        %v580 = vld [vmem:[#allocation16 + $0x18] sm:$0xff]
        %v581 = vld [vmem:[#allocation16 + $0x20] sm:$0xff]
        %v582 = vld [vmem:[#allocation16 + $0x28] sm:$0xff]
        %v583 = vld [vmem:[#allocation16 + $0x30] sm:$0xff]
        %v584 = vld [vmem:[#allocation16 + $0x38] sm:$0xff]
        %v585 = vld [vmem:[#allocation5] sm:$0xf]
        %v586 = vld [vmem:[#allocation7] sm:$0xf]
        %v587 = vadd.f32 %v505, %v509
        %v588 = vrot.slane %v587, 4
        %v589 = vadd.f32 %v587, %v588
        %v590 = vrot.slane %v589, 2
        %v591 = vadd.f32 %v589, %v590
        %v592 = vrot.slane %v591, 1
        %v593 = vadd.f32 %v591, %v592
        %v594 = vadd.f32 %v506, %v510
        %v595 = vrot.slane %v594, 4
        %v596 = vadd.f32 %v594, %v595
        %v597 = vrot.slane %v596, 2
        %v598 = vadd.f32 %v596, %v597
        %v599 = vrot.slane %v598, 1
        %v600 = vadd.f32 %v598, %v599
        %v601 = vadd.f32 %v507, %v511
        %v602 = vrot.slane %v601, 4
        %v603 = vadd.f32 %v601, %v602
        %v604 = vrot.slane %v603, 2
        %v605 = vadd.f32 %v603, %v604
        %v606 = vrot.slane %v605, 1
        %v607 = vadd.f32 %v605, %v606
        %v608 = vadd.f32 %v508, %v512
        %v609 = vrot.slane %v608, 4
        %v610 = vadd.f32 %v608, %v609
        %v611 = vrot.slane %v610, 2
        %v612 = vadd.f32 %v610, %v611
        %v613 = vrot.slane %v612, 1
        %v614 = vadd.f32 %v612, %v613
        %v615 = vmul.f32 %v505, %v505
        %v616 = vmul.f32 %v506, %v506
        %v617 = vmul.f32 %v507, %v507
        %v618 = vmul.f32 %v508, %v508
        %v619 = vmul.f32 %v509, %v509
        %v620 = vmul.f32 %v510, %v510
        %v621 = vmul.f32 %v511, %v511
        %v622 = vmul.f32 %v512, %v512
        %v623 = vadd.f32 %v615, %v619
        %v624 = vrot.slane %v623, 4
        %v625 = vadd.f32 %v623, %v624
        %v626 = vrot.slane %v625, 2
        %v627 = vadd.f32 %v625, %v626
        %v628 = vrot.slane %v627, 1
        %v629 = vadd.f32 %v627, %v628
        %v630 = vadd.f32 %v616, %v620
        %v631 = vrot.slane %v630, 4
        %v632 = vadd.f32 %v630, %v631
        %v633 = vrot.slane %v632, 2
        %v634 = vadd.f32 %v632, %v633
        %v635 = vrot.slane %v634, 1
        %v636 = vadd.f32 %v634, %v635
        %v637 = vadd.f32 %v617, %v621
        %v638 = vrot.slane %v637, 4
        %v639 = vadd.f32 %v637, %v638
        %v640 = vrot.slane %v639, 2
        %v641 = vadd.f32 %v639, %v640
        %v642 = vrot.slane %v641, 1
        %v643 = vadd.f32 %v641, %v642
        %v644 = vadd.f32 %v618, %v622
        %v645 = vrot.slane %v644, 4
        %v646 = vadd.f32 %v644, %v645
        %v647 = vrot.slane %v646, 2
        %v648 = vadd.f32 %v646, %v647
        %v649 = vrot.slane %v648, 1
        %v650 = vadd.f32 %v648, %v649
        %651 = vmatpush.msra.mxu0 %v528
        %652 = vmatpush.msra.mxu0 %v527
        %653 = vmatpush.msra.mxu0 %v526
        %654 = vmatpush.msra.mxu0 %v525
        %655 = vmatpush.msra.mxu0 %v524
        %656 = vmatpush.msra.mxu0 %v523
        %657 = vmatpush.msra.mxu0 %v522
        %658 = vmatpush.msra.mxu0 %v521
        %659 = vmatpush.msra.mxu0 %v520
        %660 = vmatpush.msra.mxu0 %v519
        %661 = vmatpush.msra.mxu0 %v518
        %662 = vmatpush.msra.mxu0 %v517
        %663 = vmatpush.msra.mxu0 %v516
        %664 = vmatpush.msra.mxu0 %v515
        %665 = vmatpush.msra.mxu0 %v514
        %666 = vmatpush.msra.mxu0 %v513
        %667 = vmatmul.f32.gmra.mxu0 %v593
        %v668 = vpop.f32.mrf.mxu0
        %v669 = vadd.f32 0.0, %v668
        %670 = vdwg.mxu0
        %671 = vmatpush.msra.mxu0 %v544
        %672 = vmatpush.msra.mxu0 %v543
        %673 = vmatpush.msra.mxu0 %v542
        %674 = vmatpush.msra.mxu0 %v541
        %675 = vmatpush.msra.mxu0 %v540
        %676 = vmatpush.msra.mxu0 %v539
        %677 = vmatpush.msra.mxu0 %v538
        %678 = vmatpush.msra.mxu0 %v537
        %679 = vmatpush.msra.mxu0 %v536
        %680 = vmatpush.msra.mxu0 %v535
        %681 = vmatpush.msra.mxu0 %v534
        %682 = vmatpush.msra.mxu0 %v533
        %683 = vmatpush.msra.mxu0 %v532
        %684 = vmatpush.msra.mxu0 %v531
        %685 = vmatpush.msra.mxu0 %v530
        %686 = vmatpush.msra.mxu0 %v529
        %687 = vmatmul.f32.gmra.mxu0 %v600
        %v688 = vpop.f32.mrf.mxu0
        %v689 = vadd.f32 %v669, %v688
        %690 = vdwg.mxu0
        %691 = vmatpush.msra.mxu0 %v560
        %692 = vmatpush.msra.mxu0 %v559
        %693 = vmatpush.msra.mxu0 %v558
        %694 = vmatpush.msra.mxu0 %v557
        %695 = vmatpush.msra.mxu0 %v556
        %696 = vmatpush.msra.mxu0 %v555
        %697 = vmatpush.msra.mxu0 %v554
        %698 = vmatpush.msra.mxu0 %v553
        %699 = vmatpush.msra.mxu0 %v552
        %700 = vmatpush.msra.mxu0 %v551
        %701 = vmatpush.msra.mxu0 %v550
        %702 = vmatpush.msra.mxu0 %v549
        %703 = vmatpush.msra.mxu0 %v548
        %704 = vmatpush.msra.mxu0 %v547
        %705 = vmatpush.msra.mxu0 %v546
        %706 = vmatpush.msra.mxu0 %v545
        %707 = vmatmul.f32.gmra.mxu0 %v607
        %v708 = vpop.f32.mrf.mxu0
        %v709 = vadd.f32 %v689, %v708
        %710 = vdwg.mxu0
        %711 = vmatpush.msra.mxu0 %v576
        %712 = vmatpush.msra.mxu0 %v575
        %713 = vmatpush.msra.mxu0 %v574
        %714 = vmatpush.msra.mxu0 %v573
        %715 = vmatpush.msra.mxu0 %v572
        %716 = vmatpush.msra.mxu0 %v571
        %717 = vmatpush.msra.mxu0 %v570
        %718 = vmatpush.msra.mxu0 %v569
        %719 = vmatpush.msra.mxu0 %v568
        %720 = vmatpush.msra.mxu0 %v567
        %721 = vmatpush.msra.mxu0 %v566
        %722 = vmatpush.msra.mxu0 %v565
        %723 = vmatpush.msra.mxu0 %v564
        %724 = vmatpush.msra.mxu0 %v563
        %725 = vmatpush.msra.mxu0 %v562
        %726 = vmatpush.msra.mxu0 %v561
        %727 = vmatmul.f32.gmra.mxu0 %v614
        %v728 = vpop.f32.mrf.mxu0
        %v729 = vadd.f32 %v709, %v728
        %730 = vdwg.mxu0
        %731 = vmatpush.msra.mxu0 %v528
        %732 = vmatpush.msra.mxu0 %v527
        %733 = vmatpush.msra.mxu0 %v526
        %734 = vmatpush.msra.mxu0 %v525
        %735 = vmatpush.msra.mxu0 %v524
        %736 = vmatpush.msra.mxu0 %v523
        %737 = vmatpush.msra.mxu0 %v522
        %738 = vmatpush.msra.mxu0 %v521
        %739 = vmatpush.msra.mxu0 %v520
        %740 = vmatpush.msra.mxu0 %v519
        %741 = vmatpush.msra.mxu0 %v518
        %742 = vmatpush.msra.mxu0 %v517
        %743 = vmatpush.msra.mxu0 %v516
        %744 = vmatpush.msra.mxu0 %v515
        %745 = vmatpush.msra.mxu0 %v514
        %746 = vmatpush.msra.mxu0 %v513
        %747 = vmatmul.f32.gmra.mxu0 %v629
        %v748 = vpop.f32.mrf.mxu0
        %v749 = vadd.f32 0.0, %v748
        %750 = vdwg.mxu0
        %751 = vmatpush.msra.mxu0 %v544
        %752 = vmatpush.msra.mxu0 %v543
        %753 = vmatpush.msra.mxu0 %v542
        %754 = vmatpush.msra.mxu0 %v541
        %755 = vmatpush.msra.mxu0 %v540
        %756 = vmatpush.msra.mxu0 %v539
        %757 = vmatpush.msra.mxu0 %v538
        %758 = vmatpush.msra.mxu0 %v537
        %759 = vmatpush.msra.mxu0 %v536
        %760 = vmatpush.msra.mxu0 %v535
        %761 = vmatpush.msra.mxu0 %v534
        %762 = vmatpush.msra.mxu0 %v533
        %763 = vmatpush.msra.mxu0 %v532
        %764 = vmatpush.msra.mxu0 %v531
        %765 = vmatpush.msra.mxu0 %v530
        %766 = vmatpush.msra.mxu0 %v529
        %767 = vmatmul.f32.gmra.mxu0 %v636
        %v768 = vpop.f32.mrf.mxu0
        %v769 = vadd.f32 %v749, %v768
        %770 = vdwg.mxu0
        %771 = vmatpush.msra.mxu0 %v560
        %772 = vmatpush.msra.mxu0 %v559
        %773 = vmatpush.msra.mxu0 %v558
        %774 = vmatpush.msra.mxu0 %v557
        %775 = vmatpush.msra.mxu0 %v556
        %776 = vmatpush.msra.mxu0 %v555
        %777 = vmatpush.msra.mxu0 %v554
        %778 = vmatpush.msra.mxu0 %v553
        %779 = vmatpush.msra.mxu0 %v552
        %780 = vmatpush.msra.mxu0 %v551
        %781 = vmatpush.msra.mxu0 %v550
        %782 = vmatpush.msra.mxu0 %v549
        %783 = vmatpush.msra.mxu0 %v548
        %784 = vmatpush.msra.mxu0 %v547
        %785 = vmatpush.msra.mxu0 %v546
        %786 = vmatpush.msra.mxu0 %v545
        %787 = vmatmul.f32.gmra.mxu0 %v643
        %v788 = vpop.f32.mrf.mxu0
        %v789 = vadd.f32 %v769, %v788
        %790 = vdwg.mxu0
        %791 = vmatpush.msra.mxu0 %v576
        %792 = vmatpush.msra.mxu0 %v575
        %793 = vmatpush.msra.mxu0 %v574
        %794 = vmatpush.msra.mxu0 %v573
        %795 = vmatpush.msra.mxu0 %v572
        %796 = vmatpush.msra.mxu0 %v571
        %797 = vmatpush.msra.mxu0 %v570
        %798 = vmatpush.msra.mxu0 %v569
        %799 = vmatpush.msra.mxu0 %v568
        %800 = vmatpush.msra.mxu0 %v567
        %801 = vmatpush.msra.mxu0 %v566
        %802 = vmatpush.msra.mxu0 %v565
        %803 = vmatpush.msra.mxu0 %v564
        %804 = vmatpush.msra.mxu0 %v563
        %805 = vmatpush.msra.mxu0 %v562
        %806 = vmatpush.msra.mxu0 %v561
        %807 = vmatmul.f32.gmra.mxu0 %v650
        %v808 = vpop.f32.mrf.mxu0
        %v809 = vadd.f32 %v789, %v808
        %810 = vdwg.mxu0
        %v811 = vmul.f32 %v729, 0.001953125
        %v812 = vmul.f32 %v809, 0.001953125
        %v813 = vmul.f32 %v811, %v811
        %v814 = vsub.f32 %v812, %v813
        %v815 = vadd.f32 %v814, 1e-05
        %v816 = vrsqrt.pop %v815
        %v817 = vmul.f32 %v816, %v815
        %v818 = vmul.f32 %v817, %v816
        %v819 = vmul.f32 0.5, %v818
        %v820 = vsub.f32 1.5, %v819
        %v821 = vmul.f32 %v816, %v820
        %vm822 = vweird.f32 %v815
        %vm823 = vweird.f32 %v816
        %vm824 = vmor %vm822, %vm823
        %v825 = vsel %vm824, %v816, %v821
        %vm826 = vcmask 130048
        %v828 = vsel %vm826, %v811, 0
        %830 = vmatpush.msra.mxu0 0.0
        %831 = vmatpush.msra.mxu0 0.0
        %832 = vmatpush.msra.mxu0 0.0
        %833 = vmatpush.msra.mxu0 0.0
        %834 = vmatpush.msra.mxu0 0.0
        %835 = vmatpush.msra.mxu0 0.0
        %836 = vmatpush.msra.mxu0 0.0
        %837 = vmatpush.msra.mxu0 0.0
        %838 = vmatpush.msra.mxu0 0.0
        %839 = vmatpush.msra.mxu0 0.0
        %840 = vmatpush.msra.mxu0 0.0
        %841 = vmatpush.msra.mxu0 0.0
        %842 = vmatpush.msra.mxu0 0.0
        %843 = vmatpush.msra.mxu0 0.0
        %844 = vmatpush.msra.mxu0 %v581
        %845 = vmatpush.msra.mxu0 %v577
        %846 = vmatmul.f32.gmra.mxu0 %v828
        %v847 = vpop.f32.mrf.mxu0
        %v848 = vadd.f32 0.0, %v847
        %849 = vdwg.mxu0
        %850 = vmatpush.msra.mxu0 0.0
        %851 = vmatpush.msra.mxu0 0.0
        %852 = vmatpush.msra.mxu0 0.0
        %853 = vmatpush.msra.mxu0 0.0
        %854 = vmatpush.msra.mxu0 0.0
        %855 = vmatpush.msra.mxu0 0.0
        %856 = vmatpush.msra.mxu0 0.0
        %857 = vmatpush.msra.mxu0 0.0
        %858 = vmatpush.msra.mxu0 0.0
        %859 = vmatpush.msra.mxu0 0.0
        %860 = vmatpush.msra.mxu0 0.0
        %861 = vmatpush.msra.mxu0 0.0
        %862 = vmatpush.msra.mxu0 0.0
        %863 = vmatpush.msra.mxu0 0.0
        %864 = vmatpush.msra.mxu0 %v582
        %865 = vmatpush.msra.mxu0 %v578
        %866 = vmatmul.f32.gmra.mxu0 %v828
        %v867 = vpop.f32.mrf.mxu0
        %v868 = vadd.f32 0.0, %v867
        %869 = vdwg.mxu0
        %870 = vmatpush.msra.mxu0 0.0
        %871 = vmatpush.msra.mxu0 0.0
        %872 = vmatpush.msra.mxu0 0.0
        %873 = vmatpush.msra.mxu0 0.0
        %874 = vmatpush.msra.mxu0 0.0
        %875 = vmatpush.msra.mxu0 0.0
        %876 = vmatpush.msra.mxu0 0.0
        %877 = vmatpush.msra.mxu0 0.0
        %878 = vmatpush.msra.mxu0 0.0
        %879 = vmatpush.msra.mxu0 0.0
        %880 = vmatpush.msra.mxu0 0.0
        %881 = vmatpush.msra.mxu0 0.0
        %882 = vmatpush.msra.mxu0 0.0
        %883 = vmatpush.msra.mxu0 0.0
        %884 = vmatpush.msra.mxu0 %v583
        %885 = vmatpush.msra.mxu0 %v579
        %886 = vmatmul.f32.gmra.mxu0 %v828
        %v887 = vpop.f32.mrf.mxu0
        %v888 = vadd.f32 0.0, %v887
        %889 = vdwg.mxu0
        %890 = vmatpush.msra.mxu0 0.0
        %891 = vmatpush.msra.mxu0 0.0
        %892 = vmatpush.msra.mxu0 0.0
        %893 = vmatpush.msra.mxu0 0.0
        %894 = vmatpush.msra.mxu0 0.0
        %895 = vmatpush.msra.mxu0 0.0
        %896 = vmatpush.msra.mxu0 0.0
        %897 = vmatpush.msra.mxu0 0.0
        %898 = vmatpush.msra.mxu0 0.0
        %899 = vmatpush.msra.mxu0 0.0
        %900 = vmatpush.msra.mxu0 0.0
        %901 = vmatpush.msra.mxu0 0.0
        %902 = vmatpush.msra.mxu0 0.0
        %903 = vmatpush.msra.mxu0 0.0
        %904 = vmatpush.msra.mxu0 %v584
        %905 = vmatpush.msra.mxu0 %v580
        %906 = vmatmul.f32.gmra.mxu0 %v828
        %v907 = vpop.f32.mrf.mxu0
        %v908 = vadd.f32 0.0, %v907
        %909 = vdwg.mxu0
        %v911 = vsel %vm826, %v825, 0
        %913 = vmatpush.msra.mxu0 0.0
        %914 = vmatpush.msra.mxu0 0.0
        %915 = vmatpush.msra.mxu0 0.0
        %916 = vmatpush.msra.mxu0 0.0
        %917 = vmatpush.msra.mxu0 0.0
        %918 = vmatpush.msra.mxu0 0.0
        %919 = vmatpush.msra.mxu0 0.0
        %920 = vmatpush.msra.mxu0 0.0
        %921 = vmatpush.msra.mxu0 0.0
        %922 = vmatpush.msra.mxu0 0.0
        %923 = vmatpush.msra.mxu0 0.0
        %924 = vmatpush.msra.mxu0 0.0
        %925 = vmatpush.msra.mxu0 0.0
        %926 = vmatpush.msra.mxu0 0.0
        %927 = vmatpush.msra.mxu0 %v581
        %928 = vmatpush.msra.mxu0 %v577
        %929 = vmatmul.f32.gmra.mxu0 %v911
        %v930 = vpop.f32.mrf.mxu0
        %v931 = vadd.f32 0.0, %v930
        %932 = vdwg.mxu0
        %933 = vmatpush.msra.mxu0 0.0
        %934 = vmatpush.msra.mxu0 0.0
        %935 = vmatpush.msra.mxu0 0.0
        %936 = vmatpush.msra.mxu0 0.0
        %937 = vmatpush.msra.mxu0 0.0
        %938 = vmatpush.msra.mxu0 0.0
        %939 = vmatpush.msra.mxu0 0.0
        %940 = vmatpush.msra.mxu0 0.0
        %941 = vmatpush.msra.mxu0 0.0
        %942 = vmatpush.msra.mxu0 0.0
        %943 = vmatpush.msra.mxu0 0.0
        %944 = vmatpush.msra.mxu0 0.0
        %945 = vmatpush.msra.mxu0 0.0
        %946 = vmatpush.msra.mxu0 0.0
        %947 = vmatpush.msra.mxu0 %v582
        %948 = vmatpush.msra.mxu0 %v578
        %949 = vmatmul.f32.gmra.mxu0 %v911
        %v950 = vpop.f32.mrf.mxu0
        %v951 = vadd.f32 0.0, %v950
        %952 = vdwg.mxu0
        %953 = vmatpush.msra.mxu0 0.0
        %954 = vmatpush.msra.mxu0 0.0
        %955 = vmatpush.msra.mxu0 0.0
        %956 = vmatpush.msra.mxu0 0.0
        %957 = vmatpush.msra.mxu0 0.0
        %958 = vmatpush.msra.mxu0 0.0
        %959 = vmatpush.msra.mxu0 0.0
        %960 = vmatpush.msra.mxu0 0.0
        %961 = vmatpush.msra.mxu0 0.0
        %962 = vmatpush.msra.mxu0 0.0
        %963 = vmatpush.msra.mxu0 0.0
        %964 = vmatpush.msra.mxu0 0.0
        %965 = vmatpush.msra.mxu0 0.0
        %966 = vmatpush.msra.mxu0 0.0
        %967 = vmatpush.msra.mxu0 %v583
        %968 = vmatpush.msra.mxu0 %v579
        %969 = vmatmul.f32.gmra.mxu0 %v911
        %v970 = vpop.f32.mrf.mxu0
        %v971 = vadd.f32 0.0, %v970
        %972 = vdwg.mxu0
        %973 = vmatpush.msra.mxu0 0.0
        %974 = vmatpush.msra.mxu0 0.0
        %975 = vmatpush.msra.mxu0 0.0
        %976 = vmatpush.msra.mxu0 0.0
        %977 = vmatpush.msra.mxu0 0.0
        %978 = vmatpush.msra.mxu0 0.0
        %979 = vmatpush.msra.mxu0 0.0
        %980 = vmatpush.msra.mxu0 0.0
        %981 = vmatpush.msra.mxu0 0.0
        %982 = vmatpush.msra.mxu0 0.0
        %983 = vmatpush.msra.mxu0 0.0
        %984 = vmatpush.msra.mxu0 0.0
        %985 = vmatpush.msra.mxu0 0.0
        %986 = vmatpush.msra.mxu0 0.0
        %987 = vmatpush.msra.mxu0 %v584
        %988 = vmatpush.msra.mxu0 %v580
        %989 = vmatmul.f32.gmra.mxu0 %v911
        %v990 = vpop.f32.mrf.mxu0
        %v991 = vadd.f32 0.0, %v990
        %992 = vdwg.mxu0
        %v993 = vperm.slane %v848, 0
        %v994 = vperm.slane %v868, 0
        %v995 = vperm.slane %v888, 0
        %v996 = vperm.slane %v908, 0
        %v997 = vsub.f32 %v505, %v993
        %v998 = vsub.f32 %v506, %v994
        %v999 = vsub.f32 %v507, %v995
        %v1000 = vsub.f32 %v508, %v996
        %v1001 = vsub.f32 %v509, %v993
        %v1002 = vsub.f32 %v510, %v994
        %v1003 = vsub.f32 %v511, %v995
        %v1004 = vsub.f32 %v512, %v996
        %v1006 = vperm.slane %v585, 0
        %v1007 = vperm.slane %v585, 1
        %v1008 = vperm.slane %v585, 2
        %v1009 = vperm.slane %v585, 3
        %v1014 = vmul.f32 %v931, %v1006
        %v1015 = vmul.f32 %v951, %v1007
        %v1016 = vmul.f32 %v971, %v1008
        %v1017 = vmul.f32 %v991, %v1009
        %v1018 = vperm.slane %v1014, 0
        %v1019 = vperm.slane %v1015, 0
        %v1020 = vperm.slane %v1016, 0
        %v1021 = vperm.slane %v1017, 0
        %v1022 = vmul.f32 %v997, %v1018
        %v1023 = vmul.f32 %v998, %v1019
        %v1024 = vmul.f32 %v999, %v1020
        %v1025 = vmul.f32 %v1000, %v1021
        %v1026 = vmul.f32 %v1001, %v1018
        %v1027 = vmul.f32 %v1002, %v1019
        %v1028 = vmul.f32 %v1003, %v1020
        %v1029 = vmul.f32 %v1004, %v1021
        %v1031 = vperm.slane %v586, 0
        %v1032 = vperm.slane %v586, 1
        %v1033 = vperm.slane %v586, 2
        %v1034 = vperm.slane %v586, 3
        %v1039 = vadd.f32 %v1022, %v1031
        %v1040 = vadd.f32 %v1023, %v1032
        %v1041 = vadd.f32 %v1024, %v1033
        %v1042 = vadd.f32 %v1025, %v1034
        %v1043 = vadd.f32 %v1026, %v1031
        %v1044 = vadd.f32 %v1027, %v1032
        %v1045 = vadd.f32 %v1028, %v1033
        %v1046 = vadd.f32 %v1029, %v1034
        %v1047 = vmax.f32 %v1039, 0.0
        %v1048 = vmax.f32 %v1040, 0.0
        %v1049 = vmax.f32 %v1041, 0.0
        %v1050 = vmax.f32 %v1042, 0.0
        %v1051 = vmax.f32 %v1043, 0.0
        %v1052 = vmax.f32 %v1044, 0.0
        %v1053 = vmax.f32 %v1045, 0.0
        %v1054 = vmax.f32 %v1046, 0.0
        %v1055 = vpack.c.bf16 %v1051, %v1047
        %v1056 = vpack.c.bf16 %v1052, %v1048
        %v1057 = vpack.c.bf16 %v1053, %v1049
        %v1058 = vpack.c.bf16 %v1054, %v1050
        %v1059 = vld [vmem:[#allocation11] sm:$0xf]
        %v1060 = vld [vmem:[#allocation11 + $0x4] sm:$0xf]
        %v1063 = vunpack.c.l.b16 %v1059
        %v1064 = vunpack.c.l.b16 %v1060
        %v1065 = vpack.c.b16 %v1064, %v1063
        %v1067 = vsel %vm826, %v1065, 0
        %1069 = vmatpush.bf16.msra.mxu0 0
        %1070 = vmatpush.bf16.msra.mxu0 0
        %1071 = vmatpush.bf16.msra.mxu0 0
        %1072 = vmatpush.bf16.msra.mxu0 0
        %1073 = vmatpush.bf16.msra.mxu0 0
        %1074 = vmatpush.bf16.msra.mxu0 0
        %1075 = vmatpush.bf16.msra.mxu0 0
        %1076 = vmatpush.bf16.msra.mxu0 %v1055
        %1077 = vmatmul.bf16.gmra.mxu0 %v1067
        %v1078 = vpop.f32.mrf.mxu0
        %v1079 = vadd.f32 0.0, %v1078
        %v1080 = vpop.f32.mrf.mxu0
        %v1081 = vadd.f32 0.0, %v1080
        %1082 = vdwg.mxu0
        %1083 = vmatpush.bf16.msra.mxu0 0
        %1084 = vmatpush.bf16.msra.mxu0 0
        %1085 = vmatpush.bf16.msra.mxu0 0
        %1086 = vmatpush.bf16.msra.mxu0 0
        %1087 = vmatpush.bf16.msra.mxu0 0
        %1088 = vmatpush.bf16.msra.mxu0 0
        %1089 = vmatpush.bf16.msra.mxu0 0
        %1090 = vmatpush.bf16.msra.mxu0 %v1056
        %1091 = vmatmul.bf16.gmra.mxu0 %v1067
        %v1092 = vpop.f32.mrf.mxu0
        %v1093 = vadd.f32 0.0, %v1092
        %v1094 = vpop.f32.mrf.mxu0
        %v1095 = vadd.f32 0.0, %v1094
        %1096 = vdwg.mxu0
        %1097 = vmatpush.bf16.msra.mxu0 0
        %1098 = vmatpush.bf16.msra.mxu0 0
        %1099 = vmatpush.bf16.msra.mxu0 0
        %1100 = vmatpush.bf16.msra.mxu0 0
        %1101 = vmatpush.bf16.msra.mxu0 0
        %1102 = vmatpush.bf16.msra.mxu0 0
        %1103 = vmatpush.bf16.msra.mxu0 0
        %1104 = vmatpush.bf16.msra.mxu0 %v1057
        %1105 = vmatmul.bf16.gmra.mxu0 %v1067
        %v1106 = vpop.f32.mrf.mxu0
        %v1107 = vadd.f32 0.0, %v1106
        %v1108 = vpop.f32.mrf.mxu0
        %v1109 = vadd.f32 0.0, %v1108
        %1110 = vdwg.mxu0
        %1111 = vmatpush.bf16.msra.mxu0 0
        %1112 = vmatpush.bf16.msra.mxu0 0
        %1113 = vmatpush.bf16.msra.mxu0 0
        %1114 = vmatpush.bf16.msra.mxu0 0
        %1115 = vmatpush.bf16.msra.mxu0 0
        %1116 = vmatpush.bf16.msra.mxu0 0
        %1117 = vmatpush.bf16.msra.mxu0 0
        %1118 = vmatpush.bf16.msra.mxu0 %v1058
        %1119 = vmatmul.bf16.gmra.mxu0 %v1067
        %v1120 = vpop.f32.mrf.mxu0
        %v1121 = vadd.f32 0.0, %v1120
        %v1122 = vpop.f32.mrf.mxu0
        %v1123 = vadd.f32 0.0, %v1122
        %1124 = vdwg.mxu0
        %v1125 = vpack.c.bf16 %v1081, %v1079
        %v1126 = vpack.c.bf16 %v1095, %v1093
        %v1127 = vpack.c.bf16 %v1109, %v1107
        %v1128 = vpack.c.bf16 %v1123, %v1121
        %v1129 = vld [vmem:[#allocation13] sm:$0xff]
        %v1130 = vld [vmem:[#allocation13 + $0x8] sm:$0xff]
        %v1131 = vld [vmem:[#allocation13 + $0x10] sm:$0xff]
        %v1132 = vld [vmem:[#allocation13 + $0x18] sm:$0xff]
        %v1133 = vld [vmem:[#allocation13 + $0x20] sm:$0xff]
        %v1134 = vld [vmem:[#allocation13 + $0x28] sm:$0xff]
        %v1135 = vld [vmem:[#allocation13 + $0x30] sm:$0xff]
        %v1136 = vld [vmem:[#allocation13 + $0x38] sm:$0xff]
        %v1137 = vld [vmem:[#allocation13 + $0x40] sm:$0xff]
        %v1138 = vld [vmem:[#allocation13 + $0x48] sm:$0xff]
        %v1139 = vld [vmem:[#allocation13 + $0x50] sm:$0xff]
        %v1140 = vld [vmem:[#allocation13 + $0x58] sm:$0xff]
        %v1141 = vld [vmem:[#allocation13 + $0x60] sm:$0xff]
        %v1142 = vld [vmem:[#allocation13 + $0x68] sm:$0xff]
        %v1143 = vld [vmem:[#allocation13 + $0x70] sm:$0xff]
        %v1144 = vld [vmem:[#allocation13 + $0x78] sm:$0xff]
        %v1145 = vld [vmem:[#allocation13 + $0x80] sm:$0xff]
        %v1146 = vld [vmem:[#allocation13 + $0x88] sm:$0xff]
        %v1147 = vld [vmem:[#allocation13 + $0x90] sm:$0xff]
        %v1148 = vld [vmem:[#allocation13 + $0x98] sm:$0xff]
        %v1149 = vld [vmem:[#allocation13 + $0xa0] sm:$0xff]
        %v1150 = vld [vmem:[#allocation13 + $0xa8] sm:$0xff]
        %v1151 = vld [vmem:[#allocation13 + $0xb0] sm:$0xff]
        %v1152 = vld [vmem:[#allocation13 + $0xb8] sm:$0xff]
        %v1153 = vld [vmem:[#allocation13 + $0xc0] sm:$0xff]
        %v1154 = vld [vmem:[#allocation13 + $0xc8] sm:$0xff]
        %v1155 = vld [vmem:[#allocation13 + $0xd0] sm:$0xff]
        %v1156 = vld [vmem:[#allocation13 + $0xd8] sm:$0xff]
        %v1157 = vld [vmem:[#allocation13 + $0xe0] sm:$0xff]
        %v1158 = vld [vmem:[#allocation13 + $0xe8] sm:$0xff]
        %v1159 = vld [vmem:[#allocation13 + $0xf0] sm:$0xff]
        %v1160 = vld [vmem:[#allocation13 + $0xf8] sm:$0xff]
        %v1161 = vld [vmem:[#allocation13 + $0x100] sm:$0xff]
        %v1162 = vld [vmem:[#allocation13 + $0x108] sm:$0xff]
        %v1163 = vld [vmem:[#allocation13 + $0x110] sm:$0xff]
        %v1164 = vld [vmem:[#allocation13 + $0x118] sm:$0xff]
        %v1165 = vld [vmem:[#allocation13 + $0x120] sm:$0xff]
        %v1166 = vld [vmem:[#allocation13 + $0x128] sm:$0xff]
        %v1167 = vld [vmem:[#allocation13 + $0x130] sm:$0xff]
        %v1168 = vld [vmem:[#allocation13 + $0x138] sm:$0xff]
        %v1169 = vld [vmem:[#allocation13 + $0x140] sm:$0xff]
        %v1170 = vld [vmem:[#allocation13 + $0x148] sm:$0xff]
        %v1171 = vld [vmem:[#allocation13 + $0x150] sm:$0xff]
        %v1172 = vld [vmem:[#allocation13 + $0x158] sm:$0xff]
        %v1173 = vld [vmem:[#allocation13 + $0x160] sm:$0xff]
        %v1174 = vld [vmem:[#allocation13 + $0x168] sm:$0xff]
        %v1175 = vld [vmem:[#allocation13 + $0x170] sm:$0xff]
        %v1176 = vld [vmem:[#allocation13 + $0x178] sm:$0xff]
        %v1177 = vld [vmem:[#allocation13 + $0x180] sm:$0xff]
        %v1178 = vld [vmem:[#allocation13 + $0x188] sm:$0xff]
        %v1179 = vld [vmem:[#allocation13 + $0x190] sm:$0xff]
        %v1180 = vld [vmem:[#allocation13 + $0x198] sm:$0xff]
        %v1181 = vld [vmem:[#allocation13 + $0x1a0] sm:$0xff]
        %v1182 = vld [vmem:[#allocation13 + $0x1a8] sm:$0xff]
        %v1183 = vld [vmem:[#allocation13 + $0x1b0] sm:$0xff]
        %v1184 = vld [vmem:[#allocation13 + $0x1b8] sm:$0xff]
        %v1185 = vld [vmem:[#allocation13 + $0x1c0] sm:$0xff]
        %v1186 = vld [vmem:[#allocation13 + $0x1c8] sm:$0xff]
        %v1187 = vld [vmem:[#allocation13 + $0x1d0] sm:$0xff]
        %v1188 = vld [vmem:[#allocation13 + $0x1d8] sm:$0xff]
        %v1189 = vld [vmem:[#allocation13 + $0x1e0] sm:$0xff]
        %v1190 = vld [vmem:[#allocation13 + $0x1e8] sm:$0xff]
        %v1191 = vld [vmem:[#allocation13 + $0x1f0] sm:$0xff]
        %v1192 = vld [vmem:[#allocation13 + $0x1f8] sm:$0xff]
        %v1193 = vld [vmem:[#allocation13 + $0x200] sm:$0xff]
        %v1194 = vld [vmem:[#allocation13 + $0x208] sm:$0xff]
        %v1195 = vld [vmem:[#allocation13 + $0x210] sm:$0xff]
        %v1196 = vld [vmem:[#allocation13 + $0x218] sm:$0xff]
        %v1197 = vld [vmem:[#allocation13 + $0x220] sm:$0xff]
        %v1198 = vld [vmem:[#allocation13 + $0x228] sm:$0xff]
        %v1199 = vld [vmem:[#allocation13 + $0x230] sm:$0xff]
        %v1200 = vld [vmem:[#allocation13 + $0x238] sm:$0xff]
        %v1201 = vld [vmem:[#allocation13 + $0x240] sm:$0xff]
        %v1202 = vld [vmem:[#allocation13 + $0x248] sm:$0xff]
        %v1203 = vld [vmem:[#allocation13 + $0x250] sm:$0xff]
        %v1204 = vld [vmem:[#allocation13 + $0x258] sm:$0xff]
        %v1205 = vld [vmem:[#allocation13 + $0x260] sm:$0xff]
        %v1206 = vld [vmem:[#allocation13 + $0x268] sm:$0xff]
        %v1207 = vld [vmem:[#allocation13 + $0x270] sm:$0xff]
        %v1208 = vld [vmem:[#allocation13 + $0x278] sm:$0xff]
        %v1209 = vld [vmem:[#allocation13 + $0x280] sm:$0xff]
        %v1210 = vld [vmem:[#allocation13 + $0x288] sm:$0xff]
        %v1211 = vld [vmem:[#allocation13 + $0x290] sm:$0xff]
        %v1212 = vld [vmem:[#allocation13 + $0x298] sm:$0xff]
        %v1213 = vld [vmem:[#allocation13 + $0x2a0] sm:$0xff]
        %v1214 = vld [vmem:[#allocation13 + $0x2a8] sm:$0xff]
        %v1215 = vld [vmem:[#allocation13 + $0x2b0] sm:$0xff]
        %v1216 = vld [vmem:[#allocation13 + $0x2b8] sm:$0xff]
        %v1217 = vld [vmem:[#allocation13 + $0x2c0] sm:$0xff]
        %v1218 = vld [vmem:[#allocation13 + $0x2c8] sm:$0xff]
        %v1219 = vld [vmem:[#allocation13 + $0x2d0] sm:$0xff]
        %v1220 = vld [vmem:[#allocation13 + $0x2d8] sm:$0xff]
        %v1221 = vld [vmem:[#allocation13 + $0x2e0] sm:$0xff]
        %v1222 = vld [vmem:[#allocation13 + $0x2e8] sm:$0xff]
        %v1223 = vld [vmem:[#allocation13 + $0x2f0] sm:$0xff]
        %v1224 = vld [vmem:[#allocation13 + $0x2f8] sm:$0xff]
        %v1225 = vld [vmem:[#allocation13 + $0x300] sm:$0xff]
        %v1226 = vld [vmem:[#allocation13 + $0x308] sm:$0xff]
        %v1227 = vld [vmem:[#allocation13 + $0x310] sm:$0xff]
        %v1228 = vld [vmem:[#allocation13 + $0x318] sm:$0xff]
        %v1229 = vld [vmem:[#allocation13 + $0x320] sm:$0xff]
        %v1230 = vld [vmem:[#allocation13 + $0x328] sm:$0xff]
        %v1231 = vld [vmem:[#allocation13 + $0x330] sm:$0xff]
        %v1232 = vld [vmem:[#allocation13 + $0x338] sm:$0xff]
        %v1233 = vld [vmem:[#allocation13 + $0x340] sm:$0xff]
        %v1234 = vld [vmem:[#allocation13 + $0x348] sm:$0xff]
        %v1235 = vld [vmem:[#allocation13 + $0x350] sm:$0xff]
        %v1236 = vld [vmem:[#allocation13 + $0x358] sm:$0xff]
        %v1237 = vld [vmem:[#allocation13 + $0x360] sm:$0xff]
        %v1238 = vld [vmem:[#allocation13 + $0x368] sm:$0xff]
        %v1239 = vld [vmem:[#allocation13 + $0x370] sm:$0xff]
        %v1240 = vld [vmem:[#allocation13 + $0x378] sm:$0xff]
        %v1241 = vld [vmem:[#allocation13 + $0x380] sm:$0xff]
        %v1242 = vld [vmem:[#allocation13 + $0x388] sm:$0xff]
        %v1243 = vld [vmem:[#allocation13 + $0x390] sm:$0xff]
        %v1244 = vld [vmem:[#allocation13 + $0x398] sm:$0xff]
        %v1245 = vld [vmem:[#allocation13 + $0x3a0] sm:$0xff]
        %v1246 = vld [vmem:[#allocation13 + $0x3a8] sm:$0xff]
        %v1247 = vld [vmem:[#allocation13 + $0x3b0] sm:$0xff]
        %v1248 = vld [vmem:[#allocation13 + $0x3b8] sm:$0xff]
        %v1249 = vld [vmem:[#allocation13 + $0x3c0] sm:$0xff]
        %v1250 = vld [vmem:[#allocation13 + $0x3c8] sm:$0xff]
        %v1251 = vld [vmem:[#allocation13 + $0x3d0] sm:$0xff]
        %v1252 = vld [vmem:[#allocation13 + $0x3d8] sm:$0xff]
        %v1253 = vld [vmem:[#allocation13 + $0x3e0] sm:$0xff]
        %v1254 = vld [vmem:[#allocation13 + $0x3e8] sm:$0xff]
        %v1255 = vld [vmem:[#allocation13 + $0x3f0] sm:$0xff]
        %v1256 = vld [vmem:[#allocation13 + $0x3f8] sm:$0xff]
        %s1257 = scalar_lea.vmem [#allocation11], 8
        %v1258 = vld [vmem:[%s1257] sm:$0xf]
        %v1259 = vld [vmem:[%s1257 + $0x4] sm:$0xf]
        %v1262 = vunpack.c.l.b16 %v1258
        %v1263 = vunpack.c.l.b16 %v1259
        %v1264 = vpack.c.b16 %v1263, %v1262
        %v1266 = vsel %vm826, %v1264, 0
        %1268 = vmatpush.bf16.msra.mxu0 0
        %1269 = vmatpush.bf16.msra.mxu0 0
        %1270 = vmatpush.bf16.msra.mxu0 0
        %1271 = vmatpush.bf16.msra.mxu0 0
        %1272 = vmatpush.bf16.msra.mxu0 0
        %1273 = vmatpush.bf16.msra.mxu0 0
        %1274 = vmatpush.bf16.msra.mxu0 0
        %1275 = vmatpush.bf16.msra.mxu0 %v1055
        %1276 = vmatmul.bf16.gmra.mxu0 %v1266
        %v1277 = vpop.f32.mrf.mxu0
        %v1278 = vadd.f32 0.0, %v1277
        %v1279 = vpop.f32.mrf.mxu0
        %v1280 = vadd.f32 0.0, %v1279
        %1281 = vdwg.mxu0
        %1282 = vmatpush.bf16.msra.mxu0 0
        %1283 = vmatpush.bf16.msra.mxu0 0
        %1284 = vmatpush.bf16.msra.mxu0 0
        %1285 = vmatpush.bf16.msra.mxu0 0
        %1286 = vmatpush.bf16.msra.mxu0 0
        %1287 = vmatpush.bf16.msra.mxu0 0
        %1288 = vmatpush.bf16.msra.mxu0 0
        %1289 = vmatpush.bf16.msra.mxu0 %v1056
        %1290 = vmatmul.bf16.gmra.mxu0 %v1266
        %v1291 = vpop.f32.mrf.mxu0
        %v1292 = vadd.f32 0.0, %v1291
        %v1293 = vpop.f32.mrf.mxu0
        %v1294 = vadd.f32 0.0, %v1293
        %1295 = vdwg.mxu0
        %1296 = vmatpush.bf16.msra.mxu0 0
        %1297 = vmatpush.bf16.msra.mxu0 0
        %1298 = vmatpush.bf16.msra.mxu0 0
        %1299 = vmatpush.bf16.msra.mxu0 0
        %1300 = vmatpush.bf16.msra.mxu0 0
        %1301 = vmatpush.bf16.msra.mxu0 0
        %1302 = vmatpush.bf16.msra.mxu0 0
        %1303 = vmatpush.bf16.msra.mxu0 %v1057
        %1304 = vmatmul.bf16.gmra.mxu0 %v1266
        %v1305 = vpop.f32.mrf.mxu0
        %v1306 = vadd.f32 0.0, %v1305
        %v1307 = vpop.f32.mrf.mxu0
        %v1308 = vadd.f32 0.0, %v1307
        %1309 = vdwg.mxu0
        %1310 = vmatpush.bf16.msra.mxu0 0
        %1311 = vmatpush.bf16.msra.mxu0 0
        %1312 = vmatpush.bf16.msra.mxu0 0
        %1313 = vmatpush.bf16.msra.mxu0 0
        %1314 = vmatpush.bf16.msra.mxu0 0
        %1315 = vmatpush.bf16.msra.mxu0 0
        %1316 = vmatpush.bf16.msra.mxu0 0
        %1317 = vmatpush.bf16.msra.mxu0 %v1058
        %1318 = vmatmul.bf16.gmra.mxu0 %v1266
        %v1319 = vpop.f32.mrf.mxu0
        %v1320 = vadd.f32 0.0, %v1319
        %v1321 = vpop.f32.mrf.mxu0
        %v1322 = vadd.f32 0.0, %v1321
        %1323 = vdwg.mxu0
        %v1324 = vpack.c.bf16 %v1280, %v1278
        %v1325 = vpack.c.bf16 %v1294, %v1292
        %v1326 = vpack.c.bf16 %v1308, %v1306
        %v1327 = vpack.c.bf16 %v1322, %v1320
        %s1328 = scalar_lea.vmem [#allocation13], 1024
        %v1329 = vld [vmem:[%s1328] sm:$0xff]
        %v1330 = vld [vmem:[%s1328 + $0x8] sm:$0xff]
        %v1331 = vld [vmem:[%s1328 + $0x10] sm:$0xff]
        %v1332 = vld [vmem:[%s1328 + $0x18] sm:$0xff]
        %v1333 = vld [vmem:[%s1328 + $0x20] sm:$0xff]
        %v1334 = vld [vmem:[%s1328 + $0x28] sm:$0xff]
        %v1335 = vld [vmem:[%s1328 + $0x30] sm:$0xff]
        %v1336 = vld [vmem:[%s1328 + $0x38] sm:$0xff]
        %v1337 = vld [vmem:[%s1328 + $0x40] sm:$0xff]
        %v1338 = vld [vmem:[%s1328 + $0x48] sm:$0xff]
        %v1339 = vld [vmem:[%s1328 + $0x50] sm:$0xff]
        %v1340 = vld [vmem:[%s1328 + $0x58] sm:$0xff]
        %v1341 = vld [vmem:[%s1328 + $0x60] sm:$0xff]
        %v1342 = vld [vmem:[%s1328 + $0x68] sm:$0xff]
        %v1343 = vld [vmem:[%s1328 + $0x70] sm:$0xff]
        %v1344 = vld [vmem:[%s1328 + $0x78] sm:$0xff]
        %v1345 = vld [vmem:[%s1328 + $0x80] sm:$0xff]
        %v1346 = vld [vmem:[%s1328 + $0x88] sm:$0xff]
        %v1347 = vld [vmem:[%s1328 + $0x90] sm:$0xff]
        %v1348 = vld [vmem:[%s1328 + $0x98] sm:$0xff]
        %v1349 = vld [vmem:[%s1328 + $0xa0] sm:$0xff]
        %v1350 = vld [vmem:[%s1328 + $0xa8] sm:$0xff]
        %v1351 = vld [vmem:[%s1328 + $0xb0] sm:$0xff]
        %v1352 = vld [vmem:[%s1328 + $0xb8] sm:$0xff]
        %v1353 = vld [vmem:[%s1328 + $0xc0] sm:$0xff]
        %v1354 = vld [vmem:[%s1328 + $0xc8] sm:$0xff]
        %v1355 = vld [vmem:[%s1328 + $0xd0] sm:$0xff]
        %v1356 = vld [vmem:[%s1328 + $0xd8] sm:$0xff]
        %v1357 = vld [vmem:[%s1328 + $0xe0] sm:$0xff]
        %v1358 = vld [vmem:[%s1328 + $0xe8] sm:$0xff]
        %v1359 = vld [vmem:[%s1328 + $0xf0] sm:$0xff]
        %v1360 = vld [vmem:[%s1328 + $0xf8] sm:$0xff]
        %v1361 = vld [vmem:[%s1328 + $0x100] sm:$0xff]
        %v1362 = vld [vmem:[%s1328 + $0x108] sm:$0xff]
        %v1363 = vld [vmem:[%s1328 + $0x110] sm:$0xff]
        %v1364 = vld [vmem:[%s1328 + $0x118] sm:$0xff]
        %v1365 = vld [vmem:[%s1328 + $0x120] sm:$0xff]
        %v1366 = vld [vmem:[%s1328 + $0x128] sm:$0xff]
        %v1367 = vld [vmem:[%s1328 + $0x130] sm:$0xff]
        %v1368 = vld [vmem:[%s1328 + $0x138] sm:$0xff]
        %v1369 = vld [vmem:[%s1328 + $0x140] sm:$0xff]
        %v1370 = vld [vmem:[%s1328 + $0x148] sm:$0xff]
        %v1371 = vld [vmem:[%s1328 + $0x150] sm:$0xff]
        %v1372 = vld [vmem:[%s1328 + $0x158] sm:$0xff]
        %v1373 = vld [vmem:[%s1328 + $0x160] sm:$0xff]
        %v1374 = vld [vmem:[%s1328 + $0x168] sm:$0xff]
        %v1375 = vld [vmem:[%s1328 + $0x170] sm:$0xff]
        %v1376 = vld [vmem:[%s1328 + $0x178] sm:$0xff]
        %v1377 = vld [vmem:[%s1328 + $0x180] sm:$0xff]
        %v1378 = vld [vmem:[%s1328 + $0x188] sm:$0xff]
        %v1379 = vld [vmem:[%s1328 + $0x190] sm:$0xff]
        %v1380 = vld [vmem:[%s1328 + $0x198] sm:$0xff]
        %v1381 = vld [vmem:[%s1328 + $0x1a0] sm:$0xff]
        %v1382 = vld [vmem:[%s1328 + $0x1a8] sm:$0xff]
        %v1383 = vld [vmem:[%s1328 + $0x1b0] sm:$0xff]
        %v1384 = vld [vmem:[%s1328 + $0x1b8] sm:$0xff]
        %v1385 = vld [vmem:[%s1328 + $0x1c0] sm:$0xff]
        %v1386 = vld [vmem:[%s1328 + $0x1c8] sm:$0xff]
        %v1387 = vld [vmem:[%s1328 + $0x1d0] sm:$0xff]
        %v1388 = vld [vmem:[%s1328 + $0x1d8] sm:$0xff]
        %v1389 = vld [vmem:[%s1328 + $0x1e0] sm:$0xff]
        %v1390 = vld [vmem:[%s1328 + $0x1e8] sm:$0xff]
        %v1391 = vld [vmem:[%s1328 + $0x1f0] sm:$0xff]
        %v1392 = vld [vmem:[%s1328 + $0x1f8] sm:$0xff]
        %v1393 = vld [vmem:[%s1328 + $0x200] sm:$0xff]
        %v1394 = vld [vmem:[%s1328 + $0x208] sm:$0xff]
        %v1395 = vld [vmem:[%s1328 + $0x210] sm:$0xff]
        %v1396 = vld [vmem:[%s1328 + $0x218] sm:$0xff]
        %v1397 = vld [vmem:[%s1328 + $0x220] sm:$0xff]
        %v1398 = vld [vmem:[%s1328 + $0x228] sm:$0xff]
        %v1399 = vld [vmem:[%s1328 + $0x230] sm:$0xff]
        %v1400 = vld [vmem:[%s1328 + $0x238] sm:$0xff]
        %v1401 = vld [vmem:[%s1328 + $0x240] sm:$0xff]
        %v1402 = vld [vmem:[%s1328 + $0x248] sm:$0xff]
        %v1403 = vld [vmem:[%s1328 + $0x250] sm:$0xff]
        %v1404 = vld [vmem:[%s1328 + $0x258] sm:$0xff]
        %v1405 = vld [vmem:[%s1328 + $0x260] sm:$0xff]
        %v1406 = vld [vmem:[%s1328 + $0x268] sm:$0xff]
        %v1407 = vld [vmem:[%s1328 + $0x270] sm:$0xff]
        %v1408 = vld [vmem:[%s1328 + $0x278] sm:$0xff]
        %v1409 = vld [vmem:[%s1328 + $0x280] sm:$0xff]
        %v1410 = vld [vmem:[%s1328 + $0x288] sm:$0xff]
        %v1411 = vld [vmem:[%s1328 + $0x290] sm:$0xff]
        %v1412 = vld [vmem:[%s1328 + $0x298] sm:$0xff]
        %v1413 = vld [vmem:[%s1328 + $0x2a0] sm:$0xff]
        %v1414 = vld [vmem:[%s1328 + $0x2a8] sm:$0xff]
        %v1415 = vld [vmem:[%s1328 + $0x2b0] sm:$0xff]
        %v1416 = vld [vmem:[%s1328 + $0x2b8] sm:$0xff]
        %v1417 = vld [vmem:[%s1328 + $0x2c0] sm:$0xff]
        %v1418 = vld [vmem:[%s1328 + $0x2c8] sm:$0xff]
        %v1419 = vld [vmem:[%s1328 + $0x2d0] sm:$0xff]
        %v1420 = vld [vmem:[%s1328 + $0x2d8] sm:$0xff]
        %v1421 = vld [vmem:[%s1328 + $0x2e0] sm:$0xff]
        %v1422 = vld [vmem:[%s1328 + $0x2e8] sm:$0xff]
        %v1423 = vld [vmem:[%s1328 + $0x2f0] sm:$0xff]
        %v1424 = vld [vmem:[%s1328 + $0x2f8] sm:$0xff]
        %v1425 = vld [vmem:[%s1328 + $0x300] sm:$0xff]
        %v1426 = vld [vmem:[%s1328 + $0x308] sm:$0xff]
        %v1427 = vld [vmem:[%s1328 + $0x310] sm:$0xff]
        %v1428 = vld [vmem:[%s1328 + $0x318] sm:$0xff]
        %v1429 = vld [vmem:[%s1328 + $0x320] sm:$0xff]
        %v1430 = vld [vmem:[%s1328 + $0x328] sm:$0xff]
        %v1431 = vld [vmem:[%s1328 + $0x330] sm:$0xff]
        %v1432 = vld [vmem:[%s1328 + $0x338] sm:$0xff]
        %v1433 = vld [vmem:[%s1328 + $0x340] sm:$0xff]
        %v1434 = vld [vmem:[%s1328 + $0x348] sm:$0xff]
        %v1435 = vld [vmem:[%s1328 + $0x350] sm:$0xff]
        %v1436 = vld [vmem:[%s1328 + $0x358] sm:$0xff]
        %v1437 = vld [vmem:[%s1328 + $0x360] sm:$0xff]
        %v1438 = vld [vmem:[%s1328 + $0x368] sm:$0xff]
        %v1439 = vld [vmem:[%s1328 + $0x370] sm:$0xff]
        %v1440 = vld [vmem:[%s1328 + $0x378] sm:$0xff]
        %v1441 = vld [vmem:[%s1328 + $0x380] sm:$0xff]
        %v1442 = vld [vmem:[%s1328 + $0x388] sm:$0xff]
        %v1443 = vld [vmem:[%s1328 + $0x390] sm:$0xff]
        %v1444 = vld [vmem:[%s1328 + $0x398] sm:$0xff]
        %v1445 = vld [vmem:[%s1328 + $0x3a0] sm:$0xff]
        %v1446 = vld [vmem:[%s1328 + $0x3a8] sm:$0xff]
        %v1447 = vld [vmem:[%s1328 + $0x3b0] sm:$0xff]
        %v1448 = vld [vmem:[%s1328 + $0x3b8] sm:$0xff]
        %v1449 = vld [vmem:[%s1328 + $0x3c0] sm:$0xff]
        %v1450 = vld [vmem:[%s1328 + $0x3c8] sm:$0xff]
        %v1451 = vld [vmem:[%s1328 + $0x3d0] sm:$0xff]
        %v1452 = vld [vmem:[%s1328 + $0x3d8] sm:$0xff]
        %v1453 = vld [vmem:[%s1328 + $0x3e0] sm:$0xff]
        %v1454 = vld [vmem:[%s1328 + $0x3e8] sm:$0xff]
        %v1455 = vld [vmem:[%s1328 + $0x3f0] sm:$0xff]
        %v1456 = vld [vmem:[%s1328 + $0x3f8] sm:$0xff]
        %v1585 = vunpack.c.l.b16 %v1329
        %v1586 = vunpack.c.h.b16 %v1329
        %v1587 = vunpack.c.l.b16 %v1330
        %v1588 = vunpack.c.h.b16 %v1330
        %v1589 = vunpack.c.l.b16 %v1331
        %v1590 = vunpack.c.h.b16 %v1331
        %v1591 = vunpack.c.l.b16 %v1332
        %v1592 = vunpack.c.h.b16 %v1332
        %v1593 = vunpack.c.l.b16 %v1333
        %v1594 = vunpack.c.h.b16 %v1333
        %v1595 = vunpack.c.l.b16 %v1334
        %v1596 = vunpack.c.h.b16 %v1334
        %v1597 = vunpack.c.l.b16 %v1335
        %v1598 = vunpack.c.h.b16 %v1335
        %v1599 = vunpack.c.l.b16 %v1336
        %v1600 = vunpack.c.h.b16 %v1336
        %v1601 = vunpack.c.l.b16 %v1337
        %v1602 = vunpack.c.h.b16 %v1337
        %v1603 = vunpack.c.l.b16 %v1338
        %v1604 = vunpack.c.h.b16 %v1338
        %v1605 = vunpack.c.l.b16 %v1339
        %v1606 = vunpack.c.h.b16 %v1339
        %v1607 = vunpack.c.l.b16 %v1340
        %v1608 = vunpack.c.h.b16 %v1340
        %v1609 = vunpack.c.l.b16 %v1341
        %v1610 = vunpack.c.h.b16 %v1341
        %v1611 = vunpack.c.l.b16 %v1342
        %v1612 = vunpack.c.h.b16 %v1342
        %v1613 = vunpack.c.l.b16 %v1343
        %v1614 = vunpack.c.h.b16 %v1343
        %v1615 = vunpack.c.l.b16 %v1344
        %v1616 = vunpack.c.h.b16 %v1344
        %v1617 = vunpack.c.l.b16 %v1345
        %v1618 = vunpack.c.h.b16 %v1345
        %v1619 = vunpack.c.l.b16 %v1346
        %v1620 = vunpack.c.h.b16 %v1346
        %v1621 = vunpack.c.l.b16 %v1347
        %v1622 = vunpack.c.h.b16 %v1347
        %v1623 = vunpack.c.l.b16 %v1348
        %v1624 = vunpack.c.h.b16 %v1348
        %v1625 = vunpack.c.l.b16 %v1349
        %v1626 = vunpack.c.h.b16 %v1349
        %v1627 = vunpack.c.l.b16 %v1350
        %v1628 = vunpack.c.h.b16 %v1350
        %v1629 = vunpack.c.l.b16 %v1351
        %v1630 = vunpack.c.h.b16 %v1351
        %v1631 = vunpack.c.l.b16 %v1352
        %v1632 = vunpack.c.h.b16 %v1352
        %v1633 = vunpack.c.l.b16 %v1353
        %v1634 = vunpack.c.h.b16 %v1353
        %v1635 = vunpack.c.l.b16 %v1354
        %v1636 = vunpack.c.h.b16 %v1354
        %v1637 = vunpack.c.l.b16 %v1355
        %v1638 = vunpack.c.h.b16 %v1355
        %v1639 = vunpack.c.l.b16 %v1356
        %v1640 = vunpack.c.h.b16 %v1356
        %v1641 = vunpack.c.l.b16 %v1357
        %v1642 = vunpack.c.h.b16 %v1357
        %v1643 = vunpack.c.l.b16 %v1358
        %v1644 = vunpack.c.h.b16 %v1358
        %v1645 = vunpack.c.l.b16 %v1359
        %v1646 = vunpack.c.h.b16 %v1359
        %v1647 = vunpack.c.l.b16 %v1360
        %v1648 = vunpack.c.h.b16 %v1360
        %v1649 = vunpack.c.l.b16 %v1361
        %v1650 = vunpack.c.h.b16 %v1361
        %v1651 = vunpack.c.l.b16 %v1362
        %v1652 = vunpack.c.h.b16 %v1362
        %v1653 = vunpack.c.l.b16 %v1363
        %v1654 = vunpack.c.h.b16 %v1363
        %v1655 = vunpack.c.l.b16 %v1364
        %v1656 = vunpack.c.h.b16 %v1364
        %v1657 = vunpack.c.l.b16 %v1365
        %v1658 = vunpack.c.h.b16 %v1365
        %v1659 = vunpack.c.l.b16 %v1366
        %v1660 = vunpack.c.h.b16 %v1366
        %v1661 = vunpack.c.l.b16 %v1367
        %v1662 = vunpack.c.h.b16 %v1367
        %v1663 = vunpack.c.l.b16 %v1368
        %v1664 = vunpack.c.h.b16 %v1368
        %v1665 = vunpack.c.l.b16 %v1369
        %v1666 = vunpack.c.h.b16 %v1369
        %v1667 = vunpack.c.l.b16 %v1370
        %v1668 = vunpack.c.h.b16 %v1370
        %v1669 = vunpack.c.l.b16 %v1371
        %v1670 = vunpack.c.h.b16 %v1371
        %v1671 = vunpack.c.l.b16 %v1372
        %v1672 = vunpack.c.h.b16 %v1372
        %v1673 = vunpack.c.l.b16 %v1373
        %v1674 = vunpack.c.h.b16 %v1373
        %v1675 = vunpack.c.l.b16 %v1374
        %v1676 = vunpack.c.h.b16 %v1374
        %v1677 = vunpack.c.l.b16 %v1375
        %v1678 = vunpack.c.h.b16 %v1375
        %v1679 = vunpack.c.l.b16 %v1376
        %v1680 = vunpack.c.h.b16 %v1376
        %v1681 = vunpack.c.l.b16 %v1377
        %v1682 = vunpack.c.h.b16 %v1377
        %v1683 = vunpack.c.l.b16 %v1378
        %v1684 = vunpack.c.h.b16 %v1378
        %v1685 = vunpack.c.l.b16 %v1379
        %v1686 = vunpack.c.h.b16 %v1379
        %v1687 = vunpack.c.l.b16 %v1380
        %v1688 = vunpack.c.h.b16 %v1380
        %v1689 = vunpack.c.l.b16 %v1381
        %v1690 = vunpack.c.h.b16 %v1381
        %v1691 = vunpack.c.l.b16 %v1382
        %v1692 = vunpack.c.h.b16 %v1382
        %v1693 = vunpack.c.l.b16 %v1383
        %v1694 = vunpack.c.h.b16 %v1383
        %v1695 = vunpack.c.l.b16 %v1384
        %v1696 = vunpack.c.h.b16 %v1384
        %v1697 = vunpack.c.l.b16 %v1385
        %v1698 = vunpack.c.h.b16 %v1385
        %v1699 = vunpack.c.l.b16 %v1386
        %v1700 = vunpack.c.h.b16 %v1386
        %v1701 = vunpack.c.l.b16 %v1387
        %v1702 = vunpack.c.h.b16 %v1387
        %v1703 = vunpack.c.l.b16 %v1388
        %v1704 = vunpack.c.h.b16 %v1388
        %v1705 = vunpack.c.l.b16 %v1389
        %v1706 = vunpack.c.h.b16 %v1389
        %v1707 = vunpack.c.l.b16 %v1390
        %v1708 = vunpack.c.h.b16 %v1390
        %v1709 = vunpack.c.l.b16 %v1391
        %v1710 = vunpack.c.h.b16 %v1391
        %v1711 = vunpack.c.l.b16 %v1392
        %v1712 = vunpack.c.h.b16 %v1392
        %v1713 = vunpack.c.l.b16 %v1393
        %v1714 = vunpack.c.h.b16 %v1393
        %v1715 = vunpack.c.l.b16 %v1394
        %v1716 = vunpack.c.h.b16 %v1394
        %v1717 = vunpack.c.l.b16 %v1395
        %v1718 = vunpack.c.h.b16 %v1395
        %v1719 = vunpack.c.l.b16 %v1396
        %v1720 = vunpack.c.h.b16 %v1396
        %v1721 = vunpack.c.l.b16 %v1397
        %v1722 = vunpack.c.h.b16 %v1397
        %v1723 = vunpack.c.l.b16 %v1398
        %v1724 = vunpack.c.h.b16 %v1398
        %v1725 = vunpack.c.l.b16 %v1399
        %v1726 = vunpack.c.h.b16 %v1399
        %v1727 = vunpack.c.l.b16 %v1400
        %v1728 = vunpack.c.h.b16 %v1400
        %v1729 = vunpack.c.l.b16 %v1401
        %v1730 = vunpack.c.h.b16 %v1401
        %v1731 = vunpack.c.l.b16 %v1402
        %v1732 = vunpack.c.h.b16 %v1402
        %v1733 = vunpack.c.l.b16 %v1403
        %v1734 = vunpack.c.h.b16 %v1403
        %v1735 = vunpack.c.l.b16 %v1404
        %v1736 = vunpack.c.h.b16 %v1404
        %v1737 = vunpack.c.l.b16 %v1405
        %v1738 = vunpack.c.h.b16 %v1405
        %v1739 = vunpack.c.l.b16 %v1406
        %v1740 = vunpack.c.h.b16 %v1406
        %v1741 = vunpack.c.l.b16 %v1407
        %v1742 = vunpack.c.h.b16 %v1407
        %v1743 = vunpack.c.l.b16 %v1408
        %v1744 = vunpack.c.h.b16 %v1408
        %v1745 = vunpack.c.l.b16 %v1409
        %v1746 = vunpack.c.h.b16 %v1409
        %v1747 = vunpack.c.l.b16 %v1410
        %v1748 = vunpack.c.h.b16 %v1410
        %v1749 = vunpack.c.l.b16 %v1411
        %v1750 = vunpack.c.h.b16 %v1411
        %v1751 = vunpack.c.l.b16 %v1412
        %v1752 = vunpack.c.h.b16 %v1412
        %v1753 = vunpack.c.l.b16 %v1413
        %v1754 = vunpack.c.h.b16 %v1413
        %v1755 = vunpack.c.l.b16 %v1414
        %v1756 = vunpack.c.h.b16 %v1414
        %v1757 = vunpack.c.l.b16 %v1415
        %v1758 = vunpack.c.h.b16 %v1415
        %v1759 = vunpack.c.l.b16 %v1416
        %v1760 = vunpack.c.h.b16 %v1416
        %v1761 = vunpack.c.l.b16 %v1417
        %v1762 = vunpack.c.h.b16 %v1417
        %v1763 = vunpack.c.l.b16 %v1418
        %v1764 = vunpack.c.h.b16 %v1418
        %v1765 = vunpack.c.l.b16 %v1419
        %v1766 = vunpack.c.h.b16 %v1419
        %v1767 = vunpack.c.l.b16 %v1420
        %v1768 = vunpack.c.h.b16 %v1420
        %v1769 = vunpack.c.l.b16 %v1421
        %v1770 = vunpack.c.h.b16 %v1421
        %v1771 = vunpack.c.l.b16 %v1422
        %v1772 = vunpack.c.h.b16 %v1422
        %v1773 = vunpack.c.l.b16 %v1423
        %v1774 = vunpack.c.h.b16 %v1423
        %v1775 = vunpack.c.l.b16 %v1424
        %v1776 = vunpack.c.h.b16 %v1424
        %v1777 = vunpack.c.l.b16 %v1425
        %v1778 = vunpack.c.h.b16 %v1425
        %v1779 = vunpack.c.l.b16 %v1426
        %v1780 = vunpack.c.h.b16 %v1426
        %v1781 = vunpack.c.l.b16 %v1427
        %v1782 = vunpack.c.h.b16 %v1427
        %v1783 = vunpack.c.l.b16 %v1428
        %v1784 = vunpack.c.h.b16 %v1428
        %v1785 = vunpack.c.l.b16 %v1429
        %v1786 = vunpack.c.h.b16 %v1429
        %v1787 = vunpack.c.l.b16 %v1430
        %v1788 = vunpack.c.h.b16 %v1430
        %v1789 = vunpack.c.l.b16 %v1431
        %v1790 = vunpack.c.h.b16 %v1431
        %v1791 = vunpack.c.l.b16 %v1432
        %v1792 = vunpack.c.h.b16 %v1432
        %v1793 = vunpack.c.l.b16 %v1433
        %v1794 = vunpack.c.h.b16 %v1433
        %v1795 = vunpack.c.l.b16 %v1434
        %v1796 = vunpack.c.h.b16 %v1434
        %v1797 = vunpack.c.l.b16 %v1435
        %v1798 = vunpack.c.h.b16 %v1435
        %v1799 = vunpack.c.l.b16 %v1436
        %v1800 = vunpack.c.h.b16 %v1436
        %v1801 = vunpack.c.l.b16 %v1437
        %v1802 = vunpack.c.h.b16 %v1437
        %v1803 = vunpack.c.l.b16 %v1438
        %v1804 = vunpack.c.h.b16 %v1438
        %v1805 = vunpack.c.l.b16 %v1439
        %v1806 = vunpack.c.h.b16 %v1439
        %v1807 = vunpack.c.l.b16 %v1440
        %v1808 = vunpack.c.h.b16 %v1440
        %v1809 = vunpack.c.l.b16 %v1441
        %v1810 = vunpack.c.h.b16 %v1441
        %v1811 = vunpack.c.l.b16 %v1442
        %v1812 = vunpack.c.h.b16 %v1442
        %v1813 = vunpack.c.l.b16 %v1443
        %v1814 = vunpack.c.h.b16 %v1443
        %v1815 = vunpack.c.l.b16 %v1444
        %v1816 = vunpack.c.h.b16 %v1444
        %v1817 = vunpack.c.l.b16 %v1445
        %v1818 = vunpack.c.h.b16 %v1445
        %v1819 = vunpack.c.l.b16 %v1446
        %v1820 = vunpack.c.h.b16 %v1446
        %v1821 = vunpack.c.l.b16 %v1447
        %v1822 = vunpack.c.h.b16 %v1447
        %v1823 = vunpack.c.l.b16 %v1448
        %v1824 = vunpack.c.h.b16 %v1448
        %v1825 = vunpack.c.l.b16 %v1449
        %v1826 = vunpack.c.h.b16 %v1449
        %v1827 = vunpack.c.l.b16 %v1450
        %v1828 = vunpack.c.h.b16 %v1450
        %v1829 = vunpack.c.l.b16 %v1451
        %v1830 = vunpack.c.h.b16 %v1451
        %v1831 = vunpack.c.l.b16 %v1452
        %v1832 = vunpack.c.h.b16 %v1452
        %v1833 = vunpack.c.l.b16 %v1453
        %v1834 = vunpack.c.h.b16 %v1453
        %v1835 = vunpack.c.l.b16 %v1454
        %v1836 = vunpack.c.h.b16 %v1454
        %v1837 = vunpack.c.l.b16 %v1455
        %v1838 = vunpack.c.h.b16 %v1455
        %v1839 = vunpack.c.l.b16 %v1456
        %v1840 = vunpack.c.h.b16 %v1456
        %v1841 = vpack.c.b16 %v1589, %v1585
        %v1842 = vpack.c.b16 %v1590, %v1586
        %v1843 = vpack.c.b16 %v1591, %v1587
        %v1844 = vpack.c.b16 %v1592, %v1588
        %v1845 = vpack.c.b16 %v1597, %v1593
        %v1846 = vpack.c.b16 %v1598, %v1594
        %v1847 = vpack.c.b16 %v1599, %v1595
        %v1848 = vpack.c.b16 %v1600, %v1596
        %v1849 = vpack.c.b16 %v1605, %v1601
        %v1850 = vpack.c.b16 %v1606, %v1602
        %v1851 = vpack.c.b16 %v1607, %v1603
        %v1852 = vpack.c.b16 %v1608, %v1604
        %v1853 = vpack.c.b16 %v1613, %v1609
        %v1854 = vpack.c.b16 %v1614, %v1610
        %v1855 = vpack.c.b16 %v1615, %v1611
        %v1856 = vpack.c.b16 %v1616, %v1612
        %v1857 = vpack.c.b16 %v1621, %v1617
        %v1858 = vpack.c.b16 %v1622, %v1618
        %v1859 = vpack.c.b16 %v1623, %v1619
        %v1860 = vpack.c.b16 %v1624, %v1620
        %v1861 = vpack.c.b16 %v1629, %v1625
        %v1862 = vpack.c.b16 %v1630, %v1626
        %v1863 = vpack.c.b16 %v1631, %v1627
        %v1864 = vpack.c.b16 %v1632, %v1628
        %v1865 = vpack.c.b16 %v1637, %v1633
        %v1866 = vpack.c.b16 %v1638, %v1634
        %v1867 = vpack.c.b16 %v1639, %v1635
        %v1868 = vpack.c.b16 %v1640, %v1636
        %v1869 = vpack.c.b16 %v1645, %v1641
        %v1870 = vpack.c.b16 %v1646, %v1642
        %v1871 = vpack.c.b16 %v1647, %v1643
        %v1872 = vpack.c.b16 %v1648, %v1644
        %v1873 = vpack.c.b16 %v1653, %v1649
        %v1874 = vpack.c.b16 %v1654, %v1650
        %v1875 = vpack.c.b16 %v1655, %v1651
        %v1876 = vpack.c.b16 %v1656, %v1652
        %v1877 = vpack.c.b16 %v1661, %v1657
        %v1878 = vpack.c.b16 %v1662, %v1658
        %v1879 = vpack.c.b16 %v1663, %v1659
        %v1880 = vpack.c.b16 %v1664, %v1660
        %v1881 = vpack.c.b16 %v1669, %v1665
        %v1882 = vpack.c.b16 %v1670, %v1666
        %v1883 = vpack.c.b16 %v1671, %v1667
        %v1884 = vpack.c.b16 %v1672, %v1668
        %v1885 = vpack.c.b16 %v1677, %v1673
        %v1886 = vpack.c.b16 %v1678, %v1674
        %v1887 = vpack.c.b16 %v1679, %v1675
        %v1888 = vpack.c.b16 %v1680, %v1676
        %v1889 = vpack.c.b16 %v1685, %v1681
        %v1890 = vpack.c.b16 %v1686, %v1682
        %v1891 = vpack.c.b16 %v1687, %v1683
        %v1892 = vpack.c.b16 %v1688, %v1684
        %v1893 = vpack.c.b16 %v1693, %v1689
        %v1894 = vpack.c.b16 %v1694, %v1690
        %v1895 = vpack.c.b16 %v1695, %v1691
        %v1896 = vpack.c.b16 %v1696, %v1692
        %v1897 = vpack.c.b16 %v1701, %v1697
        %v1898 = vpack.c.b16 %v1702, %v1698
        %v1899 = vpack.c.b16 %v1703, %v1699
        %v1900 = vpack.c.b16 %v1704, %v1700
        %v1901 = vpack.c.b16 %v1709, %v1705
        %v1902 = vpack.c.b16 %v1710, %v1706
        %v1903 = vpack.c.b16 %v1711, %v1707
        %v1904 = vpack.c.b16 %v1712, %v1708
        %v1905 = vpack.c.b16 %v1717, %v1713
        %v1906 = vpack.c.b16 %v1718, %v1714
        %v1907 = vpack.c.b16 %v1719, %v1715
        %v1908 = vpack.c.b16 %v1720, %v1716
        %v1909 = vpack.c.b16 %v1725, %v1721
        %v1910 = vpack.c.b16 %v1726, %v1722
        %v1911 = vpack.c.b16 %v1727, %v1723
        %v1912 = vpack.c.b16 %v1728, %v1724
        %v1913 = vpack.c.b16 %v1733, %v1729
        %v1914 = vpack.c.b16 %v1734, %v1730
        %v1915 = vpack.c.b16 %v1735, %v1731
        %v1916 = vpack.c.b16 %v1736, %v1732
        %v1917 = vpack.c.b16 %v1741, %v1737
        %v1918 = vpack.c.b16 %v1742, %v1738
        %v1919 = vpack.c.b16 %v1743, %v1739
        %v1920 = vpack.c.b16 %v1744, %v1740
        %v1921 = vpack.c.b16 %v1749, %v1745
        %v1922 = vpack.c.b16 %v1750, %v1746
        %v1923 = vpack.c.b16 %v1751, %v1747
        %v1924 = vpack.c.b16 %v1752, %v1748
        %v1925 = vpack.c.b16 %v1757, %v1753
        %v1926 = vpack.c.b16 %v1758, %v1754
        %v1927 = vpack.c.b16 %v1759, %v1755
        %v1928 = vpack.c.b16 %v1760, %v1756
        %v1929 = vpack.c.b16 %v1765, %v1761
        %v1930 = vpack.c.b16 %v1766, %v1762
        %v1931 = vpack.c.b16 %v1767, %v1763
        %v1932 = vpack.c.b16 %v1768, %v1764
        %v1933 = vpack.c.b16 %v1773, %v1769
        %v1934 = vpack.c.b16 %v1774, %v1770
        %v1935 = vpack.c.b16 %v1775, %v1771
        %v1936 = vpack.c.b16 %v1776, %v1772
        %v1937 = vpack.c.b16 %v1781, %v1777
        %v1938 = vpack.c.b16 %v1782, %v1778
        %v1939 = vpack.c.b16 %v1783, %v1779
        %v1940 = vpack.c.b16 %v1784, %v1780
        %v1941 = vpack.c.b16 %v1789, %v1785
        %v1942 = vpack.c.b16 %v1790, %v1786
        %v1943 = vpack.c.b16 %v1791, %v1787
        %v1944 = vpack.c.b16 %v1792, %v1788
        %v1945 = vpack.c.b16 %v1797, %v1793
        %v1946 = vpack.c.b16 %v1798, %v1794
        %v1947 = vpack.c.b16 %v1799, %v1795
        %v1948 = vpack.c.b16 %v1800, %v1796
        %v1949 = vpack.c.b16 %v1805, %v1801
        %v1950 = vpack.c.b16 %v1806, %v1802
        %v1951 = vpack.c.b16 %v1807, %v1803
        %v1952 = vpack.c.b16 %v1808, %v1804
        %v1953 = vpack.c.b16 %v1813, %v1809
        %v1954 = vpack.c.b16 %v1814, %v1810
        %v1955 = vpack.c.b16 %v1815, %v1811
        %v1956 = vpack.c.b16 %v1816, %v1812
        %v1957 = vpack.c.b16 %v1821, %v1817
        %v1958 = vpack.c.b16 %v1822, %v1818
        %v1959 = vpack.c.b16 %v1823, %v1819
        %v1960 = vpack.c.b16 %v1824, %v1820
        %v1961 = vpack.c.b16 %v1829, %v1825
        %v1962 = vpack.c.b16 %v1830, %v1826
        %v1963 = vpack.c.b16 %v1831, %v1827
        %v1964 = vpack.c.b16 %v1832, %v1828
        %v1965 = vpack.c.b16 %v1837, %v1833
        %v1966 = vpack.c.b16 %v1838, %v1834
        %v1967 = vpack.c.b16 %v1839, %v1835
        %v1968 = vpack.c.b16 %v1840, %v1836
        %2097 = vmatpush.bf16.msra.mxu0 %v1869
        %2098 = vmatpush.bf16.msra.mxu0 %v1865
        %2099 = vmatpush.bf16.msra.mxu0 %v1861
        %2100 = vmatpush.bf16.msra.mxu0 %v1857
        %2101 = vmatpush.bf16.msra.mxu0 %v1853
        %2102 = vmatpush.bf16.msra.mxu0 %v1849
        %2103 = vmatpush.bf16.msra.mxu0 %v1845
        %2104 = vmatpush.bf16.msra.mxu0 %v1841
        %2105 = vmatmul.bf16.gmra.mxu0 %v1324
        %v2106 = vpop.f32.mrf.mxu0
        %v2107 = vadd.f32 0.0, %v2106
        %v2108 = vpop.f32.mrf.mxu0
        %v2109 = vadd.f32 0.0, %v2108
        %2110 = vdwg.mxu0
        %2111 = vmatpush.bf16.msra.mxu0 %v1901
        %2112 = vmatpush.bf16.msra.mxu0 %v1897
        %2113 = vmatpush.bf16.msra.mxu0 %v1893
        %2114 = vmatpush.bf16.msra.mxu0 %v1889
        %2115 = vmatpush.bf16.msra.mxu0 %v1885
        %2116 = vmatpush.bf16.msra.mxu0 %v1881
        %2117 = vmatpush.bf16.msra.mxu0 %v1877
        %2118 = vmatpush.bf16.msra.mxu0 %v1873
        %2119 = vmatmul.bf16.gmra.mxu0 %v1325
        %v2120 = vpop.f32.mrf.mxu0
        %v2121 = vadd.f32 %v2107, %v2120
        %v2122 = vpop.f32.mrf.mxu0
        %v2123 = vadd.f32 %v2109, %v2122
        %2124 = vdwg.mxu0
        %2125 = vmatpush.bf16.msra.mxu0 %v1933
        %2126 = vmatpush.bf16.msra.mxu0 %v1929
        %2127 = vmatpush.bf16.msra.mxu0 %v1925
        %2128 = vmatpush.bf16.msra.mxu0 %v1921
        %2129 = vmatpush.bf16.msra.mxu0 %v1917
        %2130 = vmatpush.bf16.msra.mxu0 %v1913
        %2131 = vmatpush.bf16.msra.mxu0 %v1909
        %2132 = vmatpush.bf16.msra.mxu0 %v1905
        %2133 = vmatmul.bf16.gmra.mxu0 %v1326
        %v2134 = vpop.f32.mrf.mxu0
        %v2135 = vadd.f32 %v2121, %v2134
        %v2136 = vpop.f32.mrf.mxu0
        %v2137 = vadd.f32 %v2123, %v2136
        %2138 = vdwg.mxu0
        %2139 = vmatpush.bf16.msra.mxu0 %v1965
        %2140 = vmatpush.bf16.msra.mxu0 %v1961
        %2141 = vmatpush.bf16.msra.mxu0 %v1957
        %2142 = vmatpush.bf16.msra.mxu0 %v1953
        %2143 = vmatpush.bf16.msra.mxu0 %v1949
        %2144 = vmatpush.bf16.msra.mxu0 %v1945
        %2145 = vmatpush.bf16.msra.mxu0 %v1941
        %2146 = vmatpush.bf16.msra.mxu0 %v1937
        %2147 = vmatmul.bf16.gmra.mxu0 %v1327
        %v2148 = vpop.f32.mrf.mxu0
        %v2149 = vadd.f32 %v2135, %v2148
        %v2150 = vpop.f32.mrf.mxu0
        %v2151 = vadd.f32 %v2137, %v2150
        %2152 = vdwg.mxu0
        %2153 = vmatpush.bf16.msra.mxu0 %v1870
        %2154 = vmatpush.bf16.msra.mxu0 %v1866
        %2155 = vmatpush.bf16.msra.mxu0 %v1862
        %2156 = vmatpush.bf16.msra.mxu0 %v1858
        %2157 = vmatpush.bf16.msra.mxu0 %v1854
        %2158 = vmatpush.bf16.msra.mxu0 %v1850
        %2159 = vmatpush.bf16.msra.mxu0 %v1846
        %2160 = vmatpush.bf16.msra.mxu0 %v1842
        %2161 = vmatmul.bf16.gmra.mxu0 %v1324
        %v2162 = vpop.f32.mrf.mxu0
        %v2163 = vadd.f32 0.0, %v2162
        %v2164 = vpop.f32.mrf.mxu0
        %v2165 = vadd.f32 0.0, %v2164
        %2166 = vdwg.mxu0
        %2167 = vmatpush.bf16.msra.mxu0 %v1902
        %2168 = vmatpush.bf16.msra.mxu0 %v1898
        %2169 = vmatpush.bf16.msra.mxu0 %v1894
        %2170 = vmatpush.bf16.msra.mxu0 %v1890
        %2171 = vmatpush.bf16.msra.mxu0 %v1886
        %2172 = vmatpush.bf16.msra.mxu0 %v1882
        %2173 = vmatpush.bf16.msra.mxu0 %v1878
        %2174 = vmatpush.bf16.msra.mxu0 %v1874
        %2175 = vmatmul.bf16.gmra.mxu0 %v1325
        %v2176 = vpop.f32.mrf.mxu0
        %v2177 = vadd.f32 %v2163, %v2176
        %v2178 = vpop.f32.mrf.mxu0
        %v2179 = vadd.f32 %v2165, %v2178
        %2180 = vdwg.mxu0
        %2181 = vmatpush.bf16.msra.mxu0 %v1934
        %2182 = vmatpush.bf16.msra.mxu0 %v1930
        %2183 = vmatpush.bf16.msra.mxu0 %v1926
        %2184 = vmatpush.bf16.msra.mxu0 %v1922
        %2185 = vmatpush.bf16.msra.mxu0 %v1918
        %2186 = vmatpush.bf16.msra.mxu0 %v1914
        %2187 = vmatpush.bf16.msra.mxu0 %v1910
        %2188 = vmatpush.bf16.msra.mxu0 %v1906
        %2189 = vmatmul.bf16.gmra.mxu0 %v1326
        %v2190 = vpop.f32.mrf.mxu0
        %v2191 = vadd.f32 %v2177, %v2190
        %v2192 = vpop.f32.mrf.mxu0
        %v2193 = vadd.f32 %v2179, %v2192
        %2194 = vdwg.mxu0
        %2195 = vmatpush.bf16.msra.mxu0 %v1966
        %2196 = vmatpush.bf16.msra.mxu0 %v1962
        %2197 = vmatpush.bf16.msra.mxu0 %v1958
        %2198 = vmatpush.bf16.msra.mxu0 %v1954
        %2199 = vmatpush.bf16.msra.mxu0 %v1950
        %2200 = vmatpush.bf16.msra.mxu0 %v1946
        %2201 = vmatpush.bf16.msra.mxu0 %v1942
        %2202 = vmatpush.bf16.msra.mxu0 %v1938
        %2203 = vmatmul.bf16.gmra.mxu0 %v1327
        %v2204 = vpop.f32.mrf.mxu0
        %v2205 = vadd.f32 %v2191, %v2204
        %v2206 = vpop.f32.mrf.mxu0
        %v2207 = vadd.f32 %v2193, %v2206
        %2208 = vdwg.mxu0
        %2209 = vmatpush.bf16.msra.mxu0 %v1871
        %2210 = vmatpush.bf16.msra.mxu0 %v1867
        %2211 = vmatpush.bf16.msra.mxu0 %v1863
        %2212 = vmatpush.bf16.msra.mxu0 %v1859
        %2213 = vmatpush.bf16.msra.mxu0 %v1855
        %2214 = vmatpush.bf16.msra.mxu0 %v1851
        %2215 = vmatpush.bf16.msra.mxu0 %v1847
        %2216 = vmatpush.bf16.msra.mxu0 %v1843
        %2217 = vmatmul.bf16.gmra.mxu0 %v1324
        %v2218 = vpop.f32.mrf.mxu0
        %v2219 = vadd.f32 0.0, %v2218
        %v2220 = vpop.f32.mrf.mxu0
        %v2221 = vadd.f32 0.0, %v2220
        %2222 = vdwg.mxu0
        %2223 = vmatpush.bf16.msra.mxu0 %v1903
        %2224 = vmatpush.bf16.msra.mxu0 %v1899
        %2225 = vmatpush.bf16.msra.mxu0 %v1895
        %2226 = vmatpush.bf16.msra.mxu0 %v1891
        %2227 = vmatpush.bf16.msra.mxu0 %v1887
        %2228 = vmatpush.bf16.msra.mxu0 %v1883
        %2229 = vmatpush.bf16.msra.mxu0 %v1879
        %2230 = vmatpush.bf16.msra.mxu0 %v1875
        %2231 = vmatmul.bf16.gmra.mxu0 %v1325
        %v2232 = vpop.f32.mrf.mxu0
        %v2233 = vadd.f32 %v2219, %v2232
        %v2234 = vpop.f32.mrf.mxu0
        %v2235 = vadd.f32 %v2221, %v2234
        %2236 = vdwg.mxu0
        %2237 = vmatpush.bf16.msra.mxu0 %v1935
        %2238 = vmatpush.bf16.msra.mxu0 %v1931
        %2239 = vmatpush.bf16.msra.mxu0 %v1927
        %2240 = vmatpush.bf16.msra.mxu0 %v1923
        %2241 = vmatpush.bf16.msra.mxu0 %v1919
        %2242 = vmatpush.bf16.msra.mxu0 %v1915
        %2243 = vmatpush.bf16.msra.mxu0 %v1911
        %2244 = vmatpush.bf16.msra.mxu0 %v1907
        %2245 = vmatmul.bf16.gmra.mxu0 %v1326
        %v2246 = vpop.f32.mrf.mxu0
        %v2247 = vadd.f32 %v2233, %v2246
        %v2248 = vpop.f32.mrf.mxu0
        %v2249 = vadd.f32 %v2235, %v2248
        %2250 = vdwg.mxu0
        %2251 = vmatpush.bf16.msra.mxu0 %v1967
        %2252 = vmatpush.bf16.msra.mxu0 %v1963
        %2253 = vmatpush.bf16.msra.mxu0 %v1959
        %2254 = vmatpush.bf16.msra.mxu0 %v1955
        %2255 = vmatpush.bf16.msra.mxu0 %v1951
        %2256 = vmatpush.bf16.msra.mxu0 %v1947
        %2257 = vmatpush.bf16.msra.mxu0 %v1943
        %2258 = vmatpush.bf16.msra.mxu0 %v1939
        %2259 = vmatmul.bf16.gmra.mxu0 %v1327
        %v2260 = vpop.f32.mrf.mxu0
        %v2261 = vadd.f32 %v2247, %v2260
        %v2262 = vpop.f32.mrf.mxu0
        %v2263 = vadd.f32 %v2249, %v2262
        %2264 = vdwg.mxu0
        %2265 = vmatpush.bf16.msra.mxu0 %v1872
        %2266 = vmatpush.bf16.msra.mxu0 %v1868
        %2267 = vmatpush.bf16.msra.mxu0 %v1864
        %2268 = vmatpush.bf16.msra.mxu0 %v1860
        %2269 = vmatpush.bf16.msra.mxu0 %v1856
        %2270 = vmatpush.bf16.msra.mxu0 %v1852
        %2271 = vmatpush.bf16.msra.mxu0 %v1848
        %2272 = vmatpush.bf16.msra.mxu0 %v1844
        %2273 = vmatmul.bf16.gmra.mxu0 %v1324
        %v2274 = vpop.f32.mrf.mxu0
        %v2275 = vadd.f32 0.0, %v2274
        %v2276 = vpop.f32.mrf.mxu0
        %v2277 = vadd.f32 0.0, %v2276
        %2278 = vdwg.mxu0
        %2279 = vmatpush.bf16.msra.mxu0 %v1904
        %2280 = vmatpush.bf16.msra.mxu0 %v1900
        %2281 = vmatpush.bf16.msra.mxu0 %v1896
        %2282 = vmatpush.bf16.msra.mxu0 %v1892
        %2283 = vmatpush.bf16.msra.mxu0 %v1888
        %2284 = vmatpush.bf16.msra.mxu0 %v1884
        %2285 = vmatpush.bf16.msra.mxu0 %v1880
        %2286 = vmatpush.bf16.msra.mxu0 %v1876
        %2287 = vmatmul.bf16.gmra.mxu0 %v1325
        %v2288 = vpop.f32.mrf.mxu0
        %v2289 = vadd.f32 %v2275, %v2288
        %v2290 = vpop.f32.mrf.mxu0
        %v2291 = vadd.f32 %v2277, %v2290
        %2292 = vdwg.mxu0
        %2293 = vmatpush.bf16.msra.mxu0 %v1936
        %2294 = vmatpush.bf16.msra.mxu0 %v1932
        %2295 = vmatpush.bf16.msra.mxu0 %v1928
        %2296 = vmatpush.bf16.msra.mxu0 %v1924
        %2297 = vmatpush.bf16.msra.mxu0 %v1920
        %2298 = vmatpush.bf16.msra.mxu0 %v1916
        %2299 = vmatpush.bf16.msra.mxu0 %v1912
        %2300 = vmatpush.bf16.msra.mxu0 %v1908
        %2301 = vmatmul.bf16.gmra.mxu0 %v1326
        %v2302 = vpop.f32.mrf.mxu0
        %v2303 = vadd.f32 %v2289, %v2302
        %v2304 = vpop.f32.mrf.mxu0
        %v2305 = vadd.f32 %v2291, %v2304
        %2306 = vdwg.mxu0
        %2307 = vmatpush.bf16.msra.mxu0 %v1968
        %2308 = vmatpush.bf16.msra.mxu0 %v1964
        %2309 = vmatpush.bf16.msra.mxu0 %v1960
        %2310 = vmatpush.bf16.msra.mxu0 %v1956
        %2311 = vmatpush.bf16.msra.mxu0 %v1952
        %2312 = vmatpush.bf16.msra.mxu0 %v1948
        %2313 = vmatpush.bf16.msra.mxu0 %v1944
        %2314 = vmatpush.bf16.msra.mxu0 %v1940
        %2315 = vmatmul.bf16.gmra.mxu0 %v1327
        %v2316 = vpop.f32.mrf.mxu0
        %v2317 = vadd.f32 %v2303, %v2316
        %v2318 = vpop.f32.mrf.mxu0
        %v2319 = vadd.f32 %v2305, %v2318
        %2320 = vdwg.mxu0
        %v2449 = vunpack.c.l.b16 %v1129
        %v2450 = vunpack.c.h.b16 %v1129
        %v2451 = vunpack.c.l.b16 %v1130
        %v2452 = vunpack.c.h.b16 %v1130
        %v2453 = vunpack.c.l.b16 %v1131
        %v2454 = vunpack.c.h.b16 %v1131
        %v2455 = vunpack.c.l.b16 %v1132
        %v2456 = vunpack.c.h.b16 %v1132
        %v2457 = vunpack.c.l.b16 %v1133
        %v2458 = vunpack.c.h.b16 %v1133
        %v2459 = vunpack.c.l.b16 %v1134
        %v2460 = vunpack.c.h.b16 %v1134
        %v2461 = vunpack.c.l.b16 %v1135
        %v2462 = vunpack.c.h.b16 %v1135
        %v2463 = vunpack.c.l.b16 %v1136
        %v2464 = vunpack.c.h.b16 %v1136
        %v2465 = vunpack.c.l.b16 %v1137
        %v2466 = vunpack.c.h.b16 %v1137
        %v2467 = vunpack.c.l.b16 %v1138
        %v2468 = vunpack.c.h.b16 %v1138
        %v2469 = vunpack.c.l.b16 %v1139
        %v2470 = vunpack.c.h.b16 %v1139
        %v2471 = vunpack.c.l.b16 %v1140
        %v2472 = vunpack.c.h.b16 %v1140
        %v2473 = vunpack.c.l.b16 %v1141
        %v2474 = vunpack.c.h.b16 %v1141
        %v2475 = vunpack.c.l.b16 %v1142
        %v2476 = vunpack.c.h.b16 %v1142
        %v2477 = vunpack.c.l.b16 %v1143
        %v2478 = vunpack.c.h.b16 %v1143
        %v2479 = vunpack.c.l.b16 %v1144
        %v2480 = vunpack.c.h.b16 %v1144
        %v2481 = vunpack.c.l.b16 %v1145
        %v2482 = vunpack.c.h.b16 %v1145
        %v2483 = vunpack.c.l.b16 %v1146
        %v2484 = vunpack.c.h.b16 %v1146
        %v2485 = vunpack.c.l.b16 %v1147
        %v2486 = vunpack.c.h.b16 %v1147
        %v2487 = vunpack.c.l.b16 %v1148
        %v2488 = vunpack.c.h.b16 %v1148
        %v2489 = vunpack.c.l.b16 %v1149
        %v2490 = vunpack.c.h.b16 %v1149
        %v2491 = vunpack.c.l.b16 %v1150
        %v2492 = vunpack.c.h.b16 %v1150
        %v2493 = vunpack.c.l.b16 %v1151
        %v2494 = vunpack.c.h.b16 %v1151
        %v2495 = vunpack.c.l.b16 %v1152
        %v2496 = vunpack.c.h.b16 %v1152
        %v2497 = vunpack.c.l.b16 %v1153
        %v2498 = vunpack.c.h.b16 %v1153
        %v2499 = vunpack.c.l.b16 %v1154
        %v2500 = vunpack.c.h.b16 %v1154
        %v2501 = vunpack.c.l.b16 %v1155
        %v2502 = vunpack.c.h.b16 %v1155
        %v2503 = vunpack.c.l.b16 %v1156
        %v2504 = vunpack.c.h.b16 %v1156
        %v2505 = vunpack.c.l.b16 %v1157
        %v2506 = vunpack.c.h.b16 %v1157
        %v2507 = vunpack.c.l.b16 %v1158
        %v2508 = vunpack.c.h.b16 %v1158
        %v2509 = vunpack.c.l.b16 %v1159
        %v2510 = vunpack.c.h.b16 %v1159
        %v2511 = vunpack.c.l.b16 %v1160
        %v2512 = vunpack.c.h.b16 %v1160
        %v2513 = vunpack.c.l.b16 %v1161
        %v2514 = vunpack.c.h.b16 %v1161
        %v2515 = vunpack.c.l.b16 %v1162
        %v2516 = vunpack.c.h.b16 %v1162
        %v2517 = vunpack.c.l.b16 %v1163
        %v2518 = vunpack.c.h.b16 %v1163
        %v2519 = vunpack.c.l.b16 %v1164
        %v2520 = vunpack.c.h.b16 %v1164
        %v2521 = vunpack.c.l.b16 %v1165
        %v2522 = vunpack.c.h.b16 %v1165
        %v2523 = vunpack.c.l.b16 %v1166
        %v2524 = vunpack.c.h.b16 %v1166
        %v2525 = vunpack.c.l.b16 %v1167
        %v2526 = vunpack.c.h.b16 %v1167
        %v2527 = vunpack.c.l.b16 %v1168
        %v2528 = vunpack.c.h.b16 %v1168
        %v2529 = vunpack.c.l.b16 %v1169
        %v2530 = vunpack.c.h.b16 %v1169
        %v2531 = vunpack.c.l.b16 %v1170
        %v2532 = vunpack.c.h.b16 %v1170
        %v2533 = vunpack.c.l.b16 %v1171
        %v2534 = vunpack.c.h.b16 %v1171
        %v2535 = vunpack.c.l.b16 %v1172
        %v2536 = vunpack.c.h.b16 %v1172
        %v2537 = vunpack.c.l.b16 %v1173
        %v2538 = vunpack.c.h.b16 %v1173
        %v2539 = vunpack.c.l.b16 %v1174
        %v2540 = vunpack.c.h.b16 %v1174
        %v2541 = vunpack.c.l.b16 %v1175
        %v2542 = vunpack.c.h.b16 %v1175
        %v2543 = vunpack.c.l.b16 %v1176
        %v2544 = vunpack.c.h.b16 %v1176
        %v2545 = vunpack.c.l.b16 %v1177
        %v2546 = vunpack.c.h.b16 %v1177
        %v2547 = vunpack.c.l.b16 %v1178
        %v2548 = vunpack.c.h.b16 %v1178
        %v2549 = vunpack.c.l.b16 %v1179
        %v2550 = vunpack.c.h.b16 %v1179
        %v2551 = vunpack.c.l.b16 %v1180
        %v2552 = vunpack.c.h.b16 %v1180
        %v2553 = vunpack.c.l.b16 %v1181
        %v2554 = vunpack.c.h.b16 %v1181
        %v2555 = vunpack.c.l.b16 %v1182
        %v2556 = vunpack.c.h.b16 %v1182
        %v2557 = vunpack.c.l.b16 %v1183
        %v2558 = vunpack.c.h.b16 %v1183
        %v2559 = vunpack.c.l.b16 %v1184
        %v2560 = vunpack.c.h.b16 %v1184
        %v2561 = vunpack.c.l.b16 %v1185
        %v2562 = vunpack.c.h.b16 %v1185
        %v2563 = vunpack.c.l.b16 %v1186
        %v2564 = vunpack.c.h.b16 %v1186
        %v2565 = vunpack.c.l.b16 %v1187
        %v2566 = vunpack.c.h.b16 %v1187
        %v2567 = vunpack.c.l.b16 %v1188
        %v2568 = vunpack.c.h.b16 %v1188
        %v2569 = vunpack.c.l.b16 %v1189
        %v2570 = vunpack.c.h.b16 %v1189
        %v2571 = vunpack.c.l.b16 %v1190
        %v2572 = vunpack.c.h.b16 %v1190
        %v2573 = vunpack.c.l.b16 %v1191
        %v2574 = vunpack.c.h.b16 %v1191
        %v2575 = vunpack.c.l.b16 %v1192
        %v2576 = vunpack.c.h.b16 %v1192
        %v2577 = vunpack.c.l.b16 %v1193
        %v2578 = vunpack.c.h.b16 %v1193
        %v2579 = vunpack.c.l.b16 %v1194
        %v2580 = vunpack.c.h.b16 %v1194
        %v2581 = vunpack.c.l.b16 %v1195
        %v2582 = vunpack.c.h.b16 %v1195
        %v2583 = vunpack.c.l.b16 %v1196
        %v2584 = vunpack.c.h.b16 %v1196
        %v2585 = vunpack.c.l.b16 %v1197
        %v2586 = vunpack.c.h.b16 %v1197
        %v2587 = vunpack.c.l.b16 %v1198
        %v2588 = vunpack.c.h.b16 %v1198
        %v2589 = vunpack.c.l.b16 %v1199
        %v2590 = vunpack.c.h.b16 %v1199
        %v2591 = vunpack.c.l.b16 %v1200
        %v2592 = vunpack.c.h.b16 %v1200
        %v2593 = vunpack.c.l.b16 %v1201
        %v2594 = vunpack.c.h.b16 %v1201
        %v2595 = vunpack.c.l.b16 %v1202
        %v2596 = vunpack.c.h.b16 %v1202
        %v2597 = vunpack.c.l.b16 %v1203
        %v2598 = vunpack.c.h.b16 %v1203
        %v2599 = vunpack.c.l.b16 %v1204
        %v2600 = vunpack.c.h.b16 %v1204
        %v2601 = vunpack.c.l.b16 %v1205
        %v2602 = vunpack.c.h.b16 %v1205
        %v2603 = vunpack.c.l.b16 %v1206
        %v2604 = vunpack.c.h.b16 %v1206
        %v2605 = vunpack.c.l.b16 %v1207
        %v2606 = vunpack.c.h.b16 %v1207
        %v2607 = vunpack.c.l.b16 %v1208
        %v2608 = vunpack.c.h.b16 %v1208
        %v2609 = vunpack.c.l.b16 %v1209
        %v2610 = vunpack.c.h.b16 %v1209
        %v2611 = vunpack.c.l.b16 %v1210
        %v2612 = vunpack.c.h.b16 %v1210
        %v2613 = vunpack.c.l.b16 %v1211
        %v2614 = vunpack.c.h.b16 %v1211
        %v2615 = vunpack.c.l.b16 %v1212
        %v2616 = vunpack.c.h.b16 %v1212
        %v2617 = vunpack.c.l.b16 %v1213
        %v2618 = vunpack.c.h.b16 %v1213
        %v2619 = vunpack.c.l.b16 %v1214
        %v2620 = vunpack.c.h.b16 %v1214
        %v2621 = vunpack.c.l.b16 %v1215
        %v2622 = vunpack.c.h.b16 %v1215
        %v2623 = vunpack.c.l.b16 %v1216
        %v2624 = vunpack.c.h.b16 %v1216
        %v2625 = vunpack.c.l.b16 %v1217
        %v2626 = vunpack.c.h.b16 %v1217
        %v2627 = vunpack.c.l.b16 %v1218
        %v2628 = vunpack.c.h.b16 %v1218
        %v2629 = vunpack.c.l.b16 %v1219
        %v2630 = vunpack.c.h.b16 %v1219
        %v2631 = vunpack.c.l.b16 %v1220
        %v2632 = vunpack.c.h.b16 %v1220
        %v2633 = vunpack.c.l.b16 %v1221
        %v2634 = vunpack.c.h.b16 %v1221
        %v2635 = vunpack.c.l.b16 %v1222
        %v2636 = vunpack.c.h.b16 %v1222
        %v2637 = vunpack.c.l.b16 %v1223
        %v2638 = vunpack.c.h.b16 %v1223
        %v2639 = vunpack.c.l.b16 %v1224
        %v2640 = vunpack.c.h.b16 %v1224
        %v2641 = vunpack.c.l.b16 %v1225
        %v2642 = vunpack.c.h.b16 %v1225
        %v2643 = vunpack.c.l.b16 %v1226
        %v2644 = vunpack.c.h.b16 %v1226
        %v2645 = vunpack.c.l.b16 %v1227
        %v2646 = vunpack.c.h.b16 %v1227
        %v2647 = vunpack.c.l.b16 %v1228
        %v2648 = vunpack.c.h.b16 %v1228
        %v2649 = vunpack.c.l.b16 %v1229
        %v2650 = vunpack.c.h.b16 %v1229
        %v2651 = vunpack.c.l.b16 %v1230
        %v2652 = vunpack.c.h.b16 %v1230
        %v2653 = vunpack.c.l.b16 %v1231
        %v2654 = vunpack.c.h.b16 %v1231
        %v2655 = vunpack.c.l.b16 %v1232
        %v2656 = vunpack.c.h.b16 %v1232
        %v2657 = vunpack.c.l.b16 %v1233
        %v2658 = vunpack.c.h.b16 %v1233
        %v2659 = vunpack.c.l.b16 %v1234
        %v2660 = vunpack.c.h.b16 %v1234
        %v2661 = vunpack.c.l.b16 %v1235
        %v2662 = vunpack.c.h.b16 %v1235
        %v2663 = vunpack.c.l.b16 %v1236
        %v2664 = vunpack.c.h.b16 %v1236
        %v2665 = vunpack.c.l.b16 %v1237
        %v2666 = vunpack.c.h.b16 %v1237
        %v2667 = vunpack.c.l.b16 %v1238
        %v2668 = vunpack.c.h.b16 %v1238
        %v2669 = vunpack.c.l.b16 %v1239
        %v2670 = vunpack.c.h.b16 %v1239
        %v2671 = vunpack.c.l.b16 %v1240
        %v2672 = vunpack.c.h.b16 %v1240
        %v2673 = vunpack.c.l.b16 %v1241
        %v2674 = vunpack.c.h.b16 %v1241
        %v2675 = vunpack.c.l.b16 %v1242
        %v2676 = vunpack.c.h.b16 %v1242
        %v2677 = vunpack.c.l.b16 %v1243
        %v2678 = vunpack.c.h.b16 %v1243
        %v2679 = vunpack.c.l.b16 %v1244
        %v2680 = vunpack.c.h.b16 %v1244
        %v2681 = vunpack.c.l.b16 %v1245
        %v2682 = vunpack.c.h.b16 %v1245
        %v2683 = vunpack.c.l.b16 %v1246
        %v2684 = vunpack.c.h.b16 %v1246
        %v2685 = vunpack.c.l.b16 %v1247
        %v2686 = vunpack.c.h.b16 %v1247
        %v2687 = vunpack.c.l.b16 %v1248
        %v2688 = vunpack.c.h.b16 %v1248
        %v2689 = vunpack.c.l.b16 %v1249
        %v2690 = vunpack.c.h.b16 %v1249
        %v2691 = vunpack.c.l.b16 %v1250
        %v2692 = vunpack.c.h.b16 %v1250
        %v2693 = vunpack.c.l.b16 %v1251
        %v2694 = vunpack.c.h.b16 %v1251
        %v2695 = vunpack.c.l.b16 %v1252
        %v2696 = vunpack.c.h.b16 %v1252
        %v2697 = vunpack.c.l.b16 %v1253
        %v2698 = vunpack.c.h.b16 %v1253
        %v2699 = vunpack.c.l.b16 %v1254
        %v2700 = vunpack.c.h.b16 %v1254
        %v2701 = vunpack.c.l.b16 %v1255
        %v2702 = vunpack.c.h.b16 %v1255
        %v2703 = vunpack.c.l.b16 %v1256
        %v2704 = vunpack.c.h.b16 %v1256
        %v2705 = vpack.c.b16 %v2453, %v2449
        %v2706 = vpack.c.b16 %v2454, %v2450
        %v2707 = vpack.c.b16 %v2455, %v2451
        %v2708 = vpack.c.b16 %v2456, %v2452
        %v2709 = vpack.c.b16 %v2461, %v2457
        %v2710 = vpack.c.b16 %v2462, %v2458
        %v2711 = vpack.c.b16 %v2463, %v2459
        %v2712 = vpack.c.b16 %v2464, %v2460
        %v2713 = vpack.c.b16 %v2469, %v2465
        %v2714 = vpack.c.b16 %v2470, %v2466
        %v2715 = vpack.c.b16 %v2471, %v2467
        %v2716 = vpack.c.b16 %v2472, %v2468
        %v2717 = vpack.c.b16 %v2477, %v2473
        %v2718 = vpack.c.b16 %v2478, %v2474
        %v2719 = vpack.c.b16 %v2479, %v2475
        %v2720 = vpack.c.b16 %v2480, %v2476
        %v2721 = vpack.c.b16 %v2485, %v2481
        %v2722 = vpack.c.b16 %v2486, %v2482
        %v2723 = vpack.c.b16 %v2487, %v2483
        %v2724 = vpack.c.b16 %v2488, %v2484
        %v2725 = vpack.c.b16 %v2493, %v2489
        %v2726 = vpack.c.b16 %v2494, %v2490
        %v2727 = vpack.c.b16 %v2495, %v2491
        %v2728 = vpack.c.b16 %v2496, %v2492
        %v2729 = vpack.c.b16 %v2501, %v2497
        %v2730 = vpack.c.b16 %v2502, %v2498
        %v2731 = vpack.c.b16 %v2503, %v2499
        %v2732 = vpack.c.b16 %v2504, %v2500
        %v2733 = vpack.c.b16 %v2509, %v2505
        %v2734 = vpack.c.b16 %v2510, %v2506
        %v2735 = vpack.c.b16 %v2511, %v2507
        %v2736 = vpack.c.b16 %v2512, %v2508
        %v2737 = vpack.c.b16 %v2517, %v2513
        %v2738 = vpack.c.b16 %v2518, %v2514
        %v2739 = vpack.c.b16 %v2519, %v2515
        %v2740 = vpack.c.b16 %v2520, %v2516
        %v2741 = vpack.c.b16 %v2525, %v2521
        %v2742 = vpack.c.b16 %v2526, %v2522
        %v2743 = vpack.c.b16 %v2527, %v2523
        %v2744 = vpack.c.b16 %v2528, %v2524
        %v2745 = vpack.c.b16 %v2533, %v2529
        %v2746 = vpack.c.b16 %v2534, %v2530
        %v2747 = vpack.c.b16 %v2535, %v2531
        %v2748 = vpack.c.b16 %v2536, %v2532
        %v2749 = vpack.c.b16 %v2541, %v2537
        %v2750 = vpack.c.b16 %v2542, %v2538
        %v2751 = vpack.c.b16 %v2543, %v2539
        %v2752 = vpack.c.b16 %v2544, %v2540
        %v2753 = vpack.c.b16 %v2549, %v2545
        %v2754 = vpack.c.b16 %v2550, %v2546
        %v2755 = vpack.c.b16 %v2551, %v2547
        %v2756 = vpack.c.b16 %v2552, %v2548
        %v2757 = vpack.c.b16 %v2557, %v2553
        %v2758 = vpack.c.b16 %v2558, %v2554
        %v2759 = vpack.c.b16 %v2559, %v2555
        %v2760 = vpack.c.b16 %v2560, %v2556
        %v2761 = vpack.c.b16 %v2565, %v2561
        %v2762 = vpack.c.b16 %v2566, %v2562
        %v2763 = vpack.c.b16 %v2567, %v2563
        %v2764 = vpack.c.b16 %v2568, %v2564
        %v2765 = vpack.c.b16 %v2573, %v2569
        %v2766 = vpack.c.b16 %v2574, %v2570
        %v2767 = vpack.c.b16 %v2575, %v2571
        %v2768 = vpack.c.b16 %v2576, %v2572
        %v2769 = vpack.c.b16 %v2581, %v2577
        %v2770 = vpack.c.b16 %v2582, %v2578
        %v2771 = vpack.c.b16 %v2583, %v2579
        %v2772 = vpack.c.b16 %v2584, %v2580
        %v2773 = vpack.c.b16 %v2589, %v2585
        %v2774 = vpack.c.b16 %v2590, %v2586
        %v2775 = vpack.c.b16 %v2591, %v2587
        %v2776 = vpack.c.b16 %v2592, %v2588
        %v2777 = vpack.c.b16 %v2597, %v2593
        %v2778 = vpack.c.b16 %v2598, %v2594
        %v2779 = vpack.c.b16 %v2599, %v2595
        %v2780 = vpack.c.b16 %v2600, %v2596
        %v2781 = vpack.c.b16 %v2605, %v2601
        %v2782 = vpack.c.b16 %v2606, %v2602
        %v2783 = vpack.c.b16 %v2607, %v2603
        %v2784 = vpack.c.b16 %v2608, %v2604
        %v2785 = vpack.c.b16 %v2613, %v2609
        %v2786 = vpack.c.b16 %v2614, %v2610
        %v2787 = vpack.c.b16 %v2615, %v2611
        %v2788 = vpack.c.b16 %v2616, %v2612
        %v2789 = vpack.c.b16 %v2621, %v2617
        %v2790 = vpack.c.b16 %v2622, %v2618
        %v2791 = vpack.c.b16 %v2623, %v2619
        %v2792 = vpack.c.b16 %v2624, %v2620
        %v2793 = vpack.c.b16 %v2629, %v2625
        %v2794 = vpack.c.b16 %v2630, %v2626
        %v2795 = vpack.c.b16 %v2631, %v2627
        %v2796 = vpack.c.b16 %v2632, %v2628
        %v2797 = vpack.c.b16 %v2637, %v2633
        %v2798 = vpack.c.b16 %v2638, %v2634
        %v2799 = vpack.c.b16 %v2639, %v2635
        %v2800 = vpack.c.b16 %v2640, %v2636
        %v2801 = vpack.c.b16 %v2645, %v2641
        %v2802 = vpack.c.b16 %v2646, %v2642
        %v2803 = vpack.c.b16 %v2647, %v2643
        %v2804 = vpack.c.b16 %v2648, %v2644
        %v2805 = vpack.c.b16 %v2653, %v2649
        %v2806 = vpack.c.b16 %v2654, %v2650
        %v2807 = vpack.c.b16 %v2655, %v2651
        %v2808 = vpack.c.b16 %v2656, %v2652
        %v2809 = vpack.c.b16 %v2661, %v2657
        %v2810 = vpack.c.b16 %v2662, %v2658
        %v2811 = vpack.c.b16 %v2663, %v2659
        %v2812 = vpack.c.b16 %v2664, %v2660
        %v2813 = vpack.c.b16 %v2669, %v2665
        %v2814 = vpack.c.b16 %v2670, %v2666
        %v2815 = vpack.c.b16 %v2671, %v2667
        %v2816 = vpack.c.b16 %v2672, %v2668
        %v2817 = vpack.c.b16 %v2677, %v2673
        %v2818 = vpack.c.b16 %v2678, %v2674
        %v2819 = vpack.c.b16 %v2679, %v2675
        %v2820 = vpack.c.b16 %v2680, %v2676
        %v2821 = vpack.c.b16 %v2685, %v2681
        %v2822 = vpack.c.b16 %v2686, %v2682
        %v2823 = vpack.c.b16 %v2687, %v2683
        %v2824 = vpack.c.b16 %v2688, %v2684
        %v2825 = vpack.c.b16 %v2693, %v2689
        %v2826 = vpack.c.b16 %v2694, %v2690
        %v2827 = vpack.c.b16 %v2695, %v2691
        %v2828 = vpack.c.b16 %v2696, %v2692
        %v2829 = vpack.c.b16 %v2701, %v2697
        %v2830 = vpack.c.b16 %v2702, %v2698
        %v2831 = vpack.c.b16 %v2703, %v2699
        %v2832 = vpack.c.b16 %v2704, %v2700
        %2961 = vmatpush.bf16.msra.mxu0 %v2733
        %2962 = vmatpush.bf16.msra.mxu0 %v2729
        %2963 = vmatpush.bf16.msra.mxu0 %v2725
        %2964 = vmatpush.bf16.msra.mxu0 %v2721
        %2965 = vmatpush.bf16.msra.mxu0 %v2717
        %2966 = vmatpush.bf16.msra.mxu0 %v2713
        %2967 = vmatpush.bf16.msra.mxu0 %v2709
        %2968 = vmatpush.bf16.msra.mxu0 %v2705
        %2969 = vmatmul.bf16.gmra.mxu0 %v1125
        %v2970 = vpop.f32.mrf.mxu0
        %v2971 = vadd.f32 %v2149, %v2970
        %v2972 = vpop.f32.mrf.mxu0
        %v2973 = vadd.f32 %v2151, %v2972
        %2974 = vdwg.mxu0
        %2975 = vmatpush.bf16.msra.mxu0 %v2765
        %2976 = vmatpush.bf16.msra.mxu0 %v2761
        %2977 = vmatpush.bf16.msra.mxu0 %v2757
        %2978 = vmatpush.bf16.msra.mxu0 %v2753
        %2979 = vmatpush.bf16.msra.mxu0 %v2749
        %2980 = vmatpush.bf16.msra.mxu0 %v2745
        %2981 = vmatpush.bf16.msra.mxu0 %v2741
        %2982 = vmatpush.bf16.msra.mxu0 %v2737
        %2983 = vmatmul.bf16.gmra.mxu0 %v1126
        %v2984 = vpop.f32.mrf.mxu0
        %v2985 = vadd.f32 %v2971, %v2984
        %v2986 = vpop.f32.mrf.mxu0
        %v2987 = vadd.f32 %v2973, %v2986
        %2988 = vdwg.mxu0
        %2989 = vmatpush.bf16.msra.mxu0 %v2797
        %2990 = vmatpush.bf16.msra.mxu0 %v2793
        %2991 = vmatpush.bf16.msra.mxu0 %v2789
        %2992 = vmatpush.bf16.msra.mxu0 %v2785
        %2993 = vmatpush.bf16.msra.mxu0 %v2781
        %2994 = vmatpush.bf16.msra.mxu0 %v2777
        %2995 = vmatpush.bf16.msra.mxu0 %v2773
        %2996 = vmatpush.bf16.msra.mxu0 %v2769
        %2997 = vmatmul.bf16.gmra.mxu0 %v1127
        %v2998 = vpop.f32.mrf.mxu0
        %v2999 = vadd.f32 %v2985, %v2998
        %v3000 = vpop.f32.mrf.mxu0
        %v3001 = vadd.f32 %v2987, %v3000
        %3002 = vdwg.mxu0
        %3003 = vmatpush.bf16.msra.mxu0 %v2829
        %3004 = vmatpush.bf16.msra.mxu0 %v2825
        %3005 = vmatpush.bf16.msra.mxu0 %v2821
        %3006 = vmatpush.bf16.msra.mxu0 %v2817
        %3007 = vmatpush.bf16.msra.mxu0 %v2813
        %3008 = vmatpush.bf16.msra.mxu0 %v2809
        %3009 = vmatpush.bf16.msra.mxu0 %v2805
        %3010 = vmatpush.bf16.msra.mxu0 %v2801
        %3011 = vmatmul.bf16.gmra.mxu0 %v1128
        %v3012 = vpop.f32.mrf.mxu0
        %v3013 = vadd.f32 %v2999, %v3012
        %v3014 = vpop.f32.mrf.mxu0
        %v3015 = vadd.f32 %v3001, %v3014
        %3016 = vdwg.mxu0
        %3017 = vmatpush.bf16.msra.mxu0 %v2734
        %3018 = vmatpush.bf16.msra.mxu0 %v2730
        %3019 = vmatpush.bf16.msra.mxu0 %v2726
        %3020 = vmatpush.bf16.msra.mxu0 %v2722
        %3021 = vmatpush.bf16.msra.mxu0 %v2718
        %3022 = vmatpush.bf16.msra.mxu0 %v2714
        %3023 = vmatpush.bf16.msra.mxu0 %v2710
        %3024 = vmatpush.bf16.msra.mxu0 %v2706
        %3025 = vmatmul.bf16.gmra.mxu0 %v1125
        %v3026 = vpop.f32.mrf.mxu0
        %v3027 = vadd.f32 %v2205, %v3026
        %v3028 = vpop.f32.mrf.mxu0
        %v3029 = vadd.f32 %v2207, %v3028
        %3030 = vdwg.mxu0
        %3031 = vmatpush.bf16.msra.mxu0 %v2766
        %3032 = vmatpush.bf16.msra.mxu0 %v2762
        %3033 = vmatpush.bf16.msra.mxu0 %v2758
        %3034 = vmatpush.bf16.msra.mxu0 %v2754
        %3035 = vmatpush.bf16.msra.mxu0 %v2750
        %3036 = vmatpush.bf16.msra.mxu0 %v2746
        %3037 = vmatpush.bf16.msra.mxu0 %v2742
        %3038 = vmatpush.bf16.msra.mxu0 %v2738
        %3039 = vmatmul.bf16.gmra.mxu0 %v1126
        %v3040 = vpop.f32.mrf.mxu0
        %v3041 = vadd.f32 %v3027, %v3040
        %v3042 = vpop.f32.mrf.mxu0
        %v3043 = vadd.f32 %v3029, %v3042
        %3044 = vdwg.mxu0
        %3045 = vmatpush.bf16.msra.mxu0 %v2798
        %3046 = vmatpush.bf16.msra.mxu0 %v2794
        %3047 = vmatpush.bf16.msra.mxu0 %v2790
        %3048 = vmatpush.bf16.msra.mxu0 %v2786
        %3049 = vmatpush.bf16.msra.mxu0 %v2782
        %3050 = vmatpush.bf16.msra.mxu0 %v2778
        %3051 = vmatpush.bf16.msra.mxu0 %v2774
        %3052 = vmatpush.bf16.msra.mxu0 %v2770
        %3053 = vmatmul.bf16.gmra.mxu0 %v1127
        %v3054 = vpop.f32.mrf.mxu0
        %v3055 = vadd.f32 %v3041, %v3054
        %v3056 = vpop.f32.mrf.mxu0
        %v3057 = vadd.f32 %v3043, %v3056
        %3058 = vdwg.mxu0
        %3059 = vmatpush.bf16.msra.mxu0 %v2830
        %3060 = vmatpush.bf16.msra.mxu0 %v2826
        %3061 = vmatpush.bf16.msra.mxu0 %v2822
        %3062 = vmatpush.bf16.msra.mxu0 %v2818
        %3063 = vmatpush.bf16.msra.mxu0 %v2814
        %3064 = vmatpush.bf16.msra.mxu0 %v2810
        %3065 = vmatpush.bf16.msra.mxu0 %v2806
        %3066 = vmatpush.bf16.msra.mxu0 %v2802
        %3067 = vmatmul.bf16.gmra.mxu0 %v1128
        %v3068 = vpop.f32.mrf.mxu0
        %v3069 = vadd.f32 %v3055, %v3068
        %v3070 = vpop.f32.mrf.mxu0
        %v3071 = vadd.f32 %v3057, %v3070
        %3072 = vdwg.mxu0
        %3073 = vmatpush.bf16.msra.mxu0 %v2735
        %3074 = vmatpush.bf16.msra.mxu0 %v2731
        %3075 = vmatpush.bf16.msra.mxu0 %v2727
        %3076 = vmatpush.bf16.msra.mxu0 %v2723
        %3077 = vmatpush.bf16.msra.mxu0 %v2719
        %3078 = vmatpush.bf16.msra.mxu0 %v2715
        %3079 = vmatpush.bf16.msra.mxu0 %v2711
        %3080 = vmatpush.bf16.msra.mxu0 %v2707
        %3081 = vmatmul.bf16.gmra.mxu0 %v1125
        %v3082 = vpop.f32.mrf.mxu0
        %v3083 = vadd.f32 %v2261, %v3082
        %v3084 = vpop.f32.mrf.mxu0
        %v3085 = vadd.f32 %v2263, %v3084
        %3086 = vdwg.mxu0
        %3087 = vmatpush.bf16.msra.mxu0 %v2767
        %3088 = vmatpush.bf16.msra.mxu0 %v2763
        %3089 = vmatpush.bf16.msra.mxu0 %v2759
        %3090 = vmatpush.bf16.msra.mxu0 %v2755
        %3091 = vmatpush.bf16.msra.mxu0 %v2751
        %3092 = vmatpush.bf16.msra.mxu0 %v2747
        %3093 = vmatpush.bf16.msra.mxu0 %v2743
        %3094 = vmatpush.bf16.msra.mxu0 %v2739
        %3095 = vmatmul.bf16.gmra.mxu0 %v1126
        %v3096 = vpop.f32.mrf.mxu0
        %v3097 = vadd.f32 %v3083, %v3096
        %v3098 = vpop.f32.mrf.mxu0
        %v3099 = vadd.f32 %v3085, %v3098
        %3100 = vdwg.mxu0
        %3101 = vmatpush.bf16.msra.mxu0 %v2799
        %3102 = vmatpush.bf16.msra.mxu0 %v2795
        %3103 = vmatpush.bf16.msra.mxu0 %v2791
        %3104 = vmatpush.bf16.msra.mxu0 %v2787
        %3105 = vmatpush.bf16.msra.mxu0 %v2783
        %3106 = vmatpush.bf16.msra.mxu0 %v2779
        %3107 = vmatpush.bf16.msra.mxu0 %v2775
        %3108 = vmatpush.bf16.msra.mxu0 %v2771
        %3109 = vmatmul.bf16.gmra.mxu0 %v1127
        %v3110 = vpop.f32.mrf.mxu0
        %v3111 = vadd.f32 %v3097, %v3110
        %v3112 = vpop.f32.mrf.mxu0
        %v3113 = vadd.f32 %v3099, %v3112
        %3114 = vdwg.mxu0
        %3115 = vmatpush.bf16.msra.mxu0 %v2831
        %3116 = vmatpush.bf16.msra.mxu0 %v2827
        %3117 = vmatpush.bf16.msra.mxu0 %v2823
        %3118 = vmatpush.bf16.msra.mxu0 %v2819
        %3119 = vmatpush.bf16.msra.mxu0 %v2815
        %3120 = vmatpush.bf16.msra.mxu0 %v2811
        %3121 = vmatpush.bf16.msra.mxu0 %v2807
        %3122 = vmatpush.bf16.msra.mxu0 %v2803
        %3123 = vmatmul.bf16.gmra.mxu0 %v1128
        %v3124 = vpop.f32.mrf.mxu0
        %v3125 = vadd.f32 %v3111, %v3124
        %v3126 = vpop.f32.mrf.mxu0
        %v3127 = vadd.f32 %v3113, %v3126
        %3128 = vdwg.mxu0
        %3129 = vmatpush.bf16.msra.mxu0 %v2736
        %3130 = vmatpush.bf16.msra.mxu0 %v2732
        %3131 = vmatpush.bf16.msra.mxu0 %v2728
        %3132 = vmatpush.bf16.msra.mxu0 %v2724
        %3133 = vmatpush.bf16.msra.mxu0 %v2720
        %3134 = vmatpush.bf16.msra.mxu0 %v2716
        %3135 = vmatpush.bf16.msra.mxu0 %v2712
        %3136 = vmatpush.bf16.msra.mxu0 %v2708
        %3137 = vmatmul.bf16.gmra.mxu0 %v1125
        %v3138 = vpop.f32.mrf.mxu0
        %v3139 = vadd.f32 %v2317, %v3138
        %v3140 = vpop.f32.mrf.mxu0
        %v3141 = vadd.f32 %v2319, %v3140
        %3142 = vdwg.mxu0
        %3143 = vmatpush.bf16.msra.mxu0 %v2768
        %3144 = vmatpush.bf16.msra.mxu0 %v2764
        %3145 = vmatpush.bf16.msra.mxu0 %v2760
        %3146 = vmatpush.bf16.msra.mxu0 %v2756
        %3147 = vmatpush.bf16.msra.mxu0 %v2752
        %3148 = vmatpush.bf16.msra.mxu0 %v2748
        %3149 = vmatpush.bf16.msra.mxu0 %v2744
        %3150 = vmatpush.bf16.msra.mxu0 %v2740
        %3151 = vmatmul.bf16.gmra.mxu0 %v1126
        %v3152 = vpop.f32.mrf.mxu0
        %v3153 = vadd.f32 %v3139, %v3152
        %v3154 = vpop.f32.mrf.mxu0
        %v3155 = vadd.f32 %v3141, %v3154
        %3156 = vdwg.mxu0
        %3157 = vmatpush.bf16.msra.mxu0 %v2800
        %3158 = vmatpush.bf16.msra.mxu0 %v2796
        %3159 = vmatpush.bf16.msra.mxu0 %v2792
        %3160 = vmatpush.bf16.msra.mxu0 %v2788
        %3161 = vmatpush.bf16.msra.mxu0 %v2784
        %3162 = vmatpush.bf16.msra.mxu0 %v2780
        %3163 = vmatpush.bf16.msra.mxu0 %v2776
        %3164 = vmatpush.bf16.msra.mxu0 %v2772
        %3165 = vmatmul.bf16.gmra.mxu0 %v1127
        %v3166 = vpop.f32.mrf.mxu0
        %v3167 = vadd.f32 %v3153, %v3166
        %v3168 = vpop.f32.mrf.mxu0
        %v3169 = vadd.f32 %v3155, %v3168
        %3170 = vdwg.mxu0
        %3171 = vmatpush.bf16.msra.mxu0 %v2832
        %3172 = vmatpush.bf16.msra.mxu0 %v2828
        %3173 = vmatpush.bf16.msra.mxu0 %v2824
        %3174 = vmatpush.bf16.msra.mxu0 %v2820
        %3175 = vmatpush.bf16.msra.mxu0 %v2816
        %3176 = vmatpush.bf16.msra.mxu0 %v2812
        %3177 = vmatpush.bf16.msra.mxu0 %v2808
        %3178 = vmatpush.bf16.msra.mxu0 %v2804
        %3179 = vmatmul.bf16.gmra.mxu0 %v1128
        %v3180 = vpop.f32.mrf.mxu0
        %v3181 = vadd.f32 %v3167, %v3180
        %v3182 = vpop.f32.mrf.mxu0
        %v3183 = vadd.f32 %v3169, %v3182
        %3184 = vdwg.mxu0
        %s3185 = scalar_lea.vmem [#allocation11], 16
        %v3186 = vld [vmem:[%s3185] sm:$0xf]
        %v3187 = vld [vmem:[%s3185 + $0x4] sm:$0xf]
        %v3190 = vunpack.c.l.b16 %v3186
        %v3191 = vunpack.c.l.b16 %v3187
        %v3192 = vpack.c.b16 %v3191, %v3190
        %v3194 = vsel %vm826, %v3192, 0
        %3196 = vmatpush.bf16.msra.mxu0 0
        %3197 = vmatpush.bf16.msra.mxu0 0
        %3198 = vmatpush.bf16.msra.mxu0 0
        %3199 = vmatpush.bf16.msra.mxu0 0
        %3200 = vmatpush.bf16.msra.mxu0 0
        %3201 = vmatpush.bf16.msra.mxu0 0
        %3202 = vmatpush.bf16.msra.mxu0 0
        %3203 = vmatpush.bf16.msra.mxu0 %v1055
        %3204 = vmatmul.bf16.gmra.mxu0 %v3194
        %v3205 = vpop.f32.mrf.mxu0
        %v3206 = vadd.f32 0.0, %v3205
        %v3207 = vpop.f32.mrf.mxu0
        %v3208 = vadd.f32 0.0, %v3207
        %3209 = vdwg.mxu0
        %3210 = vmatpush.bf16.msra.mxu0 0
        %3211 = vmatpush.bf16.msra.mxu0 0
        %3212 = vmatpush.bf16.msra.mxu0 0
        %3213 = vmatpush.bf16.msra.mxu0 0
        %3214 = vmatpush.bf16.msra.mxu0 0
        %3215 = vmatpush.bf16.msra.mxu0 0
        %3216 = vmatpush.bf16.msra.mxu0 0
        %3217 = vmatpush.bf16.msra.mxu0 %v1056
        %3218 = vmatmul.bf16.gmra.mxu0 %v3194
        %v3219 = vpop.f32.mrf.mxu0
        %v3220 = vadd.f32 0.0, %v3219
        %v3221 = vpop.f32.mrf.mxu0
        %v3222 = vadd.f32 0.0, %v3221
        %3223 = vdwg.mxu0
        %3224 = vmatpush.bf16.msra.mxu0 0
        %3225 = vmatpush.bf16.msra.mxu0 0
        %3226 = vmatpush.bf16.msra.mxu0 0
        %3227 = vmatpush.bf16.msra.mxu0 0
        %3228 = vmatpush.bf16.msra.mxu0 0
        %3229 = vmatpush.bf16.msra.mxu0 0
        %3230 = vmatpush.bf16.msra.mxu0 0
        %3231 = vmatpush.bf16.msra.mxu0 %v1057
        %3232 = vmatmul.bf16.gmra.mxu0 %v3194
        %v3233 = vpop.f32.mrf.mxu0
        %v3234 = vadd.f32 0.0, %v3233
        %v3235 = vpop.f32.mrf.mxu0
        %v3236 = vadd.f32 0.0, %v3235
        %3237 = vdwg.mxu0
        %3238 = vmatpush.bf16.msra.mxu0 0
        %3239 = vmatpush.bf16.msra.mxu0 0
        %3240 = vmatpush.bf16.msra.mxu0 0
        %3241 = vmatpush.bf16.msra.mxu0 0
        %3242 = vmatpush.bf16.msra.mxu0 0
        %3243 = vmatpush.bf16.msra.mxu0 0
        %3244 = vmatpush.bf16.msra.mxu0 0
        %3245 = vmatpush.bf16.msra.mxu0 %v1058
        %3246 = vmatmul.bf16.gmra.mxu0 %v3194
        %v3247 = vpop.f32.mrf.mxu0
        %v3248 = vadd.f32 0.0, %v3247
        %v3249 = vpop.f32.mrf.mxu0
        %v3250 = vadd.f32 0.0, %v3249
        %3251 = vdwg.mxu0
        %v3252 = vpack.c.bf16 %v3208, %v3206
        %v3253 = vpack.c.bf16 %v3222, %v3220
        %v3254 = vpack.c.bf16 %v3236, %v3234
        %v3255 = vpack.c.bf16 %v3250, %v3248
        %s3256 = scalar_lea.vmem [#allocation13], 2048
        %v3257 = vld [vmem:[%s3256] sm:$0xff]
        %v3258 = vld [vmem:[%s3256 + $0x8] sm:$0xff]
        %v3259 = vld [vmem:[%s3256 + $0x10] sm:$0xff]
        %v3260 = vld [vmem:[%s3256 + $0x18] sm:$0xff]
        %v3261 = vld [vmem:[%s3256 + $0x20] sm:$0xff]
        %v3262 = vld [vmem:[%s3256 + $0x28] sm:$0xff]
        %v3263 = vld [vmem:[%s3256 + $0x30] sm:$0xff]
        %v3264 = vld [vmem:[%s3256 + $0x38] sm:$0xff]
        %v3265 = vld [vmem:[%s3256 + $0x40] sm:$0xff]
        %v3266 = vld [vmem:[%s3256 + $0x48] sm:$0xff]
        %v3267 = vld [vmem:[%s3256 + $0x50] sm:$0xff]
        %v3268 = vld [vmem:[%s3256 + $0x58] sm:$0xff]
        %v3269 = vld [vmem:[%s3256 + $0x60] sm:$0xff]
        %v3270 = vld [vmem:[%s3256 + $0x68] sm:$0xff]
        %v3271 = vld [vmem:[%s3256 + $0x70] sm:$0xff]
        %v3272 = vld [vmem:[%s3256 + $0x78] sm:$0xff]
        %v3273 = vld [vmem:[%s3256 + $0x80] sm:$0xff]
        %v3274 = vld [vmem:[%s3256 + $0x88] sm:$0xff]
        %v3275 = vld [vmem:[%s3256 + $0x90] sm:$0xff]
        %v3276 = vld [vmem:[%s3256 + $0x98] sm:$0xff]
        %v3277 = vld [vmem:[%s3256 + $0xa0] sm:$0xff]
        %v3278 = vld [vmem:[%s3256 + $0xa8] sm:$0xff]
        %v3279 = vld [vmem:[%s3256 + $0xb0] sm:$0xff]
        %v3280 = vld [vmem:[%s3256 + $0xb8] sm:$0xff]
        %v3281 = vld [vmem:[%s3256 + $0xc0] sm:$0xff]
        %v3282 = vld [vmem:[%s3256 + $0xc8] sm:$0xff]
        %v3283 = vld [vmem:[%s3256 + $0xd0] sm:$0xff]
        %v3284 = vld [vmem:[%s3256 + $0xd8] sm:$0xff]
        %v3285 = vld [vmem:[%s3256 + $0xe0] sm:$0xff]
        %v3286 = vld [vmem:[%s3256 + $0xe8] sm:$0xff]
        %v3287 = vld [vmem:[%s3256 + $0xf0] sm:$0xff]
        %v3288 = vld [vmem:[%s3256 + $0xf8] sm:$0xff]
        %v3289 = vld [vmem:[%s3256 + $0x100] sm:$0xff]
        %v3290 = vld [vmem:[%s3256 + $0x108] sm:$0xff]
        %v3291 = vld [vmem:[%s3256 + $0x110] sm:$0xff]
        %v3292 = vld [vmem:[%s3256 + $0x118] sm:$0xff]
        %v3293 = vld [vmem:[%s3256 + $0x120] sm:$0xff]
        %v3294 = vld [vmem:[%s3256 + $0x128] sm:$0xff]
        %v3295 = vld [vmem:[%s3256 + $0x130] sm:$0xff]
        %v3296 = vld [vmem:[%s3256 + $0x138] sm:$0xff]
        %v3297 = vld [vmem:[%s3256 + $0x140] sm:$0xff]
        %v3298 = vld [vmem:[%s3256 + $0x148] sm:$0xff]
        %v3299 = vld [vmem:[%s3256 + $0x150] sm:$0xff]
        %v3300 = vld [vmem:[%s3256 + $0x158] sm:$0xff]
        %v3301 = vld [vmem:[%s3256 + $0x160] sm:$0xff]
        %v3302 = vld [vmem:[%s3256 + $0x168] sm:$0xff]
        %v3303 = vld [vmem:[%s3256 + $0x170] sm:$0xff]
        %v3304 = vld [vmem:[%s3256 + $0x178] sm:$0xff]
        %v3305 = vld [vmem:[%s3256 + $0x180] sm:$0xff]
        %v3306 = vld [vmem:[%s3256 + $0x188] sm:$0xff]
        %v3307 = vld [vmem:[%s3256 + $0x190] sm:$0xff]
        %v3308 = vld [vmem:[%s3256 + $0x198] sm:$0xff]
        %v3309 = vld [vmem:[%s3256 + $0x1a0] sm:$0xff]
        %v3310 = vld [vmem:[%s3256 + $0x1a8] sm:$0xff]
        %v3311 = vld [vmem:[%s3256 + $0x1b0] sm:$0xff]
        %v3312 = vld [vmem:[%s3256 + $0x1b8] sm:$0xff]
        %v3313 = vld [vmem:[%s3256 + $0x1c0] sm:$0xff]
        %v3314 = vld [vmem:[%s3256 + $0x1c8] sm:$0xff]
        %v3315 = vld [vmem:[%s3256 + $0x1d0] sm:$0xff]
        %v3316 = vld [vmem:[%s3256 + $0x1d8] sm:$0xff]
        %v3317 = vld [vmem:[%s3256 + $0x1e0] sm:$0xff]
        %v3318 = vld [vmem:[%s3256 + $0x1e8] sm:$0xff]
        %v3319 = vld [vmem:[%s3256 + $0x1f0] sm:$0xff]
        %v3320 = vld [vmem:[%s3256 + $0x1f8] sm:$0xff]
        %v3321 = vld [vmem:[%s3256 + $0x200] sm:$0xff]
        %v3322 = vld [vmem:[%s3256 + $0x208] sm:$0xff]
        %v3323 = vld [vmem:[%s3256 + $0x210] sm:$0xff]
        %v3324 = vld [vmem:[%s3256 + $0x218] sm:$0xff]
        %v3325 = vld [vmem:[%s3256 + $0x220] sm:$0xff]
        %v3326 = vld [vmem:[%s3256 + $0x228] sm:$0xff]
        %v3327 = vld [vmem:[%s3256 + $0x230] sm:$0xff]
        %v3328 = vld [vmem:[%s3256 + $0x238] sm:$0xff]
        %v3329 = vld [vmem:[%s3256 + $0x240] sm:$0xff]
        %v3330 = vld [vmem:[%s3256 + $0x248] sm:$0xff]
        %v3331 = vld [vmem:[%s3256 + $0x250] sm:$0xff]
        %v3332 = vld [vmem:[%s3256 + $0x258] sm:$0xff]
        %v3333 = vld [vmem:[%s3256 + $0x260] sm:$0xff]
        %v3334 = vld [vmem:[%s3256 + $0x268] sm:$0xff]
        %v3335 = vld [vmem:[%s3256 + $0x270] sm:$0xff]
        %v3336 = vld [vmem:[%s3256 + $0x278] sm:$0xff]
        %v3337 = vld [vmem:[%s3256 + $0x280] sm:$0xff]
        %v3338 = vld [vmem:[%s3256 + $0x288] sm:$0xff]
        %v3339 = vld [vmem:[%s3256 + $0x290] sm:$0xff]
        %v3340 = vld [vmem:[%s3256 + $0x298] sm:$0xff]
        %v3341 = vld [vmem:[%s3256 + $0x2a0] sm:$0xff]
        %v3342 = vld [vmem:[%s3256 + $0x2a8] sm:$0xff]
        %v3343 = vld [vmem:[%s3256 + $0x2b0] sm:$0xff]
        %v3344 = vld [vmem:[%s3256 + $0x2b8] sm:$0xff]
        %v3345 = vld [vmem:[%s3256 + $0x2c0] sm:$0xff]
        %v3346 = vld [vmem:[%s3256 + $0x2c8] sm:$0xff]
        %v3347 = vld [vmem:[%s3256 + $0x2d0] sm:$0xff]
        %v3348 = vld [vmem:[%s3256 + $0x2d8] sm:$0xff]
        %v3349 = vld [vmem:[%s3256 + $0x2e0] sm:$0xff]
        %v3350 = vld [vmem:[%s3256 + $0x2e8] sm:$0xff]
        %v3351 = vld [vmem:[%s3256 + $0x2f0] sm:$0xff]
        %v3352 = vld [vmem:[%s3256 + $0x2f8] sm:$0xff]
        %v3353 = vld [vmem:[%s3256 + $0x300] sm:$0xff]
        %v3354 = vld [vmem:[%s3256 + $0x308] sm:$0xff]
        %v3355 = vld [vmem:[%s3256 + $0x310] sm:$0xff]
        %v3356 = vld [vmem:[%s3256 + $0x318] sm:$0xff]
        %v3357 = vld [vmem:[%s3256 + $0x320] sm:$0xff]
        %v3358 = vld [vmem:[%s3256 + $0x328] sm:$0xff]
        %v3359 = vld [vmem:[%s3256 + $0x330] sm:$0xff]
        %v3360 = vld [vmem:[%s3256 + $0x338] sm:$0xff]
        %v3361 = vld [vmem:[%s3256 + $0x340] sm:$0xff]
        %v3362 = vld [vmem:[%s3256 + $0x348] sm:$0xff]
        %v3363 = vld [vmem:[%s3256 + $0x350] sm:$0xff]
        %v3364 = vld [vmem:[%s3256 + $0x358] sm:$0xff]
        %v3365 = vld [vmem:[%s3256 + $0x360] sm:$0xff]
        %v3366 = vld [vmem:[%s3256 + $0x368] sm:$0xff]
        %v3367 = vld [vmem:[%s3256 + $0x370] sm:$0xff]
        %v3368 = vld [vmem:[%s3256 + $0x378] sm:$0xff]
        %v3369 = vld [vmem:[%s3256 + $0x380] sm:$0xff]
        %v3370 = vld [vmem:[%s3256 + $0x388] sm:$0xff]
        %v3371 = vld [vmem:[%s3256 + $0x390] sm:$0xff]
        %v3372 = vld [vmem:[%s3256 + $0x398] sm:$0xff]
        %v3373 = vld [vmem:[%s3256 + $0x3a0] sm:$0xff]
        %v3374 = vld [vmem:[%s3256 + $0x3a8] sm:$0xff]
        %v3375 = vld [vmem:[%s3256 + $0x3b0] sm:$0xff]
        %v3376 = vld [vmem:[%s3256 + $0x3b8] sm:$0xff]
        %v3377 = vld [vmem:[%s3256 + $0x3c0] sm:$0xff]
        %v3378 = vld [vmem:[%s3256 + $0x3c8] sm:$0xff]
        %v3379 = vld [vmem:[%s3256 + $0x3d0] sm:$0xff]
        %v3380 = vld [vmem:[%s3256 + $0x3d8] sm:$0xff]
        %v3381 = vld [vmem:[%s3256 + $0x3e0] sm:$0xff]
        %v3382 = vld [vmem:[%s3256 + $0x3e8] sm:$0xff]
        %v3383 = vld [vmem:[%s3256 + $0x3f0] sm:$0xff]
        %v3384 = vld [vmem:[%s3256 + $0x3f8] sm:$0xff]
        %v3513 = vunpack.c.l.b16 %v3257
        %v3514 = vunpack.c.h.b16 %v3257
        %v3515 = vunpack.c.l.b16 %v3258
        %v3516 = vunpack.c.h.b16 %v3258
        %v3517 = vunpack.c.l.b16 %v3259
        %v3518 = vunpack.c.h.b16 %v3259
        %v3519 = vunpack.c.l.b16 %v3260
        %v3520 = vunpack.c.h.b16 %v3260
        %v3521 = vunpack.c.l.b16 %v3261
        %v3522 = vunpack.c.h.b16 %v3261
        %v3523 = vunpack.c.l.b16 %v3262
        %v3524 = vunpack.c.h.b16 %v3262
        %v3525 = vunpack.c.l.b16 %v3263
        %v3526 = vunpack.c.h.b16 %v3263
        %v3527 = vunpack.c.l.b16 %v3264
        %v3528 = vunpack.c.h.b16 %v3264
        %v3529 = vunpack.c.l.b16 %v3265
        %v3530 = vunpack.c.h.b16 %v3265
        %v3531 = vunpack.c.l.b16 %v3266
        %v3532 = vunpack.c.h.b16 %v3266
        %v3533 = vunpack.c.l.b16 %v3267
        %v3534 = vunpack.c.h.b16 %v3267
        %v3535 = vunpack.c.l.b16 %v3268
        %v3536 = vunpack.c.h.b16 %v3268
        %v3537 = vunpack.c.l.b16 %v3269
        %v3538 = vunpack.c.h.b16 %v3269
        %v3539 = vunpack.c.l.b16 %v3270
        %v3540 = vunpack.c.h.b16 %v3270
        %v3541 = vunpack.c.l.b16 %v3271
        %v3542 = vunpack.c.h.b16 %v3271
        %v3543 = vunpack.c.l.b16 %v3272
        %v3544 = vunpack.c.h.b16 %v3272
        %v3545 = vunpack.c.l.b16 %v3273
        %v3546 = vunpack.c.h.b16 %v3273
        %v3547 = vunpack.c.l.b16 %v3274
        %v3548 = vunpack.c.h.b16 %v3274
        %v3549 = vunpack.c.l.b16 %v3275
        %v3550 = vunpack.c.h.b16 %v3275
        %v3551 = vunpack.c.l.b16 %v3276
        %v3552 = vunpack.c.h.b16 %v3276
        %v3553 = vunpack.c.l.b16 %v3277
        %v3554 = vunpack.c.h.b16 %v3277
        %v3555 = vunpack.c.l.b16 %v3278
        %v3556 = vunpack.c.h.b16 %v3278
        %v3557 = vunpack.c.l.b16 %v3279
        %v3558 = vunpack.c.h.b16 %v3279
        %v3559 = vunpack.c.l.b16 %v3280
        %v3560 = vunpack.c.h.b16 %v3280
        %v3561 = vunpack.c.l.b16 %v3281
        %v3562 = vunpack.c.h.b16 %v3281
        %v3563 = vunpack.c.l.b16 %v3282
        %v3564 = vunpack.c.h.b16 %v3282
        %v3565 = vunpack.c.l.b16 %v3283
        %v3566 = vunpack.c.h.b16 %v3283
        %v3567 = vunpack.c.l.b16 %v3284
        %v3568 = vunpack.c.h.b16 %v3284
        %v3569 = vunpack.c.l.b16 %v3285
        %v3570 = vunpack.c.h.b16 %v3285
        %v3571 = vunpack.c.l.b16 %v3286
        %v3572 = vunpack.c.h.b16 %v3286
        %v3573 = vunpack.c.l.b16 %v3287
        %v3574 = vunpack.c.h.b16 %v3287
        %v3575 = vunpack.c.l.b16 %v3288
        %v3576 = vunpack.c.h.b16 %v3288
        %v3577 = vunpack.c.l.b16 %v3289
        %v3578 = vunpack.c.h.b16 %v3289
        %v3579 = vunpack.c.l.b16 %v3290
        %v3580 = vunpack.c.h.b16 %v3290
        %v3581 = vunpack.c.l.b16 %v3291
        %v3582 = vunpack.c.h.b16 %v3291
        %v3583 = vunpack.c.l.b16 %v3292
        %v3584 = vunpack.c.h.b16 %v3292
        %v3585 = vunpack.c.l.b16 %v3293
        %v3586 = vunpack.c.h.b16 %v3293
        %v3587 = vunpack.c.l.b16 %v3294
        %v3588 = vunpack.c.h.b16 %v3294
        %v3589 = vunpack.c.l.b16 %v3295
        %v3590 = vunpack.c.h.b16 %v3295
        %v3591 = vunpack.c.l.b16 %v3296
        %v3592 = vunpack.c.h.b16 %v3296
        %v3593 = vunpack.c.l.b16 %v3297
        %v3594 = vunpack.c.h.b16 %v3297
        %v3595 = vunpack.c.l.b16 %v3298
        %v3596 = vunpack.c.h.b16 %v3298
        %v3597 = vunpack.c.l.b16 %v3299
        %v3598 = vunpack.c.h.b16 %v3299
        %v3599 = vunpack.c.l.b16 %v3300
        %v3600 = vunpack.c.h.b16 %v3300
        %v3601 = vunpack.c.l.b16 %v3301
        %v3602 = vunpack.c.h.b16 %v3301
        %v3603 = vunpack.c.l.b16 %v3302
        %v3604 = vunpack.c.h.b16 %v3302
        %v3605 = vunpack.c.l.b16 %v3303
        %v3606 = vunpack.c.h.b16 %v3303
        %v3607 = vunpack.c.l.b16 %v3304
        %v3608 = vunpack.c.h.b16 %v3304
        %v3609 = vunpack.c.l.b16 %v3305
        %v3610 = vunpack.c.h.b16 %v3305
        %v3611 = vunpack.c.l.b16 %v3306
        %v3612 = vunpack.c.h.b16 %v3306
        %v3613 = vunpack.c.l.b16 %v3307
        %v3614 = vunpack.c.h.b16 %v3307
        %v3615 = vunpack.c.l.b16 %v3308
        %v3616 = vunpack.c.h.b16 %v3308
        %v3617 = vunpack.c.l.b16 %v3309
        %v3618 = vunpack.c.h.b16 %v3309
        %v3619 = vunpack.c.l.b16 %v3310
        %v3620 = vunpack.c.h.b16 %v3310
        %v3621 = vunpack.c.l.b16 %v3311
        %v3622 = vunpack.c.h.b16 %v3311
        %v3623 = vunpack.c.l.b16 %v3312
        %v3624 = vunpack.c.h.b16 %v3312
        %v3625 = vunpack.c.l.b16 %v3313
        %v3626 = vunpack.c.h.b16 %v3313
        %v3627 = vunpack.c.l.b16 %v3314
        %v3628 = vunpack.c.h.b16 %v3314
        %v3629 = vunpack.c.l.b16 %v3315
        %v3630 = vunpack.c.h.b16 %v3315
        %v3631 = vunpack.c.l.b16 %v3316
        %v3632 = vunpack.c.h.b16 %v3316
        %v3633 = vunpack.c.l.b16 %v3317
        %v3634 = vunpack.c.h.b16 %v3317
        %v3635 = vunpack.c.l.b16 %v3318
        %v3636 = vunpack.c.h.b16 %v3318
        %v3637 = vunpack.c.l.b16 %v3319
        %v3638 = vunpack.c.h.b16 %v3319
        %v3639 = vunpack.c.l.b16 %v3320
        %v3640 = vunpack.c.h.b16 %v3320
        %v3641 = vunpack.c.l.b16 %v3321
        %v3642 = vunpack.c.h.b16 %v3321
        %v3643 = vunpack.c.l.b16 %v3322
        %v3644 = vunpack.c.h.b16 %v3322
        %v3645 = vunpack.c.l.b16 %v3323
        %v3646 = vunpack.c.h.b16 %v3323
        %v3647 = vunpack.c.l.b16 %v3324
        %v3648 = vunpack.c.h.b16 %v3324
        %v3649 = vunpack.c.l.b16 %v3325
        %v3650 = vunpack.c.h.b16 %v3325
        %v3651 = vunpack.c.l.b16 %v3326
        %v3652 = vunpack.c.h.b16 %v3326
        %v3653 = vunpack.c.l.b16 %v3327
        %v3654 = vunpack.c.h.b16 %v3327
        %v3655 = vunpack.c.l.b16 %v3328
        %v3656 = vunpack.c.h.b16 %v3328
        %v3657 = vunpack.c.l.b16 %v3329
        %v3658 = vunpack.c.h.b16 %v3329
        %v3659 = vunpack.c.l.b16 %v3330
        %v3660 = vunpack.c.h.b16 %v3330
        %v3661 = vunpack.c.l.b16 %v3331
        %v3662 = vunpack.c.h.b16 %v3331
        %v3663 = vunpack.c.l.b16 %v3332
        %v3664 = vunpack.c.h.b16 %v3332
        %v3665 = vunpack.c.l.b16 %v3333
        %v3666 = vunpack.c.h.b16 %v3333
        %v3667 = vunpack.c.l.b16 %v3334
        %v3668 = vunpack.c.h.b16 %v3334
        %v3669 = vunpack.c.l.b16 %v3335
        %v3670 = vunpack.c.h.b16 %v3335
        %v3671 = vunpack.c.l.b16 %v3336
        %v3672 = vunpack.c.h.b16 %v3336
        %v3673 = vunpack.c.l.b16 %v3337
        %v3674 = vunpack.c.h.b16 %v3337
        %v3675 = vunpack.c.l.b16 %v3338
        %v3676 = vunpack.c.h.b16 %v3338
        %v3677 = vunpack.c.l.b16 %v3339
        %v3678 = vunpack.c.h.b16 %v3339
        %v3679 = vunpack.c.l.b16 %v3340
        %v3680 = vunpack.c.h.b16 %v3340
        %v3681 = vunpack.c.l.b16 %v3341
        %v3682 = vunpack.c.h.b16 %v3341
        %v3683 = vunpack.c.l.b16 %v3342
        %v3684 = vunpack.c.h.b16 %v3342
        %v3685 = vunpack.c.l.b16 %v3343
        %v3686 = vunpack.c.h.b16 %v3343
        %v3687 = vunpack.c.l.b16 %v3344
        %v3688 = vunpack.c.h.b16 %v3344
        %v3689 = vunpack.c.l.b16 %v3345
        %v3690 = vunpack.c.h.b16 %v3345
        %v3691 = vunpack.c.l.b16 %v3346
        %v3692 = vunpack.c.h.b16 %v3346
        %v3693 = vunpack.c.l.b16 %v3347
        %v3694 = vunpack.c.h.b16 %v3347
        %v3695 = vunpack.c.l.b16 %v3348
        %v3696 = vunpack.c.h.b16 %v3348
        %v3697 = vunpack.c.l.b16 %v3349
        %v3698 = vunpack.c.h.b16 %v3349
        %v3699 = vunpack.c.l.b16 %v3350
        %v3700 = vunpack.c.h.b16 %v3350
        %v3701 = vunpack.c.l.b16 %v3351
        %v3702 = vunpack.c.h.b16 %v3351
        %v3703 = vunpack.c.l.b16 %v3352
        %v3704 = vunpack.c.h.b16 %v3352
        %v3705 = vunpack.c.l.b16 %v3353
        %v3706 = vunpack.c.h.b16 %v3353
        %v3707 = vunpack.c.l.b16 %v3354
        %v3708 = vunpack.c.h.b16 %v3354
        %v3709 = vunpack.c.l.b16 %v3355
        %v3710 = vunpack.c.h.b16 %v3355
        %v3711 = vunpack.c.l.b16 %v3356
        %v3712 = vunpack.c.h.b16 %v3356
        %v3713 = vunpack.c.l.b16 %v3357
        %v3714 = vunpack.c.h.b16 %v3357
        %v3715 = vunpack.c.l.b16 %v3358
        %v3716 = vunpack.c.h.b16 %v3358
        %v3717 = vunpack.c.l.b16 %v3359
        %v3718 = vunpack.c.h.b16 %v3359
        %v3719 = vunpack.c.l.b16 %v3360
        %v3720 = vunpack.c.h.b16 %v3360
        %v3721 = vunpack.c.l.b16 %v3361
        %v3722 = vunpack.c.h.b16 %v3361
        %v3723 = vunpack.c.l.b16 %v3362
        %v3724 = vunpack.c.h.b16 %v3362
        %v3725 = vunpack.c.l.b16 %v3363
        %v3726 = vunpack.c.h.b16 %v3363
        %v3727 = vunpack.c.l.b16 %v3364
        %v3728 = vunpack.c.h.b16 %v3364
        %v3729 = vunpack.c.l.b16 %v3365
        %v3730 = vunpack.c.h.b16 %v3365
        %v3731 = vunpack.c.l.b16 %v3366
        %v3732 = vunpack.c.h.b16 %v3366
        %v3733 = vunpack.c.l.b16 %v3367
        %v3734 = vunpack.c.h.b16 %v3367
        %v3735 = vunpack.c.l.b16 %v3368
        %v3736 = vunpack.c.h.b16 %v3368
        %v3737 = vunpack.c.l.b16 %v3369
        %v3738 = vunpack.c.h.b16 %v3369
        %v3739 = vunpack.c.l.b16 %v3370
        %v3740 = vunpack.c.h.b16 %v3370
        %v3741 = vunpack.c.l.b16 %v3371
        %v3742 = vunpack.c.h.b16 %v3371
        %v3743 = vunpack.c.l.b16 %v3372
        %v3744 = vunpack.c.h.b16 %v3372
        %v3745 = vunpack.c.l.b16 %v3373
        %v3746 = vunpack.c.h.b16 %v3373
        %v3747 = vunpack.c.l.b16 %v3374
        %v3748 = vunpack.c.h.b16 %v3374
        %v3749 = vunpack.c.l.b16 %v3375
        %v3750 = vunpack.c.h.b16 %v3375
        %v3751 = vunpack.c.l.b16 %v3376
        %v3752 = vunpack.c.h.b16 %v3376
        %v3753 = vunpack.c.l.b16 %v3377
        %v3754 = vunpack.c.h.b16 %v3377
        %v3755 = vunpack.c.l.b16 %v3378
        %v3756 = vunpack.c.h.b16 %v3378
        %v3757 = vunpack.c.l.b16 %v3379
        %v3758 = vunpack.c.h.b16 %v3379
        %v3759 = vunpack.c.l.b16 %v3380
        %v3760 = vunpack.c.h.b16 %v3380
        %v3761 = vunpack.c.l.b16 %v3381
        %v3762 = vunpack.c.h.b16 %v3381
        %v3763 = vunpack.c.l.b16 %v3382
        %v3764 = vunpack.c.h.b16 %v3382
        %v3765 = vunpack.c.l.b16 %v3383
        %v3766 = vunpack.c.h.b16 %v3383
        %v3767 = vunpack.c.l.b16 %v3384
        %v3768 = vunpack.c.h.b16 %v3384
        %v3769 = vpack.c.b16 %v3517, %v3513
        %v3770 = vpack.c.b16 %v3518, %v3514
        %v3771 = vpack.c.b16 %v3519, %v3515
        %v3772 = vpack.c.b16 %v3520, %v3516
        %v3773 = vpack.c.b16 %v3525, %v3521
        %v3774 = vpack.c.b16 %v3526, %v3522
        %v3775 = vpack.c.b16 %v3527, %v3523
        %v3776 = vpack.c.b16 %v3528, %v3524
        %v3777 = vpack.c.b16 %v3533, %v3529
        %v3778 = vpack.c.b16 %v3534, %v3530
        %v3779 = vpack.c.b16 %v3535, %v3531
        %v3780 = vpack.c.b16 %v3536, %v3532
        %v3781 = vpack.c.b16 %v3541, %v3537
        %v3782 = vpack.c.b16 %v3542, %v3538
        %v3783 = vpack.c.b16 %v3543, %v3539
        %v3784 = vpack.c.b16 %v3544, %v3540
        %v3785 = vpack.c.b16 %v3549, %v3545
        %v3786 = vpack.c.b16 %v3550, %v3546
        %v3787 = vpack.c.b16 %v3551, %v3547
        %v3788 = vpack.c.b16 %v3552, %v3548
        %v3789 = vpack.c.b16 %v3557, %v3553
        %v3790 = vpack.c.b16 %v3558, %v3554
        %v3791 = vpack.c.b16 %v3559, %v3555
        %v3792 = vpack.c.b16 %v3560, %v3556
        %v3793 = vpack.c.b16 %v3565, %v3561
        %v3794 = vpack.c.b16 %v3566, %v3562
        %v3795 = vpack.c.b16 %v3567, %v3563
        %v3796 = vpack.c.b16 %v3568, %v3564
        %v3797 = vpack.c.b16 %v3573, %v3569
        %v3798 = vpack.c.b16 %v3574, %v3570
        %v3799 = vpack.c.b16 %v3575, %v3571
        %v3800 = vpack.c.b16 %v3576, %v3572
        %v3801 = vpack.c.b16 %v3581, %v3577
        %v3802 = vpack.c.b16 %v3582, %v3578
        %v3803 = vpack.c.b16 %v3583, %v3579
        %v3804 = vpack.c.b16 %v3584, %v3580
        %v3805 = vpack.c.b16 %v3589, %v3585
        %v3806 = vpack.c.b16 %v3590, %v3586
        %v3807 = vpack.c.b16 %v3591, %v3587
        %v3808 = vpack.c.b16 %v3592, %v3588
        %v3809 = vpack.c.b16 %v3597, %v3593
        %v3810 = vpack.c.b16 %v3598, %v3594
        %v3811 = vpack.c.b16 %v3599, %v3595
        %v3812 = vpack.c.b16 %v3600, %v3596
        %v3813 = vpack.c.b16 %v3605, %v3601
        %v3814 = vpack.c.b16 %v3606, %v3602
        %v3815 = vpack.c.b16 %v3607, %v3603
        %v3816 = vpack.c.b16 %v3608, %v3604
        %v3817 = vpack.c.b16 %v3613, %v3609
        %v3818 = vpack.c.b16 %v3614, %v3610
        %v3819 = vpack.c.b16 %v3615, %v3611
        %v3820 = vpack.c.b16 %v3616, %v3612
        %v3821 = vpack.c.b16 %v3621, %v3617
        %v3822 = vpack.c.b16 %v3622, %v3618
        %v3823 = vpack.c.b16 %v3623, %v3619
        %v3824 = vpack.c.b16 %v3624, %v3620
        %v3825 = vpack.c.b16 %v3629, %v3625
        %v3826 = vpack.c.b16 %v3630, %v3626
        %v3827 = vpack.c.b16 %v3631, %v3627
        %v3828 = vpack.c.b16 %v3632, %v3628
        %v3829 = vpack.c.b16 %v3637, %v3633
        %v3830 = vpack.c.b16 %v3638, %v3634
        %v3831 = vpack.c.b16 %v3639, %v3635
        %v3832 = vpack.c.b16 %v3640, %v3636
        %v3833 = vpack.c.b16 %v3645, %v3641
        %v3834 = vpack.c.b16 %v3646, %v3642
        %v3835 = vpack.c.b16 %v3647, %v3643
        %v3836 = vpack.c.b16 %v3648, %v3644
        %v3837 = vpack.c.b16 %v3653, %v3649
        %v3838 = vpack.c.b16 %v3654, %v3650
        %v3839 = vpack.c.b16 %v3655, %v3651
        %v3840 = vpack.c.b16 %v3656, %v3652
        %v3841 = vpack.c.b16 %v3661, %v3657
        %v3842 = vpack.c.b16 %v3662, %v3658
        %v3843 = vpack.c.b16 %v3663, %v3659
        %v3844 = vpack.c.b16 %v3664, %v3660
        %v3845 = vpack.c.b16 %v3669, %v3665
        %v3846 = vpack.c.b16 %v3670, %v3666
        %v3847 = vpack.c.b16 %v3671, %v3667
        %v3848 = vpack.c.b16 %v3672, %v3668
        %v3849 = vpack.c.b16 %v3677, %v3673
        %v3850 = vpack.c.b16 %v3678, %v3674
        %v3851 = vpack.c.b16 %v3679, %v3675
        %v3852 = vpack.c.b16 %v3680, %v3676
        %v3853 = vpack.c.b16 %v3685, %v3681
        %v3854 = vpack.c.b16 %v3686, %v3682
        %v3855 = vpack.c.b16 %v3687, %v3683
        %v3856 = vpack.c.b16 %v3688, %v3684
        %v3857 = vpack.c.b16 %v3693, %v3689
        %v3858 = vpack.c.b16 %v3694, %v3690
        %v3859 = vpack.c.b16 %v3695, %v3691
        %v3860 = vpack.c.b16 %v3696, %v3692
        %v3861 = vpack.c.b16 %v3701, %v3697
        %v3862 = vpack.c.b16 %v3702, %v3698
        %v3863 = vpack.c.b16 %v3703, %v3699
        %v3864 = vpack.c.b16 %v3704, %v3700
        %v3865 = vpack.c.b16 %v3709, %v3705
        %v3866 = vpack.c.b16 %v3710, %v3706
        %v3867 = vpack.c.b16 %v3711, %v3707
        %v3868 = vpack.c.b16 %v3712, %v3708
        %v3869 = vpack.c.b16 %v3717, %v3713
        %v3870 = vpack.c.b16 %v3718, %v3714
        %v3871 = vpack.c.b16 %v3719, %v3715
        %v3872 = vpack.c.b16 %v3720, %v3716
        %v3873 = vpack.c.b16 %v3725, %v3721
        %v3874 = vpack.c.b16 %v3726, %v3722
        %v3875 = vpack.c.b16 %v3727, %v3723
        %v3876 = vpack.c.b16 %v3728, %v3724
        %v3877 = vpack.c.b16 %v3733, %v3729
        %v3878 = vpack.c.b16 %v3734, %v3730
        %v3879 = vpack.c.b16 %v3735, %v3731
        %v3880 = vpack.c.b16 %v3736, %v3732
        %v3881 = vpack.c.b16 %v3741, %v3737
        %v3882 = vpack.c.b16 %v3742, %v3738
        %v3883 = vpack.c.b16 %v3743, %v3739
        %v3884 = vpack.c.b16 %v3744, %v3740
        %v3885 = vpack.c.b16 %v3749, %v3745
        %v3886 = vpack.c.b16 %v3750, %v3746
        %v3887 = vpack.c.b16 %v3751, %v3747
        %v3888 = vpack.c.b16 %v3752, %v3748
        %v3889 = vpack.c.b16 %v3757, %v3753
        %v3890 = vpack.c.b16 %v3758, %v3754
        %v3891 = vpack.c.b16 %v3759, %v3755
        %v3892 = vpack.c.b16 %v3760, %v3756
        %v3893 = vpack.c.b16 %v3765, %v3761
        %v3894 = vpack.c.b16 %v3766, %v3762
        %v3895 = vpack.c.b16 %v3767, %v3763
        %v3896 = vpack.c.b16 %v3768, %v3764
        %4025 = vmatpush.bf16.msra.mxu0 %v3797
        %4026 = vmatpush.bf16.msra.mxu0 %v3793
        %4027 = vmatpush.bf16.msra.mxu0 %v3789
        %4028 = vmatpush.bf16.msra.mxu0 %v3785
        %4029 = vmatpush.bf16.msra.mxu0 %v3781
        %4030 = vmatpush.bf16.msra.mxu0 %v3777
        %4031 = vmatpush.bf16.msra.mxu0 %v3773
        %4032 = vmatpush.bf16.msra.mxu0 %v3769
        %4033 = vmatmul.bf16.gmra.mxu0 %v3252
        %v4034 = vpop.f32.mrf.mxu0
        %v4035 = vadd.f32 0.0, %v4034
        %v4036 = vpop.f32.mrf.mxu0
        %v4037 = vadd.f32 0.0, %v4036
        %4038 = vdwg.mxu0
        %4039 = vmatpush.bf16.msra.mxu0 %v3829
        %4040 = vmatpush.bf16.msra.mxu0 %v3825
        %4041 = vmatpush.bf16.msra.mxu0 %v3821
        %4042 = vmatpush.bf16.msra.mxu0 %v3817
        %4043 = vmatpush.bf16.msra.mxu0 %v3813
        %4044 = vmatpush.bf16.msra.mxu0 %v3809
        %4045 = vmatpush.bf16.msra.mxu0 %v3805
        %4046 = vmatpush.bf16.msra.mxu0 %v3801
        %4047 = vmatmul.bf16.gmra.mxu0 %v3253
        %v4048 = vpop.f32.mrf.mxu0
        %v4049 = vadd.f32 %v4035, %v4048
        %v4050 = vpop.f32.mrf.mxu0
        %v4051 = vadd.f32 %v4037, %v4050
        %4052 = vdwg.mxu0
        %4053 = vmatpush.bf16.msra.mxu0 %v3861
        %4054 = vmatpush.bf16.msra.mxu0 %v3857
        %4055 = vmatpush.bf16.msra.mxu0 %v3853
        %4056 = vmatpush.bf16.msra.mxu0 %v3849
        %4057 = vmatpush.bf16.msra.mxu0 %v3845
        %4058 = vmatpush.bf16.msra.mxu0 %v3841
        %4059 = vmatpush.bf16.msra.mxu0 %v3837
        %4060 = vmatpush.bf16.msra.mxu0 %v3833
        %4061 = vmatmul.bf16.gmra.mxu0 %v3254
        %v4062 = vpop.f32.mrf.mxu0
        %v4063 = vadd.f32 %v4049, %v4062
        %v4064 = vpop.f32.mrf.mxu0
        %v4065 = vadd.f32 %v4051, %v4064
        %4066 = vdwg.mxu0
        %4067 = vmatpush.bf16.msra.mxu0 %v3893
        %4068 = vmatpush.bf16.msra.mxu0 %v3889
        %4069 = vmatpush.bf16.msra.mxu0 %v3885
        %4070 = vmatpush.bf16.msra.mxu0 %v3881
        %4071 = vmatpush.bf16.msra.mxu0 %v3877
        %4072 = vmatpush.bf16.msra.mxu0 %v3873
        %4073 = vmatpush.bf16.msra.mxu0 %v3869
        %4074 = vmatpush.bf16.msra.mxu0 %v3865
        %4075 = vmatmul.bf16.gmra.mxu0 %v3255
        %v4076 = vpop.f32.mrf.mxu0
        %v4077 = vadd.f32 %v4063, %v4076
        %v4078 = vpop.f32.mrf.mxu0
        %v4079 = vadd.f32 %v4065, %v4078
        %4080 = vdwg.mxu0
        %4081 = vmatpush.bf16.msra.mxu0 %v3798
        %4082 = vmatpush.bf16.msra.mxu0 %v3794
        %4083 = vmatpush.bf16.msra.mxu0 %v3790
        %4084 = vmatpush.bf16.msra.mxu0 %v3786
        %4085 = vmatpush.bf16.msra.mxu0 %v3782
        %4086 = vmatpush.bf16.msra.mxu0 %v3778
        %4087 = vmatpush.bf16.msra.mxu0 %v3774
        %4088 = vmatpush.bf16.msra.mxu0 %v3770
        %4089 = vmatmul.bf16.gmra.mxu0 %v3252
        %v4090 = vpop.f32.mrf.mxu0
        %v4091 = vadd.f32 0.0, %v4090
        %v4092 = vpop.f32.mrf.mxu0
        %v4093 = vadd.f32 0.0, %v4092
        %4094 = vdwg.mxu0
        %4095 = vmatpush.bf16.msra.mxu0 %v3830
        %4096 = vmatpush.bf16.msra.mxu0 %v3826
        %4097 = vmatpush.bf16.msra.mxu0 %v3822
        %4098 = vmatpush.bf16.msra.mxu0 %v3818
        %4099 = vmatpush.bf16.msra.mxu0 %v3814
        %4100 = vmatpush.bf16.msra.mxu0 %v3810
        %4101 = vmatpush.bf16.msra.mxu0 %v3806
        %4102 = vmatpush.bf16.msra.mxu0 %v3802
        %4103 = vmatmul.bf16.gmra.mxu0 %v3253
        %v4104 = vpop.f32.mrf.mxu0
        %v4105 = vadd.f32 %v4091, %v4104
        %v4106 = vpop.f32.mrf.mxu0
        %v4107 = vadd.f32 %v4093, %v4106
        %4108 = vdwg.mxu0
        %4109 = vmatpush.bf16.msra.mxu0 %v3862
        %4110 = vmatpush.bf16.msra.mxu0 %v3858
        %4111 = vmatpush.bf16.msra.mxu0 %v3854
        %4112 = vmatpush.bf16.msra.mxu0 %v3850
        %4113 = vmatpush.bf16.msra.mxu0 %v3846
        %4114 = vmatpush.bf16.msra.mxu0 %v3842
        %4115 = vmatpush.bf16.msra.mxu0 %v3838
        %4116 = vmatpush.bf16.msra.mxu0 %v3834
        %4117 = vmatmul.bf16.gmra.mxu0 %v3254
        %v4118 = vpop.f32.mrf.mxu0
        %v4119 = vadd.f32 %v4105, %v4118
        %v4120 = vpop.f32.mrf.mxu0
        %v4121 = vadd.f32 %v4107, %v4120
        %4122 = vdwg.mxu0
        %4123 = vmatpush.bf16.msra.mxu0 %v3894
        %4124 = vmatpush.bf16.msra.mxu0 %v3890
        %4125 = vmatpush.bf16.msra.mxu0 %v3886
        %4126 = vmatpush.bf16.msra.mxu0 %v3882
        %4127 = vmatpush.bf16.msra.mxu0 %v3878
        %4128 = vmatpush.bf16.msra.mxu0 %v3874
        %4129 = vmatpush.bf16.msra.mxu0 %v3870
        %4130 = vmatpush.bf16.msra.mxu0 %v3866
        %4131 = vmatmul.bf16.gmra.mxu0 %v3255
        %v4132 = vpop.f32.mrf.mxu0
        %v4133 = vadd.f32 %v4119, %v4132
        %v4134 = vpop.f32.mrf.mxu0
        %v4135 = vadd.f32 %v4121, %v4134
        %4136 = vdwg.mxu0
        %4137 = vmatpush.bf16.msra.mxu0 %v3799
        %4138 = vmatpush.bf16.msra.mxu0 %v3795
        %4139 = vmatpush.bf16.msra.mxu0 %v3791
        %4140 = vmatpush.bf16.msra.mxu0 %v3787
        %4141 = vmatpush.bf16.msra.mxu0 %v3783
        %4142 = vmatpush.bf16.msra.mxu0 %v3779
        %4143 = vmatpush.bf16.msra.mxu0 %v3775
        %4144 = vmatpush.bf16.msra.mxu0 %v3771
        %4145 = vmatmul.bf16.gmra.mxu0 %v3252
        %v4146 = vpop.f32.mrf.mxu0
        %v4147 = vadd.f32 0.0, %v4146
        %v4148 = vpop.f32.mrf.mxu0
        %v4149 = vadd.f32 0.0, %v4148
        %4150 = vdwg.mxu0
        %4151 = vmatpush.bf16.msra.mxu0 %v3831
        %4152 = vmatpush.bf16.msra.mxu0 %v3827
        %4153 = vmatpush.bf16.msra.mxu0 %v3823
        %4154 = vmatpush.bf16.msra.mxu0 %v3819
        %4155 = vmatpush.bf16.msra.mxu0 %v3815
        %4156 = vmatpush.bf16.msra.mxu0 %v3811
        %4157 = vmatpush.bf16.msra.mxu0 %v3807
        %4158 = vmatpush.bf16.msra.mxu0 %v3803
        %4159 = vmatmul.bf16.gmra.mxu0 %v3253
        %v4160 = vpop.f32.mrf.mxu0
        %v4161 = vadd.f32 %v4147, %v4160
        %v4162 = vpop.f32.mrf.mxu0
        %v4163 = vadd.f32 %v4149, %v4162
        %4164 = vdwg.mxu0
        %4165 = vmatpush.bf16.msra.mxu0 %v3863
        %4166 = vmatpush.bf16.msra.mxu0 %v3859
        %4167 = vmatpush.bf16.msra.mxu0 %v3855
        %4168 = vmatpush.bf16.msra.mxu0 %v3851
        %4169 = vmatpush.bf16.msra.mxu0 %v3847
        %4170 = vmatpush.bf16.msra.mxu0 %v3843
        %4171 = vmatpush.bf16.msra.mxu0 %v3839
        %4172 = vmatpush.bf16.msra.mxu0 %v3835
        %4173 = vmatmul.bf16.gmra.mxu0 %v3254
        %v4174 = vpop.f32.mrf.mxu0
        %v4175 = vadd.f32 %v4161, %v4174
        %v4176 = vpop.f32.mrf.mxu0
        %v4177 = vadd.f32 %v4163, %v4176
        %4178 = vdwg.mxu0
        %4179 = vmatpush.bf16.msra.mxu0 %v3895
        %4180 = vmatpush.bf16.msra.mxu0 %v3891
        %4181 = vmatpush.bf16.msra.mxu0 %v3887
        %4182 = vmatpush.bf16.msra.mxu0 %v3883
        %4183 = vmatpush.bf16.msra.mxu0 %v3879
        %4184 = vmatpush.bf16.msra.mxu0 %v3875
        %4185 = vmatpush.bf16.msra.mxu0 %v3871
        %4186 = vmatpush.bf16.msra.mxu0 %v3867
        %4187 = vmatmul.bf16.gmra.mxu0 %v3255
        %v4188 = vpop.f32.mrf.mxu0
        %v4189 = vadd.f32 %v4175, %v4188
        %v4190 = vpop.f32.mrf.mxu0
        %v4191 = vadd.f32 %v4177, %v4190
        %4192 = vdwg.mxu0
        %4193 = vmatpush.bf16.msra.mxu0 %v3800
        %4194 = vmatpush.bf16.msra.mxu0 %v3796
        %4195 = vmatpush.bf16.msra.mxu0 %v3792
        %4196 = vmatpush.bf16.msra.mxu0 %v3788
        %4197 = vmatpush.bf16.msra.mxu0 %v3784
        %4198 = vmatpush.bf16.msra.mxu0 %v3780
        %4199 = vmatpush.bf16.msra.mxu0 %v3776
        %4200 = vmatpush.bf16.msra.mxu0 %v3772
        %4201 = vmatmul.bf16.gmra.mxu0 %v3252
        %v4202 = vpop.f32.mrf.mxu0
        %v4203 = vadd.f32 0.0, %v4202
        %v4204 = vpop.f32.mrf.mxu0
        %v4205 = vadd.f32 0.0, %v4204
        %4206 = vdwg.mxu0
        %4207 = vmatpush.bf16.msra.mxu0 %v3832
        %4208 = vmatpush.bf16.msra.mxu0 %v3828
        %4209 = vmatpush.bf16.msra.mxu0 %v3824
        %4210 = vmatpush.bf16.msra.mxu0 %v3820
        %4211 = vmatpush.bf16.msra.mxu0 %v3816
        %4212 = vmatpush.bf16.msra.mxu0 %v3812
        %4213 = vmatpush.bf16.msra.mxu0 %v3808
        %4214 = vmatpush.bf16.msra.mxu0 %v3804
        %4215 = vmatmul.bf16.gmra.mxu0 %v3253
        %v4216 = vpop.f32.mrf.mxu0
        %v4217 = vadd.f32 %v4203, %v4216
        %v4218 = vpop.f32.mrf.mxu0
        %v4219 = vadd.f32 %v4205, %v4218
        %4220 = vdwg.mxu0
        %4221 = vmatpush.bf16.msra.mxu0 %v3864
        %4222 = vmatpush.bf16.msra.mxu0 %v3860
        %4223 = vmatpush.bf16.msra.mxu0 %v3856
        %4224 = vmatpush.bf16.msra.mxu0 %v3852
        %4225 = vmatpush.bf16.msra.mxu0 %v3848
        %4226 = vmatpush.bf16.msra.mxu0 %v3844
        %4227 = vmatpush.bf16.msra.mxu0 %v3840
        %4228 = vmatpush.bf16.msra.mxu0 %v3836
        %4229 = vmatmul.bf16.gmra.mxu0 %v3254
        %v4230 = vpop.f32.mrf.mxu0
        %v4231 = vadd.f32 %v4217, %v4230
        %v4232 = vpop.f32.mrf.mxu0
        %v4233 = vadd.f32 %v4219, %v4232
        %4234 = vdwg.mxu0
        %4235 = vmatpush.bf16.msra.mxu0 %v3896
        %4236 = vmatpush.bf16.msra.mxu0 %v3892
        %4237 = vmatpush.bf16.msra.mxu0 %v3888
        %4238 = vmatpush.bf16.msra.mxu0 %v3884
        %4239 = vmatpush.bf16.msra.mxu0 %v3880
        %4240 = vmatpush.bf16.msra.mxu0 %v3876
        %4241 = vmatpush.bf16.msra.mxu0 %v3872
        %4242 = vmatpush.bf16.msra.mxu0 %v3868
        %4243 = vmatmul.bf16.gmra.mxu0 %v3255
        %v4244 = vpop.f32.mrf.mxu0
        %v4245 = vadd.f32 %v4231, %v4244
        %v4246 = vpop.f32.mrf.mxu0
        %v4247 = vadd.f32 %v4233, %v4246
        %4248 = vdwg.mxu0
        %v4249 = vadd.f32 %v3013, %v4077
        %v4250 = vadd.f32 %v3069, %v4133
        %v4251 = vadd.f32 %v3125, %v4189
        %v4252 = vadd.f32 %v3181, %v4245
        %v4253 = vadd.f32 %v3015, %v4079
        %v4254 = vadd.f32 %v3071, %v4135
        %v4255 = vadd.f32 %v3127, %v4191
        %v4256 = vadd.f32 %v3183, %v4247
        %v4257 = vld [vmem:[#allocation8] sm:$0xf]
        %v4258 = vld [vmem:[#allocation10] sm:$0xf]
        %v4259 = vadd.f32 %v4249, %v4253
        %v4260 = vrot.slane %v4259, 4
        %v4261 = vadd.f32 %v4259, %v4260
        %v4262 = vrot.slane %v4261, 2
        %v4263 = vadd.f32 %v4261, %v4262
        %v4264 = vrot.slane %v4263, 1
        %v4265 = vadd.f32 %v4263, %v4264
        %v4266 = vadd.f32 %v4250, %v4254
        %v4267 = vrot.slane %v4266, 4
        %v4268 = vadd.f32 %v4266, %v4267
        %v4269 = vrot.slane %v4268, 2
        %v4270 = vadd.f32 %v4268, %v4269
        %v4271 = vrot.slane %v4270, 1
        %v4272 = vadd.f32 %v4270, %v4271
        %v4273 = vadd.f32 %v4251, %v4255
        %v4274 = vrot.slane %v4273, 4
        %v4275 = vadd.f32 %v4273, %v4274
        %v4276 = vrot.slane %v4275, 2
        %v4277 = vadd.f32 %v4275, %v4276
        %v4278 = vrot.slane %v4277, 1
        %v4279 = vadd.f32 %v4277, %v4278
        %v4280 = vadd.f32 %v4252, %v4256
        %v4281 = vrot.slane %v4280, 4
        %v4282 = vadd.f32 %v4280, %v4281
        %v4283 = vrot.slane %v4282, 2
        %v4284 = vadd.f32 %v4282, %v4283
        %v4285 = vrot.slane %v4284, 1
        %v4286 = vadd.f32 %v4284, %v4285
        %v4287 = vmul.f32 %v4249, %v4249
        %v4288 = vmul.f32 %v4250, %v4250
        %v4289 = vmul.f32 %v4251, %v4251
        %v4290 = vmul.f32 %v4252, %v4252
        %v4291 = vmul.f32 %v4253, %v4253
        %v4292 = vmul.f32 %v4254, %v4254
        %v4293 = vmul.f32 %v4255, %v4255
        %v4294 = vmul.f32 %v4256, %v4256
        %v4295 = vadd.f32 %v4287, %v4291
        %v4296 = vrot.slane %v4295, 4
        %v4297 = vadd.f32 %v4295, %v4296
        %v4298 = vrot.slane %v4297, 2
        %v4299 = vadd.f32 %v4297, %v4298
        %v4300 = vrot.slane %v4299, 1
        %v4301 = vadd.f32 %v4299, %v4300
        %v4302 = vadd.f32 %v4288, %v4292
        %v4303 = vrot.slane %v4302, 4
        %v4304 = vadd.f32 %v4302, %v4303
        %v4305 = vrot.slane %v4304, 2
        %v4306 = vadd.f32 %v4304, %v4305
        %v4307 = vrot.slane %v4306, 1
        %v4308 = vadd.f32 %v4306, %v4307
        %v4309 = vadd.f32 %v4289, %v4293
        %v4310 = vrot.slane %v4309, 4
        %v4311 = vadd.f32 %v4309, %v4310
        %v4312 = vrot.slane %v4311, 2
        %v4313 = vadd.f32 %v4311, %v4312
        %v4314 = vrot.slane %v4313, 1
        %v4315 = vadd.f32 %v4313, %v4314
        %v4316 = vadd.f32 %v4290, %v4294
        %v4317 = vrot.slane %v4316, 4
        %v4318 = vadd.f32 %v4316, %v4317
        %v4319 = vrot.slane %v4318, 2
        %v4320 = vadd.f32 %v4318, %v4319
        %v4321 = vrot.slane %v4320, 1
        %v4322 = vadd.f32 %v4320, %v4321
        %4323 = vmatpush.msra.mxu0 %v528
        %4324 = vmatpush.msra.mxu0 %v527
        %4325 = vmatpush.msra.mxu0 %v526
        %4326 = vmatpush.msra.mxu0 %v525
        %4327 = vmatpush.msra.mxu0 %v524
        %4328 = vmatpush.msra.mxu0 %v523
        %4329 = vmatpush.msra.mxu0 %v522
        %4330 = vmatpush.msra.mxu0 %v521
        %4331 = vmatpush.msra.mxu0 %v520
        %4332 = vmatpush.msra.mxu0 %v519
        %4333 = vmatpush.msra.mxu0 %v518
        %4334 = vmatpush.msra.mxu0 %v517
        %4335 = vmatpush.msra.mxu0 %v516
        %4336 = vmatpush.msra.mxu0 %v515
        %4337 = vmatpush.msra.mxu0 %v514
        %4338 = vmatpush.msra.mxu0 %v513
        %4339 = vmatmul.f32.gmra.mxu0 %v4265
        %v4340 = vpop.f32.mrf.mxu0
        %v4341 = vadd.f32 0.0, %v4340
        %4342 = vdwg.mxu0
        %4343 = vmatpush.msra.mxu0 %v544
        %4344 = vmatpush.msra.mxu0 %v543
        %4345 = vmatpush.msra.mxu0 %v542
        %4346 = vmatpush.msra.mxu0 %v541
        %4347 = vmatpush.msra.mxu0 %v540
        %4348 = vmatpush.msra.mxu0 %v539
        %4349 = vmatpush.msra.mxu0 %v538
        %4350 = vmatpush.msra.mxu0 %v537
        %4351 = vmatpush.msra.mxu0 %v536
        %4352 = vmatpush.msra.mxu0 %v535
        %4353 = vmatpush.msra.mxu0 %v534
        %4354 = vmatpush.msra.mxu0 %v533
        %4355 = vmatpush.msra.mxu0 %v532
        %4356 = vmatpush.msra.mxu0 %v531
        %4357 = vmatpush.msra.mxu0 %v530
        %4358 = vmatpush.msra.mxu0 %v529
        %4359 = vmatmul.f32.gmra.mxu0 %v4272
        %v4360 = vpop.f32.mrf.mxu0
        %v4361 = vadd.f32 %v4341, %v4360
        %4362 = vdwg.mxu0
        %4363 = vmatpush.msra.mxu0 %v560
        %4364 = vmatpush.msra.mxu0 %v559
        %4365 = vmatpush.msra.mxu0 %v558
        %4366 = vmatpush.msra.mxu0 %v557
        %4367 = vmatpush.msra.mxu0 %v556
        %4368 = vmatpush.msra.mxu0 %v555
        %4369 = vmatpush.msra.mxu0 %v554
        %4370 = vmatpush.msra.mxu0 %v553
        %4371 = vmatpush.msra.mxu0 %v552
        %4372 = vmatpush.msra.mxu0 %v551
        %4373 = vmatpush.msra.mxu0 %v550
        %4374 = vmatpush.msra.mxu0 %v549
        %4375 = vmatpush.msra.mxu0 %v548
        %4376 = vmatpush.msra.mxu0 %v547
        %4377 = vmatpush.msra.mxu0 %v546
        %4378 = vmatpush.msra.mxu0 %v545
        %4379 = vmatmul.f32.gmra.mxu0 %v4279
        %v4380 = vpop.f32.mrf.mxu0
        %v4381 = vadd.f32 %v4361, %v4380
        %4382 = vdwg.mxu0
        %4383 = vmatpush.msra.mxu0 %v576
        %4384 = vmatpush.msra.mxu0 %v575
        %4385 = vmatpush.msra.mxu0 %v574
        %4386 = vmatpush.msra.mxu0 %v573
        %4387 = vmatpush.msra.mxu0 %v572
        %4388 = vmatpush.msra.mxu0 %v571
        %4389 = vmatpush.msra.mxu0 %v570
        %4390 = vmatpush.msra.mxu0 %v569
        %4391 = vmatpush.msra.mxu0 %v568
        %4392 = vmatpush.msra.mxu0 %v567
        %4393 = vmatpush.msra.mxu0 %v566
        %4394 = vmatpush.msra.mxu0 %v565
        %4395 = vmatpush.msra.mxu0 %v564
        %4396 = vmatpush.msra.mxu0 %v563
        %4397 = vmatpush.msra.mxu0 %v562
        %4398 = vmatpush.msra.mxu0 %v561
        %4399 = vmatmul.f32.gmra.mxu0 %v4286
        %v4400 = vpop.f32.mrf.mxu0
        %v4401 = vadd.f32 %v4381, %v4400
        %4402 = vdwg.mxu0
        %4403 = vmatpush.msra.mxu0 %v528
        %4404 = vmatpush.msra.mxu0 %v527
        %4405 = vmatpush.msra.mxu0 %v526
        %4406 = vmatpush.msra.mxu0 %v525
        %4407 = vmatpush.msra.mxu0 %v524
        %4408 = vmatpush.msra.mxu0 %v523
        %4409 = vmatpush.msra.mxu0 %v522
        %4410 = vmatpush.msra.mxu0 %v521
        %4411 = vmatpush.msra.mxu0 %v520
        %4412 = vmatpush.msra.mxu0 %v519
        %4413 = vmatpush.msra.mxu0 %v518
        %4414 = vmatpush.msra.mxu0 %v517
        %4415 = vmatpush.msra.mxu0 %v516
        %4416 = vmatpush.msra.mxu0 %v515
        %4417 = vmatpush.msra.mxu0 %v514
        %4418 = vmatpush.msra.mxu0 %v513
        %4419 = vmatmul.f32.gmra.mxu0 %v4301
        %v4420 = vpop.f32.mrf.mxu0
        %v4421 = vadd.f32 0.0, %v4420
        %4422 = vdwg.mxu0
        %4423 = vmatpush.msra.mxu0 %v544
        %4424 = vmatpush.msra.mxu0 %v543
        %4425 = vmatpush.msra.mxu0 %v542
        %4426 = vmatpush.msra.mxu0 %v541
        %4427 = vmatpush.msra.mxu0 %v540
        %4428 = vmatpush.msra.mxu0 %v539
        %4429 = vmatpush.msra.mxu0 %v538
        %4430 = vmatpush.msra.mxu0 %v537
        %4431 = vmatpush.msra.mxu0 %v536
        %4432 = vmatpush.msra.mxu0 %v535
        %4433 = vmatpush.msra.mxu0 %v534
        %4434 = vmatpush.msra.mxu0 %v533
        %4435 = vmatpush.msra.mxu0 %v532
        %4436 = vmatpush.msra.mxu0 %v531
        %4437 = vmatpush.msra.mxu0 %v530
        %4438 = vmatpush.msra.mxu0 %v529
        %4439 = vmatmul.f32.gmra.mxu0 %v4308
        %v4440 = vpop.f32.mrf.mxu0
        %v4441 = vadd.f32 %v4421, %v4440
        %4442 = vdwg.mxu0
        %4443 = vmatpush.msra.mxu0 %v560
        %4444 = vmatpush.msra.mxu0 %v559
        %4445 = vmatpush.msra.mxu0 %v558
        %4446 = vmatpush.msra.mxu0 %v557
        %4447 = vmatpush.msra.mxu0 %v556
        %4448 = vmatpush.msra.mxu0 %v555
        %4449 = vmatpush.msra.mxu0 %v554
        %4450 = vmatpush.msra.mxu0 %v553
        %4451 = vmatpush.msra.mxu0 %v552
        %4452 = vmatpush.msra.mxu0 %v551
        %4453 = vmatpush.msra.mxu0 %v550
        %4454 = vmatpush.msra.mxu0 %v549
        %4455 = vmatpush.msra.mxu0 %v548
        %4456 = vmatpush.msra.mxu0 %v547
        %4457 = vmatpush.msra.mxu0 %v546
        %4458 = vmatpush.msra.mxu0 %v545
        %4459 = vmatmul.f32.gmra.mxu0 %v4315
        %v4460 = vpop.f32.mrf.mxu0
        %v4461 = vadd.f32 %v4441, %v4460
        %4462 = vdwg.mxu0
        %4463 = vmatpush.msra.mxu0 %v576
        %4464 = vmatpush.msra.mxu0 %v575
        %4465 = vmatpush.msra.mxu0 %v574
        %4466 = vmatpush.msra.mxu0 %v573
        %4467 = vmatpush.msra.mxu0 %v572
        %4468 = vmatpush.msra.mxu0 %v571
        %4469 = vmatpush.msra.mxu0 %v570
        %4470 = vmatpush.msra.mxu0 %v569
        %4471 = vmatpush.msra.mxu0 %v568
        %4472 = vmatpush.msra.mxu0 %v567
        %4473 = vmatpush.msra.mxu0 %v566
        %4474 = vmatpush.msra.mxu0 %v565
        %4475 = vmatpush.msra.mxu0 %v564
        %4476 = vmatpush.msra.mxu0 %v563
        %4477 = vmatpush.msra.mxu0 %v562
        %4478 = vmatpush.msra.mxu0 %v561
        %4479 = vmatmul.f32.gmra.mxu0 %v4322
        %v4480 = vpop.f32.mrf.mxu0
        %v4481 = vadd.f32 %v4461, %v4480
        %4482 = vdwg.mxu0
        %v4483 = vmul.f32 %v4401, 0.001953125
        %v4484 = vmul.f32 %v4481, 0.001953125
        %v4485 = vmul.f32 %v4483, %v4483
        %v4486 = vsub.f32 %v4484, %v4485
        %v4487 = vadd.f32 %v4486, 1e-05
        %v4488 = vrsqrt.pop %v4487
        %v4489 = vmul.f32 %v4488, %v4487
        %v4490 = vmul.f32 %v4489, %v4488
        %v4491 = vmul.f32 0.5, %v4490
        %v4492 = vsub.f32 1.5, %v4491
        %v4493 = vmul.f32 %v4488, %v4492
        %vm4494 = vweird.f32 %v4487
        %vm4495 = vweird.f32 %v4488
        %vm4496 = vmor %vm4494, %vm4495
        %v4497 = vsel %vm4496, %v4488, %v4493
        %v4499 = vsel %vm826, %v4483, 0
        %4501 = vmatpush.msra.mxu0 0.0
        %4502 = vmatpush.msra.mxu0 0.0
        %4503 = vmatpush.msra.mxu0 0.0
        %4504 = vmatpush.msra.mxu0 0.0
        %4505 = vmatpush.msra.mxu0 0.0
        %4506 = vmatpush.msra.mxu0 0.0
        %4507 = vmatpush.msra.mxu0 0.0
        %4508 = vmatpush.msra.mxu0 0.0
        %4509 = vmatpush.msra.mxu0 0.0
        %4510 = vmatpush.msra.mxu0 0.0
        %4511 = vmatpush.msra.mxu0 0.0
        %4512 = vmatpush.msra.mxu0 0.0
        %4513 = vmatpush.msra.mxu0 0.0
        %4514 = vmatpush.msra.mxu0 0.0
        %4515 = vmatpush.msra.mxu0 %v581
        %4516 = vmatpush.msra.mxu0 %v577
        %4517 = vmatmul.f32.gmra.mxu0 %v4499
        %v4518 = vpop.f32.mrf.mxu0
        %v4519 = vadd.f32 0.0, %v4518
        %4520 = vdwg.mxu0
        %4521 = vmatpush.msra.mxu0 0.0
        %4522 = vmatpush.msra.mxu0 0.0
        %4523 = vmatpush.msra.mxu0 0.0
        %4524 = vmatpush.msra.mxu0 0.0
        %4525 = vmatpush.msra.mxu0 0.0
        %4526 = vmatpush.msra.mxu0 0.0
        %4527 = vmatpush.msra.mxu0 0.0
        %4528 = vmatpush.msra.mxu0 0.0
        %4529 = vmatpush.msra.mxu0 0.0
        %4530 = vmatpush.msra.mxu0 0.0
        %4531 = vmatpush.msra.mxu0 0.0
        %4532 = vmatpush.msra.mxu0 0.0
        %4533 = vmatpush.msra.mxu0 0.0
        %4534 = vmatpush.msra.mxu0 0.0
        %4535 = vmatpush.msra.mxu0 %v582
        %4536 = vmatpush.msra.mxu0 %v578
        %4537 = vmatmul.f32.gmra.mxu0 %v4499
        %v4538 = vpop.f32.mrf.mxu0
        %v4539 = vadd.f32 0.0, %v4538
        %4540 = vdwg.mxu0
        %4541 = vmatpush.msra.mxu0 0.0
        %4542 = vmatpush.msra.mxu0 0.0
        %4543 = vmatpush.msra.mxu0 0.0
        %4544 = vmatpush.msra.mxu0 0.0
        %4545 = vmatpush.msra.mxu0 0.0
        %4546 = vmatpush.msra.mxu0 0.0
        %4547 = vmatpush.msra.mxu0 0.0
        %4548 = vmatpush.msra.mxu0 0.0
        %4549 = vmatpush.msra.mxu0 0.0
        %4550 = vmatpush.msra.mxu0 0.0
        %4551 = vmatpush.msra.mxu0 0.0
        %4552 = vmatpush.msra.mxu0 0.0
        %4553 = vmatpush.msra.mxu0 0.0
        %4554 = vmatpush.msra.mxu0 0.0
        %4555 = vmatpush.msra.mxu0 %v583
        %4556 = vmatpush.msra.mxu0 %v579
        %4557 = vmatmul.f32.gmra.mxu0 %v4499
        %v4558 = vpop.f32.mrf.mxu0
        %v4559 = vadd.f32 0.0, %v4558
        %4560 = vdwg.mxu0
        %4561 = vmatpush.msra.mxu0 0.0
        %4562 = vmatpush.msra.mxu0 0.0
        %4563 = vmatpush.msra.mxu0 0.0
        %4564 = vmatpush.msra.mxu0 0.0
        %4565 = vmatpush.msra.mxu0 0.0
        %4566 = vmatpush.msra.mxu0 0.0
        %4567 = vmatpush.msra.mxu0 0.0
        %4568 = vmatpush.msra.mxu0 0.0
        %4569 = vmatpush.msra.mxu0 0.0
        %4570 = vmatpush.msra.mxu0 0.0
        %4571 = vmatpush.msra.mxu0 0.0
        %4572 = vmatpush.msra.mxu0 0.0
        %4573 = vmatpush.msra.mxu0 0.0
        %4574 = vmatpush.msra.mxu0 0.0
        %4575 = vmatpush.msra.mxu0 %v584
        %4576 = vmatpush.msra.mxu0 %v580
        %4577 = vmatmul.f32.gmra.mxu0 %v4499
        %v4578 = vpop.f32.mrf.mxu0
        %v4579 = vadd.f32 0.0, %v4578
        %4580 = vdwg.mxu0
        %v4582 = vsel %vm826, %v4497, 0
        %4584 = vmatpush.msra.mxu0 0.0
        %4585 = vmatpush.msra.mxu0 0.0
        %4586 = vmatpush.msra.mxu0 0.0
        %4587 = vmatpush.msra.mxu0 0.0
        %4588 = vmatpush.msra.mxu0 0.0
        %4589 = vmatpush.msra.mxu0 0.0
        %4590 = vmatpush.msra.mxu0 0.0
        %4591 = vmatpush.msra.mxu0 0.0
        %4592 = vmatpush.msra.mxu0 0.0
        %4593 = vmatpush.msra.mxu0 0.0
        %4594 = vmatpush.msra.mxu0 0.0
        %4595 = vmatpush.msra.mxu0 0.0
        %4596 = vmatpush.msra.mxu0 0.0
        %4597 = vmatpush.msra.mxu0 0.0
        %4598 = vmatpush.msra.mxu0 %v581
        %4599 = vmatpush.msra.mxu0 %v577
        %4600 = vmatmul.f32.gmra.mxu0 %v4582
        %v4601 = vpop.f32.mrf.mxu0
        %v4602 = vadd.f32 0.0, %v4601
        %4603 = vdwg.mxu0
        %4604 = vmatpush.msra.mxu0 0.0
        %4605 = vmatpush.msra.mxu0 0.0
        %4606 = vmatpush.msra.mxu0 0.0
        %4607 = vmatpush.msra.mxu0 0.0
        %4608 = vmatpush.msra.mxu0 0.0
        %4609 = vmatpush.msra.mxu0 0.0
        %4610 = vmatpush.msra.mxu0 0.0
        %4611 = vmatpush.msra.mxu0 0.0
        %4612 = vmatpush.msra.mxu0 0.0
        %4613 = vmatpush.msra.mxu0 0.0
        %4614 = vmatpush.msra.mxu0 0.0
        %4615 = vmatpush.msra.mxu0 0.0
        %4616 = vmatpush.msra.mxu0 0.0
        %4617 = vmatpush.msra.mxu0 0.0
        %4618 = vmatpush.msra.mxu0 %v582
        %4619 = vmatpush.msra.mxu0 %v578
        %4620 = vmatmul.f32.gmra.mxu0 %v4582
        %v4621 = vpop.f32.mrf.mxu0
        %v4622 = vadd.f32 0.0, %v4621
        %4623 = vdwg.mxu0
        %4624 = vmatpush.msra.mxu0 0.0
        %4625 = vmatpush.msra.mxu0 0.0
        %4626 = vmatpush.msra.mxu0 0.0
        %4627 = vmatpush.msra.mxu0 0.0
        %4628 = vmatpush.msra.mxu0 0.0
        %4629 = vmatpush.msra.mxu0 0.0
        %4630 = vmatpush.msra.mxu0 0.0
        %4631 = vmatpush.msra.mxu0 0.0
        %4632 = vmatpush.msra.mxu0 0.0
        %4633 = vmatpush.msra.mxu0 0.0
        %4634 = vmatpush.msra.mxu0 0.0
        %4635 = vmatpush.msra.mxu0 0.0
        %4636 = vmatpush.msra.mxu0 0.0
        %4637 = vmatpush.msra.mxu0 0.0
        %4638 = vmatpush.msra.mxu0 %v583
        %4639 = vmatpush.msra.mxu0 %v579
        %4640 = vmatmul.f32.gmra.mxu0 %v4582
        %v4641 = vpop.f32.mrf.mxu0
        %v4642 = vadd.f32 0.0, %v4641
        %4643 = vdwg.mxu0
        %4644 = vmatpush.msra.mxu0 0.0
        %4645 = vmatpush.msra.mxu0 0.0
        %4646 = vmatpush.msra.mxu0 0.0
        %4647 = vmatpush.msra.mxu0 0.0
        %4648 = vmatpush.msra.mxu0 0.0
        %4649 = vmatpush.msra.mxu0 0.0
        %4650 = vmatpush.msra.mxu0 0.0
        %4651 = vmatpush.msra.mxu0 0.0
        %4652 = vmatpush.msra.mxu0 0.0
        %4653 = vmatpush.msra.mxu0 0.0
        %4654 = vmatpush.msra.mxu0 0.0
        %4655 = vmatpush.msra.mxu0 0.0
        %4656 = vmatpush.msra.mxu0 0.0
        %4657 = vmatpush.msra.mxu0 0.0
        %4658 = vmatpush.msra.mxu0 %v584
        %4659 = vmatpush.msra.mxu0 %v580
        %4660 = vmatmul.f32.gmra.mxu0 %v4582
        %v4661 = vpop.f32.mrf.mxu0
        %v4662 = vadd.f32 0.0, %v4661
        %4663 = vdwg.mxu0
        %v4664 = vperm.slane %v4519, 0
        %v4665 = vperm.slane %v4539, 0
        %v4666 = vperm.slane %v4559, 0
        %v4667 = vperm.slane %v4579, 0
        %v4668 = vsub.f32 %v4249, %v4664
        %v4669 = vsub.f32 %v4250, %v4665
        %v4670 = vsub.f32 %v4251, %v4666
        %v4671 = vsub.f32 %v4252, %v4667
        %v4672 = vsub.f32 %v4253, %v4664
        %v4673 = vsub.f32 %v4254, %v4665
        %v4674 = vsub.f32 %v4255, %v4666
        %v4675 = vsub.f32 %v4256, %v4667
        %v4677 = vperm.slane %v4257, 0
        %v4678 = vperm.slane %v4257, 1
        %v4679 = vperm.slane %v4257, 2
        %v4680 = vperm.slane %v4257, 3
        %v4685 = vmul.f32 %v4602, %v4677
        %v4686 = vmul.f32 %v4622, %v4678
        %v4687 = vmul.f32 %v4642, %v4679
        %v4688 = vmul.f32 %v4662, %v4680
        %v4689 = vperm.slane %v4685, 0
        %v4690 = vperm.slane %v4686, 0
        %v4691 = vperm.slane %v4687, 0
        %v4692 = vperm.slane %v4688, 0
        %v4693 = vmul.f32 %v4668, %v4689
        %v4694 = vmul.f32 %v4669, %v4690
        %v4695 = vmul.f32 %v4670, %v4691
        %v4696 = vmul.f32 %v4671, %v4692
        %v4697 = vmul.f32 %v4672, %v4689
        %v4698 = vmul.f32 %v4673, %v4690
        %v4699 = vmul.f32 %v4674, %v4691
        %v4700 = vmul.f32 %v4675, %v4692
        %v4702 = vperm.slane %v4258, 0
        %v4703 = vperm.slane %v4258, 1
        %v4704 = vperm.slane %v4258, 2
        %v4705 = vperm.slane %v4258, 3
        %v4710 = vadd.f32 %v4693, %v4702
        %v4711 = vadd.f32 %v4694, %v4703
        %v4712 = vadd.f32 %v4695, %v4704
        %v4713 = vadd.f32 %v4696, %v4705
        %v4714 = vadd.f32 %v4697, %v4702
        %v4715 = vadd.f32 %v4698, %v4703
        %v4716 = vadd.f32 %v4699, %v4704
        %v4717 = vadd.f32 %v4700, %v4705
        %v4718 = vmax.f32 %v4710, 0.0
        %v4719 = vmax.f32 %v4711, 0.0
        %v4720 = vmax.f32 %v4712, 0.0
        %v4721 = vmax.f32 %v4713, 0.0
        %v4722 = vmax.f32 %v4714, 0.0
        %v4723 = vmax.f32 %v4715, 0.0
        %v4724 = vmax.f32 %v4716, 0.0
        %v4725 = vmax.f32 %v4717, 0.0
        %v4726 = vpack.c.bf16 %v4722, %v4718
        %v4727 = vpack.c.bf16 %v4723, %v4719
        %v4728 = vpack.c.bf16 %v4724, %v4720
        %v4729 = vpack.c.bf16 %v4725, %v4721
        %4730 = vmatpush.bf16.msra.mxu0 0
        %4731 = vmatpush.bf16.msra.mxu0 0
        %4732 = vmatpush.bf16.msra.mxu0 0
        %4733 = vmatpush.bf16.msra.mxu0 0
        %4734 = vmatpush.bf16.msra.mxu0 0
        %4735 = vmatpush.bf16.msra.mxu0 0
        %4736 = vmatpush.bf16.msra.mxu0 0
        %4737 = vmatpush.bf16.msra.mxu0 %v4726
        %4738 = vmatmul.bf16.gmra.mxu0 %v1067
        %v4739 = vpop.f32.mrf.mxu0
        %v4740 = vadd.f32 0.0, %v4739
        %v4741 = vpop.f32.mrf.mxu0
        %v4742 = vadd.f32 0.0, %v4741
        %4743 = vdwg.mxu0
        %4744 = vmatpush.bf16.msra.mxu0 0
        %4745 = vmatpush.bf16.msra.mxu0 0
        %4746 = vmatpush.bf16.msra.mxu0 0
        %4747 = vmatpush.bf16.msra.mxu0 0
        %4748 = vmatpush.bf16.msra.mxu0 0
        %4749 = vmatpush.bf16.msra.mxu0 0
        %4750 = vmatpush.bf16.msra.mxu0 0
        %4751 = vmatpush.bf16.msra.mxu0 %v4727
        %4752 = vmatmul.bf16.gmra.mxu0 %v1067
        %v4753 = vpop.f32.mrf.mxu0
        %v4754 = vadd.f32 0.0, %v4753
        %v4755 = vpop.f32.mrf.mxu0
        %v4756 = vadd.f32 0.0, %v4755
        %4757 = vdwg.mxu0
        %4758 = vmatpush.bf16.msra.mxu0 0
        %4759 = vmatpush.bf16.msra.mxu0 0
        %4760 = vmatpush.bf16.msra.mxu0 0
        %4761 = vmatpush.bf16.msra.mxu0 0
        %4762 = vmatpush.bf16.msra.mxu0 0
        %4763 = vmatpush.bf16.msra.mxu0 0
        %4764 = vmatpush.bf16.msra.mxu0 0
        %4765 = vmatpush.bf16.msra.mxu0 %v4728
        %4766 = vmatmul.bf16.gmra.mxu0 %v1067
        %v4767 = vpop.f32.mrf.mxu0
        %v4768 = vadd.f32 0.0, %v4767
        %v4769 = vpop.f32.mrf.mxu0
        %v4770 = vadd.f32 0.0, %v4769
        %4771 = vdwg.mxu0
        %4772 = vmatpush.bf16.msra.mxu0 0
        %4773 = vmatpush.bf16.msra.mxu0 0
        %4774 = vmatpush.bf16.msra.mxu0 0
        %4775 = vmatpush.bf16.msra.mxu0 0
        %4776 = vmatpush.bf16.msra.mxu0 0
        %4777 = vmatpush.bf16.msra.mxu0 0
        %4778 = vmatpush.bf16.msra.mxu0 0
        %4779 = vmatpush.bf16.msra.mxu0 %v4729
        %4780 = vmatmul.bf16.gmra.mxu0 %v1067
        %v4781 = vpop.f32.mrf.mxu0
        %v4782 = vadd.f32 0.0, %v4781
        %v4783 = vpop.f32.mrf.mxu0
        %v4784 = vadd.f32 0.0, %v4783
        %4785 = vdwg.mxu0
        %v4786 = vpack.c.bf16 %v4742, %v4740
        %v4787 = vpack.c.bf16 %v4756, %v4754
        %v4788 = vpack.c.bf16 %v4770, %v4768
        %v4789 = vpack.c.bf16 %v4784, %v4782
        %v4790 = vld [vmem:[#allocation14] sm:$0xff]
        %v4791 = vld [vmem:[#allocation14 + $0x8] sm:$0xff]
        %v4792 = vld [vmem:[#allocation14 + $0x10] sm:$0xff]
        %v4793 = vld [vmem:[#allocation14 + $0x18] sm:$0xff]
        %v4794 = vld [vmem:[#allocation14 + $0x20] sm:$0xff]
        %v4795 = vld [vmem:[#allocation14 + $0x28] sm:$0xff]
        %v4796 = vld [vmem:[#allocation14 + $0x30] sm:$0xff]
        %v4797 = vld [vmem:[#allocation14 + $0x38] sm:$0xff]
        %v4798 = vld [vmem:[#allocation14 + $0x40] sm:$0xff]
        %v4799 = vld [vmem:[#allocation14 + $0x48] sm:$0xff]
        %v4800 = vld [vmem:[#allocation14 + $0x50] sm:$0xff]
        %v4801 = vld [vmem:[#allocation14 + $0x58] sm:$0xff]
        %v4802 = vld [vmem:[#allocation14 + $0x60] sm:$0xff]
        %v4803 = vld [vmem:[#allocation14 + $0x68] sm:$0xff]
        %v4804 = vld [vmem:[#allocation14 + $0x70] sm:$0xff]
        %v4805 = vld [vmem:[#allocation14 + $0x78] sm:$0xff]
        %v4806 = vld [vmem:[#allocation14 + $0x80] sm:$0xff]
        %v4807 = vld [vmem:[#allocation14 + $0x88] sm:$0xff]
        %v4808 = vld [vmem:[#allocation14 + $0x90] sm:$0xff]
        %v4809 = vld [vmem:[#allocation14 + $0x98] sm:$0xff]
        %v4810 = vld [vmem:[#allocation14 + $0xa0] sm:$0xff]
        %v4811 = vld [vmem:[#allocation14 + $0xa8] sm:$0xff]
        %v4812 = vld [vmem:[#allocation14 + $0xb0] sm:$0xff]
        %v4813 = vld [vmem:[#allocation14 + $0xb8] sm:$0xff]
        %v4814 = vld [vmem:[#allocation14 + $0xc0] sm:$0xff]
        %v4815 = vld [vmem:[#allocation14 + $0xc8] sm:$0xff]
        %v4816 = vld [vmem:[#allocation14 + $0xd0] sm:$0xff]
        %v4817 = vld [vmem:[#allocation14 + $0xd8] sm:$0xff]
        %v4818 = vld [vmem:[#allocation14 + $0xe0] sm:$0xff]
        %v4819 = vld [vmem:[#allocation14 + $0xe8] sm:$0xff]
        %v4820 = vld [vmem:[#allocation14 + $0xf0] sm:$0xff]
        %v4821 = vld [vmem:[#allocation14 + $0xf8] sm:$0xff]
        %v4822 = vld [vmem:[#allocation14 + $0x100] sm:$0xff]
        %v4823 = vld [vmem:[#allocation14 + $0x108] sm:$0xff]
        %v4824 = vld [vmem:[#allocation14 + $0x110] sm:$0xff]
        %v4825 = vld [vmem:[#allocation14 + $0x118] sm:$0xff]
        %v4826 = vld [vmem:[#allocation14 + $0x120] sm:$0xff]
        %v4827 = vld [vmem:[#allocation14 + $0x128] sm:$0xff]
        %v4828 = vld [vmem:[#allocation14 + $0x130] sm:$0xff]
        %v4829 = vld [vmem:[#allocation14 + $0x138] sm:$0xff]
        %v4830 = vld [vmem:[#allocation14 + $0x140] sm:$0xff]
        %v4831 = vld [vmem:[#allocation14 + $0x148] sm:$0xff]
        %v4832 = vld [vmem:[#allocation14 + $0x150] sm:$0xff]
        %v4833 = vld [vmem:[#allocation14 + $0x158] sm:$0xff]
        %v4834 = vld [vmem:[#allocation14 + $0x160] sm:$0xff]
        %v4835 = vld [vmem:[#allocation14 + $0x168] sm:$0xff]
        %v4836 = vld [vmem:[#allocation14 + $0x170] sm:$0xff]
        %v4837 = vld [vmem:[#allocation14 + $0x178] sm:$0xff]
        %v4838 = vld [vmem:[#allocation14 + $0x180] sm:$0xff]
        %v4839 = vld [vmem:[#allocation14 + $0x188] sm:$0xff]
        %v4840 = vld [vmem:[#allocation14 + $0x190] sm:$0xff]
        %v4841 = vld [vmem:[#allocation14 + $0x198] sm:$0xff]
        %v4842 = vld [vmem:[#allocation14 + $0x1a0] sm:$0xff]
        %v4843 = vld [vmem:[#allocation14 + $0x1a8] sm:$0xff]
        %v4844 = vld [vmem:[#allocation14 + $0x1b0] sm:$0xff]
        %v4845 = vld [vmem:[#allocation14 + $0x1b8] sm:$0xff]
        %v4846 = vld [vmem:[#allocation14 + $0x1c0] sm:$0xff]
        %v4847 = vld [vmem:[#allocation14 + $0x1c8] sm:$0xff]
        %v4848 = vld [vmem:[#allocation14 + $0x1d0] sm:$0xff]
        %v4849 = vld [vmem:[#allocation14 + $0x1d8] sm:$0xff]
        %v4850 = vld [vmem:[#allocation14 + $0x1e0] sm:$0xff]
        %v4851 = vld [vmem:[#allocation14 + $0x1e8] sm:$0xff]
        %v4852 = vld [vmem:[#allocation14 + $0x1f0] sm:$0xff]
        %v4853 = vld [vmem:[#allocation14 + $0x1f8] sm:$0xff]
        %v4854 = vld [vmem:[#allocation14 + $0x200] sm:$0xff]
        %v4855 = vld [vmem:[#allocation14 + $0x208] sm:$0xff]
        %v4856 = vld [vmem:[#allocation14 + $0x210] sm:$0xff]
        %v4857 = vld [vmem:[#allocation14 + $0x218] sm:$0xff]
        %v4858 = vld [vmem:[#allocation14 + $0x220] sm:$0xff]
        %v4859 = vld [vmem:[#allocation14 + $0x228] sm:$0xff]
        %v4860 = vld [vmem:[#allocation14 + $0x230] sm:$0xff]
        %v4861 = vld [vmem:[#allocation14 + $0x238] sm:$0xff]
        %v4862 = vld [vmem:[#allocation14 + $0x240] sm:$0xff]
        %v4863 = vld [vmem:[#allocation14 + $0x248] sm:$0xff]
        %v4864 = vld [vmem:[#allocation14 + $0x250] sm:$0xff]
        %v4865 = vld [vmem:[#allocation14 + $0x258] sm:$0xff]
        %v4866 = vld [vmem:[#allocation14 + $0x260] sm:$0xff]
        %v4867 = vld [vmem:[#allocation14 + $0x268] sm:$0xff]
        %v4868 = vld [vmem:[#allocation14 + $0x270] sm:$0xff]
        %v4869 = vld [vmem:[#allocation14 + $0x278] sm:$0xff]
        %v4870 = vld [vmem:[#allocation14 + $0x280] sm:$0xff]
        %v4871 = vld [vmem:[#allocation14 + $0x288] sm:$0xff]
        %v4872 = vld [vmem:[#allocation14 + $0x290] sm:$0xff]
        %v4873 = vld [vmem:[#allocation14 + $0x298] sm:$0xff]
        %v4874 = vld [vmem:[#allocation14 + $0x2a0] sm:$0xff]
        %v4875 = vld [vmem:[#allocation14 + $0x2a8] sm:$0xff]
        %v4876 = vld [vmem:[#allocation14 + $0x2b0] sm:$0xff]
        %v4877 = vld [vmem:[#allocation14 + $0x2b8] sm:$0xff]
        %v4878 = vld [vmem:[#allocation14 + $0x2c0] sm:$0xff]
        %v4879 = vld [vmem:[#allocation14 + $0x2c8] sm:$0xff]
        %v4880 = vld [vmem:[#allocation14 + $0x2d0] sm:$0xff]
        %v4881 = vld [vmem:[#allocation14 + $0x2d8] sm:$0xff]
        %v4882 = vld [vmem:[#allocation14 + $0x2e0] sm:$0xff]
        %v4883 = vld [vmem:[#allocation14 + $0x2e8] sm:$0xff]
        %v4884 = vld [vmem:[#allocation14 + $0x2f0] sm:$0xff]
        %v4885 = vld [vmem:[#allocation14 + $0x2f8] sm:$0xff]
        %v4886 = vld [vmem:[#allocation14 + $0x300] sm:$0xff]
        %v4887 = vld [vmem:[#allocation14 + $0x308] sm:$0xff]
        %v4888 = vld [vmem:[#allocation14 + $0x310] sm:$0xff]
        %v4889 = vld [vmem:[#allocation14 + $0x318] sm:$0xff]
        %v4890 = vld [vmem:[#allocation14 + $0x320] sm:$0xff]
        %v4891 = vld [vmem:[#allocation14 + $0x328] sm:$0xff]
        %v4892 = vld [vmem:[#allocation14 + $0x330] sm:$0xff]
        %v4893 = vld [vmem:[#allocation14 + $0x338] sm:$0xff]
        %v4894 = vld [vmem:[#allocation14 + $0x340] sm:$0xff]
        %v4895 = vld [vmem:[#allocation14 + $0x348] sm:$0xff]
        %v4896 = vld [vmem:[#allocation14 + $0x350] sm:$0xff]
        %v4897 = vld [vmem:[#allocation14 + $0x358] sm:$0xff]
        %v4898 = vld [vmem:[#allocation14 + $0x360] sm:$0xff]
        %v4899 = vld [vmem:[#allocation14 + $0x368] sm:$0xff]
        %v4900 = vld [vmem:[#allocation14 + $0x370] sm:$0xff]
        %v4901 = vld [vmem:[#allocation14 + $0x378] sm:$0xff]
        %v4902 = vld [vmem:[#allocation14 + $0x380] sm:$0xff]
        %v4903 = vld [vmem:[#allocation14 + $0x388] sm:$0xff]
        %v4904 = vld [vmem:[#allocation14 + $0x390] sm:$0xff]
        %v4905 = vld [vmem:[#allocation14 + $0x398] sm:$0xff]
        %v4906 = vld [vmem:[#allocation14 + $0x3a0] sm:$0xff]
        %v4907 = vld [vmem:[#allocation14 + $0x3a8] sm:$0xff]
        %v4908 = vld [vmem:[#allocation14 + $0x3b0] sm:$0xff]
        %v4909 = vld [vmem:[#allocation14 + $0x3b8] sm:$0xff]
        %v4910 = vld [vmem:[#allocation14 + $0x3c0] sm:$0xff]
        %v4911 = vld [vmem:[#allocation14 + $0x3c8] sm:$0xff]
        %v4912 = vld [vmem:[#allocation14 + $0x3d0] sm:$0xff]
        %v4913 = vld [vmem:[#allocation14 + $0x3d8] sm:$0xff]
        %v4914 = vld [vmem:[#allocation14 + $0x3e0] sm:$0xff]
        %v4915 = vld [vmem:[#allocation14 + $0x3e8] sm:$0xff]
        %v4916 = vld [vmem:[#allocation14 + $0x3f0] sm:$0xff]
        %v4917 = vld [vmem:[#allocation14 + $0x3f8] sm:$0xff]
        %4918 = vmatpush.bf16.msra.mxu0 0
        %4919 = vmatpush.bf16.msra.mxu0 0
        %4920 = vmatpush.bf16.msra.mxu0 0
        %4921 = vmatpush.bf16.msra.mxu0 0
        %4922 = vmatpush.bf16.msra.mxu0 0
        %4923 = vmatpush.bf16.msra.mxu0 0
        %4924 = vmatpush.bf16.msra.mxu0 0
        %4925 = vmatpush.bf16.msra.mxu0 %v4726
        %4926 = vmatmul.bf16.gmra.mxu0 %v1266
        %v4927 = vpop.f32.mrf.mxu0
        %v4928 = vadd.f32 0.0, %v4927
        %v4929 = vpop.f32.mrf.mxu0
        %v4930 = vadd.f32 0.0, %v4929
        %4931 = vdwg.mxu0
        %4932 = vmatpush.bf16.msra.mxu0 0
        %4933 = vmatpush.bf16.msra.mxu0 0
        %4934 = vmatpush.bf16.msra.mxu0 0
        %4935 = vmatpush.bf16.msra.mxu0 0
        %4936 = vmatpush.bf16.msra.mxu0 0
        %4937 = vmatpush.bf16.msra.mxu0 0
        %4938 = vmatpush.bf16.msra.mxu0 0
        %4939 = vmatpush.bf16.msra.mxu0 %v4727
        %4940 = vmatmul.bf16.gmra.mxu0 %v1266
        %v4941 = vpop.f32.mrf.mxu0
        %v4942 = vadd.f32 0.0, %v4941
        %v4943 = vpop.f32.mrf.mxu0
        %v4944 = vadd.f32 0.0, %v4943
        %4945 = vdwg.mxu0
        %4946 = vmatpush.bf16.msra.mxu0 0
        %4947 = vmatpush.bf16.msra.mxu0 0
        %4948 = vmatpush.bf16.msra.mxu0 0
        %4949 = vmatpush.bf16.msra.mxu0 0
        %4950 = vmatpush.bf16.msra.mxu0 0
        %4951 = vmatpush.bf16.msra.mxu0 0
        %4952 = vmatpush.bf16.msra.mxu0 0
        %4953 = vmatpush.bf16.msra.mxu0 %v4728
        %4954 = vmatmul.bf16.gmra.mxu0 %v1266
        %v4955 = vpop.f32.mrf.mxu0
        %v4956 = vadd.f32 0.0, %v4955
        %v4957 = vpop.f32.mrf.mxu0
        %v4958 = vadd.f32 0.0, %v4957
        %4959 = vdwg.mxu0
        %4960 = vmatpush.bf16.msra.mxu0 0
        %4961 = vmatpush.bf16.msra.mxu0 0
        %4962 = vmatpush.bf16.msra.mxu0 0
        %4963 = vmatpush.bf16.msra.mxu0 0
        %4964 = vmatpush.bf16.msra.mxu0 0
        %4965 = vmatpush.bf16.msra.mxu0 0
        %4966 = vmatpush.bf16.msra.mxu0 0
        %4967 = vmatpush.bf16.msra.mxu0 %v4729
        %4968 = vmatmul.bf16.gmra.mxu0 %v1266
        %v4969 = vpop.f32.mrf.mxu0
        %v4970 = vadd.f32 0.0, %v4969
        %v4971 = vpop.f32.mrf.mxu0
        %v4972 = vadd.f32 0.0, %v4971
        %4973 = vdwg.mxu0
        %v4974 = vpack.c.bf16 %v4930, %v4928
        %v4975 = vpack.c.bf16 %v4944, %v4942
        %v4976 = vpack.c.bf16 %v4958, %v4956
        %v4977 = vpack.c.bf16 %v4972, %v4970
        %s4978 = scalar_lea.vmem [#allocation14], 1024
        %v4979 = vld [vmem:[%s4978] sm:$0xff]
        %v4980 = vld [vmem:[%s4978 + $0x8] sm:$0xff]
        %v4981 = vld [vmem:[%s4978 + $0x10] sm:$0xff]
        %v4982 = vld [vmem:[%s4978 + $0x18] sm:$0xff]
        %v4983 = vld [vmem:[%s4978 + $0x20] sm:$0xff]
        %v4984 = vld [vmem:[%s4978 + $0x28] sm:$0xff]
        %v4985 = vld [vmem:[%s4978 + $0x30] sm:$0xff]
        %v4986 = vld [vmem:[%s4978 + $0x38] sm:$0xff]
        %v4987 = vld [vmem:[%s4978 + $0x40] sm:$0xff]
        %v4988 = vld [vmem:[%s4978 + $0x48] sm:$0xff]
        %v4989 = vld [vmem:[%s4978 + $0x50] sm:$0xff]
        %v4990 = vld [vmem:[%s4978 + $0x58] sm:$0xff]
        %v4991 = vld [vmem:[%s4978 + $0x60] sm:$0xff]
        %v4992 = vld [vmem:[%s4978 + $0x68] sm:$0xff]
        %v4993 = vld [vmem:[%s4978 + $0x70] sm:$0xff]
        %v4994 = vld [vmem:[%s4978 + $0x78] sm:$0xff]
        %v4995 = vld [vmem:[%s4978 + $0x80] sm:$0xff]
        %v4996 = vld [vmem:[%s4978 + $0x88] sm:$0xff]
        %v4997 = vld [vmem:[%s4978 + $0x90] sm:$0xff]
        %v4998 = vld [vmem:[%s4978 + $0x98] sm:$0xff]
        %v4999 = vld [vmem:[%s4978 + $0xa0] sm:$0xff]
        %v5000 = vld [vmem:[%s4978 + $0xa8] sm:$0xff]
        %v5001 = vld [vmem:[%s4978 + $0xb0] sm:$0xff]
        %v5002 = vld [vmem:[%s4978 + $0xb8] sm:$0xff]
        %v5003 = vld [vmem:[%s4978 + $0xc0] sm:$0xff]
        %v5004 = vld [vmem:[%s4978 + $0xc8] sm:$0xff]
        %v5005 = vld [vmem:[%s4978 + $0xd0] sm:$0xff]
        %v5006 = vld [vmem:[%s4978 + $0xd8] sm:$0xff]
        %v5007 = vld [vmem:[%s4978 + $0xe0] sm:$0xff]
        %v5008 = vld [vmem:[%s4978 + $0xe8] sm:$0xff]
        %v5009 = vld [vmem:[%s4978 + $0xf0] sm:$0xff]
        %v5010 = vld [vmem:[%s4978 + $0xf8] sm:$0xff]
        %v5011 = vld [vmem:[%s4978 + $0x100] sm:$0xff]
        %v5012 = vld [vmem:[%s4978 + $0x108] sm:$0xff]
        %v5013 = vld [vmem:[%s4978 + $0x110] sm:$0xff]
        %v5014 = vld [vmem:[%s4978 + $0x118] sm:$0xff]
        %v5015 = vld [vmem:[%s4978 + $0x120] sm:$0xff]
        %v5016 = vld [vmem:[%s4978 + $0x128] sm:$0xff]
        %v5017 = vld [vmem:[%s4978 + $0x130] sm:$0xff]
        %v5018 = vld [vmem:[%s4978 + $0x138] sm:$0xff]
        %v5019 = vld [vmem:[%s4978 + $0x140] sm:$0xff]
        %v5020 = vld [vmem:[%s4978 + $0x148] sm:$0xff]
        %v5021 = vld [vmem:[%s4978 + $0x150] sm:$0xff]
        %v5022 = vld [vmem:[%s4978 + $0x158] sm:$0xff]
        %v5023 = vld [vmem:[%s4978 + $0x160] sm:$0xff]
        %v5024 = vld [vmem:[%s4978 + $0x168] sm:$0xff]
        %v5025 = vld [vmem:[%s4978 + $0x170] sm:$0xff]
        %v5026 = vld [vmem:[%s4978 + $0x178] sm:$0xff]
        %v5027 = vld [vmem:[%s4978 + $0x180] sm:$0xff]
        %v5028 = vld [vmem:[%s4978 + $0x188] sm:$0xff]
        %v5029 = vld [vmem:[%s4978 + $0x190] sm:$0xff]
        %v5030 = vld [vmem:[%s4978 + $0x198] sm:$0xff]
        %v5031 = vld [vmem:[%s4978 + $0x1a0] sm:$0xff]
        %v5032 = vld [vmem:[%s4978 + $0x1a8] sm:$0xff]
        %v5033 = vld [vmem:[%s4978 + $0x1b0] sm:$0xff]
        %v5034 = vld [vmem:[%s4978 + $0x1b8] sm:$0xff]
        %v5035 = vld [vmem:[%s4978 + $0x1c0] sm:$0xff]
        %v5036 = vld [vmem:[%s4978 + $0x1c8] sm:$0xff]
        %v5037 = vld [vmem:[%s4978 + $0x1d0] sm:$0xff]
        %v5038 = vld [vmem:[%s4978 + $0x1d8] sm:$0xff]
        %v5039 = vld [vmem:[%s4978 + $0x1e0] sm:$0xff]
        %v5040 = vld [vmem:[%s4978 + $0x1e8] sm:$0xff]
        %v5041 = vld [vmem:[%s4978 + $0x1f0] sm:$0xff]
        %v5042 = vld [vmem:[%s4978 + $0x1f8] sm:$0xff]
        %v5043 = vld [vmem:[%s4978 + $0x200] sm:$0xff]
        %v5044 = vld [vmem:[%s4978 + $0x208] sm:$0xff]
        %v5045 = vld [vmem:[%s4978 + $0x210] sm:$0xff]
        %v5046 = vld [vmem:[%s4978 + $0x218] sm:$0xff]
        %v5047 = vld [vmem:[%s4978 + $0x220] sm:$0xff]
        %v5048 = vld [vmem:[%s4978 + $0x228] sm:$0xff]
        %v5049 = vld [vmem:[%s4978 + $0x230] sm:$0xff]
        %v5050 = vld [vmem:[%s4978 + $0x238] sm:$0xff]
        %v5051 = vld [vmem:[%s4978 + $0x240] sm:$0xff]
        %v5052 = vld [vmem:[%s4978 + $0x248] sm:$0xff]
        %v5053 = vld [vmem:[%s4978 + $0x250] sm:$0xff]
        %v5054 = vld [vmem:[%s4978 + $0x258] sm:$0xff]
        %v5055 = vld [vmem:[%s4978 + $0x260] sm:$0xff]
        %v5056 = vld [vmem:[%s4978 + $0x268] sm:$0xff]
        %v5057 = vld [vmem:[%s4978 + $0x270] sm:$0xff]
        %v5058 = vld [vmem:[%s4978 + $0x278] sm:$0xff]
        %v5059 = vld [vmem:[%s4978 + $0x280] sm:$0xff]
        %v5060 = vld [vmem:[%s4978 + $0x288] sm:$0xff]
        %v5061 = vld [vmem:[%s4978 + $0x290] sm:$0xff]
        %v5062 = vld [vmem:[%s4978 + $0x298] sm:$0xff]
        %v5063 = vld [vmem:[%s4978 + $0x2a0] sm:$0xff]
        %v5064 = vld [vmem:[%s4978 + $0x2a8] sm:$0xff]
        %v5065 = vld [vmem:[%s4978 + $0x2b0] sm:$0xff]
        %v5066 = vld [vmem:[%s4978 + $0x2b8] sm:$0xff]
        %v5067 = vld [vmem:[%s4978 + $0x2c0] sm:$0xff]
        %v5068 = vld [vmem:[%s4978 + $0x2c8] sm:$0xff]
        %v5069 = vld [vmem:[%s4978 + $0x2d0] sm:$0xff]
        %v5070 = vld [vmem:[%s4978 + $0x2d8] sm:$0xff]
        %v5071 = vld [vmem:[%s4978 + $0x2e0] sm:$0xff]
        %v5072 = vld [vmem:[%s4978 + $0x2e8] sm:$0xff]
        %v5073 = vld [vmem:[%s4978 + $0x2f0] sm:$0xff]
        %v5074 = vld [vmem:[%s4978 + $0x2f8] sm:$0xff]
        %v5075 = vld [vmem:[%s4978 + $0x300] sm:$0xff]
        %v5076 = vld [vmem:[%s4978 + $0x308] sm:$0xff]
        %v5077 = vld [vmem:[%s4978 + $0x310] sm:$0xff]
        %v5078 = vld [vmem:[%s4978 + $0x318] sm:$0xff]
        %v5079 = vld [vmem:[%s4978 + $0x320] sm:$0xff]
        %v5080 = vld [vmem:[%s4978 + $0x328] sm:$0xff]
        %v5081 = vld [vmem:[%s4978 + $0x330] sm:$0xff]
        %v5082 = vld [vmem:[%s4978 + $0x338] sm:$0xff]
        %v5083 = vld [vmem:[%s4978 + $0x340] sm:$0xff]
        %v5084 = vld [vmem:[%s4978 + $0x348] sm:$0xff]
        %v5085 = vld [vmem:[%s4978 + $0x350] sm:$0xff]
        %v5086 = vld [vmem:[%s4978 + $0x358] sm:$0xff]
        %v5087 = vld [vmem:[%s4978 + $0x360] sm:$0xff]
        %v5088 = vld [vmem:[%s4978 + $0x368] sm:$0xff]
        %v5089 = vld [vmem:[%s4978 + $0x370] sm:$0xff]
        %v5090 = vld [vmem:[%s4978 + $0x378] sm:$0xff]
        %v5091 = vld [vmem:[%s4978 + $0x380] sm:$0xff]
        %v5092 = vld [vmem:[%s4978 + $0x388] sm:$0xff]
        %v5093 = vld [vmem:[%s4978 + $0x390] sm:$0xff]
        %v5094 = vld [vmem:[%s4978 + $0x398] sm:$0xff]
        %v5095 = vld [vmem:[%s4978 + $0x3a0] sm:$0xff]
        %v5096 = vld [vmem:[%s4978 + $0x3a8] sm:$0xff]
        %v5097 = vld [vmem:[%s4978 + $0x3b0] sm:$0xff]
        %v5098 = vld [vmem:[%s4978 + $0x3b8] sm:$0xff]
        %v5099 = vld [vmem:[%s4978 + $0x3c0] sm:$0xff]
        %v5100 = vld [vmem:[%s4978 + $0x3c8] sm:$0xff]
        %v5101 = vld [vmem:[%s4978 + $0x3d0] sm:$0xff]
        %v5102 = vld [vmem:[%s4978 + $0x3d8] sm:$0xff]
        %v5103 = vld [vmem:[%s4978 + $0x3e0] sm:$0xff]
        %v5104 = vld [vmem:[%s4978 + $0x3e8] sm:$0xff]
        %v5105 = vld [vmem:[%s4978 + $0x3f0] sm:$0xff]
        %v5106 = vld [vmem:[%s4978 + $0x3f8] sm:$0xff]
        %v5235 = vunpack.c.l.b16 %v4979
        %v5236 = vunpack.c.h.b16 %v4979
        %v5237 = vunpack.c.l.b16 %v4980
        %v5238 = vunpack.c.h.b16 %v4980
        %v5239 = vunpack.c.l.b16 %v4981
        %v5240 = vunpack.c.h.b16 %v4981
        %v5241 = vunpack.c.l.b16 %v4982
        %v5242 = vunpack.c.h.b16 %v4982
        %v5243 = vunpack.c.l.b16 %v4983
        %v5244 = vunpack.c.h.b16 %v4983
        %v5245 = vunpack.c.l.b16 %v4984
        %v5246 = vunpack.c.h.b16 %v4984
        %v5247 = vunpack.c.l.b16 %v4985
        %v5248 = vunpack.c.h.b16 %v4985
        %v5249 = vunpack.c.l.b16 %v4986
        %v5250 = vunpack.c.h.b16 %v4986
        %v5251 = vunpack.c.l.b16 %v4987
        %v5252 = vunpack.c.h.b16 %v4987
        %v5253 = vunpack.c.l.b16 %v4988
        %v5254 = vunpack.c.h.b16 %v4988
        %v5255 = vunpack.c.l.b16 %v4989
        %v5256 = vunpack.c.h.b16 %v4989
        %v5257 = vunpack.c.l.b16 %v4990
        %v5258 = vunpack.c.h.b16 %v4990
        %v5259 = vunpack.c.l.b16 %v4991
        %v5260 = vunpack.c.h.b16 %v4991
        %v5261 = vunpack.c.l.b16 %v4992
        %v5262 = vunpack.c.h.b16 %v4992
        %v5263 = vunpack.c.l.b16 %v4993
        %v5264 = vunpack.c.h.b16 %v4993
        %v5265 = vunpack.c.l.b16 %v4994
        %v5266 = vunpack.c.h.b16 %v4994
        %v5267 = vunpack.c.l.b16 %v4995
        %v5268 = vunpack.c.h.b16 %v4995
        %v5269 = vunpack.c.l.b16 %v4996
        %v5270 = vunpack.c.h.b16 %v4996
        %v5271 = vunpack.c.l.b16 %v4997
        %v5272 = vunpack.c.h.b16 %v4997
        %v5273 = vunpack.c.l.b16 %v4998
        %v5274 = vunpack.c.h.b16 %v4998
        %v5275 = vunpack.c.l.b16 %v4999
        %v5276 = vunpack.c.h.b16 %v4999
        %v5277 = vunpack.c.l.b16 %v5000
        %v5278 = vunpack.c.h.b16 %v5000
        %v5279 = vunpack.c.l.b16 %v5001
        %v5280 = vunpack.c.h.b16 %v5001
        %v5281 = vunpack.c.l.b16 %v5002
        %v5282 = vunpack.c.h.b16 %v5002
        %v5283 = vunpack.c.l.b16 %v5003
        %v5284 = vunpack.c.h.b16 %v5003
        %v5285 = vunpack.c.l.b16 %v5004
        %v5286 = vunpack.c.h.b16 %v5004
        %v5287 = vunpack.c.l.b16 %v5005
        %v5288 = vunpack.c.h.b16 %v5005
        %v5289 = vunpack.c.l.b16 %v5006
        %v5290 = vunpack.c.h.b16 %v5006
        %v5291 = vunpack.c.l.b16 %v5007
        %v5292 = vunpack.c.h.b16 %v5007
        %v5293 = vunpack.c.l.b16 %v5008
        %v5294 = vunpack.c.h.b16 %v5008
        %v5295 = vunpack.c.l.b16 %v5009
        %v5296 = vunpack.c.h.b16 %v5009
        %v5297 = vunpack.c.l.b16 %v5010
        %v5298 = vunpack.c.h.b16 %v5010
        %v5299 = vunpack.c.l.b16 %v5011
        %v5300 = vunpack.c.h.b16 %v5011
        %v5301 = vunpack.c.l.b16 %v5012
        %v5302 = vunpack.c.h.b16 %v5012
        %v5303 = vunpack.c.l.b16 %v5013
        %v5304 = vunpack.c.h.b16 %v5013
        %v5305 = vunpack.c.l.b16 %v5014
        %v5306 = vunpack.c.h.b16 %v5014
        %v5307 = vunpack.c.l.b16 %v5015
        %v5308 = vunpack.c.h.b16 %v5015
        %v5309 = vunpack.c.l.b16 %v5016
        %v5310 = vunpack.c.h.b16 %v5016
        %v5311 = vunpack.c.l.b16 %v5017
        %v5312 = vunpack.c.h.b16 %v5017
        %v5313 = vunpack.c.l.b16 %v5018
        %v5314 = vunpack.c.h.b16 %v5018
        %v5315 = vunpack.c.l.b16 %v5019
        %v5316 = vunpack.c.h.b16 %v5019
        %v5317 = vunpack.c.l.b16 %v5020
        %v5318 = vunpack.c.h.b16 %v5020
        %v5319 = vunpack.c.l.b16 %v5021
        %v5320 = vunpack.c.h.b16 %v5021
        %v5321 = vunpack.c.l.b16 %v5022
        %v5322 = vunpack.c.h.b16 %v5022
        %v5323 = vunpack.c.l.b16 %v5023
        %v5324 = vunpack.c.h.b16 %v5023
        %v5325 = vunpack.c.l.b16 %v5024
        %v5326 = vunpack.c.h.b16 %v5024
        %v5327 = vunpack.c.l.b16 %v5025
        %v5328 = vunpack.c.h.b16 %v5025
        %v5329 = vunpack.c.l.b16 %v5026
        %v5330 = vunpack.c.h.b16 %v5026
        %v5331 = vunpack.c.l.b16 %v5027
        %v5332 = vunpack.c.h.b16 %v5027
        %v5333 = vunpack.c.l.b16 %v5028
        %v5334 = vunpack.c.h.b16 %v5028
        %v5335 = vunpack.c.l.b16 %v5029
        %v5336 = vunpack.c.h.b16 %v5029
        %v5337 = vunpack.c.l.b16 %v5030
        %v5338 = vunpack.c.h.b16 %v5030
        %v5339 = vunpack.c.l.b16 %v5031
        %v5340 = vunpack.c.h.b16 %v5031
        %v5341 = vunpack.c.l.b16 %v5032
        %v5342 = vunpack.c.h.b16 %v5032
        %v5343 = vunpack.c.l.b16 %v5033
        %v5344 = vunpack.c.h.b16 %v5033
        %v5345 = vunpack.c.l.b16 %v5034
        %v5346 = vunpack.c.h.b16 %v5034
        %v5347 = vunpack.c.l.b16 %v5035
        %v5348 = vunpack.c.h.b16 %v5035
        %v5349 = vunpack.c.l.b16 %v5036
        %v5350 = vunpack.c.h.b16 %v5036
        %v5351 = vunpack.c.l.b16 %v5037
        %v5352 = vunpack.c.h.b16 %v5037
        %v5353 = vunpack.c.l.b16 %v5038
        %v5354 = vunpack.c.h.b16 %v5038
        %v5355 = vunpack.c.l.b16 %v5039
        %v5356 = vunpack.c.h.b16 %v5039
        %v5357 = vunpack.c.l.b16 %v5040
        %v5358 = vunpack.c.h.b16 %v5040
        %v5359 = vunpack.c.l.b16 %v5041
        %v5360 = vunpack.c.h.b16 %v5041
        %v5361 = vunpack.c.l.b16 %v5042
        %v5362 = vunpack.c.h.b16 %v5042
        %v5363 = vunpack.c.l.b16 %v5043
        %v5364 = vunpack.c.h.b16 %v5043
        %v5365 = vunpack.c.l.b16 %v5044
        %v5366 = vunpack.c.h.b16 %v5044
        %v5367 = vunpack.c.l.b16 %v5045
        %v5368 = vunpack.c.h.b16 %v5045
        %v5369 = vunpack.c.l.b16 %v5046
        %v5370 = vunpack.c.h.b16 %v5046
        %v5371 = vunpack.c.l.b16 %v5047
        %v5372 = vunpack.c.h.b16 %v5047
        %v5373 = vunpack.c.l.b16 %v5048
        %v5374 = vunpack.c.h.b16 %v5048
        %v5375 = vunpack.c.l.b16 %v5049
        %v5376 = vunpack.c.h.b16 %v5049
        %v5377 = vunpack.c.l.b16 %v5050
        %v5378 = vunpack.c.h.b16 %v5050
        %v5379 = vunpack.c.l.b16 %v5051
        %v5380 = vunpack.c.h.b16 %v5051
        %v5381 = vunpack.c.l.b16 %v5052
        %v5382 = vunpack.c.h.b16 %v5052
        %v5383 = vunpack.c.l.b16 %v5053
        %v5384 = vunpack.c.h.b16 %v5053
        %v5385 = vunpack.c.l.b16 %v5054
        %v5386 = vunpack.c.h.b16 %v5054
        %v5387 = vunpack.c.l.b16 %v5055
        %v5388 = vunpack.c.h.b16 %v5055
        %v5389 = vunpack.c.l.b16 %v5056
        %v5390 = vunpack.c.h.b16 %v5056
        %v5391 = vunpack.c.l.b16 %v5057
        %v5392 = vunpack.c.h.b16 %v5057
        %v5393 = vunpack.c.l.b16 %v5058
        %v5394 = vunpack.c.h.b16 %v5058
        %v5395 = vunpack.c.l.b16 %v5059
        %v5396 = vunpack.c.h.b16 %v5059
        %v5397 = vunpack.c.l.b16 %v5060
        %v5398 = vunpack.c.h.b16 %v5060
        %v5399 = vunpack.c.l.b16 %v5061
        %v5400 = vunpack.c.h.b16 %v5061
        %v5401 = vunpack.c.l.b16 %v5062
        %v5402 = vunpack.c.h.b16 %v5062
        %v5403 = vunpack.c.l.b16 %v5063
        %v5404 = vunpack.c.h.b16 %v5063
        %v5405 = vunpack.c.l.b16 %v5064
        %v5406 = vunpack.c.h.b16 %v5064
        %v5407 = vunpack.c.l.b16 %v5065
        %v5408 = vunpack.c.h.b16 %v5065
        %v5409 = vunpack.c.l.b16 %v5066
        %v5410 = vunpack.c.h.b16 %v5066
        %v5411 = vunpack.c.l.b16 %v5067
        %v5412 = vunpack.c.h.b16 %v5067
        %v5413 = vunpack.c.l.b16 %v5068
        %v5414 = vunpack.c.h.b16 %v5068
        %v5415 = vunpack.c.l.b16 %v5069
        %v5416 = vunpack.c.h.b16 %v5069
        %v5417 = vunpack.c.l.b16 %v5070
        %v5418 = vunpack.c.h.b16 %v5070
        %v5419 = vunpack.c.l.b16 %v5071
        %v5420 = vunpack.c.h.b16 %v5071
        %v5421 = vunpack.c.l.b16 %v5072
        %v5422 = vunpack.c.h.b16 %v5072
        %v5423 = vunpack.c.l.b16 %v5073
        %v5424 = vunpack.c.h.b16 %v5073
        %v5425 = vunpack.c.l.b16 %v5074
        %v5426 = vunpack.c.h.b16 %v5074
        %v5427 = vunpack.c.l.b16 %v5075
        %v5428 = vunpack.c.h.b16 %v5075
        %v5429 = vunpack.c.l.b16 %v5076
        %v5430 = vunpack.c.h.b16 %v5076
        %v5431 = vunpack.c.l.b16 %v5077
        %v5432 = vunpack.c.h.b16 %v5077
        %v5433 = vunpack.c.l.b16 %v5078
        %v5434 = vunpack.c.h.b16 %v5078
        %v5435 = vunpack.c.l.b16 %v5079
        %v5436 = vunpack.c.h.b16 %v5079
        %v5437 = vunpack.c.l.b16 %v5080
        %v5438 = vunpack.c.h.b16 %v5080
        %v5439 = vunpack.c.l.b16 %v5081
        %v5440 = vunpack.c.h.b16 %v5081
        %v5441 = vunpack.c.l.b16 %v5082
        %v5442 = vunpack.c.h.b16 %v5082
        %v5443 = vunpack.c.l.b16 %v5083
        %v5444 = vunpack.c.h.b16 %v5083
        %v5445 = vunpack.c.l.b16 %v5084
        %v5446 = vunpack.c.h.b16 %v5084
        %v5447 = vunpack.c.l.b16 %v5085
        %v5448 = vunpack.c.h.b16 %v5085
        %v5449 = vunpack.c.l.b16 %v5086
        %v5450 = vunpack.c.h.b16 %v5086
        %v5451 = vunpack.c.l.b16 %v5087
        %v5452 = vunpack.c.h.b16 %v5087
        %v5453 = vunpack.c.l.b16 %v5088
        %v5454 = vunpack.c.h.b16 %v5088
        %v5455 = vunpack.c.l.b16 %v5089
        %v5456 = vunpack.c.h.b16 %v5089
        %v5457 = vunpack.c.l.b16 %v5090
        %v5458 = vunpack.c.h.b16 %v5090
        %v5459 = vunpack.c.l.b16 %v5091
        %v5460 = vunpack.c.h.b16 %v5091
        %v5461 = vunpack.c.l.b16 %v5092
        %v5462 = vunpack.c.h.b16 %v5092
        %v5463 = vunpack.c.l.b16 %v5093
        %v5464 = vunpack.c.h.b16 %v5093
        %v5465 = vunpack.c.l.b16 %v5094
        %v5466 = vunpack.c.h.b16 %v5094
        %v5467 = vunpack.c.l.b16 %v5095
        %v5468 = vunpack.c.h.b16 %v5095
        %v5469 = vunpack.c.l.b16 %v5096
        %v5470 = vunpack.c.h.b16 %v5096
        %v5471 = vunpack.c.l.b16 %v5097
        %v5472 = vunpack.c.h.b16 %v5097
        %v5473 = vunpack.c.l.b16 %v5098
        %v5474 = vunpack.c.h.b16 %v5098
        %v5475 = vunpack.c.l.b16 %v5099
        %v5476 = vunpack.c.h.b16 %v5099
        %v5477 = vunpack.c.l.b16 %v5100
        %v5478 = vunpack.c.h.b16 %v5100
        %v5479 = vunpack.c.l.b16 %v5101
        %v5480 = vunpack.c.h.b16 %v5101
        %v5481 = vunpack.c.l.b16 %v5102
        %v5482 = vunpack.c.h.b16 %v5102
        %v5483 = vunpack.c.l.b16 %v5103
        %v5484 = vunpack.c.h.b16 %v5103
        %v5485 = vunpack.c.l.b16 %v5104
        %v5486 = vunpack.c.h.b16 %v5104
        %v5487 = vunpack.c.l.b16 %v5105
        %v5488 = vunpack.c.h.b16 %v5105
        %v5489 = vunpack.c.l.b16 %v5106
        %v5490 = vunpack.c.h.b16 %v5106
        %v5491 = vpack.c.b16 %v5239, %v5235
        %v5492 = vpack.c.b16 %v5240, %v5236
        %v5493 = vpack.c.b16 %v5241, %v5237
        %v5494 = vpack.c.b16 %v5242, %v5238
        %v5495 = vpack.c.b16 %v5247, %v5243
        %v5496 = vpack.c.b16 %v5248, %v5244
        %v5497 = vpack.c.b16 %v5249, %v5245
        %v5498 = vpack.c.b16 %v5250, %v5246
        %v5499 = vpack.c.b16 %v5255, %v5251
        %v5500 = vpack.c.b16 %v5256, %v5252
        %v5501 = vpack.c.b16 %v5257, %v5253
        %v5502 = vpack.c.b16 %v5258, %v5254
        %v5503 = vpack.c.b16 %v5263, %v5259
        %v5504 = vpack.c.b16 %v5264, %v5260
        %v5505 = vpack.c.b16 %v5265, %v5261
        %v5506 = vpack.c.b16 %v5266, %v5262
        %v5507 = vpack.c.b16 %v5271, %v5267
        %v5508 = vpack.c.b16 %v5272, %v5268
        %v5509 = vpack.c.b16 %v5273, %v5269
        %v5510 = vpack.c.b16 %v5274, %v5270
        %v5511 = vpack.c.b16 %v5279, %v5275
        %v5512 = vpack.c.b16 %v5280, %v5276
        %v5513 = vpack.c.b16 %v5281, %v5277
        %v5514 = vpack.c.b16 %v5282, %v5278
        %v5515 = vpack.c.b16 %v5287, %v5283
        %v5516 = vpack.c.b16 %v5288, %v5284
        %v5517 = vpack.c.b16 %v5289, %v5285
        %v5518 = vpack.c.b16 %v5290, %v5286
        %v5519 = vpack.c.b16 %v5295, %v5291
        %v5520 = vpack.c.b16 %v5296, %v5292
        %v5521 = vpack.c.b16 %v5297, %v5293
        %v5522 = vpack.c.b16 %v5298, %v5294
        %v5523 = vpack.c.b16 %v5303, %v5299
        %v5524 = vpack.c.b16 %v5304, %v5300
        %v5525 = vpack.c.b16 %v5305, %v5301
        %v5526 = vpack.c.b16 %v5306, %v5302
        %v5527 = vpack.c.b16 %v5311, %v5307
        %v5528 = vpack.c.b16 %v5312, %v5308
        %v5529 = vpack.c.b16 %v5313, %v5309
        %v5530 = vpack.c.b16 %v5314, %v5310
        %v5531 = vpack.c.b16 %v5319, %v5315
        %v5532 = vpack.c.b16 %v5320, %v5316
        %v5533 = vpack.c.b16 %v5321, %v5317
        %v5534 = vpack.c.b16 %v5322, %v5318
        %v5535 = vpack.c.b16 %v5327, %v5323
        %v5536 = vpack.c.b16 %v5328, %v5324
        %v5537 = vpack.c.b16 %v5329, %v5325
        %v5538 = vpack.c.b16 %v5330, %v5326
        %v5539 = vpack.c.b16 %v5335, %v5331
        %v5540 = vpack.c.b16 %v5336, %v5332
        %v5541 = vpack.c.b16 %v5337, %v5333
        %v5542 = vpack.c.b16 %v5338, %v5334
        %v5543 = vpack.c.b16 %v5343, %v5339
        %v5544 = vpack.c.b16 %v5344, %v5340
        %v5545 = vpack.c.b16 %v5345, %v5341
        %v5546 = vpack.c.b16 %v5346, %v5342
        %v5547 = vpack.c.b16 %v5351, %v5347
        %v5548 = vpack.c.b16 %v5352, %v5348
        %v5549 = vpack.c.b16 %v5353, %v5349
        %v5550 = vpack.c.b16 %v5354, %v5350
        %v5551 = vpack.c.b16 %v5359, %v5355
        %v5552 = vpack.c.b16 %v5360, %v5356
        %v5553 = vpack.c.b16 %v5361, %v5357
        %v5554 = vpack.c.b16 %v5362, %v5358
        %v5555 = vpack.c.b16 %v5367, %v5363
        %v5556 = vpack.c.b16 %v5368, %v5364
        %v5557 = vpack.c.b16 %v5369, %v5365
        %v5558 = vpack.c.b16 %v5370, %v5366
        %v5559 = vpack.c.b16 %v5375, %v5371
        %v5560 = vpack.c.b16 %v5376, %v5372
        %v5561 = vpack.c.b16 %v5377, %v5373
        %v5562 = vpack.c.b16 %v5378, %v5374
        %v5563 = vpack.c.b16 %v5383, %v5379
        %v5564 = vpack.c.b16 %v5384, %v5380
        %v5565 = vpack.c.b16 %v5385, %v5381
        %v5566 = vpack.c.b16 %v5386, %v5382
        %v5567 = vpack.c.b16 %v5391, %v5387
        %v5568 = vpack.c.b16 %v5392, %v5388
        %v5569 = vpack.c.b16 %v5393, %v5389
        %v5570 = vpack.c.b16 %v5394, %v5390
        %v5571 = vpack.c.b16 %v5399, %v5395
        %v5572 = vpack.c.b16 %v5400, %v5396
        %v5573 = vpack.c.b16 %v5401, %v5397
        %v5574 = vpack.c.b16 %v5402, %v5398
        %v5575 = vpack.c.b16 %v5407, %v5403
        %v5576 = vpack.c.b16 %v5408, %v5404
        %v5577 = vpack.c.b16 %v5409, %v5405
        %v5578 = vpack.c.b16 %v5410, %v5406
        %v5579 = vpack.c.b16 %v5415, %v5411
        %v5580 = vpack.c.b16 %v5416, %v5412
        %v5581 = vpack.c.b16 %v5417, %v5413
        %v5582 = vpack.c.b16 %v5418, %v5414
        %v5583 = vpack.c.b16 %v5423, %v5419
        %v5584 = vpack.c.b16 %v5424, %v5420
        %v5585 = vpack.c.b16 %v5425, %v5421
        %v5586 = vpack.c.b16 %v5426, %v5422
        %v5587 = vpack.c.b16 %v5431, %v5427
        %v5588 = vpack.c.b16 %v5432, %v5428
        %v5589 = vpack.c.b16 %v5433, %v5429
        %v5590 = vpack.c.b16 %v5434, %v5430
        %v5591 = vpack.c.b16 %v5439, %v5435
        %v5592 = vpack.c.b16 %v5440, %v5436
        %v5593 = vpack.c.b16 %v5441, %v5437
        %v5594 = vpack.c.b16 %v5442, %v5438
        %v5595 = vpack.c.b16 %v5447, %v5443
        %v5596 = vpack.c.b16 %v5448, %v5444
        %v5597 = vpack.c.b16 %v5449, %v5445
        %v5598 = vpack.c.b16 %v5450, %v5446
        %v5599 = vpack.c.b16 %v5455, %v5451
        %v5600 = vpack.c.b16 %v5456, %v5452
        %v5601 = vpack.c.b16 %v5457, %v5453
        %v5602 = vpack.c.b16 %v5458, %v5454
        %v5603 = vpack.c.b16 %v5463, %v5459
        %v5604 = vpack.c.b16 %v5464, %v5460
        %v5605 = vpack.c.b16 %v5465, %v5461
        %v5606 = vpack.c.b16 %v5466, %v5462
        %v5607 = vpack.c.b16 %v5471, %v5467
        %v5608 = vpack.c.b16 %v5472, %v5468
        %v5609 = vpack.c.b16 %v5473, %v5469
        %v5610 = vpack.c.b16 %v5474, %v5470
        %v5611 = vpack.c.b16 %v5479, %v5475
        %v5612 = vpack.c.b16 %v5480, %v5476
        %v5613 = vpack.c.b16 %v5481, %v5477
        %v5614 = vpack.c.b16 %v5482, %v5478
        %v5615 = vpack.c.b16 %v5487, %v5483
        %v5616 = vpack.c.b16 %v5488, %v5484
        %v5617 = vpack.c.b16 %v5489, %v5485
        %v5618 = vpack.c.b16 %v5490, %v5486
        %5747 = vmatpush.bf16.msra.mxu0 %v5519
        %5748 = vmatpush.bf16.msra.mxu0 %v5515
        %5749 = vmatpush.bf16.msra.mxu0 %v5511
        %5750 = vmatpush.bf16.msra.mxu0 %v5507
        %5751 = vmatpush.bf16.msra.mxu0 %v5503
        %5752 = vmatpush.bf16.msra.mxu0 %v5499
        %5753 = vmatpush.bf16.msra.mxu0 %v5495
        %5754 = vmatpush.bf16.msra.mxu0 %v5491
        %5755 = vmatmul.bf16.gmra.mxu0 %v4974
        %v5756 = vpop.f32.mrf.mxu0
        %v5757 = vadd.f32 0.0, %v5756
        %v5758 = vpop.f32.mrf.mxu0
        %v5759 = vadd.f32 0.0, %v5758
        %5760 = vdwg.mxu0
        %5761 = vmatpush.bf16.msra.mxu0 %v5551
        %5762 = vmatpush.bf16.msra.mxu0 %v5547
        %5763 = vmatpush.bf16.msra.mxu0 %v5543
        %5764 = vmatpush.bf16.msra.mxu0 %v5539
        %5765 = vmatpush.bf16.msra.mxu0 %v5535
        %5766 = vmatpush.bf16.msra.mxu0 %v5531
        %5767 = vmatpush.bf16.msra.mxu0 %v5527
        %5768 = vmatpush.bf16.msra.mxu0 %v5523
        %5769 = vmatmul.bf16.gmra.mxu0 %v4975
        %v5770 = vpop.f32.mrf.mxu0
        %v5771 = vadd.f32 %v5757, %v5770
        %v5772 = vpop.f32.mrf.mxu0
        %v5773 = vadd.f32 %v5759, %v5772
        %5774 = vdwg.mxu0
        %5775 = vmatpush.bf16.msra.mxu0 %v5583
        %5776 = vmatpush.bf16.msra.mxu0 %v5579
        %5777 = vmatpush.bf16.msra.mxu0 %v5575
        %5778 = vmatpush.bf16.msra.mxu0 %v5571
        %5779 = vmatpush.bf16.msra.mxu0 %v5567
        %5780 = vmatpush.bf16.msra.mxu0 %v5563
        %5781 = vmatpush.bf16.msra.mxu0 %v5559
        %5782 = vmatpush.bf16.msra.mxu0 %v5555
        %5783 = vmatmul.bf16.gmra.mxu0 %v4976
        %v5784 = vpop.f32.mrf.mxu0
        %v5785 = vadd.f32 %v5771, %v5784
        %v5786 = vpop.f32.mrf.mxu0
        %v5787 = vadd.f32 %v5773, %v5786
        %5788 = vdwg.mxu0
        %5789 = vmatpush.bf16.msra.mxu0 %v5615
        %5790 = vmatpush.bf16.msra.mxu0 %v5611
        %5791 = vmatpush.bf16.msra.mxu0 %v5607
        %5792 = vmatpush.bf16.msra.mxu0 %v5603
        %5793 = vmatpush.bf16.msra.mxu0 %v5599
        %5794 = vmatpush.bf16.msra.mxu0 %v5595
        %5795 = vmatpush.bf16.msra.mxu0 %v5591
        %5796 = vmatpush.bf16.msra.mxu0 %v5587
        %5797 = vmatmul.bf16.gmra.mxu0 %v4977
        %v5798 = vpop.f32.mrf.mxu0
        %v5799 = vadd.f32 %v5785, %v5798
        %v5800 = vpop.f32.mrf.mxu0
        %v5801 = vadd.f32 %v5787, %v5800
        %5802 = vdwg.mxu0
        %5803 = vmatpush.bf16.msra.mxu0 %v5520
        %5804 = vmatpush.bf16.msra.mxu0 %v5516
        %5805 = vmatpush.bf16.msra.mxu0 %v5512
        %5806 = vmatpush.bf16.msra.mxu0 %v5508
        %5807 = vmatpush.bf16.msra.mxu0 %v5504
        %5808 = vmatpush.bf16.msra.mxu0 %v5500
        %5809 = vmatpush.bf16.msra.mxu0 %v5496
        %5810 = vmatpush.bf16.msra.mxu0 %v5492
        %5811 = vmatmul.bf16.gmra.mxu0 %v4974
        %v5812 = vpop.f32.mrf.mxu0
        %v5813 = vadd.f32 0.0, %v5812
        %v5814 = vpop.f32.mrf.mxu0
        %v5815 = vadd.f32 0.0, %v5814
        %5816 = vdwg.mxu0
        %5817 = vmatpush.bf16.msra.mxu0 %v5552
        %5818 = vmatpush.bf16.msra.mxu0 %v5548
        %5819 = vmatpush.bf16.msra.mxu0 %v5544
        %5820 = vmatpush.bf16.msra.mxu0 %v5540
        %5821 = vmatpush.bf16.msra.mxu0 %v5536
        %5822 = vmatpush.bf16.msra.mxu0 %v5532
        %5823 = vmatpush.bf16.msra.mxu0 %v5528
        %5824 = vmatpush.bf16.msra.mxu0 %v5524
        %5825 = vmatmul.bf16.gmra.mxu0 %v4975
        %v5826 = vpop.f32.mrf.mxu0
        %v5827 = vadd.f32 %v5813, %v5826
        %v5828 = vpop.f32.mrf.mxu0
        %v5829 = vadd.f32 %v5815, %v5828
        %5830 = vdwg.mxu0
        %5831 = vmatpush.bf16.msra.mxu0 %v5584
        %5832 = vmatpush.bf16.msra.mxu0 %v5580
        %5833 = vmatpush.bf16.msra.mxu0 %v5576
        %5834 = vmatpush.bf16.msra.mxu0 %v5572
        %5835 = vmatpush.bf16.msra.mxu0 %v5568
        %5836 = vmatpush.bf16.msra.mxu0 %v5564
        %5837 = vmatpush.bf16.msra.mxu0 %v5560
        %5838 = vmatpush.bf16.msra.mxu0 %v5556
        %5839 = vmatmul.bf16.gmra.mxu0 %v4976
        %v5840 = vpop.f32.mrf.mxu0
        %v5841 = vadd.f32 %v5827, %v5840
        %v5842 = vpop.f32.mrf.mxu0
        %v5843 = vadd.f32 %v5829, %v5842
        %5844 = vdwg.mxu0
        %5845 = vmatpush.bf16.msra.mxu0 %v5616
        %5846 = vmatpush.bf16.msra.mxu0 %v5612
        %5847 = vmatpush.bf16.msra.mxu0 %v5608
        %5848 = vmatpush.bf16.msra.mxu0 %v5604
        %5849 = vmatpush.bf16.msra.mxu0 %v5600
        %5850 = vmatpush.bf16.msra.mxu0 %v5596
        %5851 = vmatpush.bf16.msra.mxu0 %v5592
        %5852 = vmatpush.bf16.msra.mxu0 %v5588
        %5853 = vmatmul.bf16.gmra.mxu0 %v4977
        %v5854 = vpop.f32.mrf.mxu0
        %v5855 = vadd.f32 %v5841, %v5854
        %v5856 = vpop.f32.mrf.mxu0
        %v5857 = vadd.f32 %v5843, %v5856
        %5858 = vdwg.mxu0
        %5859 = vmatpush.bf16.msra.mxu0 %v5521
        %5860 = vmatpush.bf16.msra.mxu0 %v5517
        %5861 = vmatpush.bf16.msra.mxu0 %v5513
        %5862 = vmatpush.bf16.msra.mxu0 %v5509
        %5863 = vmatpush.bf16.msra.mxu0 %v5505
        %5864 = vmatpush.bf16.msra.mxu0 %v5501
        %5865 = vmatpush.bf16.msra.mxu0 %v5497
        %5866 = vmatpush.bf16.msra.mxu0 %v5493
        %5867 = vmatmul.bf16.gmra.mxu0 %v4974
        %v5868 = vpop.f32.mrf.mxu0
        %v5869 = vadd.f32 0.0, %v5868
        %v5870 = vpop.f32.mrf.mxu0
        %v5871 = vadd.f32 0.0, %v5870
        %5872 = vdwg.mxu0
        %5873 = vmatpush.bf16.msra.mxu0 %v5553
        %5874 = vmatpush.bf16.msra.mxu0 %v5549
        %5875 = vmatpush.bf16.msra.mxu0 %v5545
        %5876 = vmatpush.bf16.msra.mxu0 %v5541
        %5877 = vmatpush.bf16.msra.mxu0 %v5537
        %5878 = vmatpush.bf16.msra.mxu0 %v5533
        %5879 = vmatpush.bf16.msra.mxu0 %v5529
        %5880 = vmatpush.bf16.msra.mxu0 %v5525
        %5881 = vmatmul.bf16.gmra.mxu0 %v4975
        %v5882 = vpop.f32.mrf.mxu0
        %v5883 = vadd.f32 %v5869, %v5882
        %v5884 = vpop.f32.mrf.mxu0
        %v5885 = vadd.f32 %v5871, %v5884
        %5886 = vdwg.mxu0
        %5887 = vmatpush.bf16.msra.mxu0 %v5585
        %5888 = vmatpush.bf16.msra.mxu0 %v5581
        %5889 = vmatpush.bf16.msra.mxu0 %v5577
        %5890 = vmatpush.bf16.msra.mxu0 %v5573
        %5891 = vmatpush.bf16.msra.mxu0 %v5569
        %5892 = vmatpush.bf16.msra.mxu0 %v5565
        %5893 = vmatpush.bf16.msra.mxu0 %v5561
        %5894 = vmatpush.bf16.msra.mxu0 %v5557
        %5895 = vmatmul.bf16.gmra.mxu0 %v4976
        %v5896 = vpop.f32.mrf.mxu0
        %v5897 = vadd.f32 %v5883, %v5896
        %v5898 = vpop.f32.mrf.mxu0
        %v5899 = vadd.f32 %v5885, %v5898
        %5900 = vdwg.mxu0
        %5901 = vmatpush.bf16.msra.mxu0 %v5617
        %5902 = vmatpush.bf16.msra.mxu0 %v5613
        %5903 = vmatpush.bf16.msra.mxu0 %v5609
        %5904 = vmatpush.bf16.msra.mxu0 %v5605
        %5905 = vmatpush.bf16.msra.mxu0 %v5601
        %5906 = vmatpush.bf16.msra.mxu0 %v5597
        %5907 = vmatpush.bf16.msra.mxu0 %v5593
        %5908 = vmatpush.bf16.msra.mxu0 %v5589
        %5909 = vmatmul.bf16.gmra.mxu0 %v4977
        %v5910 = vpop.f32.mrf.mxu0
        %v5911 = vadd.f32 %v5897, %v5910
        %v5912 = vpop.f32.mrf.mxu0
        %v5913 = vadd.f32 %v5899, %v5912
        %5914 = vdwg.mxu0
        %5915 = vmatpush.bf16.msra.mxu0 %v5522
        %5916 = vmatpush.bf16.msra.mxu0 %v5518
        %5917 = vmatpush.bf16.msra.mxu0 %v5514
        %5918 = vmatpush.bf16.msra.mxu0 %v5510
        %5919 = vmatpush.bf16.msra.mxu0 %v5506
        %5920 = vmatpush.bf16.msra.mxu0 %v5502
        %5921 = vmatpush.bf16.msra.mxu0 %v5498
        %5922 = vmatpush.bf16.msra.mxu0 %v5494
        %5923 = vmatmul.bf16.gmra.mxu0 %v4974
        %v5924 = vpop.f32.mrf.mxu0
        %v5925 = vadd.f32 0.0, %v5924
        %v5926 = vpop.f32.mrf.mxu0
        %v5927 = vadd.f32 0.0, %v5926
        %5928 = vdwg.mxu0
        %5929 = vmatpush.bf16.msra.mxu0 %v5554
        %5930 = vmatpush.bf16.msra.mxu0 %v5550
        %5931 = vmatpush.bf16.msra.mxu0 %v5546
        %5932 = vmatpush.bf16.msra.mxu0 %v5542
        %5933 = vmatpush.bf16.msra.mxu0 %v5538
        %5934 = vmatpush.bf16.msra.mxu0 %v5534
        %5935 = vmatpush.bf16.msra.mxu0 %v5530
        %5936 = vmatpush.bf16.msra.mxu0 %v5526
        %5937 = vmatmul.bf16.gmra.mxu0 %v4975
        %v5938 = vpop.f32.mrf.mxu0
        %v5939 = vadd.f32 %v5925, %v5938
        %v5940 = vpop.f32.mrf.mxu0
        %v5941 = vadd.f32 %v5927, %v5940
        %5942 = vdwg.mxu0
        %5943 = vmatpush.bf16.msra.mxu0 %v5586
        %5944 = vmatpush.bf16.msra.mxu0 %v5582
        %5945 = vmatpush.bf16.msra.mxu0 %v5578
        %5946 = vmatpush.bf16.msra.mxu0 %v5574
        %5947 = vmatpush.bf16.msra.mxu0 %v5570
        %5948 = vmatpush.bf16.msra.mxu0 %v5566
        %5949 = vmatpush.bf16.msra.mxu0 %v5562
        %5950 = vmatpush.bf16.msra.mxu0 %v5558
        %5951 = vmatmul.bf16.gmra.mxu0 %v4976
        %v5952 = vpop.f32.mrf.mxu0
        %v5953 = vadd.f32 %v5939, %v5952
        %v5954 = vpop.f32.mrf.mxu0
        %v5955 = vadd.f32 %v5941, %v5954
        %5956 = vdwg.mxu0
        %5957 = vmatpush.bf16.msra.mxu0 %v5618
        %5958 = vmatpush.bf16.msra.mxu0 %v5614
        %5959 = vmatpush.bf16.msra.mxu0 %v5610
        %5960 = vmatpush.bf16.msra.mxu0 %v5606
        %5961 = vmatpush.bf16.msra.mxu0 %v5602
        %5962 = vmatpush.bf16.msra.mxu0 %v5598
        %5963 = vmatpush.bf16.msra.mxu0 %v5594
        %5964 = vmatpush.bf16.msra.mxu0 %v5590
        %5965 = vmatmul.bf16.gmra.mxu0 %v4977
        %v5966 = vpop.f32.mrf.mxu0
        %v5967 = vadd.f32 %v5953, %v5966
        %v5968 = vpop.f32.mrf.mxu0
        %v5969 = vadd.f32 %v5955, %v5968
        %5970 = vdwg.mxu0
        %v6099 = vunpack.c.l.b16 %v4790
        %v6100 = vunpack.c.h.b16 %v4790
        %v6101 = vunpack.c.l.b16 %v4791
        %v6102 = vunpack.c.h.b16 %v4791
        %v6103 = vunpack.c.l.b16 %v4792
        %v6104 = vunpack.c.h.b16 %v4792
        %v6105 = vunpack.c.l.b16 %v4793
        %v6106 = vunpack.c.h.b16 %v4793
        %v6107 = vunpack.c.l.b16 %v4794
        %v6108 = vunpack.c.h.b16 %v4794
        %v6109 = vunpack.c.l.b16 %v4795
        %v6110 = vunpack.c.h.b16 %v4795
        %v6111 = vunpack.c.l.b16 %v4796
        %v6112 = vunpack.c.h.b16 %v4796
        %v6113 = vunpack.c.l.b16 %v4797
        %v6114 = vunpack.c.h.b16 %v4797
        %v6115 = vunpack.c.l.b16 %v4798
        %v6116 = vunpack.c.h.b16 %v4798
        %v6117 = vunpack.c.l.b16 %v4799
        %v6118 = vunpack.c.h.b16 %v4799
        %v6119 = vunpack.c.l.b16 %v4800
        %v6120 = vunpack.c.h.b16 %v4800
        %v6121 = vunpack.c.l.b16 %v4801
        %v6122 = vunpack.c.h.b16 %v4801
        %v6123 = vunpack.c.l.b16 %v4802
        %v6124 = vunpack.c.h.b16 %v4802
        %v6125 = vunpack.c.l.b16 %v4803
        %v6126 = vunpack.c.h.b16 %v4803
        %v6127 = vunpack.c.l.b16 %v4804
        %v6128 = vunpack.c.h.b16 %v4804
        %v6129 = vunpack.c.l.b16 %v4805
        %v6130 = vunpack.c.h.b16 %v4805
        %v6131 = vunpack.c.l.b16 %v4806
        %v6132 = vunpack.c.h.b16 %v4806
        %v6133 = vunpack.c.l.b16 %v4807
        %v6134 = vunpack.c.h.b16 %v4807
        %v6135 = vunpack.c.l.b16 %v4808
        %v6136 = vunpack.c.h.b16 %v4808
        %v6137 = vunpack.c.l.b16 %v4809
        %v6138 = vunpack.c.h.b16 %v4809
        %v6139 = vunpack.c.l.b16 %v4810
        %v6140 = vunpack.c.h.b16 %v4810
        %v6141 = vunpack.c.l.b16 %v4811
        %v6142 = vunpack.c.h.b16 %v4811
        %v6143 = vunpack.c.l.b16 %v4812
        %v6144 = vunpack.c.h.b16 %v4812
        %v6145 = vunpack.c.l.b16 %v4813
        %v6146 = vunpack.c.h.b16 %v4813
        %v6147 = vunpack.c.l.b16 %v4814
        %v6148 = vunpack.c.h.b16 %v4814
        %v6149 = vunpack.c.l.b16 %v4815
        %v6150 = vunpack.c.h.b16 %v4815
        %v6151 = vunpack.c.l.b16 %v4816
        %v6152 = vunpack.c.h.b16 %v4816
        %v6153 = vunpack.c.l.b16 %v4817
        %v6154 = vunpack.c.h.b16 %v4817
        %v6155 = vunpack.c.l.b16 %v4818
        %v6156 = vunpack.c.h.b16 %v4818
        %v6157 = vunpack.c.l.b16 %v4819
        %v6158 = vunpack.c.h.b16 %v4819
        %v6159 = vunpack.c.l.b16 %v4820
        %v6160 = vunpack.c.h.b16 %v4820
        %v6161 = vunpack.c.l.b16 %v4821
        %v6162 = vunpack.c.h.b16 %v4821
        %v6163 = vunpack.c.l.b16 %v4822
        %v6164 = vunpack.c.h.b16 %v4822
        %v6165 = vunpack.c.l.b16 %v4823
        %v6166 = vunpack.c.h.b16 %v4823
        %v6167 = vunpack.c.l.b16 %v4824
        %v6168 = vunpack.c.h.b16 %v4824
        %v6169 = vunpack.c.l.b16 %v4825
        %v6170 = vunpack.c.h.b16 %v4825
        %v6171 = vunpack.c.l.b16 %v4826
        %v6172 = vunpack.c.h.b16 %v4826
        %v6173 = vunpack.c.l.b16 %v4827
        %v6174 = vunpack.c.h.b16 %v4827
        %v6175 = vunpack.c.l.b16 %v4828
        %v6176 = vunpack.c.h.b16 %v4828
        %v6177 = vunpack.c.l.b16 %v4829
        %v6178 = vunpack.c.h.b16 %v4829
        %v6179 = vunpack.c.l.b16 %v4830
        %v6180 = vunpack.c.h.b16 %v4830
        %v6181 = vunpack.c.l.b16 %v4831
        %v6182 = vunpack.c.h.b16 %v4831
        %v6183 = vunpack.c.l.b16 %v4832
        %v6184 = vunpack.c.h.b16 %v4832
        %v6185 = vunpack.c.l.b16 %v4833
        %v6186 = vunpack.c.h.b16 %v4833
        %v6187 = vunpack.c.l.b16 %v4834
        %v6188 = vunpack.c.h.b16 %v4834
        %v6189 = vunpack.c.l.b16 %v4835
        %v6190 = vunpack.c.h.b16 %v4835
        %v6191 = vunpack.c.l.b16 %v4836
        %v6192 = vunpack.c.h.b16 %v4836
        %v6193 = vunpack.c.l.b16 %v4837
        %v6194 = vunpack.c.h.b16 %v4837
        %v6195 = vunpack.c.l.b16 %v4838
        %v6196 = vunpack.c.h.b16 %v4838
        %v6197 = vunpack.c.l.b16 %v4839
        %v6198 = vunpack.c.h.b16 %v4839
        %v6199 = vunpack.c.l.b16 %v4840
        %v6200 = vunpack.c.h.b16 %v4840
        %v6201 = vunpack.c.l.b16 %v4841
        %v6202 = vunpack.c.h.b16 %v4841
        %v6203 = vunpack.c.l.b16 %v4842
        %v6204 = vunpack.c.h.b16 %v4842
        %v6205 = vunpack.c.l.b16 %v4843
        %v6206 = vunpack.c.h.b16 %v4843
        %v6207 = vunpack.c.l.b16 %v4844
        %v6208 = vunpack.c.h.b16 %v4844
        %v6209 = vunpack.c.l.b16 %v4845
        %v6210 = vunpack.c.h.b16 %v4845
        %v6211 = vunpack.c.l.b16 %v4846
        %v6212 = vunpack.c.h.b16 %v4846
        %v6213 = vunpack.c.l.b16 %v4847
        %v6214 = vunpack.c.h.b16 %v4847
        %v6215 = vunpack.c.l.b16 %v4848
        %v6216 = vunpack.c.h.b16 %v4848
        %v6217 = vunpack.c.l.b16 %v4849
        %v6218 = vunpack.c.h.b16 %v4849
        %v6219 = vunpack.c.l.b16 %v4850
        %v6220 = vunpack.c.h.b16 %v4850
        %v6221 = vunpack.c.l.b16 %v4851
        %v6222 = vunpack.c.h.b16 %v4851
        %v6223 = vunpack.c.l.b16 %v4852
        %v6224 = vunpack.c.h.b16 %v4852
        %v6225 = vunpack.c.l.b16 %v4853
        %v6226 = vunpack.c.h.b16 %v4853
        %v6227 = vunpack.c.l.b16 %v4854
        %v6228 = vunpack.c.h.b16 %v4854
        %v6229 = vunpack.c.l.b16 %v4855
        %v6230 = vunpack.c.h.b16 %v4855
        %v6231 = vunpack.c.l.b16 %v4856
        %v6232 = vunpack.c.h.b16 %v4856
        %v6233 = vunpack.c.l.b16 %v4857
        %v6234 = vunpack.c.h.b16 %v4857
        %v6235 = vunpack.c.l.b16 %v4858
        %v6236 = vunpack.c.h.b16 %v4858
        %v6237 = vunpack.c.l.b16 %v4859
        %v6238 = vunpack.c.h.b16 %v4859
        %v6239 = vunpack.c.l.b16 %v4860
        %v6240 = vunpack.c.h.b16 %v4860
        %v6241 = vunpack.c.l.b16 %v4861
        %v6242 = vunpack.c.h.b16 %v4861
        %v6243 = vunpack.c.l.b16 %v4862
        %v6244 = vunpack.c.h.b16 %v4862
        %v6245 = vunpack.c.l.b16 %v4863
        %v6246 = vunpack.c.h.b16 %v4863
        %v6247 = vunpack.c.l.b16 %v4864
        %v6248 = vunpack.c.h.b16 %v4864
        %v6249 = vunpack.c.l.b16 %v4865
        %v6250 = vunpack.c.h.b16 %v4865
        %v6251 = vunpack.c.l.b16 %v4866
        %v6252 = vunpack.c.h.b16 %v4866
        %v6253 = vunpack.c.l.b16 %v4867
        %v6254 = vunpack.c.h.b16 %v4867
        %v6255 = vunpack.c.l.b16 %v4868
        %v6256 = vunpack.c.h.b16 %v4868
        %v6257 = vunpack.c.l.b16 %v4869
        %v6258 = vunpack.c.h.b16 %v4869
        %v6259 = vunpack.c.l.b16 %v4870
        %v6260 = vunpack.c.h.b16 %v4870
        %v6261 = vunpack.c.l.b16 %v4871
        %v6262 = vunpack.c.h.b16 %v4871
        %v6263 = vunpack.c.l.b16 %v4872
        %v6264 = vunpack.c.h.b16 %v4872
        %v6265 = vunpack.c.l.b16 %v4873
        %v6266 = vunpack.c.h.b16 %v4873
        %v6267 = vunpack.c.l.b16 %v4874
        %v6268 = vunpack.c.h.b16 %v4874
        %v6269 = vunpack.c.l.b16 %v4875
        %v6270 = vunpack.c.h.b16 %v4875
        %v6271 = vunpack.c.l.b16 %v4876
        %v6272 = vunpack.c.h.b16 %v4876
        %v6273 = vunpack.c.l.b16 %v4877
        %v6274 = vunpack.c.h.b16 %v4877
        %v6275 = vunpack.c.l.b16 %v4878
        %v6276 = vunpack.c.h.b16 %v4878
        %v6277 = vunpack.c.l.b16 %v4879
        %v6278 = vunpack.c.h.b16 %v4879
        %v6279 = vunpack.c.l.b16 %v4880
        %v6280 = vunpack.c.h.b16 %v4880
        %v6281 = vunpack.c.l.b16 %v4881
        %v6282 = vunpack.c.h.b16 %v4881
        %v6283 = vunpack.c.l.b16 %v4882
        %v6284 = vunpack.c.h.b16 %v4882
        %v6285 = vunpack.c.l.b16 %v4883
        %v6286 = vunpack.c.h.b16 %v4883
        %v6287 = vunpack.c.l.b16 %v4884
        %v6288 = vunpack.c.h.b16 %v4884
        %v6289 = vunpack.c.l.b16 %v4885
        %v6290 = vunpack.c.h.b16 %v4885
        %v6291 = vunpack.c.l.b16 %v4886
        %v6292 = vunpack.c.h.b16 %v4886
        %v6293 = vunpack.c.l.b16 %v4887
        %v6294 = vunpack.c.h.b16 %v4887
        %v6295 = vunpack.c.l.b16 %v4888
        %v6296 = vunpack.c.h.b16 %v4888
        %v6297 = vunpack.c.l.b16 %v4889
        %v6298 = vunpack.c.h.b16 %v4889
        %v6299 = vunpack.c.l.b16 %v4890
        %v6300 = vunpack.c.h.b16 %v4890
        %v6301 = vunpack.c.l.b16 %v4891
        %v6302 = vunpack.c.h.b16 %v4891
        %v6303 = vunpack.c.l.b16 %v4892
        %v6304 = vunpack.c.h.b16 %v4892
        %v6305 = vunpack.c.l.b16 %v4893
        %v6306 = vunpack.c.h.b16 %v4893
        %v6307 = vunpack.c.l.b16 %v4894
        %v6308 = vunpack.c.h.b16 %v4894
        %v6309 = vunpack.c.l.b16 %v4895
        %v6310 = vunpack.c.h.b16 %v4895
        %v6311 = vunpack.c.l.b16 %v4896
        %v6312 = vunpack.c.h.b16 %v4896
        %v6313 = vunpack.c.l.b16 %v4897
        %v6314 = vunpack.c.h.b16 %v4897
        %v6315 = vunpack.c.l.b16 %v4898
        %v6316 = vunpack.c.h.b16 %v4898
        %v6317 = vunpack.c.l.b16 %v4899
        %v6318 = vunpack.c.h.b16 %v4899
        %v6319 = vunpack.c.l.b16 %v4900
        %v6320 = vunpack.c.h.b16 %v4900
        %v6321 = vunpack.c.l.b16 %v4901
        %v6322 = vunpack.c.h.b16 %v4901
        %v6323 = vunpack.c.l.b16 %v4902
        %v6324 = vunpack.c.h.b16 %v4902
        %v6325 = vunpack.c.l.b16 %v4903
        %v6326 = vunpack.c.h.b16 %v4903
        %v6327 = vunpack.c.l.b16 %v4904
        %v6328 = vunpack.c.h.b16 %v4904
        %v6329 = vunpack.c.l.b16 %v4905
        %v6330 = vunpack.c.h.b16 %v4905
        %v6331 = vunpack.c.l.b16 %v4906
        %v6332 = vunpack.c.h.b16 %v4906
        %v6333 = vunpack.c.l.b16 %v4907
        %v6334 = vunpack.c.h.b16 %v4907
        %v6335 = vunpack.c.l.b16 %v4908
        %v6336 = vunpack.c.h.b16 %v4908
        %v6337 = vunpack.c.l.b16 %v4909
        %v6338 = vunpack.c.h.b16 %v4909
        %v6339 = vunpack.c.l.b16 %v4910
        %v6340 = vunpack.c.h.b16 %v4910
        %v6341 = vunpack.c.l.b16 %v4911
        %v6342 = vunpack.c.h.b16 %v4911
        %v6343 = vunpack.c.l.b16 %v4912
        %v6344 = vunpack.c.h.b16 %v4912
        %v6345 = vunpack.c.l.b16 %v4913
        %v6346 = vunpack.c.h.b16 %v4913
        %v6347 = vunpack.c.l.b16 %v4914
        %v6348 = vunpack.c.h.b16 %v4914
        %v6349 = vunpack.c.l.b16 %v4915
        %v6350 = vunpack.c.h.b16 %v4915
        %v6351 = vunpack.c.l.b16 %v4916
        %v6352 = vunpack.c.h.b16 %v4916
        %v6353 = vunpack.c.l.b16 %v4917
        %v6354 = vunpack.c.h.b16 %v4917
        %v6355 = vpack.c.b16 %v6103, %v6099
        %v6356 = vpack.c.b16 %v6104, %v6100
        %v6357 = vpack.c.b16 %v6105, %v6101
        %v6358 = vpack.c.b16 %v6106, %v6102
        %v6359 = vpack.c.b16 %v6111, %v6107
        %v6360 = vpack.c.b16 %v6112, %v6108
        %v6361 = vpack.c.b16 %v6113, %v6109
        %v6362 = vpack.c.b16 %v6114, %v6110
        %v6363 = vpack.c.b16 %v6119, %v6115
        %v6364 = vpack.c.b16 %v6120, %v6116
        %v6365 = vpack.c.b16 %v6121, %v6117
        %v6366 = vpack.c.b16 %v6122, %v6118
        %v6367 = vpack.c.b16 %v6127, %v6123
        %v6368 = vpack.c.b16 %v6128, %v6124
        %v6369 = vpack.c.b16 %v6129, %v6125
        %v6370 = vpack.c.b16 %v6130, %v6126
        %v6371 = vpack.c.b16 %v6135, %v6131
        %v6372 = vpack.c.b16 %v6136, %v6132
        %v6373 = vpack.c.b16 %v6137, %v6133
        %v6374 = vpack.c.b16 %v6138, %v6134
        %v6375 = vpack.c.b16 %v6143, %v6139
        %v6376 = vpack.c.b16 %v6144, %v6140
        %v6377 = vpack.c.b16 %v6145, %v6141
        %v6378 = vpack.c.b16 %v6146, %v6142
        %v6379 = vpack.c.b16 %v6151, %v6147
        %v6380 = vpack.c.b16 %v6152, %v6148
        %v6381 = vpack.c.b16 %v6153, %v6149
        %v6382 = vpack.c.b16 %v6154, %v6150
        %v6383 = vpack.c.b16 %v6159, %v6155
        %v6384 = vpack.c.b16 %v6160, %v6156
        %v6385 = vpack.c.b16 %v6161, %v6157
        %v6386 = vpack.c.b16 %v6162, %v6158
        %v6387 = vpack.c.b16 %v6167, %v6163
        %v6388 = vpack.c.b16 %v6168, %v6164
        %v6389 = vpack.c.b16 %v6169, %v6165
        %v6390 = vpack.c.b16 %v6170, %v6166
        %v6391 = vpack.c.b16 %v6175, %v6171
        %v6392 = vpack.c.b16 %v6176, %v6172
        %v6393 = vpack.c.b16 %v6177, %v6173
        %v6394 = vpack.c.b16 %v6178, %v6174
        %v6395 = vpack.c.b16 %v6183, %v6179
        %v6396 = vpack.c.b16 %v6184, %v6180
        %v6397 = vpack.c.b16 %v6185, %v6181
        %v6398 = vpack.c.b16 %v6186, %v6182
        %v6399 = vpack.c.b16 %v6191, %v6187
        %v6400 = vpack.c.b16 %v6192, %v6188
        %v6401 = vpack.c.b16 %v6193, %v6189
        %v6402 = vpack.c.b16 %v6194, %v6190
        %v6403 = vpack.c.b16 %v6199, %v6195
        %v6404 = vpack.c.b16 %v6200, %v6196
        %v6405 = vpack.c.b16 %v6201, %v6197
        %v6406 = vpack.c.b16 %v6202, %v6198
        %v6407 = vpack.c.b16 %v6207, %v6203
        %v6408 = vpack.c.b16 %v6208, %v6204
        %v6409 = vpack.c.b16 %v6209, %v6205
        %v6410 = vpack.c.b16 %v6210, %v6206
        %v6411 = vpack.c.b16 %v6215, %v6211
        %v6412 = vpack.c.b16 %v6216, %v6212
        %v6413 = vpack.c.b16 %v6217, %v6213
        %v6414 = vpack.c.b16 %v6218, %v6214
        %v6415 = vpack.c.b16 %v6223, %v6219
        %v6416 = vpack.c.b16 %v6224, %v6220
        %v6417 = vpack.c.b16 %v6225, %v6221
        %v6418 = vpack.c.b16 %v6226, %v6222
        %v6419 = vpack.c.b16 %v6231, %v6227
        %v6420 = vpack.c.b16 %v6232, %v6228
        %v6421 = vpack.c.b16 %v6233, %v6229
        %v6422 = vpack.c.b16 %v6234, %v6230
        %v6423 = vpack.c.b16 %v6239, %v6235
        %v6424 = vpack.c.b16 %v6240, %v6236
        %v6425 = vpack.c.b16 %v6241, %v6237
        %v6426 = vpack.c.b16 %v6242, %v6238
        %v6427 = vpack.c.b16 %v6247, %v6243
        %v6428 = vpack.c.b16 %v6248, %v6244
        %v6429 = vpack.c.b16 %v6249, %v6245
        %v6430 = vpack.c.b16 %v6250, %v6246
        %v6431 = vpack.c.b16 %v6255, %v6251
        %v6432 = vpack.c.b16 %v6256, %v6252
        %v6433 = vpack.c.b16 %v6257, %v6253
        %v6434 = vpack.c.b16 %v6258, %v6254
        %v6435 = vpack.c.b16 %v6263, %v6259
        %v6436 = vpack.c.b16 %v6264, %v6260
        %v6437 = vpack.c.b16 %v6265, %v6261
        %v6438 = vpack.c.b16 %v6266, %v6262
        %v6439 = vpack.c.b16 %v6271, %v6267
        %v6440 = vpack.c.b16 %v6272, %v6268
        %v6441 = vpack.c.b16 %v6273, %v6269
        %v6442 = vpack.c.b16 %v6274, %v6270
        %v6443 = vpack.c.b16 %v6279, %v6275
        %v6444 = vpack.c.b16 %v6280, %v6276
        %v6445 = vpack.c.b16 %v6281, %v6277
        %v6446 = vpack.c.b16 %v6282, %v6278
        %v6447 = vpack.c.b16 %v6287, %v6283
        %v6448 = vpack.c.b16 %v6288, %v6284
        %v6449 = vpack.c.b16 %v6289, %v6285
        %v6450 = vpack.c.b16 %v6290, %v6286
        %v6451 = vpack.c.b16 %v6295, %v6291
        %v6452 = vpack.c.b16 %v6296, %v6292
        %v6453 = vpack.c.b16 %v6297, %v6293
        %v6454 = vpack.c.b16 %v6298, %v6294
        %v6455 = vpack.c.b16 %v6303, %v6299
        %v6456 = vpack.c.b16 %v6304, %v6300
        %v6457 = vpack.c.b16 %v6305, %v6301
        %v6458 = vpack.c.b16 %v6306, %v6302
        %v6459 = vpack.c.b16 %v6311, %v6307
        %v6460 = vpack.c.b16 %v6312, %v6308
        %v6461 = vpack.c.b16 %v6313, %v6309
        %v6462 = vpack.c.b16 %v6314, %v6310
        %v6463 = vpack.c.b16 %v6319, %v6315
        %v6464 = vpack.c.b16 %v6320, %v6316
        %v6465 = vpack.c.b16 %v6321, %v6317
        %v6466 = vpack.c.b16 %v6322, %v6318
        %v6467 = vpack.c.b16 %v6327, %v6323
        %v6468 = vpack.c.b16 %v6328, %v6324
        %v6469 = vpack.c.b16 %v6329, %v6325
        %v6470 = vpack.c.b16 %v6330, %v6326
        %v6471 = vpack.c.b16 %v6335, %v6331
        %v6472 = vpack.c.b16 %v6336, %v6332
        %v6473 = vpack.c.b16 %v6337, %v6333
        %v6474 = vpack.c.b16 %v6338, %v6334
        %v6475 = vpack.c.b16 %v6343, %v6339
        %v6476 = vpack.c.b16 %v6344, %v6340
        %v6477 = vpack.c.b16 %v6345, %v6341
        %v6478 = vpack.c.b16 %v6346, %v6342
        %v6479 = vpack.c.b16 %v6351, %v6347
        %v6480 = vpack.c.b16 %v6352, %v6348
        %v6481 = vpack.c.b16 %v6353, %v6349
        %v6482 = vpack.c.b16 %v6354, %v6350
        %6611 = vmatpush.bf16.msra.mxu0 %v6383
        %6612 = vmatpush.bf16.msra.mxu0 %v6379
        %6613 = vmatpush.bf16.msra.mxu0 %v6375
        %6614 = vmatpush.bf16.msra.mxu0 %v6371
        %6615 = vmatpush.bf16.msra.mxu0 %v6367
        %6616 = vmatpush.bf16.msra.mxu0 %v6363
        %6617 = vmatpush.bf16.msra.mxu0 %v6359
        %6618 = vmatpush.bf16.msra.mxu0 %v6355
        %6619 = vmatmul.bf16.gmra.mxu0 %v4786
        %v6620 = vpop.f32.mrf.mxu0
        %v6621 = vadd.f32 %v5799, %v6620
        %v6622 = vpop.f32.mrf.mxu0
        %v6623 = vadd.f32 %v5801, %v6622
        %6624 = vdwg.mxu0
        %6625 = vmatpush.bf16.msra.mxu0 %v6415
        %6626 = vmatpush.bf16.msra.mxu0 %v6411
        %6627 = vmatpush.bf16.msra.mxu0 %v6407
        %6628 = vmatpush.bf16.msra.mxu0 %v6403
        %6629 = vmatpush.bf16.msra.mxu0 %v6399
        %6630 = vmatpush.bf16.msra.mxu0 %v6395
        %6631 = vmatpush.bf16.msra.mxu0 %v6391
        %6632 = vmatpush.bf16.msra.mxu0 %v6387
        %6633 = vmatmul.bf16.gmra.mxu0 %v4787
        %v6634 = vpop.f32.mrf.mxu0
        %v6635 = vadd.f32 %v6621, %v6634
        %v6636 = vpop.f32.mrf.mxu0
        %v6637 = vadd.f32 %v6623, %v6636
        %6638 = vdwg.mxu0
        %6639 = vmatpush.bf16.msra.mxu0 %v6447
        %6640 = vmatpush.bf16.msra.mxu0 %v6443
        %6641 = vmatpush.bf16.msra.mxu0 %v6439
        %6642 = vmatpush.bf16.msra.mxu0 %v6435
        %6643 = vmatpush.bf16.msra.mxu0 %v6431
        %6644 = vmatpush.bf16.msra.mxu0 %v6427
        %6645 = vmatpush.bf16.msra.mxu0 %v6423
        %6646 = vmatpush.bf16.msra.mxu0 %v6419
        %6647 = vmatmul.bf16.gmra.mxu0 %v4788
        %v6648 = vpop.f32.mrf.mxu0
        %v6649 = vadd.f32 %v6635, %v6648
        %v6650 = vpop.f32.mrf.mxu0
        %v6651 = vadd.f32 %v6637, %v6650
        %6652 = vdwg.mxu0
        %6653 = vmatpush.bf16.msra.mxu0 %v6479
        %6654 = vmatpush.bf16.msra.mxu0 %v6475
        %6655 = vmatpush.bf16.msra.mxu0 %v6471
        %6656 = vmatpush.bf16.msra.mxu0 %v6467
        %6657 = vmatpush.bf16.msra.mxu0 %v6463
        %6658 = vmatpush.bf16.msra.mxu0 %v6459
        %6659 = vmatpush.bf16.msra.mxu0 %v6455
        %6660 = vmatpush.bf16.msra.mxu0 %v6451
        %6661 = vmatmul.bf16.gmra.mxu0 %v4789
        %v6662 = vpop.f32.mrf.mxu0
        %v6663 = vadd.f32 %v6649, %v6662
        %v6664 = vpop.f32.mrf.mxu0
        %v6665 = vadd.f32 %v6651, %v6664
        %6666 = vdwg.mxu0
        %6667 = vmatpush.bf16.msra.mxu0 %v6384
        %6668 = vmatpush.bf16.msra.mxu0 %v6380
        %6669 = vmatpush.bf16.msra.mxu0 %v6376
        %6670 = vmatpush.bf16.msra.mxu0 %v6372
        %6671 = vmatpush.bf16.msra.mxu0 %v6368
        %6672 = vmatpush.bf16.msra.mxu0 %v6364
        %6673 = vmatpush.bf16.msra.mxu0 %v6360
        %6674 = vmatpush.bf16.msra.mxu0 %v6356
        %6675 = vmatmul.bf16.gmra.mxu0 %v4786
        %v6676 = vpop.f32.mrf.mxu0
        %v6677 = vadd.f32 %v5855, %v6676
        %v6678 = vpop.f32.mrf.mxu0
        %v6679 = vadd.f32 %v5857, %v6678
        %6680 = vdwg.mxu0
        %6681 = vmatpush.bf16.msra.mxu0 %v6416
        %6682 = vmatpush.bf16.msra.mxu0 %v6412
        %6683 = vmatpush.bf16.msra.mxu0 %v6408
        %6684 = vmatpush.bf16.msra.mxu0 %v6404
        %6685 = vmatpush.bf16.msra.mxu0 %v6400
        %6686 = vmatpush.bf16.msra.mxu0 %v6396
        %6687 = vmatpush.bf16.msra.mxu0 %v6392
        %6688 = vmatpush.bf16.msra.mxu0 %v6388
        %6689 = vmatmul.bf16.gmra.mxu0 %v4787
        %v6690 = vpop.f32.mrf.mxu0
        %v6691 = vadd.f32 %v6677, %v6690
        %v6692 = vpop.f32.mrf.mxu0
        %v6693 = vadd.f32 %v6679, %v6692
        %6694 = vdwg.mxu0
        %6695 = vmatpush.bf16.msra.mxu0 %v6448
        %6696 = vmatpush.bf16.msra.mxu0 %v6444
        %6697 = vmatpush.bf16.msra.mxu0 %v6440
        %6698 = vmatpush.bf16.msra.mxu0 %v6436
        %6699 = vmatpush.bf16.msra.mxu0 %v6432
        %6700 = vmatpush.bf16.msra.mxu0 %v6428
        %6701 = vmatpush.bf16.msra.mxu0 %v6424
        %6702 = vmatpush.bf16.msra.mxu0 %v6420
        %6703 = vmatmul.bf16.gmra.mxu0 %v4788
        %v6704 = vpop.f32.mrf.mxu0
        %v6705 = vadd.f32 %v6691, %v6704
        %v6706 = vpop.f32.mrf.mxu0
        %v6707 = vadd.f32 %v6693, %v6706
        %6708 = vdwg.mxu0
        %6709 = vmatpush.bf16.msra.mxu0 %v6480
        %6710 = vmatpush.bf16.msra.mxu0 %v6476
        %6711 = vmatpush.bf16.msra.mxu0 %v6472
        %6712 = vmatpush.bf16.msra.mxu0 %v6468
        %6713 = vmatpush.bf16.msra.mxu0 %v6464
        %6714 = vmatpush.bf16.msra.mxu0 %v6460
        %6715 = vmatpush.bf16.msra.mxu0 %v6456
        %6716 = vmatpush.bf16.msra.mxu0 %v6452
        %6717 = vmatmul.bf16.gmra.mxu0 %v4789
        %v6718 = vpop.f32.mrf.mxu0
        %v6719 = vadd.f32 %v6705, %v6718
        %v6720 = vpop.f32.mrf.mxu0
        %v6721 = vadd.f32 %v6707, %v6720
        %6722 = vdwg.mxu0
        %6723 = vmatpush.bf16.msra.mxu0 %v6385
        %6724 = vmatpush.bf16.msra.mxu0 %v6381
        %6725 = vmatpush.bf16.msra.mxu0 %v6377
        %6726 = vmatpush.bf16.msra.mxu0 %v6373
        %6727 = vmatpush.bf16.msra.mxu0 %v6369
        %6728 = vmatpush.bf16.msra.mxu0 %v6365
        %6729 = vmatpush.bf16.msra.mxu0 %v6361
        %6730 = vmatpush.bf16.msra.mxu0 %v6357
        %6731 = vmatmul.bf16.gmra.mxu0 %v4786
        %v6732 = vpop.f32.mrf.mxu0
        %v6733 = vadd.f32 %v5911, %v6732
        %v6734 = vpop.f32.mrf.mxu0
        %v6735 = vadd.f32 %v5913, %v6734
        %6736 = vdwg.mxu0
        %6737 = vmatpush.bf16.msra.mxu0 %v6417
        %6738 = vmatpush.bf16.msra.mxu0 %v6413
        %6739 = vmatpush.bf16.msra.mxu0 %v6409
        %6740 = vmatpush.bf16.msra.mxu0 %v6405
        %6741 = vmatpush.bf16.msra.mxu0 %v6401
        %6742 = vmatpush.bf16.msra.mxu0 %v6397
        %6743 = vmatpush.bf16.msra.mxu0 %v6393
        %6744 = vmatpush.bf16.msra.mxu0 %v6389
        %6745 = vmatmul.bf16.gmra.mxu0 %v4787
        %v6746 = vpop.f32.mrf.mxu0
        %v6747 = vadd.f32 %v6733, %v6746
        %v6748 = vpop.f32.mrf.mxu0
        %v6749 = vadd.f32 %v6735, %v6748
        %6750 = vdwg.mxu0
        %6751 = vmatpush.bf16.msra.mxu0 %v6449
        %6752 = vmatpush.bf16.msra.mxu0 %v6445
        %6753 = vmatpush.bf16.msra.mxu0 %v6441
        %6754 = vmatpush.bf16.msra.mxu0 %v6437
        %6755 = vmatpush.bf16.msra.mxu0 %v6433
        %6756 = vmatpush.bf16.msra.mxu0 %v6429
        %6757 = vmatpush.bf16.msra.mxu0 %v6425
        %6758 = vmatpush.bf16.msra.mxu0 %v6421
        %6759 = vmatmul.bf16.gmra.mxu0 %v4788
        %v6760 = vpop.f32.mrf.mxu0
        %v6761 = vadd.f32 %v6747, %v6760
        %v6762 = vpop.f32.mrf.mxu0
        %v6763 = vadd.f32 %v6749, %v6762
        %6764 = vdwg.mxu0
        %6765 = vmatpush.bf16.msra.mxu0 %v6481
        %6766 = vmatpush.bf16.msra.mxu0 %v6477
        %6767 = vmatpush.bf16.msra.mxu0 %v6473
        %6768 = vmatpush.bf16.msra.mxu0 %v6469
        %6769 = vmatpush.bf16.msra.mxu0 %v6465
        %6770 = vmatpush.bf16.msra.mxu0 %v6461
        %6771 = vmatpush.bf16.msra.mxu0 %v6457
        %6772 = vmatpush.bf16.msra.mxu0 %v6453
        %6773 = vmatmul.bf16.gmra.mxu0 %v4789
        %v6774 = vpop.f32.mrf.mxu0
        %v6775 = vadd.f32 %v6761, %v6774
        %v6776 = vpop.f32.mrf.mxu0
        %v6777 = vadd.f32 %v6763, %v6776
        %6778 = vdwg.mxu0
        %6779 = vmatpush.bf16.msra.mxu0 %v6386
        %6780 = vmatpush.bf16.msra.mxu0 %v6382
        %6781 = vmatpush.bf16.msra.mxu0 %v6378
        %6782 = vmatpush.bf16.msra.mxu0 %v6374
        %6783 = vmatpush.bf16.msra.mxu0 %v6370
        %6784 = vmatpush.bf16.msra.mxu0 %v6366
        %6785 = vmatpush.bf16.msra.mxu0 %v6362
        %6786 = vmatpush.bf16.msra.mxu0 %v6358
        %6787 = vmatmul.bf16.gmra.mxu0 %v4786
        %v6788 = vpop.f32.mrf.mxu0
        %v6789 = vadd.f32 %v5967, %v6788
        %v6790 = vpop.f32.mrf.mxu0
        %v6791 = vadd.f32 %v5969, %v6790
        %6792 = vdwg.mxu0
        %6793 = vmatpush.bf16.msra.mxu0 %v6418
        %6794 = vmatpush.bf16.msra.mxu0 %v6414
        %6795 = vmatpush.bf16.msra.mxu0 %v6410
        %6796 = vmatpush.bf16.msra.mxu0 %v6406
        %6797 = vmatpush.bf16.msra.mxu0 %v6402
        %6798 = vmatpush.bf16.msra.mxu0 %v6398
        %6799 = vmatpush.bf16.msra.mxu0 %v6394
        %6800 = vmatpush.bf16.msra.mxu0 %v6390
        %6801 = vmatmul.bf16.gmra.mxu0 %v4787
        %v6802 = vpop.f32.mrf.mxu0
        %v6803 = vadd.f32 %v6789, %v6802
        %v6804 = vpop.f32.mrf.mxu0
        %v6805 = vadd.f32 %v6791, %v6804
        %6806 = vdwg.mxu0
        %6807 = vmatpush.bf16.msra.mxu0 %v6450
        %6808 = vmatpush.bf16.msra.mxu0 %v6446
        %6809 = vmatpush.bf16.msra.mxu0 %v6442
        %6810 = vmatpush.bf16.msra.mxu0 %v6438
        %6811 = vmatpush.bf16.msra.mxu0 %v6434
        %6812 = vmatpush.bf16.msra.mxu0 %v6430
        %6813 = vmatpush.bf16.msra.mxu0 %v6426
        %6814 = vmatpush.bf16.msra.mxu0 %v6422
        %6815 = vmatmul.bf16.gmra.mxu0 %v4788
        %v6816 = vpop.f32.mrf.mxu0
        %v6817 = vadd.f32 %v6803, %v6816
        %v6818 = vpop.f32.mrf.mxu0
        %v6819 = vadd.f32 %v6805, %v6818
        %6820 = vdwg.mxu0
        %6821 = vmatpush.bf16.msra.mxu0 %v6482
        %6822 = vmatpush.bf16.msra.mxu0 %v6478
        %6823 = vmatpush.bf16.msra.mxu0 %v6474
        %6824 = vmatpush.bf16.msra.mxu0 %v6470
        %6825 = vmatpush.bf16.msra.mxu0 %v6466
        %6826 = vmatpush.bf16.msra.mxu0 %v6462
        %6827 = vmatpush.bf16.msra.mxu0 %v6458
        %6828 = vmatpush.bf16.msra.mxu0 %v6454
        %6829 = vmatmul.bf16.gmra.mxu0 %v4789
        %v6830 = vpop.f32.mrf.mxu0
        %v6831 = vadd.f32 %v6817, %v6830
        %v6832 = vpop.f32.mrf.mxu0
        %v6833 = vadd.f32 %v6819, %v6832
        %6834 = vdwg.mxu0
        %6835 = vmatpush.bf16.msra.mxu0 0
        %6836 = vmatpush.bf16.msra.mxu0 0
        %6837 = vmatpush.bf16.msra.mxu0 0
        %6838 = vmatpush.bf16.msra.mxu0 0
        %6839 = vmatpush.bf16.msra.mxu0 0
        %6840 = vmatpush.bf16.msra.mxu0 0
        %6841 = vmatpush.bf16.msra.mxu0 0
        %6842 = vmatpush.bf16.msra.mxu0 %v4726
        %6843 = vmatmul.bf16.gmra.mxu0 %v3194
        %v6844 = vpop.f32.mrf.mxu0
        %v6845 = vadd.f32 0.0, %v6844
        %v6846 = vpop.f32.mrf.mxu0
        %v6847 = vadd.f32 0.0, %v6846
        %6848 = vdwg.mxu0
        %6849 = vmatpush.bf16.msra.mxu0 0
        %6850 = vmatpush.bf16.msra.mxu0 0
        %6851 = vmatpush.bf16.msra.mxu0 0
        %6852 = vmatpush.bf16.msra.mxu0 0
        %6853 = vmatpush.bf16.msra.mxu0 0
        %6854 = vmatpush.bf16.msra.mxu0 0
        %6855 = vmatpush.bf16.msra.mxu0 0
        %6856 = vmatpush.bf16.msra.mxu0 %v4727
        %6857 = vmatmul.bf16.gmra.mxu0 %v3194
        %v6858 = vpop.f32.mrf.mxu0
        %v6859 = vadd.f32 0.0, %v6858
        %v6860 = vpop.f32.mrf.mxu0
        %v6861 = vadd.f32 0.0, %v6860
        %6862 = vdwg.mxu0
        %6863 = vmatpush.bf16.msra.mxu0 0
        %6864 = vmatpush.bf16.msra.mxu0 0
        %6865 = vmatpush.bf16.msra.mxu0 0
        %6866 = vmatpush.bf16.msra.mxu0 0
        %6867 = vmatpush.bf16.msra.mxu0 0
        %6868 = vmatpush.bf16.msra.mxu0 0
        %6869 = vmatpush.bf16.msra.mxu0 0
        %6870 = vmatpush.bf16.msra.mxu0 %v4728
        %6871 = vmatmul.bf16.gmra.mxu0 %v3194
        %v6872 = vpop.f32.mrf.mxu0
        %v6873 = vadd.f32 0.0, %v6872
        %v6874 = vpop.f32.mrf.mxu0
        %v6875 = vadd.f32 0.0, %v6874
        %6876 = vdwg.mxu0
        %6877 = vmatpush.bf16.msra.mxu0 0
        %6878 = vmatpush.bf16.msra.mxu0 0
        %6879 = vmatpush.bf16.msra.mxu0 0
        %6880 = vmatpush.bf16.msra.mxu0 0
        %6881 = vmatpush.bf16.msra.mxu0 0
        %6882 = vmatpush.bf16.msra.mxu0 0
        %6883 = vmatpush.bf16.msra.mxu0 0
        %6884 = vmatpush.bf16.msra.mxu0 %v4729
        %6885 = vmatmul.bf16.gmra.mxu0 %v3194
        %v6886 = vpop.f32.mrf.mxu0
        %v6887 = vadd.f32 0.0, %v6886
        %v6888 = vpop.f32.mrf.mxu0
        %v6889 = vadd.f32 0.0, %v6888
        %6890 = vdwg.mxu0
        %v6891 = vpack.c.bf16 %v6847, %v6845
        %v6892 = vpack.c.bf16 %v6861, %v6859
        %v6893 = vpack.c.bf16 %v6875, %v6873
        %v6894 = vpack.c.bf16 %v6889, %v6887
        %s6895 = scalar_lea.vmem [#allocation14], 2048
        %v6896 = vld [vmem:[%s6895] sm:$0xff]
        %v6897 = vld [vmem:[%s6895 + $0x8] sm:$0xff]
        %v6898 = vld [vmem:[%s6895 + $0x10] sm:$0xff]
        %v6899 = vld [vmem:[%s6895 + $0x18] sm:$0xff]
        %v6900 = vld [vmem:[%s6895 + $0x20] sm:$0xff]
        %v6901 = vld [vmem:[%s6895 + $0x28] sm:$0xff]
        %v6902 = vld [vmem:[%s6895 + $0x30] sm:$0xff]
        %v6903 = vld [vmem:[%s6895 + $0x38] sm:$0xff]
        %v6904 = vld [vmem:[%s6895 + $0x40] sm:$0xff]
        %v6905 = vld [vmem:[%s6895 + $0x48] sm:$0xff]
        %v6906 = vld [vmem:[%s6895 + $0x50] sm:$0xff]
        %v6907 = vld [vmem:[%s6895 + $0x58] sm:$0xff]
        %v6908 = vld [vmem:[%s6895 + $0x60] sm:$0xff]
        %v6909 = vld [vmem:[%s6895 + $0x68] sm:$0xff]
        %v6910 = vld [vmem:[%s6895 + $0x70] sm:$0xff]
        %v6911 = vld [vmem:[%s6895 + $0x78] sm:$0xff]
        %v6912 = vld [vmem:[%s6895 + $0x80] sm:$0xff]
        %v6913 = vld [vmem:[%s6895 + $0x88] sm:$0xff]
        %v6914 = vld [vmem:[%s6895 + $0x90] sm:$0xff]
        %v6915 = vld [vmem:[%s6895 + $0x98] sm:$0xff]
        %v6916 = vld [vmem:[%s6895 + $0xa0] sm:$0xff]
        %v6917 = vld [vmem:[%s6895 + $0xa8] sm:$0xff]
        %v6918 = vld [vmem:[%s6895 + $0xb0] sm:$0xff]
        %v6919 = vld [vmem:[%s6895 + $0xb8] sm:$0xff]
        %v6920 = vld [vmem:[%s6895 + $0xc0] sm:$0xff]
        %v6921 = vld [vmem:[%s6895 + $0xc8] sm:$0xff]
        %v6922 = vld [vmem:[%s6895 + $0xd0] sm:$0xff]
        %v6923 = vld [vmem:[%s6895 + $0xd8] sm:$0xff]
        %v6924 = vld [vmem:[%s6895 + $0xe0] sm:$0xff]
        %v6925 = vld [vmem:[%s6895 + $0xe8] sm:$0xff]
        %v6926 = vld [vmem:[%s6895 + $0xf0] sm:$0xff]
        %v6927 = vld [vmem:[%s6895 + $0xf8] sm:$0xff]
        %v6928 = vld [vmem:[%s6895 + $0x100] sm:$0xff]
        %v6929 = vld [vmem:[%s6895 + $0x108] sm:$0xff]
        %v6930 = vld [vmem:[%s6895 + $0x110] sm:$0xff]
        %v6931 = vld [vmem:[%s6895 + $0x118] sm:$0xff]
        %v6932 = vld [vmem:[%s6895 + $0x120] sm:$0xff]
        %v6933 = vld [vmem:[%s6895 + $0x128] sm:$0xff]
        %v6934 = vld [vmem:[%s6895 + $0x130] sm:$0xff]
        %v6935 = vld [vmem:[%s6895 + $0x138] sm:$0xff]
        %v6936 = vld [vmem:[%s6895 + $0x140] sm:$0xff]
        %v6937 = vld [vmem:[%s6895 + $0x148] sm:$0xff]
        %v6938 = vld [vmem:[%s6895 + $0x150] sm:$0xff]
        %v6939 = vld [vmem:[%s6895 + $0x158] sm:$0xff]
        %v6940 = vld [vmem:[%s6895 + $0x160] sm:$0xff]
        %v6941 = vld [vmem:[%s6895 + $0x168] sm:$0xff]
        %v6942 = vld [vmem:[%s6895 + $0x170] sm:$0xff]
        %v6943 = vld [vmem:[%s6895 + $0x178] sm:$0xff]
        %v6944 = vld [vmem:[%s6895 + $0x180] sm:$0xff]
        %v6945 = vld [vmem:[%s6895 + $0x188] sm:$0xff]
        %v6946 = vld [vmem:[%s6895 + $0x190] sm:$0xff]
        %v6947 = vld [vmem:[%s6895 + $0x198] sm:$0xff]
        %v6948 = vld [vmem:[%s6895 + $0x1a0] sm:$0xff]
        %v6949 = vld [vmem:[%s6895 + $0x1a8] sm:$0xff]
        %v6950 = vld [vmem:[%s6895 + $0x1b0] sm:$0xff]
        %v6951 = vld [vmem:[%s6895 + $0x1b8] sm:$0xff]
        %v6952 = vld [vmem:[%s6895 + $0x1c0] sm:$0xff]
        %v6953 = vld [vmem:[%s6895 + $0x1c8] sm:$0xff]
        %v6954 = vld [vmem:[%s6895 + $0x1d0] sm:$0xff]
        %v6955 = vld [vmem:[%s6895 + $0x1d8] sm:$0xff]
        %v6956 = vld [vmem:[%s6895 + $0x1e0] sm:$0xff]
        %v6957 = vld [vmem:[%s6895 + $0x1e8] sm:$0xff]
        %v6958 = vld [vmem:[%s6895 + $0x1f0] sm:$0xff]
        %v6959 = vld [vmem:[%s6895 + $0x1f8] sm:$0xff]
        %v6960 = vld [vmem:[%s6895 + $0x200] sm:$0xff]
        %v6961 = vld [vmem:[%s6895 + $0x208] sm:$0xff]
        %v6962 = vld [vmem:[%s6895 + $0x210] sm:$0xff]
        %v6963 = vld [vmem:[%s6895 + $0x218] sm:$0xff]
        %v6964 = vld [vmem:[%s6895 + $0x220] sm:$0xff]
        %v6965 = vld [vmem:[%s6895 + $0x228] sm:$0xff]
        %v6966 = vld [vmem:[%s6895 + $0x230] sm:$0xff]
        %v6967 = vld [vmem:[%s6895 + $0x238] sm:$0xff]
        %v6968 = vld [vmem:[%s6895 + $0x240] sm:$0xff]
        %v6969 = vld [vmem:[%s6895 + $0x248] sm:$0xff]
        %v6970 = vld [vmem:[%s6895 + $0x250] sm:$0xff]
        %v6971 = vld [vmem:[%s6895 + $0x258] sm:$0xff]
        %v6972 = vld [vmem:[%s6895 + $0x260] sm:$0xff]
        %v6973 = vld [vmem:[%s6895 + $0x268] sm:$0xff]
        %v6974 = vld [vmem:[%s6895 + $0x270] sm:$0xff]
        %v6975 = vld [vmem:[%s6895 + $0x278] sm:$0xff]
        %v6976 = vld [vmem:[%s6895 + $0x280] sm:$0xff]
        %v6977 = vld [vmem:[%s6895 + $0x288] sm:$0xff]
        %v6978 = vld [vmem:[%s6895 + $0x290] sm:$0xff]
        %v6979 = vld [vmem:[%s6895 + $0x298] sm:$0xff]
        %v6980 = vld [vmem:[%s6895 + $0x2a0] sm:$0xff]
        %v6981 = vld [vmem:[%s6895 + $0x2a8] sm:$0xff]
        %v6982 = vld [vmem:[%s6895 + $0x2b0] sm:$0xff]
        %v6983 = vld [vmem:[%s6895 + $0x2b8] sm:$0xff]
        %v6984 = vld [vmem:[%s6895 + $0x2c0] sm:$0xff]
        %v6985 = vld [vmem:[%s6895 + $0x2c8] sm:$0xff]
        %v6986 = vld [vmem:[%s6895 + $0x2d0] sm:$0xff]
        %v6987 = vld [vmem:[%s6895 + $0x2d8] sm:$0xff]
        %v6988 = vld [vmem:[%s6895 + $0x2e0] sm:$0xff]
        %v6989 = vld [vmem:[%s6895 + $0x2e8] sm:$0xff]
        %v6990 = vld [vmem:[%s6895 + $0x2f0] sm:$0xff]
        %v6991 = vld [vmem:[%s6895 + $0x2f8] sm:$0xff]
        %v6992 = vld [vmem:[%s6895 + $0x300] sm:$0xff]
        %v6993 = vld [vmem:[%s6895 + $0x308] sm:$0xff]
        %v6994 = vld [vmem:[%s6895 + $0x310] sm:$0xff]
        %v6995 = vld [vmem:[%s6895 + $0x318] sm:$0xff]
        %v6996 = vld [vmem:[%s6895 + $0x320] sm:$0xff]
        %v6997 = vld [vmem:[%s6895 + $0x328] sm:$0xff]
        %v6998 = vld [vmem:[%s6895 + $0x330] sm:$0xff]
        %v6999 = vld [vmem:[%s6895 + $0x338] sm:$0xff]
        %v7000 = vld [vmem:[%s6895 + $0x340] sm:$0xff]
        %v7001 = vld [vmem:[%s6895 + $0x348] sm:$0xff]
        %v7002 = vld [vmem:[%s6895 + $0x350] sm:$0xff]
        %v7003 = vld [vmem:[%s6895 + $0x358] sm:$0xff]
        %v7004 = vld [vmem:[%s6895 + $0x360] sm:$0xff]
        %v7005 = vld [vmem:[%s6895 + $0x368] sm:$0xff]
        %v7006 = vld [vmem:[%s6895 + $0x370] sm:$0xff]
        %v7007 = vld [vmem:[%s6895 + $0x378] sm:$0xff]
        %v7008 = vld [vmem:[%s6895 + $0x380] sm:$0xff]
        %v7009 = vld [vmem:[%s6895 + $0x388] sm:$0xff]
        %v7010 = vld [vmem:[%s6895 + $0x390] sm:$0xff]
        %v7011 = vld [vmem:[%s6895 + $0x398] sm:$0xff]
        %v7012 = vld [vmem:[%s6895 + $0x3a0] sm:$0xff]
        %v7013 = vld [vmem:[%s6895 + $0x3a8] sm:$0xff]
        %v7014 = vld [vmem:[%s6895 + $0x3b0] sm:$0xff]
        %v7015 = vld [vmem:[%s6895 + $0x3b8] sm:$0xff]
        %v7016 = vld [vmem:[%s6895 + $0x3c0] sm:$0xff]
        %v7017 = vld [vmem:[%s6895 + $0x3c8] sm:$0xff]
        %v7018 = vld [vmem:[%s6895 + $0x3d0] sm:$0xff]
        %v7019 = vld [vmem:[%s6895 + $0x3d8] sm:$0xff]
        %v7020 = vld [vmem:[%s6895 + $0x3e0] sm:$0xff]
        %v7021 = vld [vmem:[%s6895 + $0x3e8] sm:$0xff]
        %v7022 = vld [vmem:[%s6895 + $0x3f0] sm:$0xff]
        %v7023 = vld [vmem:[%s6895 + $0x3f8] sm:$0xff]
        %v7152 = vunpack.c.l.b16 %v6896
        %v7153 = vunpack.c.h.b16 %v6896
        %v7154 = vunpack.c.l.b16 %v6897
        %v7155 = vunpack.c.h.b16 %v6897
        %v7156 = vunpack.c.l.b16 %v6898
        %v7157 = vunpack.c.h.b16 %v6898
        %v7158 = vunpack.c.l.b16 %v6899
        %v7159 = vunpack.c.h.b16 %v6899
        %v7160 = vunpack.c.l.b16 %v6900
        %v7161 = vunpack.c.h.b16 %v6900
        %v7162 = vunpack.c.l.b16 %v6901
        %v7163 = vunpack.c.h.b16 %v6901
        %v7164 = vunpack.c.l.b16 %v6902
        %v7165 = vunpack.c.h.b16 %v6902
        %v7166 = vunpack.c.l.b16 %v6903
        %v7167 = vunpack.c.h.b16 %v6903
        %v7168 = vunpack.c.l.b16 %v6904
        %v7169 = vunpack.c.h.b16 %v6904
        %v7170 = vunpack.c.l.b16 %v6905
        %v7171 = vunpack.c.h.b16 %v6905
        %v7172 = vunpack.c.l.b16 %v6906
        %v7173 = vunpack.c.h.b16 %v6906
        %v7174 = vunpack.c.l.b16 %v6907
        %v7175 = vunpack.c.h.b16 %v6907
        %v7176 = vunpack.c.l.b16 %v6908
        %v7177 = vunpack.c.h.b16 %v6908
        %v7178 = vunpack.c.l.b16 %v6909
        %v7179 = vunpack.c.h.b16 %v6909
        %v7180 = vunpack.c.l.b16 %v6910
        %v7181 = vunpack.c.h.b16 %v6910
        %v7182 = vunpack.c.l.b16 %v6911
        %v7183 = vunpack.c.h.b16 %v6911
        %v7184 = vunpack.c.l.b16 %v6912
        %v7185 = vunpack.c.h.b16 %v6912
        %v7186 = vunpack.c.l.b16 %v6913
        %v7187 = vunpack.c.h.b16 %v6913
        %v7188 = vunpack.c.l.b16 %v6914
        %v7189 = vunpack.c.h.b16 %v6914
        %v7190 = vunpack.c.l.b16 %v6915
        %v7191 = vunpack.c.h.b16 %v6915
        %v7192 = vunpack.c.l.b16 %v6916
        %v7193 = vunpack.c.h.b16 %v6916
        %v7194 = vunpack.c.l.b16 %v6917
        %v7195 = vunpack.c.h.b16 %v6917
        %v7196 = vunpack.c.l.b16 %v6918
        %v7197 = vunpack.c.h.b16 %v6918
        %v7198 = vunpack.c.l.b16 %v6919
        %v7199 = vunpack.c.h.b16 %v6919
        %v7200 = vunpack.c.l.b16 %v6920
        %v7201 = vunpack.c.h.b16 %v6920
        %v7202 = vunpack.c.l.b16 %v6921
        %v7203 = vunpack.c.h.b16 %v6921
        %v7204 = vunpack.c.l.b16 %v6922
        %v7205 = vunpack.c.h.b16 %v6922
        %v7206 = vunpack.c.l.b16 %v6923
        %v7207 = vunpack.c.h.b16 %v6923
        %v7208 = vunpack.c.l.b16 %v6924
        %v7209 = vunpack.c.h.b16 %v6924
        %v7210 = vunpack.c.l.b16 %v6925
        %v7211 = vunpack.c.h.b16 %v6925
        %v7212 = vunpack.c.l.b16 %v6926
        %v7213 = vunpack.c.h.b16 %v6926
        %v7214 = vunpack.c.l.b16 %v6927
        %v7215 = vunpack.c.h.b16 %v6927
        %v7216 = vunpack.c.l.b16 %v6928
        %v7217 = vunpack.c.h.b16 %v6928
        %v7218 = vunpack.c.l.b16 %v6929
        %v7219 = vunpack.c.h.b16 %v6929
        %v7220 = vunpack.c.l.b16 %v6930
        %v7221 = vunpack.c.h.b16 %v6930
        %v7222 = vunpack.c.l.b16 %v6931
        %v7223 = vunpack.c.h.b16 %v6931
        %v7224 = vunpack.c.l.b16 %v6932
        %v7225 = vunpack.c.h.b16 %v6932
        %v7226 = vunpack.c.l.b16 %v6933
        %v7227 = vunpack.c.h.b16 %v6933
        %v7228 = vunpack.c.l.b16 %v6934
        %v7229 = vunpack.c.h.b16 %v6934
        %v7230 = vunpack.c.l.b16 %v6935
        %v7231 = vunpack.c.h.b16 %v6935
        %v7232 = vunpack.c.l.b16 %v6936
        %v7233 = vunpack.c.h.b16 %v6936
        %v7234 = vunpack.c.l.b16 %v6937
        %v7235 = vunpack.c.h.b16 %v6937
        %v7236 = vunpack.c.l.b16 %v6938
        %v7237 = vunpack.c.h.b16 %v6938
        %v7238 = vunpack.c.l.b16 %v6939
        %v7239 = vunpack.c.h.b16 %v6939
        %v7240 = vunpack.c.l.b16 %v6940
        %v7241 = vunpack.c.h.b16 %v6940
        %v7242 = vunpack.c.l.b16 %v6941
        %v7243 = vunpack.c.h.b16 %v6941
        %v7244 = vunpack.c.l.b16 %v6942
        %v7245 = vunpack.c.h.b16 %v6942
        %v7246 = vunpack.c.l.b16 %v6943
        %v7247 = vunpack.c.h.b16 %v6943
        %v7248 = vunpack.c.l.b16 %v6944
        %v7249 = vunpack.c.h.b16 %v6944
        %v7250 = vunpack.c.l.b16 %v6945
        %v7251 = vunpack.c.h.b16 %v6945
        %v7252 = vunpack.c.l.b16 %v6946
        %v7253 = vunpack.c.h.b16 %v6946
        %v7254 = vunpack.c.l.b16 %v6947
        %v7255 = vunpack.c.h.b16 %v6947
        %v7256 = vunpack.c.l.b16 %v6948
        %v7257 = vunpack.c.h.b16 %v6948
        %v7258 = vunpack.c.l.b16 %v6949
        %v7259 = vunpack.c.h.b16 %v6949
        %v7260 = vunpack.c.l.b16 %v6950
        %v7261 = vunpack.c.h.b16 %v6950
        %v7262 = vunpack.c.l.b16 %v6951
        %v7263 = vunpack.c.h.b16 %v6951
        %v7264 = vunpack.c.l.b16 %v6952
        %v7265 = vunpack.c.h.b16 %v6952
        %v7266 = vunpack.c.l.b16 %v6953
        %v7267 = vunpack.c.h.b16 %v6953
        %v7268 = vunpack.c.l.b16 %v6954
        %v7269 = vunpack.c.h.b16 %v6954
        %v7270 = vunpack.c.l.b16 %v6955
        %v7271 = vunpack.c.h.b16 %v6955
        %v7272 = vunpack.c.l.b16 %v6956
        %v7273 = vunpack.c.h.b16 %v6956
        %v7274 = vunpack.c.l.b16 %v6957
        %v7275 = vunpack.c.h.b16 %v6957
        %v7276 = vunpack.c.l.b16 %v6958
        %v7277 = vunpack.c.h.b16 %v6958
        %v7278 = vunpack.c.l.b16 %v6959
        %v7279 = vunpack.c.h.b16 %v6959
        %v7280 = vunpack.c.l.b16 %v6960
        %v7281 = vunpack.c.h.b16 %v6960
        %v7282 = vunpack.c.l.b16 %v6961
        %v7283 = vunpack.c.h.b16 %v6961
        %v7284 = vunpack.c.l.b16 %v6962
        %v7285 = vunpack.c.h.b16 %v6962
        %v7286 = vunpack.c.l.b16 %v6963
        %v7287 = vunpack.c.h.b16 %v6963
        %v7288 = vunpack.c.l.b16 %v6964
        %v7289 = vunpack.c.h.b16 %v6964
        %v7290 = vunpack.c.l.b16 %v6965
        %v7291 = vunpack.c.h.b16 %v6965
        %v7292 = vunpack.c.l.b16 %v6966
        %v7293 = vunpack.c.h.b16 %v6966
        %v7294 = vunpack.c.l.b16 %v6967
        %v7295 = vunpack.c.h.b16 %v6967
        %v7296 = vunpack.c.l.b16 %v6968
        %v7297 = vunpack.c.h.b16 %v6968
        %v7298 = vunpack.c.l.b16 %v6969
        %v7299 = vunpack.c.h.b16 %v6969
        %v7300 = vunpack.c.l.b16 %v6970
        %v7301 = vunpack.c.h.b16 %v6970
        %v7302 = vunpack.c.l.b16 %v6971
        %v7303 = vunpack.c.h.b16 %v6971
        %v7304 = vunpack.c.l.b16 %v6972
        %v7305 = vunpack.c.h.b16 %v6972
        %v7306 = vunpack.c.l.b16 %v6973
        %v7307 = vunpack.c.h.b16 %v6973
        %v7308 = vunpack.c.l.b16 %v6974
        %v7309 = vunpack.c.h.b16 %v6974
        %v7310 = vunpack.c.l.b16 %v6975
        %v7311 = vunpack.c.h.b16 %v6975
        %v7312 = vunpack.c.l.b16 %v6976
        %v7313 = vunpack.c.h.b16 %v6976
        %v7314 = vunpack.c.l.b16 %v6977
        %v7315 = vunpack.c.h.b16 %v6977
        %v7316 = vunpack.c.l.b16 %v6978
        %v7317 = vunpack.c.h.b16 %v6978
        %v7318 = vunpack.c.l.b16 %v6979
        %v7319 = vunpack.c.h.b16 %v6979
        %v7320 = vunpack.c.l.b16 %v6980
        %v7321 = vunpack.c.h.b16 %v6980
        %v7322 = vunpack.c.l.b16 %v6981
        %v7323 = vunpack.c.h.b16 %v6981
        %v7324 = vunpack.c.l.b16 %v6982
        %v7325 = vunpack.c.h.b16 %v6982
        %v7326 = vunpack.c.l.b16 %v6983
        %v7327 = vunpack.c.h.b16 %v6983
        %v7328 = vunpack.c.l.b16 %v6984
        %v7329 = vunpack.c.h.b16 %v6984
        %v7330 = vunpack.c.l.b16 %v6985
        %v7331 = vunpack.c.h.b16 %v6985
        %v7332 = vunpack.c.l.b16 %v6986
        %v7333 = vunpack.c.h.b16 %v6986
        %v7334 = vunpack.c.l.b16 %v6987
        %v7335 = vunpack.c.h.b16 %v6987
        %v7336 = vunpack.c.l.b16 %v6988
        %v7337 = vunpack.c.h.b16 %v6988
        %v7338 = vunpack.c.l.b16 %v6989
        %v7339 = vunpack.c.h.b16 %v6989
        %v7340 = vunpack.c.l.b16 %v6990
        %v7341 = vunpack.c.h.b16 %v6990
        %v7342 = vunpack.c.l.b16 %v6991
        %v7343 = vunpack.c.h.b16 %v6991
        %v7344 = vunpack.c.l.b16 %v6992
        %v7345 = vunpack.c.h.b16 %v6992
        %v7346 = vunpack.c.l.b16 %v6993
        %v7347 = vunpack.c.h.b16 %v6993
        %v7348 = vunpack.c.l.b16 %v6994
        %v7349 = vunpack.c.h.b16 %v6994
        %v7350 = vunpack.c.l.b16 %v6995
        %v7351 = vunpack.c.h.b16 %v6995
        %v7352 = vunpack.c.l.b16 %v6996
        %v7353 = vunpack.c.h.b16 %v6996
        %v7354 = vunpack.c.l.b16 %v6997
        %v7355 = vunpack.c.h.b16 %v6997
        %v7356 = vunpack.c.l.b16 %v6998
        %v7357 = vunpack.c.h.b16 %v6998
        %v7358 = vunpack.c.l.b16 %v6999
        %v7359 = vunpack.c.h.b16 %v6999
        %v7360 = vunpack.c.l.b16 %v7000
        %v7361 = vunpack.c.h.b16 %v7000
        %v7362 = vunpack.c.l.b16 %v7001
        %v7363 = vunpack.c.h.b16 %v7001
        %v7364 = vunpack.c.l.b16 %v7002
        %v7365 = vunpack.c.h.b16 %v7002
        %v7366 = vunpack.c.l.b16 %v7003
        %v7367 = vunpack.c.h.b16 %v7003
        %v7368 = vunpack.c.l.b16 %v7004
        %v7369 = vunpack.c.h.b16 %v7004
        %v7370 = vunpack.c.l.b16 %v7005
        %v7371 = vunpack.c.h.b16 %v7005
        %v7372 = vunpack.c.l.b16 %v7006
        %v7373 = vunpack.c.h.b16 %v7006
        %v7374 = vunpack.c.l.b16 %v7007
        %v7375 = vunpack.c.h.b16 %v7007
        %v7376 = vunpack.c.l.b16 %v7008
        %v7377 = vunpack.c.h.b16 %v7008
        %v7378 = vunpack.c.l.b16 %v7009
        %v7379 = vunpack.c.h.b16 %v7009
        %v7380 = vunpack.c.l.b16 %v7010
        %v7381 = vunpack.c.h.b16 %v7010
        %v7382 = vunpack.c.l.b16 %v7011
        %v7383 = vunpack.c.h.b16 %v7011
        %v7384 = vunpack.c.l.b16 %v7012
        %v7385 = vunpack.c.h.b16 %v7012
        %v7386 = vunpack.c.l.b16 %v7013
        %v7387 = vunpack.c.h.b16 %v7013
        %v7388 = vunpack.c.l.b16 %v7014
        %v7389 = vunpack.c.h.b16 %v7014
        %v7390 = vunpack.c.l.b16 %v7015
        %v7391 = vunpack.c.h.b16 %v7015
        %v7392 = vunpack.c.l.b16 %v7016
        %v7393 = vunpack.c.h.b16 %v7016
        %v7394 = vunpack.c.l.b16 %v7017
        %v7395 = vunpack.c.h.b16 %v7017
        %v7396 = vunpack.c.l.b16 %v7018
        %v7397 = vunpack.c.h.b16 %v7018
        %v7398 = vunpack.c.l.b16 %v7019
        %v7399 = vunpack.c.h.b16 %v7019
        %v7400 = vunpack.c.l.b16 %v7020
        %v7401 = vunpack.c.h.b16 %v7020
        %v7402 = vunpack.c.l.b16 %v7021
        %v7403 = vunpack.c.h.b16 %v7021
        %v7404 = vunpack.c.l.b16 %v7022
        %v7405 = vunpack.c.h.b16 %v7022
        %v7406 = vunpack.c.l.b16 %v7023
        %v7407 = vunpack.c.h.b16 %v7023
        %v7408 = vpack.c.b16 %v7156, %v7152
        %v7409 = vpack.c.b16 %v7157, %v7153
        %v7410 = vpack.c.b16 %v7158, %v7154
        %v7411 = vpack.c.b16 %v7159, %v7155
        %v7412 = vpack.c.b16 %v7164, %v7160
        %v7413 = vpack.c.b16 %v7165, %v7161
        %v7414 = vpack.c.b16 %v7166, %v7162
        %v7415 = vpack.c.b16 %v7167, %v7163
        %v7416 = vpack.c.b16 %v7172, %v7168
        %v7417 = vpack.c.b16 %v7173, %v7169
        %v7418 = vpack.c.b16 %v7174, %v7170
        %v7419 = vpack.c.b16 %v7175, %v7171
        %v7420 = vpack.c.b16 %v7180, %v7176
        %v7421 = vpack.c.b16 %v7181, %v7177
        %v7422 = vpack.c.b16 %v7182, %v7178
        %v7423 = vpack.c.b16 %v7183, %v7179
        %v7424 = vpack.c.b16 %v7188, %v7184
        %v7425 = vpack.c.b16 %v7189, %v7185
        %v7426 = vpack.c.b16 %v7190, %v7186
        %v7427 = vpack.c.b16 %v7191, %v7187
        %v7428 = vpack.c.b16 %v7196, %v7192
        %v7429 = vpack.c.b16 %v7197, %v7193
        %v7430 = vpack.c.b16 %v7198, %v7194
        %v7431 = vpack.c.b16 %v7199, %v7195
        %v7432 = vpack.c.b16 %v7204, %v7200
        %v7433 = vpack.c.b16 %v7205, %v7201
        %v7434 = vpack.c.b16 %v7206, %v7202
        %v7435 = vpack.c.b16 %v7207, %v7203
        %v7436 = vpack.c.b16 %v7212, %v7208
        %v7437 = vpack.c.b16 %v7213, %v7209
        %v7438 = vpack.c.b16 %v7214, %v7210
        %v7439 = vpack.c.b16 %v7215, %v7211
        %v7440 = vpack.c.b16 %v7220, %v7216
        %v7441 = vpack.c.b16 %v7221, %v7217
        %v7442 = vpack.c.b16 %v7222, %v7218
        %v7443 = vpack.c.b16 %v7223, %v7219
        %v7444 = vpack.c.b16 %v7228, %v7224
        %v7445 = vpack.c.b16 %v7229, %v7225
        %v7446 = vpack.c.b16 %v7230, %v7226
        %v7447 = vpack.c.b16 %v7231, %v7227
        %v7448 = vpack.c.b16 %v7236, %v7232
        %v7449 = vpack.c.b16 %v7237, %v7233
        %v7450 = vpack.c.b16 %v7238, %v7234
        %v7451 = vpack.c.b16 %v7239, %v7235
        %v7452 = vpack.c.b16 %v7244, %v7240
        %v7453 = vpack.c.b16 %v7245, %v7241
        %v7454 = vpack.c.b16 %v7246, %v7242
        %v7455 = vpack.c.b16 %v7247, %v7243
        %v7456 = vpack.c.b16 %v7252, %v7248
        %v7457 = vpack.c.b16 %v7253, %v7249
        %v7458 = vpack.c.b16 %v7254, %v7250
        %v7459 = vpack.c.b16 %v7255, %v7251
        %v7460 = vpack.c.b16 %v7260, %v7256
        %v7461 = vpack.c.b16 %v7261, %v7257
        %v7462 = vpack.c.b16 %v7262, %v7258
        %v7463 = vpack.c.b16 %v7263, %v7259
        %v7464 = vpack.c.b16 %v7268, %v7264
        %v7465 = vpack.c.b16 %v7269, %v7265
        %v7466 = vpack.c.b16 %v7270, %v7266
        %v7467 = vpack.c.b16 %v7271, %v7267
        %v7468 = vpack.c.b16 %v7276, %v7272
        %v7469 = vpack.c.b16 %v7277, %v7273
        %v7470 = vpack.c.b16 %v7278, %v7274
        %v7471 = vpack.c.b16 %v7279, %v7275
        %v7472 = vpack.c.b16 %v7284, %v7280
        %v7473 = vpack.c.b16 %v7285, %v7281
        %v7474 = vpack.c.b16 %v7286, %v7282
        %v7475 = vpack.c.b16 %v7287, %v7283
        %v7476 = vpack.c.b16 %v7292, %v7288
        %v7477 = vpack.c.b16 %v7293, %v7289
        %v7478 = vpack.c.b16 %v7294, %v7290
        %v7479 = vpack.c.b16 %v7295, %v7291
        %v7480 = vpack.c.b16 %v7300, %v7296
        %v7481 = vpack.c.b16 %v7301, %v7297
        %v7482 = vpack.c.b16 %v7302, %v7298
        %v7483 = vpack.c.b16 %v7303, %v7299
        %v7484 = vpack.c.b16 %v7308, %v7304
        %v7485 = vpack.c.b16 %v7309, %v7305
        %v7486 = vpack.c.b16 %v7310, %v7306
        %v7487 = vpack.c.b16 %v7311, %v7307
        %v7488 = vpack.c.b16 %v7316, %v7312
        %v7489 = vpack.c.b16 %v7317, %v7313
        %v7490 = vpack.c.b16 %v7318, %v7314
        %v7491 = vpack.c.b16 %v7319, %v7315
        %v7492 = vpack.c.b16 %v7324, %v7320
        %v7493 = vpack.c.b16 %v7325, %v7321
        %v7494 = vpack.c.b16 %v7326, %v7322
        %v7495 = vpack.c.b16 %v7327, %v7323
        %v7496 = vpack.c.b16 %v7332, %v7328
        %v7497 = vpack.c.b16 %v7333, %v7329
        %v7498 = vpack.c.b16 %v7334, %v7330
        %v7499 = vpack.c.b16 %v7335, %v7331
        %v7500 = vpack.c.b16 %v7340, %v7336
        %v7501 = vpack.c.b16 %v7341, %v7337
        %v7502 = vpack.c.b16 %v7342, %v7338
        %v7503 = vpack.c.b16 %v7343, %v7339
        %v7504 = vpack.c.b16 %v7348, %v7344
        %v7505 = vpack.c.b16 %v7349, %v7345
        %v7506 = vpack.c.b16 %v7350, %v7346
        %v7507 = vpack.c.b16 %v7351, %v7347
        %v7508 = vpack.c.b16 %v7356, %v7352
        %v7509 = vpack.c.b16 %v7357, %v7353
        %v7510 = vpack.c.b16 %v7358, %v7354
        %v7511 = vpack.c.b16 %v7359, %v7355
        %v7512 = vpack.c.b16 %v7364, %v7360
        %v7513 = vpack.c.b16 %v7365, %v7361
        %v7514 = vpack.c.b16 %v7366, %v7362
        %v7515 = vpack.c.b16 %v7367, %v7363
        %v7516 = vpack.c.b16 %v7372, %v7368
        %v7517 = vpack.c.b16 %v7373, %v7369
        %v7518 = vpack.c.b16 %v7374, %v7370
        %v7519 = vpack.c.b16 %v7375, %v7371
        %v7520 = vpack.c.b16 %v7380, %v7376
        %v7521 = vpack.c.b16 %v7381, %v7377
        %v7522 = vpack.c.b16 %v7382, %v7378
        %v7523 = vpack.c.b16 %v7383, %v7379
        %v7524 = vpack.c.b16 %v7388, %v7384
        %v7525 = vpack.c.b16 %v7389, %v7385
        %v7526 = vpack.c.b16 %v7390, %v7386
        %v7527 = vpack.c.b16 %v7391, %v7387
        %v7528 = vpack.c.b16 %v7396, %v7392
        %v7529 = vpack.c.b16 %v7397, %v7393
        %v7530 = vpack.c.b16 %v7398, %v7394
        %v7531 = vpack.c.b16 %v7399, %v7395
        %v7532 = vpack.c.b16 %v7404, %v7400
        %v7533 = vpack.c.b16 %v7405, %v7401
        %v7534 = vpack.c.b16 %v7406, %v7402
        %v7535 = vpack.c.b16 %v7407, %v7403
        %7664 = vmatpush.bf16.msra.mxu0 %v7436
        %7665 = vmatpush.bf16.msra.mxu0 %v7432
        %7666 = vmatpush.bf16.msra.mxu0 %v7428
        %7667 = vmatpush.bf16.msra.mxu0 %v7424
        %7668 = vmatpush.bf16.msra.mxu0 %v7420
        %7669 = vmatpush.bf16.msra.mxu0 %v7416
        %7670 = vmatpush.bf16.msra.mxu0 %v7412
        %7671 = vmatpush.bf16.msra.mxu0 %v7408
        %7672 = vmatmul.bf16.gmra.mxu0 %v6891
        %v7673 = vpop.f32.mrf.mxu0
        %v7674 = vadd.f32 0.0, %v7673
        %v7675 = vpop.f32.mrf.mxu0
        %v7676 = vadd.f32 0.0, %v7675
        %7677 = vdwg.mxu0
        %7678 = vmatpush.bf16.msra.mxu0 %v7468
        %7679 = vmatpush.bf16.msra.mxu0 %v7464
        %7680 = vmatpush.bf16.msra.mxu0 %v7460
        %7681 = vmatpush.bf16.msra.mxu0 %v7456
        %7682 = vmatpush.bf16.msra.mxu0 %v7452
        %7683 = vmatpush.bf16.msra.mxu0 %v7448
        %7684 = vmatpush.bf16.msra.mxu0 %v7444
        %7685 = vmatpush.bf16.msra.mxu0 %v7440
        %7686 = vmatmul.bf16.gmra.mxu0 %v6892
        %v7687 = vpop.f32.mrf.mxu0
        %v7688 = vadd.f32 %v7674, %v7687
        %v7689 = vpop.f32.mrf.mxu0
        %v7690 = vadd.f32 %v7676, %v7689
        %7691 = vdwg.mxu0
        %7692 = vmatpush.bf16.msra.mxu0 %v7500
        %7693 = vmatpush.bf16.msra.mxu0 %v7496
        %7694 = vmatpush.bf16.msra.mxu0 %v7492
        %7695 = vmatpush.bf16.msra.mxu0 %v7488
        %7696 = vmatpush.bf16.msra.mxu0 %v7484
        %7697 = vmatpush.bf16.msra.mxu0 %v7480
        %7698 = vmatpush.bf16.msra.mxu0 %v7476
        %7699 = vmatpush.bf16.msra.mxu0 %v7472
        %7700 = vmatmul.bf16.gmra.mxu0 %v6893
        %v7701 = vpop.f32.mrf.mxu0
        %v7702 = vadd.f32 %v7688, %v7701
        %v7703 = vpop.f32.mrf.mxu0
        %v7704 = vadd.f32 %v7690, %v7703
        %7705 = vdwg.mxu0
        %7706 = vmatpush.bf16.msra.mxu0 %v7532
        %7707 = vmatpush.bf16.msra.mxu0 %v7528
        %7708 = vmatpush.bf16.msra.mxu0 %v7524
        %7709 = vmatpush.bf16.msra.mxu0 %v7520
        %7710 = vmatpush.bf16.msra.mxu0 %v7516
        %7711 = vmatpush.bf16.msra.mxu0 %v7512
        %7712 = vmatpush.bf16.msra.mxu0 %v7508
        %7713 = vmatpush.bf16.msra.mxu0 %v7504
        %7714 = vmatmul.bf16.gmra.mxu0 %v6894
        %v7715 = vpop.f32.mrf.mxu0
        %v7716 = vadd.f32 %v7702, %v7715
        %v7717 = vpop.f32.mrf.mxu0
        %v7718 = vadd.f32 %v7704, %v7717
        %7719 = vdwg.mxu0
        %7720 = vmatpush.bf16.msra.mxu0 %v7437
        %7721 = vmatpush.bf16.msra.mxu0 %v7433
        %7722 = vmatpush.bf16.msra.mxu0 %v7429
        %7723 = vmatpush.bf16.msra.mxu0 %v7425
        %7724 = vmatpush.bf16.msra.mxu0 %v7421
        %7725 = vmatpush.bf16.msra.mxu0 %v7417
        %7726 = vmatpush.bf16.msra.mxu0 %v7413
        %7727 = vmatpush.bf16.msra.mxu0 %v7409
        %7728 = vmatmul.bf16.gmra.mxu0 %v6891
        %v7729 = vpop.f32.mrf.mxu0
        %v7730 = vadd.f32 0.0, %v7729
        %v7731 = vpop.f32.mrf.mxu0
        %v7732 = vadd.f32 0.0, %v7731
        %7733 = vdwg.mxu0
        %7734 = vmatpush.bf16.msra.mxu0 %v7469
        %7735 = vmatpush.bf16.msra.mxu0 %v7465
        %7736 = vmatpush.bf16.msra.mxu0 %v7461
        %7737 = vmatpush.bf16.msra.mxu0 %v7457
        %7738 = vmatpush.bf16.msra.mxu0 %v7453
        %7739 = vmatpush.bf16.msra.mxu0 %v7449
        %7740 = vmatpush.bf16.msra.mxu0 %v7445
        %7741 = vmatpush.bf16.msra.mxu0 %v7441
        %7742 = vmatmul.bf16.gmra.mxu0 %v6892
        %v7743 = vpop.f32.mrf.mxu0
        %v7744 = vadd.f32 %v7730, %v7743
        %v7745 = vpop.f32.mrf.mxu0
        %v7746 = vadd.f32 %v7732, %v7745
        %7747 = vdwg.mxu0
        %7748 = vmatpush.bf16.msra.mxu0 %v7501
        %7749 = vmatpush.bf16.msra.mxu0 %v7497
        %7750 = vmatpush.bf16.msra.mxu0 %v7493
        %7751 = vmatpush.bf16.msra.mxu0 %v7489
        %7752 = vmatpush.bf16.msra.mxu0 %v7485
        %7753 = vmatpush.bf16.msra.mxu0 %v7481
        %7754 = vmatpush.bf16.msra.mxu0 %v7477
        %7755 = vmatpush.bf16.msra.mxu0 %v7473
        %7756 = vmatmul.bf16.gmra.mxu0 %v6893
        %v7757 = vpop.f32.mrf.mxu0
        %v7758 = vadd.f32 %v7744, %v7757
        %v7759 = vpop.f32.mrf.mxu0
        %v7760 = vadd.f32 %v7746, %v7759
        %7761 = vdwg.mxu0
        %7762 = vmatpush.bf16.msra.mxu0 %v7533
        %7763 = vmatpush.bf16.msra.mxu0 %v7529
        %7764 = vmatpush.bf16.msra.mxu0 %v7525
        %7765 = vmatpush.bf16.msra.mxu0 %v7521
        %7766 = vmatpush.bf16.msra.mxu0 %v7517
        %7767 = vmatpush.bf16.msra.mxu0 %v7513
        %7768 = vmatpush.bf16.msra.mxu0 %v7509
        %7769 = vmatpush.bf16.msra.mxu0 %v7505
        %7770 = vmatmul.bf16.gmra.mxu0 %v6894
        %v7771 = vpop.f32.mrf.mxu0
        %v7772 = vadd.f32 %v7758, %v7771
        %v7773 = vpop.f32.mrf.mxu0
        %v7774 = vadd.f32 %v7760, %v7773
        %7775 = vdwg.mxu0
        %7776 = vmatpush.bf16.msra.mxu0 %v7438
        %7777 = vmatpush.bf16.msra.mxu0 %v7434
        %7778 = vmatpush.bf16.msra.mxu0 %v7430
        %7779 = vmatpush.bf16.msra.mxu0 %v7426
        %7780 = vmatpush.bf16.msra.mxu0 %v7422
        %7781 = vmatpush.bf16.msra.mxu0 %v7418
        %7782 = vmatpush.bf16.msra.mxu0 %v7414
        %7783 = vmatpush.bf16.msra.mxu0 %v7410
        %7784 = vmatmul.bf16.gmra.mxu0 %v6891
        %v7785 = vpop.f32.mrf.mxu0
        %v7786 = vadd.f32 0.0, %v7785
        %v7787 = vpop.f32.mrf.mxu0
        %v7788 = vadd.f32 0.0, %v7787
        %7789 = vdwg.mxu0
        %7790 = vmatpush.bf16.msra.mxu0 %v7470
        %7791 = vmatpush.bf16.msra.mxu0 %v7466
        %7792 = vmatpush.bf16.msra.mxu0 %v7462
        %7793 = vmatpush.bf16.msra.mxu0 %v7458
        %7794 = vmatpush.bf16.msra.mxu0 %v7454
        %7795 = vmatpush.bf16.msra.mxu0 %v7450
        %7796 = vmatpush.bf16.msra.mxu0 %v7446
        %7797 = vmatpush.bf16.msra.mxu0 %v7442
        %7798 = vmatmul.bf16.gmra.mxu0 %v6892
        %v7799 = vpop.f32.mrf.mxu0
        %v7800 = vadd.f32 %v7786, %v7799
        %v7801 = vpop.f32.mrf.mxu0
        %v7802 = vadd.f32 %v7788, %v7801
        %7803 = vdwg.mxu0
        %7804 = vmatpush.bf16.msra.mxu0 %v7502
        %7805 = vmatpush.bf16.msra.mxu0 %v7498
        %7806 = vmatpush.bf16.msra.mxu0 %v7494
        %7807 = vmatpush.bf16.msra.mxu0 %v7490
        %7808 = vmatpush.bf16.msra.mxu0 %v7486
        %7809 = vmatpush.bf16.msra.mxu0 %v7482
        %7810 = vmatpush.bf16.msra.mxu0 %v7478
        %7811 = vmatpush.bf16.msra.mxu0 %v7474
        %7812 = vmatmul.bf16.gmra.mxu0 %v6893
        %v7813 = vpop.f32.mrf.mxu0
        %v7814 = vadd.f32 %v7800, %v7813
        %v7815 = vpop.f32.mrf.mxu0
        %v7816 = vadd.f32 %v7802, %v7815
        %7817 = vdwg.mxu0
        %7818 = vmatpush.bf16.msra.mxu0 %v7534
        %7819 = vmatpush.bf16.msra.mxu0 %v7530
        %7820 = vmatpush.bf16.msra.mxu0 %v7526
        %7821 = vmatpush.bf16.msra.mxu0 %v7522
        %7822 = vmatpush.bf16.msra.mxu0 %v7518
        %7823 = vmatpush.bf16.msra.mxu0 %v7514
        %7824 = vmatpush.bf16.msra.mxu0 %v7510
        %7825 = vmatpush.bf16.msra.mxu0 %v7506
        %7826 = vmatmul.bf16.gmra.mxu0 %v6894
        %v7827 = vpop.f32.mrf.mxu0
        %v7828 = vadd.f32 %v7814, %v7827
        %v7829 = vpop.f32.mrf.mxu0
        %v7830 = vadd.f32 %v7816, %v7829
        %7831 = vdwg.mxu0
        %7832 = vmatpush.bf16.msra.mxu0 %v7439
        %7833 = vmatpush.bf16.msra.mxu0 %v7435
        %7834 = vmatpush.bf16.msra.mxu0 %v7431
        %7835 = vmatpush.bf16.msra.mxu0 %v7427
        %7836 = vmatpush.bf16.msra.mxu0 %v7423
        %7837 = vmatpush.bf16.msra.mxu0 %v7419
        %7838 = vmatpush.bf16.msra.mxu0 %v7415
        %7839 = vmatpush.bf16.msra.mxu0 %v7411
        %7840 = vmatmul.bf16.gmra.mxu0 %v6891
        %v7841 = vpop.f32.mrf.mxu0
        %v7842 = vadd.f32 0.0, %v7841
        %v7843 = vpop.f32.mrf.mxu0
        %v7844 = vadd.f32 0.0, %v7843
        %7845 = vdwg.mxu0
        %7846 = vmatpush.bf16.msra.mxu0 %v7471
        %7847 = vmatpush.bf16.msra.mxu0 %v7467
        %7848 = vmatpush.bf16.msra.mxu0 %v7463
        %7849 = vmatpush.bf16.msra.mxu0 %v7459
        %7850 = vmatpush.bf16.msra.mxu0 %v7455
        %7851 = vmatpush.bf16.msra.mxu0 %v7451
        %7852 = vmatpush.bf16.msra.mxu0 %v7447
        %7853 = vmatpush.bf16.msra.mxu0 %v7443
        %7854 = vmatmul.bf16.gmra.mxu0 %v6892
        %v7855 = vpop.f32.mrf.mxu0
        %v7856 = vadd.f32 %v7842, %v7855
        %v7857 = vpop.f32.mrf.mxu0
        %v7858 = vadd.f32 %v7844, %v7857
        %7859 = vdwg.mxu0
        %7860 = vmatpush.bf16.msra.mxu0 %v7503
        %7861 = vmatpush.bf16.msra.mxu0 %v7499
        %7862 = vmatpush.bf16.msra.mxu0 %v7495
        %7863 = vmatpush.bf16.msra.mxu0 %v7491
        %7864 = vmatpush.bf16.msra.mxu0 %v7487
        %7865 = vmatpush.bf16.msra.mxu0 %v7483
        %7866 = vmatpush.bf16.msra.mxu0 %v7479
        %7867 = vmatpush.bf16.msra.mxu0 %v7475
        %7868 = vmatmul.bf16.gmra.mxu0 %v6893
        %v7869 = vpop.f32.mrf.mxu0
        %v7870 = vadd.f32 %v7856, %v7869
        %v7871 = vpop.f32.mrf.mxu0
        %v7872 = vadd.f32 %v7858, %v7871
        %7873 = vdwg.mxu0
        %7874 = vmatpush.bf16.msra.mxu0 %v7535
        %7875 = vmatpush.bf16.msra.mxu0 %v7531
        %7876 = vmatpush.bf16.msra.mxu0 %v7527
        %7877 = vmatpush.bf16.msra.mxu0 %v7523
        %7878 = vmatpush.bf16.msra.mxu0 %v7519
        %7879 = vmatpush.bf16.msra.mxu0 %v7515
        %7880 = vmatpush.bf16.msra.mxu0 %v7511
        %7881 = vmatpush.bf16.msra.mxu0 %v7507
        %7882 = vmatmul.bf16.gmra.mxu0 %v6894
        %v7883 = vpop.f32.mrf.mxu0
        %v7884 = vadd.f32 %v7870, %v7883
        %v7885 = vpop.f32.mrf.mxu0
        %v7886 = vadd.f32 %v7872, %v7885
        %7887 = vdwg.mxu0
        %v7888 = vadd.f32 %v6663, %v7716
        %v7889 = vadd.f32 %v6719, %v7772
        %v7890 = vadd.f32 %v6775, %v7828
        %v7891 = vadd.f32 %v6831, %v7884
        %v7892 = vadd.f32 %v6665, %v7718
        %v7893 = vadd.f32 %v6721, %v7774
        %v7894 = vadd.f32 %v6777, %v7830
        %v7895 = vadd.f32 %v6833, %v7886
        %v7896 = vadd.f32 %v7888, %v505
        %v7897 = vadd.f32 %v7889, %v506
        %v7898 = vadd.f32 %v7890, %v507
        %v7899 = vadd.f32 %v7891, %v508
        %v7900 = vadd.f32 %v7892, %v509
        %v7901 = vadd.f32 %v7893, %v510
        %v7902 = vadd.f32 %v7894, %v511
        %v7903 = vadd.f32 %v7895, %v512
        %7904 = vst [vmem:[%s503] sm:$0xff] %v7896
        %7905 = vst [vmem:[%s503 + $0x8] sm:$0xff] %v7897
        %7906 = vst [vmem:[%s503 + $0x10] sm:$0xff] %v7898
        %7907 = vst [vmem:[%s503 + $0x18] sm:$0xff] %v7899
        %7908 = vst [vmem:[%s503 + $0x20] sm:$0xff] %v7900
        %7909 = vst [vmem:[%s503 + $0x28] sm:$0xff] %v7901
        %7910 = vst [vmem:[%s503 + $0x30] sm:$0xff] %v7902
        %7911 = vst [vmem:[%s503 + $0x38] sm:$0xff] %v7903
        %s7912 = sand.u32 %s254, 1
        %s7913 = scalar_lea.sflag [#allocation4], %s7912
        %s7914 = sand.u32 %s254, 1
        %s7915 = smul.addr %s7914, 64
        %s7916 = scalar_lea.vmem [#allocation17], %s7915
        // Predicated region
        $region97: #{tpu_custom_call.1} parent=59 // pred_check
          %p7917 = pneg %p264
        $region98: #{tpu_custom_call.1} parent=59 // pred_check_branch
          %7919 = sbr.rel (%p7917) target = $region100
        $region99: #{tpu_custom_call.1} parent=59 // pred_region
          %7921 = vsyncadd %s7913, 0
          %s7922 = smul.addr %s31, 8
          %s7923 = smul.addr %s7922, 8
          %s7924 = scalar_lea.hbm %s10, %s7923
          %s7925 = sshll.u32 %s7916, 4
          %s7926 = int_to_ptr.vmem [resolvable:$true] %s7925
          %s7927 = sshll.u32 %s7924, 4
          %s7928 = int_to_ptr.hbm [resolvable:$true] %s7927
          %7933 = dma.vmem_to_hbm [thread:$0]  %s7926, 1024, %s7928, %s7913, 512, 512, 32
        $region100: #{tpu_custom_call.1} parent=59 // pred_fallthru
          _
      $region60: #{tpu_custom_call.1} parent=5 // pred_fallthru
        _
      %p7934 = scmp.le.s32.totalorder 2, %s26
      // Predicated region
      $region101: #{tpu_custom_call.1} parent=5 // pred_check
        %p7935 = pneg %p7934
      $region102: #{tpu_custom_call.1} parent=5 // pred_check_branch
        %7937 = sbr.rel (%p7935) target = $region104
      $region103: #{tpu_custom_call.1} parent=5 // pred_region
        %s7938 = ssub.s32 %s26, 2
        // Predicated region
        $region105: #{tpu_custom_call.1} parent=103 // pred_check
          %p7939 = pneg %p270
        $region106: #{tpu_custom_call.1} parent=103 // pred_check_branch
          %7941 = sbr.rel (%p7939) target = $region108
        $region107: #{tpu_custom_call.1} parent=103 // pred_region
          %s7942 = sand.u32 %s255, 1
          %s7943 = scalar_lea.sflag [#allocation4], %s7942
          %s7944 = sand.u32 %s255, 1
          %s7945 = smul.addr %s7944, 64
          %s7946 = scalar_lea.vmem [#allocation17], %s7945
          %7948 = dma.done %s7943, 1024
        $region108: #{tpu_custom_call.1} parent=103 // pred_fallthru
          _
      $region104: #{tpu_custom_call.1} parent=5 // pred_fallthru
        _
    $region6: #{tpu_custom_call.1} parent=1 // loop_footer
      %s30 = sadd.s32 1, %s26
    $region7: #{tpu_custom_call.1} parent=1 // loop_footer_branch
      %25 = sbr.rel target = $region3
    $region8: #{tpu_custom_call.1} parent=1 // loop_exit
      _
    %7949 = vsyncpa [#allocation3], 1
    %s7950 = scalar_lea.sflag [#allocation3], 1
    %7951 = vsyncpa %s7950, 1
    %7952 = vsyncpa [#allocation6], 1
    %7953 = vsyncpa [#allocation9], 1
    %7954 = vsyncpa [#allocation12], 1
    %7955 = vsyncpa [#allocation15], 1
    %7956 = vsyncpa [#allocation4], 1
    %s7957 = scalar_lea.sflag [#allocation4], 1
    %7958 = vsyncpa %s7957, 1

</llo_original>
